<compile_context>
chip_gen: v7x
topology: tpu7x:2x2x1
jax: 0.10.0
libtpu: 0.0.40
codegen_flags: <defaults>
</compile_context>

<pallas_src>
import jax
import jax.numpy as jnp
from jax.experimental import pallas as pl
from jax.experimental.pallas import tpu as pltpu

IN_DIM = 3 * 28 * 28          # 2352 (fc1 contraction dim, left unpadded)
HID = 512
OUT_DIM = 2
OUT_PAD = 128                 # lane-dense output slab, sliced to 2 in wrapper
NEG_SLOPE = 0.01              # torch leaky_relu default


def _round_up(n, m):
    return ((n + m - 1) // m) * m


def _leaky_relu(x):
    # max(x, 0.01*x) == leaky_relu for slope < 1; mul+max instead of cmp+mul+select.
    return jnp.maximum(x, NEG_SLOPE * x)


def mlp_kernel(x_ref, w1_ref, b1_ref, w2_ref, b2_ref, w3_ref, b3_ref, o_ref):
    # x_ref: (tb, IN_DIM) f32 -> cast to bf16 once in VMEM (no HBM roundtrip).
    x = x_ref[...].astype(jnp.bfloat16)

    h1 = jnp.dot(x, w1_ref[...], preferred_element_type=jnp.float32)
    h1 = _leaky_relu(h1 + b1_ref[...]).astype(jnp.bfloat16)   # f32 epilogue (v5e-safe)

    h2 = jnp.dot(h1, w2_ref[...], preferred_element_type=jnp.float32)
    h2 = _leaky_relu(h2 + b2_ref[...]).astype(jnp.bfloat16)

    logits = jnp.dot(h2, w3_ref[...], preferred_element_type=jnp.float32)
    o_ref[...] = (logits + b3_ref[...]).astype(o_ref.dtype)    # (tb, OUT_PAD)


def _hw_budget():
    """(max batch tile, vmem limit) sized to this chip's physical VMEM."""
    phys = 64 << 20                                  # conservative default (v7x)
    try:
        info = pltpu.get_tpu_info()
        phys = getattr(info, "vmem_capacity_bytes", phys) or phys
    except Exception:
        pass
    if phys >= (100 << 20):                          # v5e / v6e: 128 MiB VMEM
        return 2048, 96 << 20
    return 1024, 48 << 20                            # v7x: 64 MiB VMEM


def _pick_tb(B, max_tb):
    if B <= 16:
        # One block spanning the whole batch dim (legal for any B, zero padding).
        return max(B, 1)
    # >= 2 grid steps so v7x megacore gets work on both TensorCores; tile is a
    # multiple of 16 (bf16 sublane packing) sized to minimize padded rows.
    n_steps = max(2, pl.cdiv(B, max_tb))
    return min(max_tb, _round_up(pl.cdiv(B, n_steps), 16))


def mlp_forward(x_nchw, params, *, tb=None):
    w1, b1, w2, b2, w3, b3 = params
    B = x_nchw.shape[0]

    max_tb, vmem_limit = _hw_budget()
    if tb is None:
        tb = _pick_tb(B, max_tb)
    grid = (pl.cdiv(B, tb),)

    # Same semantics as torch's x.view(-1, 2352) on a contiguous NCHW tensor.
    # No padding and no dtype copy of x in the wrapper (kernel casts to bf16).
    x2d = x_nchw.reshape(B, IN_DIM)
    if x2d.dtype != jnp.float32:
        x2d = x2d.astype(jnp.float32)

    # Parameters: bf16 matmul operands; only the tiny fc3 weight/bias are padded
    # to the lane-dense 128-wide output slab (numerically inert, sliced off).
    w1p = w1.astype(jnp.bfloat16)
    w2p = w2.astype(jnp.bfloat16)
    w3p = jnp.pad(w3, ((0, 0), (0, OUT_PAD - OUT_DIM))).astype(jnp.bfloat16)
    b1p = b1.astype(jnp.float32)
    b2p = b2.astype(jnp.float32)
    b3p = jnp.pad(b3, ((0, 0), (0, OUT_PAD - OUT_DIM))).astype(jnp.float32)

    rows = grid[0] * tb
    flops = 2 * rows * (IN_DIM * HID + HID * HID + HID * OUT_PAD)
    bytes_accessed = (
        B * IN_DIM * 4
        + (w1p.size + w2p.size + w3p.size) * 2
        + (b1p.size + b2p.size + b3p.size) * 4
        + B * OUT_PAD * 4
    )

    def run(single_buffer_weights):
        res_kwargs = {}
        if single_buffer_weights:
            # Constant index_maps -> one VMEM buffer is enough; frees the dead
            # ~3 MiB second copy of the weights (matters most on v7x).
            res_kwargs = dict(pipeline_mode=pl.Buffered(1))

        in_specs = [
            pl.BlockSpec((tb, IN_DIM), lambda i: (i, 0)),                 # x: batch-tiled, f32
            pl.BlockSpec((IN_DIM, HID), lambda i: (0, 0), **res_kwargs),  # w1 resident
            pl.BlockSpec((1, HID), lambda i: (0, 0), **res_kwargs),       # b1
            pl.BlockSpec((HID, HID), lambda i: (0, 0), **res_kwargs),     # w2
            pl.BlockSpec((1, HID), lambda i: (0, 0), **res_kwargs),       # b2
            pl.BlockSpec((HID, OUT_PAD), lambda i: (0, 0), **res_kwargs), # w3 (padded cols)
            pl.BlockSpec((1, OUT_PAD), lambda i: (0, 0), **res_kwargs),   # b3 (padded cols)
        ]
        return pl.pallas_call(
            mlp_kernel,
            out_shape=jax.ShapeDtypeStruct((B, OUT_PAD), jnp.float32),
            grid=grid,
            in_specs=in_specs,
            out_specs=pl.BlockSpec((tb, OUT_PAD), lambda i: (i, 0)),
            compiler_params=pltpu.CompilerParams(
                dimension_semantics=("parallel",),     # shards batch on v7x's 2 TCs
                vmem_limit_bytes=vmem_limit,           # generation-aware
            ),
            cost_estimate=pl.CostEstimate(
                flops=flops, transcendentals=0, bytes_accessed=bytes_accessed),
        )(x2d, w1p, b1p, w2p, b2p, w3p, b3p)

    try:
        out = run(True)
    except Exception:
        # pipeline_mode=pl.Buffered(1) unsupported on this jax build; default
        # double-buffered resident weights only cost ~3 MiB extra VMEM.
        out = run(False)

    return out[:B, :OUT_DIM]


def init_params(key):
    """Deterministic init mirroring nn.Linear's U(-1/sqrt(fan_in), 1/sqrt(fan_in))."""
    ks = jax.random.split(key, 6)

    def linear(kw, kb, fan_in, fan_out):
        bound = 1.0 / jnp.sqrt(jnp.float32(fan_in))
        # stored transposed relative to torch: (in, out) so the kernel does x @ W + b
        w = jax.random.uniform(kw, (fan_in, fan_out), jnp.float32, -bound, bound)
        b = jax.random.uniform(kb, (1, fan_out), jnp.float32, -bound, bound)
        return w, b

    w1, b1 = linear(ks[0], ks[1], IN_DIM, HID)
    w2, b2 = linear(ks[2], ks[3], HID, HID)
    w3, b3 = linear(ks[4], ks[5], HID, OUT_DIM)
    return (w1, b1, w2, b2, w3, b3)


def mlp_reference(x_nchw, params):
    """Pure-JAX f32 reference of the PyTorch forward pass."""
    w1, b1, w2, b2, w3, b3 = params
    x = x_nchw.reshape(x_nchw.shape[0], IN_DIM).astype(jnp.float32)
    h1 = jnp.maximum(x @ w1 + b1, NEG_SLOPE * (x @ w1 + b1))
    h2 = jnp.maximum(h1 @ w2 + b2, NEG_SLOPE * (h1 @ w2 + b2))
    return h2 @ w3 + b3


if __name__ == "__main__":
    key = jax.random.PRNGKey(0)
    k_param, k_x = jax.random.split(key)

    params = init_params(k_param)
    x = jax.random.normal(k_x, (2, 3, 28, 28), jnp.float32)   # (B, 3, 28, 28)

    out = jax.block_until_ready(mlp_forward(x, params))
    ref = mlp_reference(x, params)

    assert out.shape == (2, 2), out.shape
    # bf16 matmul inputs (f32 accumulation) -> loosened tolerance vs f32 ref.
    assert jnp.allclose(out, ref, atol=5e-2, rtol=5e-2), (out, ref)

    print("KERNEL_OK")
</pallas_src>

<mosaic_0001>
module attributes {stable_mosaic.version = 11 : i64} {
  func.func @mlp_kernel(%arg0: i32, %arg1: memref<2x2352xf32, #tpu.memory_space<vmem>>, %arg2: memref<2352x512xbf16, #tpu.memory_space<vmem>>, %arg3: memref<1x512xf32, #tpu.memory_space<vmem>>, %arg4: memref<512x512xbf16, #tpu.memory_space<vmem>>, %arg5: memref<1x512xf32, #tpu.memory_space<vmem>>, %arg6: memref<512x128xbf16, #tpu.memory_space<vmem>>, %arg7: memref<1x128xf32, #tpu.memory_space<vmem>>, %arg8: memref<2x128xf32, #tpu.memory_space<vmem>>) attributes {dimension_semantics = [#tpu.dimension_semantics<parallel>], iteration_bounds = array<i64: 1>, scalar_prefetch = 0 : i64, scratch_operands = 0 : i64, tpu.core_type = #tpu.core_type<tc>, window_params = [{transform_indices = @transform_0, window_bounds = array<i64: 2, 2352>}, {pipeline_mode = #tpu.pipeline_mode<synchronous>, transform_indices = @transform_1, window_bounds = array<i64: 2352, 512>}, {pipeline_mode = #tpu.pipeline_mode<synchronous>, transform_indices = @transform_2, window_bounds = array<i64: 1, 512>}, {pipeline_mode = #tpu.pipeline_mode<synchronous>, transform_indices = @transform_3, window_bounds = array<i64: 512, 512>}, {pipeline_mode = #tpu.pipeline_mode<synchronous>, transform_indices = @transform_4, window_bounds = array<i64: 1, 512>}, {pipeline_mode = #tpu.pipeline_mode<synchronous>, transform_indices = @transform_5, window_bounds = array<i64: 512, 128>}, {pipeline_mode = #tpu.pipeline_mode<synchronous>, transform_indices = @transform_6, window_bounds = array<i64: 1, 128>}, {transform_indices = @transform_7, window_bounds = array<i64: 2, 128>}]} {
    %c0 = arith.constant 0 : index
    %c0_0 = arith.constant 0 : index
    %0 = vector.load %arg1[%c0, %c0_0] : memref<2x2352xf32, #tpu.memory_space<vmem>>, vector<2x2352xf32>
    %1 = arith.truncf %0 : vector<2x2352xf32> to vector<2x2352xbf16>
    %c0_1 = arith.constant 0 : index
    %c0_2 = arith.constant 0 : index
    %2 = vector.load %arg2[%c0_1, %c0_2] : memref<2352x512xbf16, #tpu.memory_space<vmem>>, vector<2352x512xbf16>
    %cst = arith.constant dense<0.000000e+00> : vector<2x512xf32>
    %3 = tpu.matmul %1, %2, %cst {dimension_numbers = #tpu.dot_dimension_numbers<[1], [0], [0], [1], [0, 0, 1, 1], [], []>} : vector<2x2352xbf16>, vector<2352x512xbf16>, vector<2x512xf32> -> vector<2x512xf32>
    %c0_3 = arith.constant 0 : index
    %c0_4 = arith.constant 0 : index
    %4 = vector.load %arg3[%c0_3, %c0_4] : memref<1x512xf32, #tpu.memory_space<vmem>>, vector<1x512xf32>
    %5 = vector.broadcast %4 : vector<1x512xf32> to vector<2x512xf32>
    %6 = arith.addf %3, %5 : vector<2x512xf32>
    %cst_5 = arith.constant 0.00999999977 : f32
    %7 = vector.broadcast %cst_5 : f32 to vector<2x512xf32>
    %8 = arith.mulf %7, %6 : vector<2x512xf32>
    %9 = arith.maximumf %6, %8 : vector<2x512xf32>
    %10 = arith.truncf %9 : vector<2x512xf32> to vector<2x512xbf16>
    %c0_6 = arith.constant 0 : index
    %c0_7 = arith.constant 0 : index
    %11 = vector.load %arg4[%c0_6, %c0_7] : memref<512x512xbf16, #tpu.memory_space<vmem>>, vector<512x512xbf16>
    %cst_8 = arith.constant dense<0.000000e+00> : vector<2x512xf32>
    %12 = tpu.matmul %10, %11, %cst_8 {dimension_numbers = #tpu.dot_dimension_numbers<[1], [0], [0], [1], [0, 0, 1, 1], [], []>} : vector<2x512xbf16>, vector<512x512xbf16>, vector<2x512xf32> -> vector<2x512xf32>
    %c0_9 = arith.constant 0 : index
    %c0_10 = arith.constant 0 : index
    %13 = vector.load %arg5[%c0_9, %c0_10] : memref<1x512xf32, #tpu.memory_space<vmem>>, vector<1x512xf32>
    %14 = vector.broadcast %13 : vector<1x512xf32> to vector<2x512xf32>
    %15 = arith.addf %12, %14 : vector<2x512xf32>
    %cst_11 = arith.constant 0.00999999977 : f32
    %16 = vector.broadcast %cst_11 : f32 to vector<2x512xf32>
    %17 = arith.mulf %16, %15 : vector<2x512xf32>
    %18 = arith.maximumf %15, %17 : vector<2x512xf32>
    %19 = arith.truncf %18 : vector<2x512xf32> to vector<2x512xbf16>
    %c0_12 = arith.constant 0 : index
    %c0_13 = arith.constant 0 : index
    %20 = vector.load %arg6[%c0_12, %c0_13] : memref<512x128xbf16, #tpu.memory_space<vmem>>, vector<512x128xbf16>
    %cst_14 = arith.constant dense<0.000000e+00> : vector<2x128xf32>
    %21 = tpu.matmul %19, %20, %cst_14 {dimension_numbers = #tpu.dot_dimension_numbers<[1], [0], [0], [1], [0, 0, 1, 1], [], []>} : vector<2x512xbf16>, vector<512x128xbf16>, vector<2x128xf32> -> vector<2x128xf32>
    %c0_15 = arith.constant 0 : index
    %c0_16 = arith.constant 0 : index
    %22 = vector.load %arg7[%c0_15, %c0_16] : memref<1x128xf32, #tpu.memory_space<vmem>>, vector<1x128xf32>
    %23 = vector.broadcast %22 : vector<1x128xf32> to vector<2x128xf32>
    %24 = arith.addf %21, %23 : vector<2x128xf32>
    %c0_17 = arith.constant 0 : index
    %c0_18 = arith.constant 0 : index
    %25 = vector.load %arg8[%c0_17, %c0_18] : memref<2x128xf32, #tpu.memory_space<vmem>>, vector<2x128xf32>
    tpu.vector_store %arg8[%c0_17, %c0_18], %24 {strides = array<i32>} : memref<2x128xf32, #tpu.memory_space<vmem>>, vector<2x128xf32>,
    return
  }
  func.func @transform_0(%arg0: i32) -> (i32, i32) {
    %c0_i32 = arith.constant 0 : i32
    %c0_i32_0 = arith.constant 0 : i32
    return %arg0, %c0_i32 : i32, i32
  }
  func.func @transform_1(%arg0: i32) -> (i32, i32) {
    %c0_i32 = arith.constant 0 : i32
    %c0_i32_0 = arith.constant 0 : i32
    %c0_i32_1 = arith.constant 0 : i32
    return %c0_i32, %c0_i32_0 : i32, i32
  }
  func.func @transform_2(%arg0: i32) -> (i32, i32) {
    %c0_i32 = arith.constant 0 : i32
    %c0_i32_0 = arith.constant 0 : i32
    %c0_i32_1 = arith.constant 0 : i32
    return %c0_i32, %c0_i32_0 : i32, i32
  }
  func.func @transform_3(%arg0: i32) -> (i32, i32) {
    %c0_i32 = arith.constant 0 : i32
    %c0_i32_0 = arith.constant 0 : i32
    %c0_i32_1 = arith.constant 0 : i32
    return %c0_i32, %c0_i32_0 : i32, i32
  }
  func.func @transform_4(%arg0: i32) -> (i32, i32) {
    %c0_i32 = arith.constant 0 : i32
    %c0_i32_0 = arith.constant 0 : i32
    %c0_i32_1 = arith.constant 0 : i32
    return %c0_i32, %c0_i32_0 : i32, i32
  }
  func.func @transform_5(%arg0: i32) -> (i32, i32) {
    %c0_i32 = arith.constant 0 : i32
    %c0_i32_0 = arith.constant 0 : i32
    %c0_i32_1 = arith.constant 0 : i32
    return %c0_i32, %c0_i32_0 : i32, i32
  }
  func.func @transform_6(%arg0: i32) -> (i32, i32) {
    %c0_i32 = arith.constant 0 : i32
    %c0_i32_0 = arith.constant 0 : i32
    %c0_i32_1 = arith.constant 0 : i32
    return %c0_i32, %c0_i32_0 : i32, i32
  }
  func.func @transform_7(%arg0: i32) -> (i32, i32) {
    %c0_i32 = arith.constant 0 : i32
    %c0_i32_0 = arith.constant 0 : i32
    return %arg0, %c0_i32 : i32, i32
  }
}

module attributes {stable_mosaic.version = 11 : i64} {
  func.func @mlp_kernel(%arg0: i32, %arg1: memref<2x2352xf32, #tpu.memory_space<vmem>>, %arg2: memref<2352x512xbf16, #tpu.memory_space<vmem>>, %arg3: memref<1x512xf32, #tpu.memory_space<vmem>>, %arg4: memref<512x512xbf16, #tpu.memory_space<vmem>>, %arg5: memref<1x512xf32, #tpu.memory_space<vmem>>, %arg6: memref<512x128xbf16, #tpu.memory_space<vmem>>, %arg7: memref<1x128xf32, #tpu.memory_space<vmem>>, %arg8: memref<2x128xf32, #tpu.memory_space<vmem>>) attributes {dimension_semantics = [#tpu.dimension_semantics<parallel>], iteration_bounds = array<i64: 1>, scalar_prefetch = 0 : i64, scratch_operands = 0 : i64, tpu.core_type = #tpu.core_type<tc>, window_params = [{transform_indices = @transform_0, window_bounds = array<i64: 2, 2352>}, {pipeline_mode = #tpu.pipeline_mode<synchronous>, transform_indices = @transform_1, window_bounds = array<i64: 2352, 512>}, {pipeline_mode = #tpu.pipeline_mode<synchronous>, transform_indices = @transform_2, window_bounds = array<i64: 1, 512>}, {pipeline_mode = #tpu.pipeline_mode<synchronous>, transform_indices = @transform_3, window_bounds = array<i64: 512, 512>}, {pipeline_mode = #tpu.pipeline_mode<synchronous>, transform_indices = @transform_4, window_bounds = array<i64: 1, 512>}, {pipeline_mode = #tpu.pipeline_mode<synchronous>, transform_indices = @transform_5, window_bounds = array<i64: 512, 128>}, {pipeline_mode = #tpu.pipeline_mode<synchronous>, transform_indices = @transform_6, window_bounds = array<i64: 1, 128>}, {transform_indices = @transform_7, window_bounds = array<i64: 2, 128>}]} {
    %c0 = arith.constant 0 : index
    %c0_0 = arith.constant 0 : index
    %0 = vector.load %arg1[%c0, %c0_0] : memref<2x2352xf32, #tpu.memory_space<vmem>>, vector<2x2352xf32>
    %1 = arith.truncf %0 : vector<2x2352xf32> to vector<2x2352xbf16>
    %c0_1 = arith.constant 0 : index
    %c0_2 = arith.constant 0 : index
    %2 = vector.load %arg2[%c0_1, %c0_2] : memref<2352x512xbf16, #tpu.memory_space<vmem>>, vector<2352x512xbf16>
    %cst = arith.constant dense<0.000000e+00> : vector<2x512xf32>
    %3 = tpu.matmul %1, %2, %cst {dimension_numbers = #tpu.dot_dimension_numbers<[1], [0], [0], [1], [0, 0, 1, 1], [], []>} : vector<2x2352xbf16>, vector<2352x512xbf16>, vector<2x512xf32> -> vector<2x512xf32>
    %c0_3 = arith.constant 0 : index
    %c0_4 = arith.constant 0 : index
    %4 = vector.load %arg3[%c0_3, %c0_4] : memref<1x512xf32, #tpu.memory_space<vmem>>, vector<1x512xf32>
    %5 = vector.broadcast %4 : vector<1x512xf32> to vector<2x512xf32>
    %6 = arith.addf %3, %5 : vector<2x512xf32>
    %cst_5 = arith.constant 0.00999999977 : f32
    %7 = vector.broadcast %cst_5 : f32 to vector<2x512xf32>
    %8 = arith.mulf %7, %6 : vector<2x512xf32>
    %9 = arith.maximumf %6, %8 : vector<2x512xf32>
    %10 = arith.truncf %9 : vector<2x512xf32> to vector<2x512xbf16>
    %c0_6 = arith.constant 0 : index
    %c0_7 = arith.constant 0 : index
    %11 = vector.load %arg4[%c0_6, %c0_7] : memref<512x512xbf16, #tpu.memory_space<vmem>>, vector<512x512xbf16>
    %cst_8 = arith.constant dense<0.000000e+00> : vector<2x512xf32>
    %12 = tpu.matmul %10, %11, %cst_8 {dimension_numbers = #tpu.dot_dimension_numbers<[1], [0], [0], [1], [0, 0, 1, 1], [], []>} : vector<2x512xbf16>, vector<512x512xbf16>, vector<2x512xf32> -> vector<2x512xf32>
    %c0_9 = arith.constant 0 : index
    %c0_10 = arith.constant 0 : index
    %13 = vector.load %arg5[%c0_9, %c0_10] : memref<1x512xf32, #tpu.memory_space<vmem>>, vector<1x512xf32>
    %14 = vector.broadcast %13 : vector<1x512xf32> to vector<2x512xf32>
    %15 = arith.addf %12, %14 : vector<2x512xf32>
    %cst_11 = arith.constant 0.00999999977 : f32
    %16 = vector.broadcast %cst_11 : f32 to vector<2x512xf32>
    %17 = arith.mulf %16, %15 : vector<2x512xf32>
    %18 = arith.maximumf %15, %17 : vector<2x512xf32>
    %19 = arith.truncf %18 : vector<2x512xf32> to vector<2x512xbf16>
    %c0_12 = arith.constant 0 : index
    %c0_13 = arith.constant 0 : index
    %20 = vector.load %arg6[%c0_12, %c0_13] : memref<512x128xbf16, #tpu.memory_space<vmem>>, vector<512x128xbf16>
    %cst_14 = arith.constant dense<0.000000e+00> : vector<2x128xf32>
    %21 = tpu.matmul %19, %20, %cst_14 {dimension_numbers = #tpu.dot_dimension_numbers<[1], [0], [0], [1], [0, 0, 1, 1], [], []>} : vector<2x512xbf16>, vector<512x128xbf16>, vector<2x128xf32> -> vector<2x128xf32>
    %c0_15 = arith.constant 0 : index
    %c0_16 = arith.constant 0 : index
    %22 = vector.load %arg7[%c0_15, %c0_16] : memref<1x128xf32, #tpu.memory_space<vmem>>, vector<1x128xf32>
    %23 = vector.broadcast %22 : vector<1x128xf32> to vector<2x128xf32>
    %24 = arith.addf %21, %23 : vector<2x128xf32>
    %c0_17 = arith.constant 0 : index
    %c0_18 = arith.constant 0 : index
    %25 = vector.load %arg8[%c0_17, %c0_18] : memref<2x128xf32, #tpu.memory_space<vmem>>, vector<2x128xf32>
    tpu.vector_store %arg8[%c0_17, %c0_18], %24 {strides = array<i32>} : memref<2x128xf32, #tpu.memory_space<vmem>>, vector<2x128xf32>,
    return
  }
  func.func @transform_0(%arg0: i32) -> (i32, i32) {
    %c0_i32 = arith.constant 0 : i32
    %c0_i32_0 = arith.constant 0 : i32
    return %arg0, %c0_i32 : i32, i32
  }
  func.func @transform_1(%arg0: i32) -> (i32, i32) {
    %c0_i32 = arith.constant 0 : i32
    %c0_i32_0 = arith.constant 0 : i32
    %c0_i32_1 = arith.constant 0 : i32
    return %c0_i32, %c0_i32_0 : i32, i32
  }
  func.func @transform_2(%arg0: i32) -> (i32, i32) {
    %c0_i32 = arith.constant 0 : i32
    %c0_i32_0 = arith.constant 0 : i32
    %c0_i32_1 = arith.constant 0 : i32
    return %c0_i32, %c0_i32_0 : i32, i32
  }
  func.func @transform_3(%arg0: i32) -> (i32, i32) {
    %c0_i32 = arith.constant 0 : i32
    %c0_i32_0 = arith.constant 0 : i32
    %c0_i32_1 = arith.constant 0 : i32
    return %c0_i32, %c0_i32_0 : i32, i32
  }
  func.func @transform_4(%arg0: i32) -> (i32, i32) {
    %c0_i32 = arith.constant 0 : i32
    %c0_i32_0 = arith.constant 0 : i32
    %c0_i32_1 = arith.constant 0 : i32
    return %c0_i32, %c0_i32_0 : i32, i32
  }
  func.func @transform_5(%arg0: i32) -> (i32, i32) {
    %c0_i32 = arith.constant 0 : i32
    %c0_i32_0 = arith.constant 0 : i32
    %c0_i32_1 = arith.constant 0 : i32
    return %c0_i32, %c0_i32_0 : i32, i32
  }
  func.func @transform_6(%arg0: i32) -> (i32, i32) {
    %c0_i32 = arith.constant 0 : i32
    %c0_i32_0 = arith.constant 0 : i32
    %c0_i32_1 = arith.constant 0 : i32
    return %c0_i32, %c0_i32_0 : i32, i32
  }
  func.func @transform_7(%arg0: i32) -> (i32, i32) {
    %c0_i32 = arith.constant 0 : i32
    %c0_i32_0 = arith.constant 0 : i32
    return %arg0, %c0_i32 : i32, i32
  }
}

</mosaic_0001>

<llo_original>
// kernel: tpu_custom_call.1
$region0: #{tpu_custom_call.1}
  #allocation0 [shape = 'u32[]', space=smem, size = 0x4, offset = 0x4, fixed_abs, tag = 'smem constant byte address 0x4 - core index']
  #allocation1 [shape = 'u32[144,128]{1,0:T(1,128)}', space=vmem, size = 0x12000, scoped, tag = 'internal scratch']
  %s0 = inlined_call_operand.hbm [shape: f32[2,2352], index: 0, kind: input, shape index: {}]
  %s1 = inlined_call_operand.hbm [shape: bf16[2352,512], index: 1, kind: input, shape index: {}]
  %s2 = inlined_call_operand.hbm [shape: f32[1,512], index: 2, kind: input, shape index: {}]
  %s3 = inlined_call_operand.hbm [shape: bf16[512,512], index: 3, kind: input, shape index: {}]
  %s4 = inlined_call_operand.hbm [shape: f32[1,512], index: 4, kind: input, shape index: {}]
  %s5 = inlined_call_operand.hbm [shape: bf16[512,128], index: 5, kind: input, shape index: {}]
  %s6 = inlined_call_operand.hbm [shape: f32[1,128], index: 6, kind: input, shape index: {}]
  %s7 = inlined_call_operand.hbm [shape: f32[2,128], index: 7, kind: output, shape index: {}]
  %s8 = sld [smem:[#allocation0]]
  $region66: #{tpu_custom_call.1} parent=0
    _
  %s10 = ssub.s32 1, %s8
  %s11 = scalar_select 0, %s10, %s8
  $region1: #{tpu_custom_call.1} parent=0
    #allocation2 [shape = 'u8[19456]{0}', space=vmem, size = 0x4c00, scoped, tag = 'input window, operand 0, single buffered']
    #allocation3 [shape = 's32[1]{0}', space=sflag, size = 0x4, scoped, tag = 'scoped memory for tpu_custom_call.1']
    #allocation4 [shape = 's32[1]{0}', space=sflag, size = 0x4, scoped, tag = 'scoped memory for tpu_custom_call.1']
    #allocation5 [shape = 'u8[2408448]{0}', space=vmem, size = 0x24c000, scoped, tag = 'input window, operand 1, single buffered']
    #allocation6 [shape = 's32[1]{0}', space=sflag, size = 0x4, scoped, tag = 'scoped memory for tpu_custom_call.1']
    #allocation7 [shape = 'u8[2048]{0}', space=vmem, size = 0x800, scoped, tag = 'input window, operand 2, single buffered']
    #allocation8 [shape = 'u8[524288]{0}', space=vmem, size = 0x80000, scoped, tag = 'input window, operand 3, single buffered']
    #allocation9 [shape = 's32[1]{0}', space=sflag, size = 0x4, scoped, tag = 'scoped memory for tpu_custom_call.1']
    #allocation10 [shape = 'u8[2048]{0}', space=vmem, size = 0x800, scoped, tag = 'input window, operand 4, single buffered']
    #allocation11 [shape = 'u8[131072]{0}', space=vmem, size = 0x20000, scoped, tag = 'input window, operand 5, single buffered']
    #allocation12 [shape = 's32[1]{0}', space=sflag, size = 0x4, scoped, tag = 'scoped memory for tpu_custom_call.1']
    #allocation13 [shape = 'u8[512]{0}', space=vmem, size = 0x400, scoped, tag = 'input window, operand 6, single buffered']
    #allocation14 [shape = 'u8[1024]{0}', space=vmem, size = 0x400, scoped, tag = 'output window, operand 0, single buffered']
    %12 = vsyncpa [#allocation3], 0
    %13 = vsyncpa [#allocation6], 0
    %14 = vsyncpa [#allocation9], 0
    %15 = vsyncpa [#allocation12], 0
    %16 = vsyncpa [#allocation4], 0
    // Predicated region
    $region2: #{tpu_custom_call.1} parent=1 // pred_check
      _
    $region3: #{tpu_custom_call.1} parent=1 // pred_check_branch
      %18 = sbr.rel (0) target = $region5
    $region4: #{tpu_custom_call.1} parent=1 // pred_region
      %s20 = ssub.s32 608, 608
      %21 = vsyncadd [#allocation3], %s20
      %s23 = sshll.u32 [#allocation2], 4
      %s24 = int_to_ptr.vmem [resolvable:$true] %s23
      %26 = dma.hbm_to_vmem [thread:$0]  %s0, 608, %s24, [#allocation3]
    $region5: #{tpu_custom_call.1} parent=1 // pred_fallthru
      _
    // Predicated region
    $region6: #{tpu_custom_call.1} parent=1 // pred_check
      _
    $region7: #{tpu_custom_call.1} parent=1 // pred_check_branch
      %28 = sbr.rel (0) target = $region9
    $region8: #{tpu_custom_call.1} parent=1 // pred_region
      %s30 = ssub.s32 75264, 75264
      %31 = vsyncadd [#allocation6], %s30
      %s32 = sshll.u32 [#allocation5], 4
      %s33 = int_to_ptr.vmem [resolvable:$true] %s32
      %38 = dma.hbm_to_vmem [thread:$0]  %s1, 75264, %s33, [#allocation6], 256, 256, 16
    $region9: #{tpu_custom_call.1} parent=1 // pred_fallthru
      _
    // Predicated region
    $region10: #{tpu_custom_call.1} parent=1 // pred_check
      _
    $region11: #{tpu_custom_call.1} parent=1 // pred_check_branch
      %40 = sbr.rel (0) target = $region13
    $region12: #{tpu_custom_call.1} parent=1 // pred_region
      %s42 = ssub.s32 64, 64
      %43 = vsyncadd [#allocation6], %s42
      %s45 = sshll.u32 [#allocation7], 4
      %s46 = int_to_ptr.vmem [resolvable:$true] %s45
      %48 = dma.hbm_to_vmem [thread:$0]  %s2, 64, %s46, [#allocation6]
    $region13: #{tpu_custom_call.1} parent=1 // pred_fallthru
      _
    // Predicated region
    $region14: #{tpu_custom_call.1} parent=1 // pred_check
      _
    $region15: #{tpu_custom_call.1} parent=1 // pred_check_branch
      %50 = sbr.rel (0) target = $region17
    $region16: #{tpu_custom_call.1} parent=1 // pred_region
      %s52 = ssub.s32 16384, 16384
      %53 = vsyncadd [#allocation9], %s52
      %s54 = sshll.u32 [#allocation8], 4
      %s55 = int_to_ptr.vmem [resolvable:$true] %s54
      %60 = dma.hbm_to_vmem [thread:$0]  %s3, 16384, %s55, [#allocation9], 256, 256, 16
    $region17: #{tpu_custom_call.1} parent=1 // pred_fallthru
      _
    // Predicated region
    $region18: #{tpu_custom_call.1} parent=1 // pred_check
      _
    $region19: #{tpu_custom_call.1} parent=1 // pred_check_branch
      %62 = sbr.rel (0) target = $region21
    $region20: #{tpu_custom_call.1} parent=1 // pred_region
      %s64 = ssub.s32 64, 64
      %65 = vsyncadd [#allocation9], %s64
      %s67 = sshll.u32 [#allocation10], 4
      %s68 = int_to_ptr.vmem [resolvable:$true] %s67
      %70 = dma.hbm_to_vmem [thread:$0]  %s4, 64, %s68, [#allocation9]
    $region21: #{tpu_custom_call.1} parent=1 // pred_fallthru
      _
    // Predicated region
    $region22: #{tpu_custom_call.1} parent=1 // pred_check
      _
    $region23: #{tpu_custom_call.1} parent=1 // pred_check_branch
      %72 = sbr.rel (0) target = $region25
    $region24: #{tpu_custom_call.1} parent=1 // pred_region
      %s74 = ssub.s32 4096, 4096
      %75 = vsyncadd [#allocation12], %s74
      %s76 = sshll.u32 [#allocation11], 4
      %s77 = int_to_ptr.vmem [resolvable:$true] %s76
      %82 = dma.hbm_to_vmem [thread:$0]  %s5, 4096, %s77, [#allocation12], 64, 64, 4
    $region25: #{tpu_custom_call.1} parent=1 // pred_fallthru
      _
    // Predicated region
    $region26: #{tpu_custom_call.1} parent=1 // pred_check
      _
    $region27: #{tpu_custom_call.1} parent=1 // pred_check_branch
      %84 = sbr.rel (0) target = $region29
    $region28: #{tpu_custom_call.1} parent=1 // pred_region
      %s86 = ssub.s32 16, 16
      %87 = vsyncadd [#allocation12], %s86
      %s89 = sshll.u32 [#allocation13], 4
      %s90 = int_to_ptr.vmem [resolvable:$true] %s89
      %92 = dma.hbm_to_vmem [thread:$0]  %s6, 16, %s90, [#allocation12]
    $region29: #{tpu_custom_call.1} parent=1 // pred_fallthru
      _
    // Predicated region
    $region30: #{tpu_custom_call.1} parent=1 // pred_check
      _
    $region31: #{tpu_custom_call.1} parent=1 // pred_check_branch
      %94 = sbr.rel (0) target = $region33
    $region32: #{tpu_custom_call.1} parent=1 // pred_region
      %95 = dma.done [#allocation3], 608
    $region33: #{tpu_custom_call.1} parent=1 // pred_fallthru
      _
    // Predicated region
    $region34: #{tpu_custom_call.1} parent=1 // pred_check
      _
    $region35: #{tpu_custom_call.1} parent=1 // pred_check_branch
      %97 = sbr.rel (0) target = $region37
    $region36: #{tpu_custom_call.1} parent=1 // pred_region
      %98 = dma.done [#allocation6], 75264
    $region37: #{tpu_custom_call.1} parent=1 // pred_fallthru
      _
    // Predicated region
    $region38: #{tpu_custom_call.1} parent=1 // pred_check
      _
    $region39: #{tpu_custom_call.1} parent=1 // pred_check_branch
      %100 = sbr.rel (0) target = $region41
    $region40: #{tpu_custom_call.1} parent=1 // pred_region
      %101 = dma.done [#allocation6], 64
    $region41: #{tpu_custom_call.1} parent=1 // pred_fallthru
      _
    // Predicated region
    $region42: #{tpu_custom_call.1} parent=1 // pred_check
      _
    $region43: #{tpu_custom_call.1} parent=1 // pred_check_branch
      %103 = sbr.rel (0) target = $region45
    $region44: #{tpu_custom_call.1} parent=1 // pred_region
      %104 = dma.done [#allocation9], 16384
    $region45: #{tpu_custom_call.1} parent=1 // pred_fallthru
      _
    // Predicated region
    $region46: #{tpu_custom_call.1} parent=1 // pred_check
      _
    $region47: #{tpu_custom_call.1} parent=1 // pred_check_branch
      %106 = sbr.rel (0) target = $region49
    $region48: #{tpu_custom_call.1} parent=1 // pred_region
      %107 = dma.done [#allocation9], 64
    $region49: #{tpu_custom_call.1} parent=1 // pred_fallthru
      _
    // Predicated region
    $region50: #{tpu_custom_call.1} parent=1 // pred_check
      _
    $region51: #{tpu_custom_call.1} parent=1 // pred_check_branch
      %109 = sbr.rel (0) target = $region53
    $region52: #{tpu_custom_call.1} parent=1 // pred_region
      %110 = dma.done [#allocation12], 4096
    $region53: #{tpu_custom_call.1} parent=1 // pred_fallthru
      _
    // Predicated region
    $region54: #{tpu_custom_call.1} parent=1 // pred_check
      _
    $region55: #{tpu_custom_call.1} parent=1 // pred_check_branch
      %112 = sbr.rel (0) target = $region57
    $region56: #{tpu_custom_call.1} parent=1 // pred_region
      %113 = dma.done [#allocation12], 16
    $region57: #{tpu_custom_call.1} parent=1 // pred_fallthru
      _
    %v115 = vld [vmem:[#allocation2] sm:$0xff]
    %v116 = vld [vmem:[#allocation2 + $0x8] sm:$0xff]
    %v117 = vld [vmem:[#allocation2 + $0x10] sm:$0xff]
    %v118 = vld [vmem:[#allocation2 + $0x18] sm:$0xff]
    %v119 = vld [vmem:[#allocation2 + $0x20] sm:$0x3f]
    %v125 = vcombine.high %v115, %v115
    %v127 = vunpack.c.l.s4 1983009808
    %v128 = vunpack.c.0.s8 %v127
    %v129 = vlaneseq
    %v130 = vshrl.u32 %v129, 7
    %v131 = vsub.s32 %v128, %v130
    %v132 = vrot.slane %v115, %v131
    %v134 = vunpack.c.l.s4 1983009808
    %v135 = vunpack.c.0.s8 %v134
    %v136 = vlaneseq
    %v137 = vshrl.u32 %v136, 7
    %v138 = vsub.s32 %v135, %v137
    %v139 = vrot.slane %v125, %v138
    %v140 = vcombine.high %v132, %v132
    %v141 = vcombine.high %v139, %v139
    %v142 = vcombine.high %v116, %v116
    %v144 = vunpack.c.l.s4 1983009808
    %v145 = vunpack.c.0.s8 %v144
    %v146 = vlaneseq
    %v147 = vshrl.u32 %v146, 7
    %v148 = vsub.s32 %v145, %v147
    %v149 = vrot.slane %v116, %v148
    %v151 = vunpack.c.l.s4 1983009808
    %v152 = vunpack.c.0.s8 %v151
    %v153 = vlaneseq
    %v154 = vshrl.u32 %v153, 7
    %v155 = vsub.s32 %v152, %v154
    %v156 = vrot.slane %v142, %v155
    %v157 = vcombine.high %v149, %v149
    %v158 = vcombine.high %v156, %v156
    %v159 = vcombine.high %v117, %v117
    %v161 = vunpack.c.l.s4 1983009808
    %v162 = vunpack.c.0.s8 %v161
    %v163 = vlaneseq
    %v164 = vshrl.u32 %v163, 7
    %v165 = vsub.s32 %v162, %v164
    %v166 = vrot.slane %v117, %v165
    %v168 = vunpack.c.l.s4 1983009808
    %v169 = vunpack.c.0.s8 %v168
    %v170 = vlaneseq
    %v171 = vshrl.u32 %v170, 7
    %v172 = vsub.s32 %v169, %v171
    %v173 = vrot.slane %v159, %v172
    %v174 = vcombine.high %v166, %v166
    %v175 = vcombine.high %v173, %v173
    %v176 = vcombine.high %v118, %v118
    %v178 = vunpack.c.l.s4 1983009808
    %v179 = vunpack.c.0.s8 %v178
    %v180 = vlaneseq
    %v181 = vshrl.u32 %v180, 7
    %v182 = vsub.s32 %v179, %v181
    %v183 = vrot.slane %v118, %v182
    %v185 = vunpack.c.l.s4 1983009808
    %v186 = vunpack.c.0.s8 %v185
    %v187 = vlaneseq
    %v188 = vshrl.u32 %v187, 7
    %v189 = vsub.s32 %v186, %v188
    %v190 = vrot.slane %v176, %v189
    %v191 = vcombine.high %v183, %v183
    %v192 = vcombine.high %v190, %v190
    %v193 = vcombine.high %v119, %v119
    %v195 = vunpack.c.l.s4 1983009808
    %v196 = vunpack.c.0.s8 %v195
    %v197 = vlaneseq
    %v198 = vshrl.u32 %v197, 7
    %v199 = vsub.s32 %v196, %v198
    %v200 = vrot.slane %v119, %v199
    %v202 = vunpack.c.l.s4 1983009808
    %v203 = vunpack.c.0.s8 %v202
    %v204 = vlaneseq
    %v205 = vshrl.u32 %v204, 7
    %v206 = vsub.s32 %v203, %v205
    %v207 = vrot.slane %v193, %v206
    %v208 = vcombine.high %v200, %v200
    %v228 = vpack.c.bf16 %v132, %v132
    %v229 = vpack.c.bf16 %v140, %v140
    %v230 = vpack.c.bf16 %v139, %v139
    %v231 = vpack.c.bf16 %v141, %v141
    %v232 = vpack.c.bf16 %v149, %v149
    %v233 = vpack.c.bf16 %v157, %v157
    %v234 = vpack.c.bf16 %v156, %v156
    %v235 = vpack.c.bf16 %v158, %v158
    %v236 = vpack.c.bf16 %v166, %v166
    %v237 = vpack.c.bf16 %v174, %v174
    %v238 = vpack.c.bf16 %v173, %v173
    %v239 = vpack.c.bf16 %v175, %v175
    %v240 = vpack.c.bf16 %v183, %v183
    %v241 = vpack.c.bf16 %v191, %v191
    %v242 = vpack.c.bf16 %v190, %v190
    %v243 = vpack.c.bf16 %v192, %v192
    %v244 = vpack.c.bf16 %v200, %v200
    %v245 = vpack.c.bf16 %v208, %v208
    %v246 = vpack.c.bf16 %v207, %v207
    %v247 = vld [vmem:[#allocation5] sm:$0xff]
    %v248 = vld [vmem:[#allocation5 + $0x8] sm:$0xff]
    %v249 = vld [vmem:[#allocation5 + $0x10] sm:$0xff]
    %v250 = vld [vmem:[#allocation5 + $0x18] sm:$0xff]
    %v251 = vld [vmem:[#allocation5 + $0x20] sm:$0xff]
    %v252 = vld [vmem:[#allocation5 + $0x28] sm:$0xff]
    %v253 = vld [vmem:[#allocation5 + $0x30] sm:$0xff]
    %v254 = vld [vmem:[#allocation5 + $0x38] sm:$0xff]
    %v255 = vld [vmem:[#allocation5 + $0x40] sm:$0xff]
    %v256 = vld [vmem:[#allocation5 + $0x48] sm:$0xff]
    %v257 = vld [vmem:[#allocation5 + $0x50] sm:$0xff]
    %v258 = vld [vmem:[#allocation5 + $0x58] sm:$0xff]
    %v259 = vld [vmem:[#allocation5 + $0x60] sm:$0xff]
    %v260 = vld [vmem:[#allocation5 + $0x68] sm:$0xff]
    %v261 = vld [vmem:[#allocation5 + $0x70] sm:$0xff]
    %v262 = vld [vmem:[#allocation5 + $0x78] sm:$0xff]
    %v263 = vld [vmem:[#allocation5 + $0x80] sm:$0xff]
    %v264 = vld [vmem:[#allocation5 + $0x88] sm:$0xff]
    %v265 = vld [vmem:[#allocation5 + $0x90] sm:$0xff]
    %v266 = vld [vmem:[#allocation5 + $0x98] sm:$0xff]
    %v267 = vld [vmem:[#allocation5 + $0xa0] sm:$0xff]
    %v268 = vld [vmem:[#allocation5 + $0xa8] sm:$0xff]
    %v269 = vld [vmem:[#allocation5 + $0xb0] sm:$0xff]
    %v270 = vld [vmem:[#allocation5 + $0xb8] sm:$0xff]
    %v271 = vld [vmem:[#allocation5 + $0xc0] sm:$0xff]
    %v272 = vld [vmem:[#allocation5 + $0xc8] sm:$0xff]
    %v273 = vld [vmem:[#allocation5 + $0xd0] sm:$0xff]
    %v274 = vld [vmem:[#allocation5 + $0xd8] sm:$0xff]
    %v275 = vld [vmem:[#allocation5 + $0xe0] sm:$0xff]
    %v276 = vld [vmem:[#allocation5 + $0xe8] sm:$0xff]
    %v277 = vld [vmem:[#allocation5 + $0xf0] sm:$0xff]
    %v278 = vld [vmem:[#allocation5 + $0xf8] sm:$0xff]
    %v279 = vld [vmem:[#allocation5 + $0x100] sm:$0xff]
    %v280 = vld [vmem:[#allocation5 + $0x108] sm:$0xff]
    %v281 = vld [vmem:[#allocation5 + $0x110] sm:$0xff]
    %v282 = vld [vmem:[#allocation5 + $0x118] sm:$0xff]
    %v283 = vld [vmem:[#allocation5 + $0x120] sm:$0xff]
    %v284 = vld [vmem:[#allocation5 + $0x128] sm:$0xff]
    %v285 = vld [vmem:[#allocation5 + $0x130] sm:$0xff]
    %v286 = vld [vmem:[#allocation5 + $0x138] sm:$0xff]
    %v287 = vld [vmem:[#allocation5 + $0x140] sm:$0xff]
    %v288 = vld [vmem:[#allocation5 + $0x148] sm:$0xff]
    %v289 = vld [vmem:[#allocation5 + $0x150] sm:$0xff]
    %v290 = vld [vmem:[#allocation5 + $0x158] sm:$0xff]
    %v291 = vld [vmem:[#allocation5 + $0x160] sm:$0xff]
    %v292 = vld [vmem:[#allocation5 + $0x168] sm:$0xff]
    %v293 = vld [vmem:[#allocation5 + $0x170] sm:$0xff]
    %v294 = vld [vmem:[#allocation5 + $0x178] sm:$0xff]
    %v295 = vld [vmem:[#allocation5 + $0x180] sm:$0xff]
    %v296 = vld [vmem:[#allocation5 + $0x188] sm:$0xff]
    %v297 = vld [vmem:[#allocation5 + $0x190] sm:$0xff]
    %v298 = vld [vmem:[#allocation5 + $0x198] sm:$0xff]
    %v299 = vld [vmem:[#allocation5 + $0x1a0] sm:$0xff]
    %v300 = vld [vmem:[#allocation5 + $0x1a8] sm:$0xff]
    %v301 = vld [vmem:[#allocation5 + $0x1b0] sm:$0xff]
    %v302 = vld [vmem:[#allocation5 + $0x1b8] sm:$0xff]
    %v303 = vld [vmem:[#allocation5 + $0x1c0] sm:$0xff]
    %v304 = vld [vmem:[#allocation5 + $0x1c8] sm:$0xff]
    %v305 = vld [vmem:[#allocation5 + $0x1d0] sm:$0xff]
    %v306 = vld [vmem:[#allocation5 + $0x1d8] sm:$0xff]
    %v307 = vld [vmem:[#allocation5 + $0x1e0] sm:$0xff]
    %v308 = vld [vmem:[#allocation5 + $0x1e8] sm:$0xff]
    %v309 = vld [vmem:[#allocation5 + $0x1f0] sm:$0xff]
    %v310 = vld [vmem:[#allocation5 + $0x1f8] sm:$0xff]
    %v311 = vld [vmem:[#allocation5 + $0x200] sm:$0xff]
    %v312 = vld [vmem:[#allocation5 + $0x208] sm:$0xff]
    %v313 = vld [vmem:[#allocation5 + $0x210] sm:$0xff]
    %v314 = vld [vmem:[#allocation5 + $0x218] sm:$0xff]
    %v315 = vld [vmem:[#allocation5 + $0x220] sm:$0xff]
    %v316 = vld [vmem:[#allocation5 + $0x228] sm:$0xff]
    %v317 = vld [vmem:[#allocation5 + $0x230] sm:$0xff]
    %v318 = vld [vmem:[#allocation5 + $0x238] sm:$0xff]
    %v319 = vld [vmem:[#allocation5 + $0x240] sm:$0xff]
    %v320 = vld [vmem:[#allocation5 + $0x248] sm:$0xff]
    %v321 = vld [vmem:[#allocation5 + $0x250] sm:$0xff]
    %v322 = vld [vmem:[#allocation5 + $0x258] sm:$0xff]
    %v323 = vld [vmem:[#allocation5 + $0x260] sm:$0xff]
    %v324 = vld [vmem:[#allocation5 + $0x268] sm:$0xff]
    %v325 = vld [vmem:[#allocation5 + $0x270] sm:$0xff]
    %v326 = vld [vmem:[#allocation5 + $0x278] sm:$0xff]
    %v327 = vld [vmem:[#allocation5 + $0x280] sm:$0xff]
    %v328 = vld [vmem:[#allocation5 + $0x288] sm:$0xff]
    %v329 = vld [vmem:[#allocation5 + $0x290] sm:$0xff]
    %v330 = vld [vmem:[#allocation5 + $0x298] sm:$0xff]
    %v331 = vld [vmem:[#allocation5 + $0x2a0] sm:$0xff]
    %v332 = vld [vmem:[#allocation5 + $0x2a8] sm:$0xff]
    %v333 = vld [vmem:[#allocation5 + $0x2b0] sm:$0xff]
    %v334 = vld [vmem:[#allocation5 + $0x2b8] sm:$0xff]
    %v335 = vld [vmem:[#allocation5 + $0x2c0] sm:$0xff]
    %v336 = vld [vmem:[#allocation5 + $0x2c8] sm:$0xff]
    %v337 = vld [vmem:[#allocation5 + $0x2d0] sm:$0xff]
    %v338 = vld [vmem:[#allocation5 + $0x2d8] sm:$0xff]
    %v339 = vld [vmem:[#allocation5 + $0x2e0] sm:$0xff]
    %v340 = vld [vmem:[#allocation5 + $0x2e8] sm:$0xff]
    %v341 = vld [vmem:[#allocation5 + $0x2f0] sm:$0xff]
    %v342 = vld [vmem:[#allocation5 + $0x2f8] sm:$0xff]
    %v343 = vld [vmem:[#allocation5 + $0x300] sm:$0xff]
    %v344 = vld [vmem:[#allocation5 + $0x308] sm:$0xff]
    %v345 = vld [vmem:[#allocation5 + $0x310] sm:$0xff]
    %v346 = vld [vmem:[#allocation5 + $0x318] sm:$0xff]
    %v347 = vld [vmem:[#allocation5 + $0x320] sm:$0xff]
    %v348 = vld [vmem:[#allocation5 + $0x328] sm:$0xff]
    %v349 = vld [vmem:[#allocation5 + $0x330] sm:$0xff]
    %v350 = vld [vmem:[#allocation5 + $0x338] sm:$0xff]
    %v351 = vld [vmem:[#allocation5 + $0x340] sm:$0xff]
    %v352 = vld [vmem:[#allocation5 + $0x348] sm:$0xff]
    %v353 = vld [vmem:[#allocation5 + $0x350] sm:$0xff]
    %v354 = vld [vmem:[#allocation5 + $0x358] sm:$0xff]
    %v355 = vld [vmem:[#allocation5 + $0x360] sm:$0xff]
    %v356 = vld [vmem:[#allocation5 + $0x368] sm:$0xff]
    %v357 = vld [vmem:[#allocation5 + $0x370] sm:$0xff]
    %v358 = vld [vmem:[#allocation5 + $0x378] sm:$0xff]
    %v359 = vld [vmem:[#allocation5 + $0x380] sm:$0xff]
    %v360 = vld [vmem:[#allocation5 + $0x388] sm:$0xff]
    %v361 = vld [vmem:[#allocation5 + $0x390] sm:$0xff]
    %v362 = vld [vmem:[#allocation5 + $0x398] sm:$0xff]
    %v363 = vld [vmem:[#allocation5 + $0x3a0] sm:$0xff]
    %v364 = vld [vmem:[#allocation5 + $0x3a8] sm:$0xff]
    %v365 = vld [vmem:[#allocation5 + $0x3b0] sm:$0xff]
    %v366 = vld [vmem:[#allocation5 + $0x3b8] sm:$0xff]
    %v367 = vld [vmem:[#allocation5 + $0x3c0] sm:$0xff]
    %v368 = vld [vmem:[#allocation5 + $0x3c8] sm:$0xff]
    %v369 = vld [vmem:[#allocation5 + $0x3d0] sm:$0xff]
    %v370 = vld [vmem:[#allocation5 + $0x3d8] sm:$0xff]
    %v371 = vld [vmem:[#allocation5 + $0x3e0] sm:$0xff]
    %v372 = vld [vmem:[#allocation5 + $0x3e8] sm:$0xff]
    %v373 = vld [vmem:[#allocation5 + $0x3f0] sm:$0xff]
    %v374 = vld [vmem:[#allocation5 + $0x3f8] sm:$0xff]
    %v375 = vld [vmem:[#allocation5 + $0x400] sm:$0xff]
    %v376 = vld [vmem:[#allocation5 + $0x408] sm:$0xff]
    %v377 = vld [vmem:[#allocation5 + $0x410] sm:$0xff]
    %v378 = vld [vmem:[#allocation5 + $0x418] sm:$0xff]
    %v379 = vld [vmem:[#allocation5 + $0x420] sm:$0xff]
    %v380 = vld [vmem:[#allocation5 + $0x428] sm:$0xff]
    %v381 = vld [vmem:[#allocation5 + $0x430] sm:$0xff]
    %v382 = vld [vmem:[#allocation5 + $0x438] sm:$0xff]
    %v383 = vld [vmem:[#allocation5 + $0x440] sm:$0xff]
    %v384 = vld [vmem:[#allocation5 + $0x448] sm:$0xff]
    %v385 = vld [vmem:[#allocation5 + $0x450] sm:$0xff]
    %v386 = vld [vmem:[#allocation5 + $0x458] sm:$0xff]
    %v387 = vld [vmem:[#allocation5 + $0x460] sm:$0xff]
    %v388 = vld [vmem:[#allocation5 + $0x468] sm:$0xff]
    %v389 = vld [vmem:[#allocation5 + $0x470] sm:$0xff]
    %v390 = vld [vmem:[#allocation5 + $0x478] sm:$0xff]
    %v391 = vld [vmem:[#allocation5 + $0x480] sm:$0xff]
    %v392 = vld [vmem:[#allocation5 + $0x488] sm:$0xff]
    %v393 = vld [vmem:[#allocation5 + $0x490] sm:$0xff]
    %v394 = vld [vmem:[#allocation5 + $0x498] sm:$0xff]
    %v395 = vld [vmem:[#allocation5 + $0x4a0] sm:$0xff]
    %v396 = vld [vmem:[#allocation5 + $0x4a8] sm:$0xff]
    %v397 = vld [vmem:[#allocation5 + $0x4b0] sm:$0xff]
    %v398 = vld [vmem:[#allocation5 + $0x4b8] sm:$0xff]
    %v399 = vld [vmem:[#allocation5 + $0x4c0] sm:$0xff]
    %v400 = vld [vmem:[#allocation5 + $0x4c8] sm:$0xff]
    %v401 = vld [vmem:[#allocation5 + $0x4d0] sm:$0xff]
    %v402 = vld [vmem:[#allocation5 + $0x4d8] sm:$0xff]
    %v403 = vld [vmem:[#allocation5 + $0x4e0] sm:$0xff]
    %v404 = vld [vmem:[#allocation5 + $0x4e8] sm:$0xff]
    %v405 = vld [vmem:[#allocation5 + $0x4f0] sm:$0xff]
    %v406 = vld [vmem:[#allocation5 + $0x4f8] sm:$0xff]
    %v407 = vld [vmem:[#allocation5 + $0x500] sm:$0xff]
    %v408 = vld [vmem:[#allocation5 + $0x508] sm:$0xff]
    %v409 = vld [vmem:[#allocation5 + $0x510] sm:$0xff]
    %v410 = vld [vmem:[#allocation5 + $0x518] sm:$0xff]
    %v411 = vld [vmem:[#allocation5 + $0x520] sm:$0xff]
    %v412 = vld [vmem:[#allocation5 + $0x528] sm:$0xff]
    %v413 = vld [vmem:[#allocation5 + $0x530] sm:$0xff]
    %v414 = vld [vmem:[#allocation5 + $0x538] sm:$0xff]
    %v415 = vld [vmem:[#allocation5 + $0x540] sm:$0xff]
    %v416 = vld [vmem:[#allocation5 + $0x548] sm:$0xff]
    %v417 = vld [vmem:[#allocation5 + $0x550] sm:$0xff]
    %v418 = vld [vmem:[#allocation5 + $0x558] sm:$0xff]
    %v419 = vld [vmem:[#allocation5 + $0x560] sm:$0xff]
    %v420 = vld [vmem:[#allocation5 + $0x568] sm:$0xff]
    %v421 = vld [vmem:[#allocation5 + $0x570] sm:$0xff]
    %v422 = vld [vmem:[#allocation5 + $0x578] sm:$0xff]
    %v423 = vld [vmem:[#allocation5 + $0x580] sm:$0xff]
    %v424 = vld [vmem:[#allocation5 + $0x588] sm:$0xff]
    %v425 = vld [vmem:[#allocation5 + $0x590] sm:$0xff]
    %v426 = vld [vmem:[#allocation5 + $0x598] sm:$0xff]
    %v427 = vld [vmem:[#allocation5 + $0x5a0] sm:$0xff]
    %v428 = vld [vmem:[#allocation5 + $0x5a8] sm:$0xff]
    %v429 = vld [vmem:[#allocation5 + $0x5b0] sm:$0xff]
    %v430 = vld [vmem:[#allocation5 + $0x5b8] sm:$0xff]
    %v431 = vld [vmem:[#allocation5 + $0x5c0] sm:$0xff]
    %v432 = vld [vmem:[#allocation5 + $0x5c8] sm:$0xff]
    %v433 = vld [vmem:[#allocation5 + $0x5d0] sm:$0xff]
    %v434 = vld [vmem:[#allocation5 + $0x5d8] sm:$0xff]
    %v435 = vld [vmem:[#allocation5 + $0x5e0] sm:$0xff]
    %v436 = vld [vmem:[#allocation5 + $0x5e8] sm:$0xff]
    %v437 = vld [vmem:[#allocation5 + $0x5f0] sm:$0xff]
    %v438 = vld [vmem:[#allocation5 + $0x5f8] sm:$0xff]
    %v439 = vld [vmem:[#allocation5 + $0x600] sm:$0xff]
    %v440 = vld [vmem:[#allocation5 + $0x608] sm:$0xff]
    %v441 = vld [vmem:[#allocation5 + $0x610] sm:$0xff]
    %v442 = vld [vmem:[#allocation5 + $0x618] sm:$0xff]
    %v443 = vld [vmem:[#allocation5 + $0x620] sm:$0xff]
    %v444 = vld [vmem:[#allocation5 + $0x628] sm:$0xff]
    %v445 = vld [vmem:[#allocation5 + $0x630] sm:$0xff]
    %v446 = vld [vmem:[#allocation5 + $0x638] sm:$0xff]
    %v447 = vld [vmem:[#allocation5 + $0x640] sm:$0xff]
    %v448 = vld [vmem:[#allocation5 + $0x648] sm:$0xff]
    %v449 = vld [vmem:[#allocation5 + $0x650] sm:$0xff]
    %v450 = vld [vmem:[#allocation5 + $0x658] sm:$0xff]
    %v451 = vld [vmem:[#allocation5 + $0x660] sm:$0xff]
    %v452 = vld [vmem:[#allocation5 + $0x668] sm:$0xff]
    %v453 = vld [vmem:[#allocation5 + $0x670] sm:$0xff]
    %v454 = vld [vmem:[#allocation5 + $0x678] sm:$0xff]
    %v455 = vld [vmem:[#allocation5 + $0x680] sm:$0xff]
    %v456 = vld [vmem:[#allocation5 + $0x688] sm:$0xff]
    %v457 = vld [vmem:[#allocation5 + $0x690] sm:$0xff]
    %v458 = vld [vmem:[#allocation5 + $0x698] sm:$0xff]
    %v459 = vld [vmem:[#allocation5 + $0x6a0] sm:$0xff]
    %v460 = vld [vmem:[#allocation5 + $0x6a8] sm:$0xff]
    %v461 = vld [vmem:[#allocation5 + $0x6b0] sm:$0xff]
    %v462 = vld [vmem:[#allocation5 + $0x6b8] sm:$0xff]
    %v463 = vld [vmem:[#allocation5 + $0x6c0] sm:$0xff]
    %v464 = vld [vmem:[#allocation5 + $0x6c8] sm:$0xff]
    %v465 = vld [vmem:[#allocation5 + $0x6d0] sm:$0xff]
    %v466 = vld [vmem:[#allocation5 + $0x6d8] sm:$0xff]
    %v467 = vld [vmem:[#allocation5 + $0x6e0] sm:$0xff]
    %v468 = vld [vmem:[#allocation5 + $0x6e8] sm:$0xff]
    %v469 = vld [vmem:[#allocation5 + $0x6f0] sm:$0xff]
    %v470 = vld [vmem:[#allocation5 + $0x6f8] sm:$0xff]
    %v471 = vld [vmem:[#allocation5 + $0x700] sm:$0xff]
    %v472 = vld [vmem:[#allocation5 + $0x708] sm:$0xff]
    %v473 = vld [vmem:[#allocation5 + $0x710] sm:$0xff]
    %v474 = vld [vmem:[#allocation5 + $0x718] sm:$0xff]
    %v475 = vld [vmem:[#allocation5 + $0x720] sm:$0xff]
    %v476 = vld [vmem:[#allocation5 + $0x728] sm:$0xff]
    %v477 = vld [vmem:[#allocation5 + $0x730] sm:$0xff]
    %v478 = vld [vmem:[#allocation5 + $0x738] sm:$0xff]
    %v479 = vld [vmem:[#allocation5 + $0x740] sm:$0xff]
    %v480 = vld [vmem:[#allocation5 + $0x748] sm:$0xff]
    %v481 = vld [vmem:[#allocation5 + $0x750] sm:$0xff]
    %v482 = vld [vmem:[#allocation5 + $0x758] sm:$0xff]
    %v483 = vld [vmem:[#allocation5 + $0x760] sm:$0xff]
    %v484 = vld [vmem:[#allocation5 + $0x768] sm:$0xff]
    %v485 = vld [vmem:[#allocation5 + $0x770] sm:$0xff]
    %v486 = vld [vmem:[#allocation5 + $0x778] sm:$0xff]
    %v487 = vld [vmem:[#allocation5 + $0x780] sm:$0xff]
    %v488 = vld [vmem:[#allocation5 + $0x788] sm:$0xff]
    %v489 = vld [vmem:[#allocation5 + $0x790] sm:$0xff]
    %v490 = vld [vmem:[#allocation5 + $0x798] sm:$0xff]
    %v491 = vld [vmem:[#allocation5 + $0x7a0] sm:$0xff]
    %v492 = vld [vmem:[#allocation5 + $0x7a8] sm:$0xff]
    %v493 = vld [vmem:[#allocation5 + $0x7b0] sm:$0xff]
    %v494 = vld [vmem:[#allocation5 + $0x7b8] sm:$0xff]
    %v495 = vld [vmem:[#allocation5 + $0x7c0] sm:$0xff]
    %v496 = vld [vmem:[#allocation5 + $0x7c8] sm:$0xff]
    %v497 = vld [vmem:[#allocation5 + $0x7d0] sm:$0xff]
    %v498 = vld [vmem:[#allocation5 + $0x7d8] sm:$0xff]
    %v499 = vld [vmem:[#allocation5 + $0x7e0] sm:$0xff]
    %v500 = vld [vmem:[#allocation5 + $0x7e8] sm:$0xff]
    %v501 = vld [vmem:[#allocation5 + $0x7f0] sm:$0xff]
    %v502 = vld [vmem:[#allocation5 + $0x7f8] sm:$0xff]
    %v503 = vld [vmem:[#allocation5 + $0x800] sm:$0xff]
    %v504 = vld [vmem:[#allocation5 + $0x808] sm:$0xff]
    %v505 = vld [vmem:[#allocation5 + $0x810] sm:$0xff]
    %v506 = vld [vmem:[#allocation5 + $0x818] sm:$0xff]
    %v507 = vld [vmem:[#allocation5 + $0x820] sm:$0xff]
    %v508 = vld [vmem:[#allocation5 + $0x828] sm:$0xff]
    %v509 = vld [vmem:[#allocation5 + $0x830] sm:$0xff]
    %v510 = vld [vmem:[#allocation5 + $0x838] sm:$0xff]
    %v511 = vld [vmem:[#allocation5 + $0x840] sm:$0xff]
    %v512 = vld [vmem:[#allocation5 + $0x848] sm:$0xff]
    %v513 = vld [vmem:[#allocation5 + $0x850] sm:$0xff]
    %v514 = vld [vmem:[#allocation5 + $0x858] sm:$0xff]
    %v515 = vld [vmem:[#allocation5 + $0x860] sm:$0xff]
    %v516 = vld [vmem:[#allocation5 + $0x868] sm:$0xff]
    %v517 = vld [vmem:[#allocation5 + $0x870] sm:$0xff]
    %v518 = vld [vmem:[#allocation5 + $0x878] sm:$0xff]
    %v519 = vld [vmem:[#allocation5 + $0x880] sm:$0xff]
    %v520 = vld [vmem:[#allocation5 + $0x888] sm:$0xff]
    %v521 = vld [vmem:[#allocation5 + $0x890] sm:$0xff]
    %v522 = vld [vmem:[#allocation5 + $0x898] sm:$0xff]
    %v523 = vld [vmem:[#allocation5 + $0x8a0] sm:$0xff]
    %v524 = vld [vmem:[#allocation5 + $0x8a8] sm:$0xff]
    %v525 = vld [vmem:[#allocation5 + $0x8b0] sm:$0xff]
    %v526 = vld [vmem:[#allocation5 + $0x8b8] sm:$0xff]
    %v527 = vld [vmem:[#allocation5 + $0x8c0] sm:$0xff]
    %v528 = vld [vmem:[#allocation5 + $0x8c8] sm:$0xff]
    %v529 = vld [vmem:[#allocation5 + $0x8d0] sm:$0xff]
    %v530 = vld [vmem:[#allocation5 + $0x8d8] sm:$0xff]
    %v531 = vld [vmem:[#allocation5 + $0x8e0] sm:$0xff]
    %v532 = vld [vmem:[#allocation5 + $0x8e8] sm:$0xff]
    %v533 = vld [vmem:[#allocation5 + $0x8f0] sm:$0xff]
    %v534 = vld [vmem:[#allocation5 + $0x8f8] sm:$0xff]
    %v535 = vld [vmem:[#allocation5 + $0x900] sm:$0xff]
    %v536 = vld [vmem:[#allocation5 + $0x908] sm:$0xff]
    %v537 = vld [vmem:[#allocation5 + $0x910] sm:$0xff]
    %v538 = vld [vmem:[#allocation5 + $0x918] sm:$0xff]
    %v539 = vld [vmem:[#allocation5 + $0x920] sm:$0xff]
    %v540 = vld [vmem:[#allocation5 + $0x928] sm:$0xff]
    %v541 = vld [vmem:[#allocation5 + $0x930] sm:$0xff]
    %v542 = vld [vmem:[#allocation5 + $0x938] sm:$0xff]
    %v543 = vld [vmem:[#allocation5 + $0x940] sm:$0xff]
    %v544 = vld [vmem:[#allocation5 + $0x948] sm:$0xff]
    %v545 = vld [vmem:[#allocation5 + $0x950] sm:$0xff]
    %v546 = vld [vmem:[#allocation5 + $0x958] sm:$0xff]
    %v547 = vld [vmem:[#allocation5 + $0x960] sm:$0xff]
    %v548 = vld [vmem:[#allocation5 + $0x968] sm:$0xff]
    %v549 = vld [vmem:[#allocation5 + $0x970] sm:$0xff]
    %v550 = vld [vmem:[#allocation5 + $0x978] sm:$0xff]
    %v551 = vld [vmem:[#allocation5 + $0x980] sm:$0xff]
    %v552 = vld [vmem:[#allocation5 + $0x988] sm:$0xff]
    %v553 = vld [vmem:[#allocation5 + $0x990] sm:$0xff]
    %v554 = vld [vmem:[#allocation5 + $0x998] sm:$0xff]
    %v555 = vld [vmem:[#allocation5 + $0x9a0] sm:$0xff]
    %v556 = vld [vmem:[#allocation5 + $0x9a8] sm:$0xff]
    %v557 = vld [vmem:[#allocation5 + $0x9b0] sm:$0xff]
    %v558 = vld [vmem:[#allocation5 + $0x9b8] sm:$0xff]
    %v559 = vld [vmem:[#allocation5 + $0x9c0] sm:$0xff]
    %v560 = vld [vmem:[#allocation5 + $0x9c8] sm:$0xff]
    %v561 = vld [vmem:[#allocation5 + $0x9d0] sm:$0xff]
    %v562 = vld [vmem:[#allocation5 + $0x9d8] sm:$0xff]
    %v563 = vld [vmem:[#allocation5 + $0x9e0] sm:$0xff]
    %v564 = vld [vmem:[#allocation5 + $0x9e8] sm:$0xff]
    %v565 = vld [vmem:[#allocation5 + $0x9f0] sm:$0xff]
    %v566 = vld [vmem:[#allocation5 + $0x9f8] sm:$0xff]
    %v567 = vld [vmem:[#allocation5 + $0xa00] sm:$0xff]
    %v568 = vld [vmem:[#allocation5 + $0xa08] sm:$0xff]
    %v569 = vld [vmem:[#allocation5 + $0xa10] sm:$0xff]
    %v570 = vld [vmem:[#allocation5 + $0xa18] sm:$0xff]
    %v571 = vld [vmem:[#allocation5 + $0xa20] sm:$0xff]
    %v572 = vld [vmem:[#allocation5 + $0xa28] sm:$0xff]
    %v573 = vld [vmem:[#allocation5 + $0xa30] sm:$0xff]
    %v574 = vld [vmem:[#allocation5 + $0xa38] sm:$0xff]
    %v575 = vld [vmem:[#allocation5 + $0xa40] sm:$0xff]
    %v576 = vld [vmem:[#allocation5 + $0xa48] sm:$0xff]
    %v577 = vld [vmem:[#allocation5 + $0xa50] sm:$0xff]
    %v578 = vld [vmem:[#allocation5 + $0xa58] sm:$0xff]
    %v579 = vld [vmem:[#allocation5 + $0xa60] sm:$0xff]
    %v580 = vld [vmem:[#allocation5 + $0xa68] sm:$0xff]
    %v581 = vld [vmem:[#allocation5 + $0xa70] sm:$0xff]
    %v582 = vld [vmem:[#allocation5 + $0xa78] sm:$0xff]
    %v583 = vld [vmem:[#allocation5 + $0xa80] sm:$0xff]
    %v584 = vld [vmem:[#allocation5 + $0xa88] sm:$0xff]
    %v585 = vld [vmem:[#allocation5 + $0xa90] sm:$0xff]
    %v586 = vld [vmem:[#allocation5 + $0xa98] sm:$0xff]
    %v587 = vld [vmem:[#allocation5 + $0xaa0] sm:$0xff]
    %v588 = vld [vmem:[#allocation5 + $0xaa8] sm:$0xff]
    %v589 = vld [vmem:[#allocation5 + $0xab0] sm:$0xff]
    %v590 = vld [vmem:[#allocation5 + $0xab8] sm:$0xff]
    %v591 = vld [vmem:[#allocation5 + $0xac0] sm:$0xff]
    %v592 = vld [vmem:[#allocation5 + $0xac8] sm:$0xff]
    %v593 = vld [vmem:[#allocation5 + $0xad0] sm:$0xff]
    %v594 = vld [vmem:[#allocation5 + $0xad8] sm:$0xff]
    %v595 = vld [vmem:[#allocation5 + $0xae0] sm:$0xff]
    %v596 = vld [vmem:[#allocation5 + $0xae8] sm:$0xff]
    %v597 = vld [vmem:[#allocation5 + $0xaf0] sm:$0xff]
    %v598 = vld [vmem:[#allocation5 + $0xaf8] sm:$0xff]
    %v599 = vld [vmem:[#allocation5 + $0xb00] sm:$0xff]
    %v600 = vld [vmem:[#allocation5 + $0xb08] sm:$0xff]
    %v601 = vld [vmem:[#allocation5 + $0xb10] sm:$0xff]
    %v602 = vld [vmem:[#allocation5 + $0xb18] sm:$0xff]
    %v603 = vld [vmem:[#allocation5 + $0xb20] sm:$0xff]
    %v604 = vld [vmem:[#allocation5 + $0xb28] sm:$0xff]
    %v605 = vld [vmem:[#allocation5 + $0xb30] sm:$0xff]
    %v606 = vld [vmem:[#allocation5 + $0xb38] sm:$0xff]
    %v607 = vld [vmem:[#allocation5 + $0xb40] sm:$0xff]
    %v608 = vld [vmem:[#allocation5 + $0xb48] sm:$0xff]
    %v609 = vld [vmem:[#allocation5 + $0xb50] sm:$0xff]
    %v610 = vld [vmem:[#allocation5 + $0xb58] sm:$0xff]
    %v611 = vld [vmem:[#allocation5 + $0xb60] sm:$0xff]
    %v612 = vld [vmem:[#allocation5 + $0xb68] sm:$0xff]
    %v613 = vld [vmem:[#allocation5 + $0xb70] sm:$0xff]
    %v614 = vld [vmem:[#allocation5 + $0xb78] sm:$0xff]
    %v615 = vld [vmem:[#allocation5 + $0xb80] sm:$0xff]
    %v616 = vld [vmem:[#allocation5 + $0xb88] sm:$0xff]
    %v617 = vld [vmem:[#allocation5 + $0xb90] sm:$0xff]
    %v618 = vld [vmem:[#allocation5 + $0xb98] sm:$0xff]
    %v619 = vld [vmem:[#allocation5 + $0xba0] sm:$0xff]
    %v620 = vld [vmem:[#allocation5 + $0xba8] sm:$0xff]
    %v621 = vld [vmem:[#allocation5 + $0xbb0] sm:$0xff]
    %v622 = vld [vmem:[#allocation5 + $0xbb8] sm:$0xff]
    %v623 = vld [vmem:[#allocation5 + $0xbc0] sm:$0xff]
    %v624 = vld [vmem:[#allocation5 + $0xbc8] sm:$0xff]
    %v625 = vld [vmem:[#allocation5 + $0xbd0] sm:$0xff]
    %v626 = vld [vmem:[#allocation5 + $0xbd8] sm:$0xff]
    %v627 = vld [vmem:[#allocation5 + $0xbe0] sm:$0xff]
    %v628 = vld [vmem:[#allocation5 + $0xbe8] sm:$0xff]
    %v629 = vld [vmem:[#allocation5 + $0xbf0] sm:$0xff]
    %v630 = vld [vmem:[#allocation5 + $0xbf8] sm:$0xff]
    %v631 = vld [vmem:[#allocation5 + $0xc00] sm:$0xff]
    %v632 = vld [vmem:[#allocation5 + $0xc08] sm:$0xff]
    %v633 = vld [vmem:[#allocation5 + $0xc10] sm:$0xff]
    %v634 = vld [vmem:[#allocation5 + $0xc18] sm:$0xff]
    %v635 = vld [vmem:[#allocation5 + $0xc20] sm:$0xff]
    %v636 = vld [vmem:[#allocation5 + $0xc28] sm:$0xff]
    %v637 = vld [vmem:[#allocation5 + $0xc30] sm:$0xff]
    %v638 = vld [vmem:[#allocation5 + $0xc38] sm:$0xff]
    %v639 = vld [vmem:[#allocation5 + $0xc40] sm:$0xff]
    %v640 = vld [vmem:[#allocation5 + $0xc48] sm:$0xff]
    %v641 = vld [vmem:[#allocation5 + $0xc50] sm:$0xff]
    %v642 = vld [vmem:[#allocation5 + $0xc58] sm:$0xff]
    %v643 = vld [vmem:[#allocation5 + $0xc60] sm:$0xff]
    %v644 = vld [vmem:[#allocation5 + $0xc68] sm:$0xff]
    %v645 = vld [vmem:[#allocation5 + $0xc70] sm:$0xff]
    %v646 = vld [vmem:[#allocation5 + $0xc78] sm:$0xff]
    %v647 = vld [vmem:[#allocation5 + $0xc80] sm:$0xff]
    %v648 = vld [vmem:[#allocation5 + $0xc88] sm:$0xff]
    %v649 = vld [vmem:[#allocation5 + $0xc90] sm:$0xff]
    %v650 = vld [vmem:[#allocation5 + $0xc98] sm:$0xff]
    %v651 = vld [vmem:[#allocation5 + $0xca0] sm:$0xff]
    %v652 = vld [vmem:[#allocation5 + $0xca8] sm:$0xff]
    %v653 = vld [vmem:[#allocation5 + $0xcb0] sm:$0xff]
    %v654 = vld [vmem:[#allocation5 + $0xcb8] sm:$0xff]
    %v655 = vld [vmem:[#allocation5 + $0xcc0] sm:$0xff]
    %v656 = vld [vmem:[#allocation5 + $0xcc8] sm:$0xff]
    %v657 = vld [vmem:[#allocation5 + $0xcd0] sm:$0xff]
    %v658 = vld [vmem:[#allocation5 + $0xcd8] sm:$0xff]
    %v659 = vld [vmem:[#allocation5 + $0xce0] sm:$0xff]
    %v660 = vld [vmem:[#allocation5 + $0xce8] sm:$0xff]
    %v661 = vld [vmem:[#allocation5 + $0xcf0] sm:$0xff]
    %v662 = vld [vmem:[#allocation5 + $0xcf8] sm:$0xff]
    %v663 = vld [vmem:[#allocation5 + $0xd00] sm:$0xff]
    %v664 = vld [vmem:[#allocation5 + $0xd08] sm:$0xff]
    %v665 = vld [vmem:[#allocation5 + $0xd10] sm:$0xff]
    %v666 = vld [vmem:[#allocation5 + $0xd18] sm:$0xff]
    %v667 = vld [vmem:[#allocation5 + $0xd20] sm:$0xff]
    %v668 = vld [vmem:[#allocation5 + $0xd28] sm:$0xff]
    %v669 = vld [vmem:[#allocation5 + $0xd30] sm:$0xff]
    %v670 = vld [vmem:[#allocation5 + $0xd38] sm:$0xff]
    %v671 = vld [vmem:[#allocation5 + $0xd40] sm:$0xff]
    %v672 = vld [vmem:[#allocation5 + $0xd48] sm:$0xff]
    %v673 = vld [vmem:[#allocation5 + $0xd50] sm:$0xff]
    %v674 = vld [vmem:[#allocation5 + $0xd58] sm:$0xff]
    %v675 = vld [vmem:[#allocation5 + $0xd60] sm:$0xff]
    %v676 = vld [vmem:[#allocation5 + $0xd68] sm:$0xff]
    %v677 = vld [vmem:[#allocation5 + $0xd70] sm:$0xff]
    %v678 = vld [vmem:[#allocation5 + $0xd78] sm:$0xff]
    %v679 = vld [vmem:[#allocation5 + $0xd80] sm:$0xff]
    %v680 = vld [vmem:[#allocation5 + $0xd88] sm:$0xff]
    %v681 = vld [vmem:[#allocation5 + $0xd90] sm:$0xff]
    %v682 = vld [vmem:[#allocation5 + $0xd98] sm:$0xff]
    %v683 = vld [vmem:[#allocation5 + $0xda0] sm:$0xff]
    %v684 = vld [vmem:[#allocation5 + $0xda8] sm:$0xff]
    %v685 = vld [vmem:[#allocation5 + $0xdb0] sm:$0xff]
    %v686 = vld [vmem:[#allocation5 + $0xdb8] sm:$0xff]
    %v687 = vld [vmem:[#allocation5 + $0xdc0] sm:$0xff]
    %v688 = vld [vmem:[#allocation5 + $0xdc8] sm:$0xff]
    %v689 = vld [vmem:[#allocation5 + $0xdd0] sm:$0xff]
    %v690 = vld [vmem:[#allocation5 + $0xdd8] sm:$0xff]
    %v691 = vld [vmem:[#allocation5 + $0xde0] sm:$0xff]
    %v692 = vld [vmem:[#allocation5 + $0xde8] sm:$0xff]
    %v693 = vld [vmem:[#allocation5 + $0xdf0] sm:$0xff]
    %v694 = vld [vmem:[#allocation5 + $0xdf8] sm:$0xff]
    %v695 = vld [vmem:[#allocation5 + $0xe00] sm:$0xff]
    %v696 = vld [vmem:[#allocation5 + $0xe08] sm:$0xff]
    %v697 = vld [vmem:[#allocation5 + $0xe10] sm:$0xff]
    %v698 = vld [vmem:[#allocation5 + $0xe18] sm:$0xff]
    %v699 = vld [vmem:[#allocation5 + $0xe20] sm:$0xff]
    %v700 = vld [vmem:[#allocation5 + $0xe28] sm:$0xff]
    %v701 = vld [vmem:[#allocation5 + $0xe30] sm:$0xff]
    %v702 = vld [vmem:[#allocation5 + $0xe38] sm:$0xff]
    %v703 = vld [vmem:[#allocation5 + $0xe40] sm:$0xff]
    %v704 = vld [vmem:[#allocation5 + $0xe48] sm:$0xff]
    %v705 = vld [vmem:[#allocation5 + $0xe50] sm:$0xff]
    %v706 = vld [vmem:[#allocation5 + $0xe58] sm:$0xff]
    %v707 = vld [vmem:[#allocation5 + $0xe60] sm:$0xff]
    %v708 = vld [vmem:[#allocation5 + $0xe68] sm:$0xff]
    %v709 = vld [vmem:[#allocation5 + $0xe70] sm:$0xff]
    %v710 = vld [vmem:[#allocation5 + $0xe78] sm:$0xff]
    %v711 = vld [vmem:[#allocation5 + $0xe80] sm:$0xff]
    %v712 = vld [vmem:[#allocation5 + $0xe88] sm:$0xff]
    %v713 = vld [vmem:[#allocation5 + $0xe90] sm:$0xff]
    %v714 = vld [vmem:[#allocation5 + $0xe98] sm:$0xff]
    %v715 = vld [vmem:[#allocation5 + $0xea0] sm:$0xff]
    %v716 = vld [vmem:[#allocation5 + $0xea8] sm:$0xff]
    %v717 = vld [vmem:[#allocation5 + $0xeb0] sm:$0xff]
    %v718 = vld [vmem:[#allocation5 + $0xeb8] sm:$0xff]
    %v719 = vld [vmem:[#allocation5 + $0xec0] sm:$0xff]
    %v720 = vld [vmem:[#allocation5 + $0xec8] sm:$0xff]
    %v721 = vld [vmem:[#allocation5 + $0xed0] sm:$0xff]
    %v722 = vld [vmem:[#allocation5 + $0xed8] sm:$0xff]
    %v723 = vld [vmem:[#allocation5 + $0xee0] sm:$0xff]
    %v724 = vld [vmem:[#allocation5 + $0xee8] sm:$0xff]
    %v725 = vld [vmem:[#allocation5 + $0xef0] sm:$0xff]
    %v726 = vld [vmem:[#allocation5 + $0xef8] sm:$0xff]
    %v727 = vld [vmem:[#allocation5 + $0xf00] sm:$0xff]
    %v728 = vld [vmem:[#allocation5 + $0xf08] sm:$0xff]
    %v729 = vld [vmem:[#allocation5 + $0xf10] sm:$0xff]
    %v730 = vld [vmem:[#allocation5 + $0xf18] sm:$0xff]
    %v731 = vld [vmem:[#allocation5 + $0xf20] sm:$0xff]
    %v732 = vld [vmem:[#allocation5 + $0xf28] sm:$0xff]
    %v733 = vld [vmem:[#allocation5 + $0xf30] sm:$0xff]
    %v734 = vld [vmem:[#allocation5 + $0xf38] sm:$0xff]
    %v735 = vld [vmem:[#allocation5 + $0xf40] sm:$0xff]
    %v736 = vld [vmem:[#allocation5 + $0xf48] sm:$0xff]
    %v737 = vld [vmem:[#allocation5 + $0xf50] sm:$0xff]
    %v738 = vld [vmem:[#allocation5 + $0xf58] sm:$0xff]
    %v739 = vld [vmem:[#allocation5 + $0xf60] sm:$0xff]
    %v740 = vld [vmem:[#allocation5 + $0xf68] sm:$0xff]
    %v741 = vld [vmem:[#allocation5 + $0xf70] sm:$0xff]
    %v742 = vld [vmem:[#allocation5 + $0xf78] sm:$0xff]
    %v743 = vld [vmem:[#allocation5 + $0xf80] sm:$0xff]
    %v744 = vld [vmem:[#allocation5 + $0xf88] sm:$0xff]
    %v745 = vld [vmem:[#allocation5 + $0xf90] sm:$0xff]
    %v746 = vld [vmem:[#allocation5 + $0xf98] sm:$0xff]
    %v747 = vld [vmem:[#allocation5 + $0xfa0] sm:$0xff]
    %v748 = vld [vmem:[#allocation5 + $0xfa8] sm:$0xff]
    %v749 = vld [vmem:[#allocation5 + $0xfb0] sm:$0xff]
    %v750 = vld [vmem:[#allocation5 + $0xfb8] sm:$0xff]
    %v751 = vld [vmem:[#allocation5 + $0xfc0] sm:$0xff]
    %v752 = vld [vmem:[#allocation5 + $0xfc8] sm:$0xff]
    %v753 = vld [vmem:[#allocation5 + $0xfd0] sm:$0xff]
    %v754 = vld [vmem:[#allocation5 + $0xfd8] sm:$0xff]
    %v755 = vld [vmem:[#allocation5 + $0xfe0] sm:$0xff]
    %v756 = vld [vmem:[#allocation5 + $0xfe8] sm:$0xff]
    %v757 = vld [vmem:[#allocation5 + $0xff0] sm:$0xff]
    %v758 = vld [vmem:[#allocation5 + $0xff8] sm:$0xff]
    %v759 = vld [vmem:[#allocation5 + $0x1000] sm:$0xff]
    %v760 = vld [vmem:[#allocation5 + $0x1008] sm:$0xff]
    %v761 = vld [vmem:[#allocation5 + $0x1010] sm:$0xff]
    %v762 = vld [vmem:[#allocation5 + $0x1018] sm:$0xff]
    %v763 = vld [vmem:[#allocation5 + $0x1020] sm:$0xff]
    %v764 = vld [vmem:[#allocation5 + $0x1028] sm:$0xff]
    %v765 = vld [vmem:[#allocation5 + $0x1030] sm:$0xff]
    %v766 = vld [vmem:[#allocation5 + $0x1038] sm:$0xff]
    %v767 = vld [vmem:[#allocation5 + $0x1040] sm:$0xff]
    %v768 = vld [vmem:[#allocation5 + $0x1048] sm:$0xff]
    %v769 = vld [vmem:[#allocation5 + $0x1050] sm:$0xff]
    %v770 = vld [vmem:[#allocation5 + $0x1058] sm:$0xff]
    %v771 = vld [vmem:[#allocation5 + $0x1060] sm:$0xff]
    %v772 = vld [vmem:[#allocation5 + $0x1068] sm:$0xff]
    %v773 = vld [vmem:[#allocation5 + $0x1070] sm:$0xff]
    %v774 = vld [vmem:[#allocation5 + $0x1078] sm:$0xff]
    %v775 = vld [vmem:[#allocation5 + $0x1080] sm:$0xff]
    %v776 = vld [vmem:[#allocation5 + $0x1088] sm:$0xff]
    %v777 = vld [vmem:[#allocation5 + $0x1090] sm:$0xff]
    %v778 = vld [vmem:[#allocation5 + $0x1098] sm:$0xff]
    %v779 = vld [vmem:[#allocation5 + $0x10a0] sm:$0xff]
    %v780 = vld [vmem:[#allocation5 + $0x10a8] sm:$0xff]
    %v781 = vld [vmem:[#allocation5 + $0x10b0] sm:$0xff]
    %v782 = vld [vmem:[#allocation5 + $0x10b8] sm:$0xff]
    %v783 = vld [vmem:[#allocation5 + $0x10c0] sm:$0xff]
    %v784 = vld [vmem:[#allocation5 + $0x10c8] sm:$0xff]
    %v785 = vld [vmem:[#allocation5 + $0x10d0] sm:$0xff]
    %v786 = vld [vmem:[#allocation5 + $0x10d8] sm:$0xff]
    %v787 = vld [vmem:[#allocation5 + $0x10e0] sm:$0xff]
    %v788 = vld [vmem:[#allocation5 + $0x10e8] sm:$0xff]
    %v789 = vld [vmem:[#allocation5 + $0x10f0] sm:$0xff]
    %v790 = vld [vmem:[#allocation5 + $0x10f8] sm:$0xff]
    %v791 = vld [vmem:[#allocation5 + $0x1100] sm:$0xff]
    %v792 = vld [vmem:[#allocation5 + $0x1108] sm:$0xff]
    %v793 = vld [vmem:[#allocation5 + $0x1110] sm:$0xff]
    %v794 = vld [vmem:[#allocation5 + $0x1118] sm:$0xff]
    %v795 = vld [vmem:[#allocation5 + $0x1120] sm:$0xff]
    %v796 = vld [vmem:[#allocation5 + $0x1128] sm:$0xff]
    %v797 = vld [vmem:[#allocation5 + $0x1130] sm:$0xff]
    %v798 = vld [vmem:[#allocation5 + $0x1138] sm:$0xff]
    %v799 = vld [vmem:[#allocation5 + $0x1140] sm:$0xff]
    %v800 = vld [vmem:[#allocation5 + $0x1148] sm:$0xff]
    %v801 = vld [vmem:[#allocation5 + $0x1150] sm:$0xff]
    %v802 = vld [vmem:[#allocation5 + $0x1158] sm:$0xff]
    %v803 = vld [vmem:[#allocation5 + $0x1160] sm:$0xff]
    %v804 = vld [vmem:[#allocation5 + $0x1168] sm:$0xff]
    %v805 = vld [vmem:[#allocation5 + $0x1170] sm:$0xff]
    %v806 = vld [vmem:[#allocation5 + $0x1178] sm:$0xff]
    %v807 = vld [vmem:[#allocation5 + $0x1180] sm:$0xff]
    %v808 = vld [vmem:[#allocation5 + $0x1188] sm:$0xff]
    %v809 = vld [vmem:[#allocation5 + $0x1190] sm:$0xff]
    %v810 = vld [vmem:[#allocation5 + $0x1198] sm:$0xff]
    %v811 = vld [vmem:[#allocation5 + $0x11a0] sm:$0xff]
    %v812 = vld [vmem:[#allocation5 + $0x11a8] sm:$0xff]
    %v813 = vld [vmem:[#allocation5 + $0x11b0] sm:$0xff]
    %v814 = vld [vmem:[#allocation5 + $0x11b8] sm:$0xff]
    %v815 = vld [vmem:[#allocation5 + $0x11c0] sm:$0xff]
    %v816 = vld [vmem:[#allocation5 + $0x11c8] sm:$0xff]
    %v817 = vld [vmem:[#allocation5 + $0x11d0] sm:$0xff]
    %v818 = vld [vmem:[#allocation5 + $0x11d8] sm:$0xff]
    %v819 = vld [vmem:[#allocation5 + $0x11e0] sm:$0xff]
    %v820 = vld [vmem:[#allocation5 + $0x11e8] sm:$0xff]
    %v821 = vld [vmem:[#allocation5 + $0x11f0] sm:$0xff]
    %v822 = vld [vmem:[#allocation5 + $0x11f8] sm:$0xff]
    %v823 = vld [vmem:[#allocation5 + $0x1200] sm:$0xff]
    %v824 = vld [vmem:[#allocation5 + $0x1208] sm:$0xff]
    %v825 = vld [vmem:[#allocation5 + $0x1210] sm:$0xff]
    %v826 = vld [vmem:[#allocation5 + $0x1218] sm:$0xff]
    %v827 = vld [vmem:[#allocation5 + $0x1220] sm:$0xff]
    %v828 = vld [vmem:[#allocation5 + $0x1228] sm:$0xff]
    %v829 = vld [vmem:[#allocation5 + $0x1230] sm:$0xff]
    %v830 = vld [vmem:[#allocation5 + $0x1238] sm:$0xff]
    %v831 = vld [vmem:[#allocation5 + $0x1240] sm:$0xff]
    %v832 = vld [vmem:[#allocation5 + $0x1248] sm:$0xff]
    %v833 = vld [vmem:[#allocation5 + $0x1250] sm:$0xff]
    %v834 = vld [vmem:[#allocation5 + $0x1258] sm:$0xff]
    %v835 = vld [vmem:[#allocation7] sm:$0xf]
    %v837 = vlaneseq
    %v838 = vshrl.u32 %v837, 7
    %v839 = vsub.s32 0, %v838
    %v840 = vrot.slane %v835, %v839
    %v841 = vlaneseq
    %v842 = vshrl.u32 %v841, 7
    %v843 = vsub.s32 1, %v842
    %v844 = vrot.slane %v835, %v843
    %v845 = vlaneseq
    %v846 = vshrl.u32 %v845, 7
    %v847 = vsub.s32 2, %v846
    %v848 = vrot.slane %v835, %v847
    %v849 = vlaneseq
    %v850 = vshrl.u32 %v849, 7
    %v851 = vsub.s32 3, %v850
    %v852 = vrot.slane %v835, %v851
    %v1445 = vunpack.c.l.b16 %v247
    %v1446 = vunpack.c.h.b16 %v247
    %v1447 = vunpack.c.l.b16 %v248
    %v1448 = vunpack.c.h.b16 %v248
    %v1449 = vunpack.c.l.b16 %v249
    %v1450 = vunpack.c.h.b16 %v249
    %v1451 = vunpack.c.l.b16 %v250
    %v1452 = vunpack.c.h.b16 %v250
    %v1453 = vunpack.c.l.b16 %v251
    %v1454 = vunpack.c.h.b16 %v251
    %v1455 = vunpack.c.l.b16 %v252
    %v1456 = vunpack.c.h.b16 %v252
    %v1457 = vunpack.c.l.b16 %v253
    %v1458 = vunpack.c.h.b16 %v253
    %v1459 = vunpack.c.l.b16 %v254
    %v1460 = vunpack.c.h.b16 %v254
    %v1461 = vunpack.c.l.b16 %v255
    %v1462 = vunpack.c.h.b16 %v255
    %v1463 = vunpack.c.l.b16 %v256
    %v1464 = vunpack.c.h.b16 %v256
    %v1465 = vunpack.c.l.b16 %v257
    %v1466 = vunpack.c.h.b16 %v257
    %v1467 = vunpack.c.l.b16 %v258
    %v1468 = vunpack.c.h.b16 %v258
    %v1469 = vunpack.c.l.b16 %v259
    %v1470 = vunpack.c.h.b16 %v259
    %v1471 = vunpack.c.l.b16 %v260
    %v1472 = vunpack.c.h.b16 %v260
    %v1473 = vunpack.c.l.b16 %v261
    %v1474 = vunpack.c.h.b16 %v261
    %v1475 = vunpack.c.l.b16 %v262
    %v1476 = vunpack.c.h.b16 %v262
    %v1477 = vunpack.c.l.b16 %v263
    %v1478 = vunpack.c.h.b16 %v263
    %v1479 = vunpack.c.l.b16 %v264
    %v1480 = vunpack.c.h.b16 %v264
    %v1481 = vunpack.c.l.b16 %v265
    %v1482 = vunpack.c.h.b16 %v265
    %v1483 = vunpack.c.l.b16 %v266
    %v1484 = vunpack.c.h.b16 %v266
    %v1485 = vunpack.c.l.b16 %v267
    %v1486 = vunpack.c.h.b16 %v267
    %v1487 = vunpack.c.l.b16 %v268
    %v1488 = vunpack.c.h.b16 %v268
    %v1489 = vunpack.c.l.b16 %v269
    %v1490 = vunpack.c.h.b16 %v269
    %v1491 = vunpack.c.l.b16 %v270
    %v1492 = vunpack.c.h.b16 %v270
    %v1493 = vunpack.c.l.b16 %v271
    %v1494 = vunpack.c.h.b16 %v271
    %v1495 = vunpack.c.l.b16 %v272
    %v1496 = vunpack.c.h.b16 %v272
    %v1497 = vunpack.c.l.b16 %v273
    %v1498 = vunpack.c.h.b16 %v273
    %v1499 = vunpack.c.l.b16 %v274
    %v1500 = vunpack.c.h.b16 %v274
    %v1501 = vunpack.c.l.b16 %v275
    %v1502 = vunpack.c.h.b16 %v275
    %v1503 = vunpack.c.l.b16 %v276
    %v1504 = vunpack.c.h.b16 %v276
    %v1505 = vunpack.c.l.b16 %v277
    %v1506 = vunpack.c.h.b16 %v277
    %v1507 = vunpack.c.l.b16 %v278
    %v1508 = vunpack.c.h.b16 %v278
    %v1509 = vunpack.c.l.b16 %v279
    %v1510 = vunpack.c.h.b16 %v279
    %v1511 = vunpack.c.l.b16 %v280
    %v1512 = vunpack.c.h.b16 %v280
    %v1513 = vunpack.c.l.b16 %v281
    %v1514 = vunpack.c.h.b16 %v281
    %v1515 = vunpack.c.l.b16 %v282
    %v1516 = vunpack.c.h.b16 %v282
    %v1517 = vunpack.c.l.b16 %v283
    %v1518 = vunpack.c.h.b16 %v283
    %v1519 = vunpack.c.l.b16 %v284
    %v1520 = vunpack.c.h.b16 %v284
    %v1521 = vunpack.c.l.b16 %v285
    %v1522 = vunpack.c.h.b16 %v285
    %v1523 = vunpack.c.l.b16 %v286
    %v1524 = vunpack.c.h.b16 %v286
    %v1525 = vunpack.c.l.b16 %v287
    %v1526 = vunpack.c.h.b16 %v287
    %v1527 = vunpack.c.l.b16 %v288
    %v1528 = vunpack.c.h.b16 %v288
    %v1529 = vunpack.c.l.b16 %v289
    %v1530 = vunpack.c.h.b16 %v289
    %v1531 = vunpack.c.l.b16 %v290
    %v1532 = vunpack.c.h.b16 %v290
    %v1533 = vunpack.c.l.b16 %v291
    %v1534 = vunpack.c.h.b16 %v291
    %v1535 = vunpack.c.l.b16 %v292
    %v1536 = vunpack.c.h.b16 %v292
    %v1537 = vunpack.c.l.b16 %v293
    %v1538 = vunpack.c.h.b16 %v293
    %v1539 = vunpack.c.l.b16 %v294
    %v1540 = vunpack.c.h.b16 %v294
    %v1541 = vunpack.c.l.b16 %v295
    %v1542 = vunpack.c.h.b16 %v295
    %v1543 = vunpack.c.l.b16 %v296
    %v1544 = vunpack.c.h.b16 %v296
    %v1545 = vunpack.c.l.b16 %v297
    %v1546 = vunpack.c.h.b16 %v297
    %v1547 = vunpack.c.l.b16 %v298
    %v1548 = vunpack.c.h.b16 %v298
    %v1549 = vunpack.c.l.b16 %v299
    %v1550 = vunpack.c.h.b16 %v299
    %v1551 = vunpack.c.l.b16 %v300
    %v1552 = vunpack.c.h.b16 %v300
    %v1553 = vunpack.c.l.b16 %v301
    %v1554 = vunpack.c.h.b16 %v301
    %v1555 = vunpack.c.l.b16 %v302
    %v1556 = vunpack.c.h.b16 %v302
    %v1557 = vunpack.c.l.b16 %v303
    %v1558 = vunpack.c.h.b16 %v303
    %v1559 = vunpack.c.l.b16 %v304
    %v1560 = vunpack.c.h.b16 %v304
    %v1561 = vunpack.c.l.b16 %v305
    %v1562 = vunpack.c.h.b16 %v305
    %v1563 = vunpack.c.l.b16 %v306
    %v1564 = vunpack.c.h.b16 %v306
    %v1565 = vunpack.c.l.b16 %v307
    %v1566 = vunpack.c.h.b16 %v307
    %v1567 = vunpack.c.l.b16 %v308
    %v1568 = vunpack.c.h.b16 %v308
    %v1569 = vunpack.c.l.b16 %v309
    %v1570 = vunpack.c.h.b16 %v309
    %v1571 = vunpack.c.l.b16 %v310
    %v1572 = vunpack.c.h.b16 %v310
    %v1573 = vunpack.c.l.b16 %v311
    %v1574 = vunpack.c.h.b16 %v311
    %v1575 = vunpack.c.l.b16 %v312
    %v1576 = vunpack.c.h.b16 %v312
    %v1577 = vunpack.c.l.b16 %v313
    %v1578 = vunpack.c.h.b16 %v313
    %v1579 = vunpack.c.l.b16 %v314
    %v1580 = vunpack.c.h.b16 %v314
    %v1581 = vunpack.c.l.b16 %v315
    %v1582 = vunpack.c.h.b16 %v315
    %v1583 = vunpack.c.l.b16 %v316
    %v1584 = vunpack.c.h.b16 %v316
    %v1585 = vunpack.c.l.b16 %v317
    %v1586 = vunpack.c.h.b16 %v317
    %v1587 = vunpack.c.l.b16 %v318
    %v1588 = vunpack.c.h.b16 %v318
    %v1589 = vunpack.c.l.b16 %v319
    %v1590 = vunpack.c.h.b16 %v319
    %v1591 = vunpack.c.l.b16 %v320
    %v1592 = vunpack.c.h.b16 %v320
    %v1593 = vunpack.c.l.b16 %v321
    %v1594 = vunpack.c.h.b16 %v321
    %v1595 = vunpack.c.l.b16 %v322
    %v1596 = vunpack.c.h.b16 %v322
    %v1597 = vunpack.c.l.b16 %v323
    %v1598 = vunpack.c.h.b16 %v323
    %v1599 = vunpack.c.l.b16 %v324
    %v1600 = vunpack.c.h.b16 %v324
    %v1601 = vunpack.c.l.b16 %v325
    %v1602 = vunpack.c.h.b16 %v325
    %v1603 = vunpack.c.l.b16 %v326
    %v1604 = vunpack.c.h.b16 %v326
    %v1605 = vunpack.c.l.b16 %v327
    %v1606 = vunpack.c.h.b16 %v327
    %v1607 = vunpack.c.l.b16 %v328
    %v1608 = vunpack.c.h.b16 %v328
    %v1609 = vunpack.c.l.b16 %v329
    %v1610 = vunpack.c.h.b16 %v329
    %v1611 = vunpack.c.l.b16 %v330
    %v1612 = vunpack.c.h.b16 %v330
    %v1613 = vunpack.c.l.b16 %v331
    %v1614 = vunpack.c.h.b16 %v331
    %v1615 = vunpack.c.l.b16 %v332
    %v1616 = vunpack.c.h.b16 %v332
    %v1617 = vunpack.c.l.b16 %v333
    %v1618 = vunpack.c.h.b16 %v333
    %v1619 = vunpack.c.l.b16 %v334
    %v1620 = vunpack.c.h.b16 %v334
    %v1621 = vunpack.c.l.b16 %v335
    %v1622 = vunpack.c.h.b16 %v335
    %v1623 = vunpack.c.l.b16 %v336
    %v1624 = vunpack.c.h.b16 %v336
    %v1625 = vunpack.c.l.b16 %v337
    %v1626 = vunpack.c.h.b16 %v337
    %v1627 = vunpack.c.l.b16 %v338
    %v1628 = vunpack.c.h.b16 %v338
    %v1629 = vunpack.c.l.b16 %v339
    %v1630 = vunpack.c.h.b16 %v339
    %v1631 = vunpack.c.l.b16 %v340
    %v1632 = vunpack.c.h.b16 %v340
    %v1633 = vunpack.c.l.b16 %v341
    %v1634 = vunpack.c.h.b16 %v341
    %v1635 = vunpack.c.l.b16 %v342
    %v1636 = vunpack.c.h.b16 %v342
    %v1637 = vunpack.c.l.b16 %v343
    %v1638 = vunpack.c.h.b16 %v343
    %v1639 = vunpack.c.l.b16 %v344
    %v1640 = vunpack.c.h.b16 %v344
    %v1641 = vunpack.c.l.b16 %v345
    %v1642 = vunpack.c.h.b16 %v345
    %v1643 = vunpack.c.l.b16 %v346
    %v1644 = vunpack.c.h.b16 %v346
    %v1645 = vunpack.c.l.b16 %v347
    %v1646 = vunpack.c.h.b16 %v347
    %v1647 = vunpack.c.l.b16 %v348
    %v1648 = vunpack.c.h.b16 %v348
    %v1649 = vunpack.c.l.b16 %v349
    %v1650 = vunpack.c.h.b16 %v349
    %v1651 = vunpack.c.l.b16 %v350
    %v1652 = vunpack.c.h.b16 %v350
    %v1653 = vunpack.c.l.b16 %v351
    %v1654 = vunpack.c.h.b16 %v351
    %v1655 = vunpack.c.l.b16 %v352
    %v1656 = vunpack.c.h.b16 %v352
    %v1657 = vunpack.c.l.b16 %v353
    %v1658 = vunpack.c.h.b16 %v353
    %v1659 = vunpack.c.l.b16 %v354
    %v1660 = vunpack.c.h.b16 %v354
    %v1661 = vunpack.c.l.b16 %v355
    %v1662 = vunpack.c.h.b16 %v355
    %v1663 = vunpack.c.l.b16 %v356
    %v1664 = vunpack.c.h.b16 %v356
    %v1665 = vunpack.c.l.b16 %v357
    %v1666 = vunpack.c.h.b16 %v357
    %v1667 = vunpack.c.l.b16 %v358
    %v1668 = vunpack.c.h.b16 %v358
    %v1669 = vunpack.c.l.b16 %v359
    %v1670 = vunpack.c.h.b16 %v359
    %v1671 = vunpack.c.l.b16 %v360
    %v1672 = vunpack.c.h.b16 %v360
    %v1673 = vunpack.c.l.b16 %v361
    %v1674 = vunpack.c.h.b16 %v361
    %v1675 = vunpack.c.l.b16 %v362
    %v1676 = vunpack.c.h.b16 %v362
    %v1677 = vunpack.c.l.b16 %v363
    %v1678 = vunpack.c.h.b16 %v363
    %v1679 = vunpack.c.l.b16 %v364
    %v1680 = vunpack.c.h.b16 %v364
    %v1681 = vunpack.c.l.b16 %v365
    %v1682 = vunpack.c.h.b16 %v365
    %v1683 = vunpack.c.l.b16 %v366
    %v1684 = vunpack.c.h.b16 %v366
    %v1685 = vunpack.c.l.b16 %v367
    %v1686 = vunpack.c.h.b16 %v367
    %v1687 = vunpack.c.l.b16 %v368
    %v1688 = vunpack.c.h.b16 %v368
    %v1689 = vunpack.c.l.b16 %v369
    %v1690 = vunpack.c.h.b16 %v369
    %v1691 = vunpack.c.l.b16 %v370
    %v1692 = vunpack.c.h.b16 %v370
    %v1693 = vunpack.c.l.b16 %v371
    %v1694 = vunpack.c.h.b16 %v371
    %v1695 = vunpack.c.l.b16 %v372
    %v1696 = vunpack.c.h.b16 %v372
    %v1697 = vunpack.c.l.b16 %v373
    %v1698 = vunpack.c.h.b16 %v373
    %v1699 = vunpack.c.l.b16 %v374
    %v1700 = vunpack.c.h.b16 %v374
    %v1701 = vunpack.c.l.b16 %v375
    %v1702 = vunpack.c.h.b16 %v375
    %v1703 = vunpack.c.l.b16 %v376
    %v1704 = vunpack.c.h.b16 %v376
    %v1705 = vunpack.c.l.b16 %v377
    %v1706 = vunpack.c.h.b16 %v377
    %v1707 = vunpack.c.l.b16 %v378
    %v1708 = vunpack.c.h.b16 %v378
    %v1709 = vunpack.c.l.b16 %v379
    %v1710 = vunpack.c.h.b16 %v379
    %v1711 = vunpack.c.l.b16 %v380
    %v1712 = vunpack.c.h.b16 %v380
    %v1713 = vunpack.c.l.b16 %v381
    %v1714 = vunpack.c.h.b16 %v381
    %v1715 = vunpack.c.l.b16 %v382
    %v1716 = vunpack.c.h.b16 %v382
    %v1717 = vunpack.c.l.b16 %v383
    %v1718 = vunpack.c.h.b16 %v383
    %v1719 = vunpack.c.l.b16 %v384
    %v1720 = vunpack.c.h.b16 %v384
    %v1721 = vunpack.c.l.b16 %v385
    %v1722 = vunpack.c.h.b16 %v385
    %v1723 = vunpack.c.l.b16 %v386
    %v1724 = vunpack.c.h.b16 %v386
    %v1725 = vunpack.c.l.b16 %v387
    %v1726 = vunpack.c.h.b16 %v387
    %v1727 = vunpack.c.l.b16 %v388
    %v1728 = vunpack.c.h.b16 %v388
    %v1729 = vunpack.c.l.b16 %v389
    %v1730 = vunpack.c.h.b16 %v389
    %v1731 = vunpack.c.l.b16 %v390
    %v1732 = vunpack.c.h.b16 %v390
    %v1733 = vunpack.c.l.b16 %v391
    %v1734 = vunpack.c.h.b16 %v391
    %v1735 = vunpack.c.l.b16 %v392
    %v1736 = vunpack.c.h.b16 %v392
    %v1737 = vunpack.c.l.b16 %v393
    %v1738 = vunpack.c.h.b16 %v393
    %v1739 = vunpack.c.l.b16 %v394
    %v1740 = vunpack.c.h.b16 %v394
    %v1741 = vunpack.c.l.b16 %v395
    %v1742 = vunpack.c.h.b16 %v395
    %v1743 = vunpack.c.l.b16 %v396
    %v1744 = vunpack.c.h.b16 %v396
    %v1745 = vunpack.c.l.b16 %v397
    %v1746 = vunpack.c.h.b16 %v397
    %v1747 = vunpack.c.l.b16 %v398
    %v1748 = vunpack.c.h.b16 %v398
    %v1749 = vunpack.c.l.b16 %v399
    %v1750 = vunpack.c.h.b16 %v399
    %v1751 = vunpack.c.l.b16 %v400
    %v1752 = vunpack.c.h.b16 %v400
    %v1753 = vunpack.c.l.b16 %v401
    %v1754 = vunpack.c.h.b16 %v401
    %v1755 = vunpack.c.l.b16 %v402
    %v1756 = vunpack.c.h.b16 %v402
    %v1757 = vunpack.c.l.b16 %v403
    %v1758 = vunpack.c.h.b16 %v403
    %v1759 = vunpack.c.l.b16 %v404
    %v1760 = vunpack.c.h.b16 %v404
    %v1761 = vunpack.c.l.b16 %v405
    %v1762 = vunpack.c.h.b16 %v405
    %v1763 = vunpack.c.l.b16 %v406
    %v1764 = vunpack.c.h.b16 %v406
    %v1765 = vunpack.c.l.b16 %v407
    %v1766 = vunpack.c.h.b16 %v407
    %v1767 = vunpack.c.l.b16 %v408
    %v1768 = vunpack.c.h.b16 %v408
    %v1769 = vunpack.c.l.b16 %v409
    %v1770 = vunpack.c.h.b16 %v409
    %v1771 = vunpack.c.l.b16 %v410
    %v1772 = vunpack.c.h.b16 %v410
    %v1773 = vunpack.c.l.b16 %v411
    %v1774 = vunpack.c.h.b16 %v411
    %v1775 = vunpack.c.l.b16 %v412
    %v1776 = vunpack.c.h.b16 %v412
    %v1777 = vunpack.c.l.b16 %v413
    %v1778 = vunpack.c.h.b16 %v413
    %v1779 = vunpack.c.l.b16 %v414
    %v1780 = vunpack.c.h.b16 %v414
    %v1781 = vunpack.c.l.b16 %v415
    %v1782 = vunpack.c.h.b16 %v415
    %v1783 = vunpack.c.l.b16 %v416
    %v1784 = vunpack.c.h.b16 %v416
    %v1785 = vunpack.c.l.b16 %v417
    %v1786 = vunpack.c.h.b16 %v417
    %v1787 = vunpack.c.l.b16 %v418
    %v1788 = vunpack.c.h.b16 %v418
    %v1789 = vunpack.c.l.b16 %v419
    %v1790 = vunpack.c.h.b16 %v419
    %v1791 = vunpack.c.l.b16 %v420
    %v1792 = vunpack.c.h.b16 %v420
    %v1793 = vunpack.c.l.b16 %v421
    %v1794 = vunpack.c.h.b16 %v421
    %v1795 = vunpack.c.l.b16 %v422
    %v1796 = vunpack.c.h.b16 %v422
    %v1797 = vunpack.c.l.b16 %v423
    %v1798 = vunpack.c.h.b16 %v423
    %v1799 = vunpack.c.l.b16 %v424
    %v1800 = vunpack.c.h.b16 %v424
    %v1801 = vunpack.c.l.b16 %v425
    %v1802 = vunpack.c.h.b16 %v425
    %v1803 = vunpack.c.l.b16 %v426
    %v1804 = vunpack.c.h.b16 %v426
    %v1805 = vunpack.c.l.b16 %v427
    %v1806 = vunpack.c.h.b16 %v427
    %v1807 = vunpack.c.l.b16 %v428
    %v1808 = vunpack.c.h.b16 %v428
    %v1809 = vunpack.c.l.b16 %v429
    %v1810 = vunpack.c.h.b16 %v429
    %v1811 = vunpack.c.l.b16 %v430
    %v1812 = vunpack.c.h.b16 %v430
    %v1813 = vunpack.c.l.b16 %v431
    %v1814 = vunpack.c.h.b16 %v431
    %v1815 = vunpack.c.l.b16 %v432
    %v1816 = vunpack.c.h.b16 %v432
    %v1817 = vunpack.c.l.b16 %v433
    %v1818 = vunpack.c.h.b16 %v433
    %v1819 = vunpack.c.l.b16 %v434
    %v1820 = vunpack.c.h.b16 %v434
    %v1821 = vunpack.c.l.b16 %v435
    %v1822 = vunpack.c.h.b16 %v435
    %v1823 = vunpack.c.l.b16 %v436
    %v1824 = vunpack.c.h.b16 %v436
    %v1825 = vunpack.c.l.b16 %v437
    %v1826 = vunpack.c.h.b16 %v437
    %v1827 = vunpack.c.l.b16 %v438
    %v1828 = vunpack.c.h.b16 %v438
    %v1829 = vunpack.c.l.b16 %v439
    %v1830 = vunpack.c.h.b16 %v439
    %v1831 = vunpack.c.l.b16 %v440
    %v1832 = vunpack.c.h.b16 %v440
    %v1833 = vunpack.c.l.b16 %v441
    %v1834 = vunpack.c.h.b16 %v441
    %v1835 = vunpack.c.l.b16 %v442
    %v1836 = vunpack.c.h.b16 %v442
    %v1837 = vunpack.c.l.b16 %v443
    %v1838 = vunpack.c.h.b16 %v443
    %v1839 = vunpack.c.l.b16 %v444
    %v1840 = vunpack.c.h.b16 %v444
    %v1841 = vunpack.c.l.b16 %v445
    %v1842 = vunpack.c.h.b16 %v445
    %v1843 = vunpack.c.l.b16 %v446
    %v1844 = vunpack.c.h.b16 %v446
    %v1845 = vunpack.c.l.b16 %v447
    %v1846 = vunpack.c.h.b16 %v447
    %v1847 = vunpack.c.l.b16 %v448
    %v1848 = vunpack.c.h.b16 %v448
    %v1849 = vunpack.c.l.b16 %v449
    %v1850 = vunpack.c.h.b16 %v449
    %v1851 = vunpack.c.l.b16 %v450
    %v1852 = vunpack.c.h.b16 %v450
    %v1853 = vunpack.c.l.b16 %v451
    %v1854 = vunpack.c.h.b16 %v451
    %v1855 = vunpack.c.l.b16 %v452
    %v1856 = vunpack.c.h.b16 %v452
    %v1857 = vunpack.c.l.b16 %v453
    %v1858 = vunpack.c.h.b16 %v453
    %v1859 = vunpack.c.l.b16 %v454
    %v1860 = vunpack.c.h.b16 %v454
    %v1861 = vunpack.c.l.b16 %v455
    %v1862 = vunpack.c.h.b16 %v455
    %v1863 = vunpack.c.l.b16 %v456
    %v1864 = vunpack.c.h.b16 %v456
    %v1865 = vunpack.c.l.b16 %v457
    %v1866 = vunpack.c.h.b16 %v457
    %v1867 = vunpack.c.l.b16 %v458
    %v1868 = vunpack.c.h.b16 %v458
    %v1869 = vunpack.c.l.b16 %v459
    %v1870 = vunpack.c.h.b16 %v459
    %v1871 = vunpack.c.l.b16 %v460
    %v1872 = vunpack.c.h.b16 %v460
    %v1873 = vunpack.c.l.b16 %v461
    %v1874 = vunpack.c.h.b16 %v461
    %v1875 = vunpack.c.l.b16 %v462
    %v1876 = vunpack.c.h.b16 %v462
    %v1877 = vunpack.c.l.b16 %v463
    %v1878 = vunpack.c.h.b16 %v463
    %v1879 = vunpack.c.l.b16 %v464
    %v1880 = vunpack.c.h.b16 %v464
    %v1881 = vunpack.c.l.b16 %v465
    %v1882 = vunpack.c.h.b16 %v465
    %v1883 = vunpack.c.l.b16 %v466
    %v1884 = vunpack.c.h.b16 %v466
    %v1885 = vunpack.c.l.b16 %v467
    %v1886 = vunpack.c.h.b16 %v467
    %v1887 = vunpack.c.l.b16 %v468
    %v1888 = vunpack.c.h.b16 %v468
    %v1889 = vunpack.c.l.b16 %v469
    %v1890 = vunpack.c.h.b16 %v469
    %v1891 = vunpack.c.l.b16 %v470
    %v1892 = vunpack.c.h.b16 %v470
    %v1893 = vunpack.c.l.b16 %v471
    %v1894 = vunpack.c.h.b16 %v471
    %v1895 = vunpack.c.l.b16 %v472
    %v1896 = vunpack.c.h.b16 %v472
    %v1897 = vunpack.c.l.b16 %v473
    %v1898 = vunpack.c.h.b16 %v473
    %v1899 = vunpack.c.l.b16 %v474
    %v1900 = vunpack.c.h.b16 %v474
    %v1901 = vunpack.c.l.b16 %v475
    %v1902 = vunpack.c.h.b16 %v475
    %v1903 = vunpack.c.l.b16 %v476
    %v1904 = vunpack.c.h.b16 %v476
    %v1905 = vunpack.c.l.b16 %v477
    %v1906 = vunpack.c.h.b16 %v477
    %v1907 = vunpack.c.l.b16 %v478
    %v1908 = vunpack.c.h.b16 %v478
    %v1909 = vunpack.c.l.b16 %v479
    %v1910 = vunpack.c.h.b16 %v479
    %v1911 = vunpack.c.l.b16 %v480
    %v1912 = vunpack.c.h.b16 %v480
    %v1913 = vunpack.c.l.b16 %v481
    %v1914 = vunpack.c.h.b16 %v481
    %v1915 = vunpack.c.l.b16 %v482
    %v1916 = vunpack.c.h.b16 %v482
    %v1917 = vunpack.c.l.b16 %v483
    %v1918 = vunpack.c.h.b16 %v483
    %v1919 = vunpack.c.l.b16 %v484
    %v1920 = vunpack.c.h.b16 %v484
    %v1921 = vunpack.c.l.b16 %v485
    %v1922 = vunpack.c.h.b16 %v485
    %v1923 = vunpack.c.l.b16 %v486
    %v1924 = vunpack.c.h.b16 %v486
    %v1925 = vunpack.c.l.b16 %v487
    %v1926 = vunpack.c.h.b16 %v487
    %v1927 = vunpack.c.l.b16 %v488
    %v1928 = vunpack.c.h.b16 %v488
    %v1929 = vunpack.c.l.b16 %v489
    %v1930 = vunpack.c.h.b16 %v489
    %v1931 = vunpack.c.l.b16 %v490
    %v1932 = vunpack.c.h.b16 %v490
    %v1933 = vunpack.c.l.b16 %v491
    %v1934 = vunpack.c.h.b16 %v491
    %v1935 = vunpack.c.l.b16 %v492
    %v1936 = vunpack.c.h.b16 %v492
    %v1937 = vunpack.c.l.b16 %v493
    %v1938 = vunpack.c.h.b16 %v493
    %v1939 = vunpack.c.l.b16 %v494
    %v1940 = vunpack.c.h.b16 %v494
    %v1941 = vunpack.c.l.b16 %v495
    %v1942 = vunpack.c.h.b16 %v495
    %v1943 = vunpack.c.l.b16 %v496
    %v1944 = vunpack.c.h.b16 %v496
    %v1945 = vunpack.c.l.b16 %v497
    %v1946 = vunpack.c.h.b16 %v497
    %v1947 = vunpack.c.l.b16 %v498
    %v1948 = vunpack.c.h.b16 %v498
    %v1949 = vunpack.c.l.b16 %v499
    %v1950 = vunpack.c.h.b16 %v499
    %v1951 = vunpack.c.l.b16 %v500
    %v1952 = vunpack.c.h.b16 %v500
    %v1953 = vunpack.c.l.b16 %v501
    %v1954 = vunpack.c.h.b16 %v501
    %v1955 = vunpack.c.l.b16 %v502
    %v1956 = vunpack.c.h.b16 %v502
    %v1957 = vunpack.c.l.b16 %v503
    %v1958 = vunpack.c.h.b16 %v503
    %v1959 = vunpack.c.l.b16 %v504
    %v1960 = vunpack.c.h.b16 %v504
    %v1961 = vunpack.c.l.b16 %v505
    %v1962 = vunpack.c.h.b16 %v505
    %v1963 = vunpack.c.l.b16 %v506
    %v1964 = vunpack.c.h.b16 %v506
    %v1965 = vunpack.c.l.b16 %v507
    %v1966 = vunpack.c.h.b16 %v507
    %v1967 = vunpack.c.l.b16 %v508
    %v1968 = vunpack.c.h.b16 %v508
    %v1969 = vunpack.c.l.b16 %v509
    %v1970 = vunpack.c.h.b16 %v509
    %v1971 = vunpack.c.l.b16 %v510
    %v1972 = vunpack.c.h.b16 %v510
    %v1973 = vunpack.c.l.b16 %v511
    %v1974 = vunpack.c.h.b16 %v511
    %v1975 = vunpack.c.l.b16 %v512
    %v1976 = vunpack.c.h.b16 %v512
    %v1977 = vunpack.c.l.b16 %v513
    %v1978 = vunpack.c.h.b16 %v513
    %v1979 = vunpack.c.l.b16 %v514
    %v1980 = vunpack.c.h.b16 %v514
    %v1981 = vunpack.c.l.b16 %v515
    %v1982 = vunpack.c.h.b16 %v515
    %v1983 = vunpack.c.l.b16 %v516
    %v1984 = vunpack.c.h.b16 %v516
    %v1985 = vunpack.c.l.b16 %v517
    %v1986 = vunpack.c.h.b16 %v517
    %v1987 = vunpack.c.l.b16 %v518
    %v1988 = vunpack.c.h.b16 %v518
    %v1989 = vunpack.c.l.b16 %v519
    %v1990 = vunpack.c.h.b16 %v519
    %v1991 = vunpack.c.l.b16 %v520
    %v1992 = vunpack.c.h.b16 %v520
    %v1993 = vunpack.c.l.b16 %v521
    %v1994 = vunpack.c.h.b16 %v521
    %v1995 = vunpack.c.l.b16 %v522
    %v1996 = vunpack.c.h.b16 %v522
    %v1997 = vunpack.c.l.b16 %v523
    %v1998 = vunpack.c.h.b16 %v523
    %v1999 = vunpack.c.l.b16 %v524
    %v2000 = vunpack.c.h.b16 %v524
    %v2001 = vunpack.c.l.b16 %v525
    %v2002 = vunpack.c.h.b16 %v525
    %v2003 = vunpack.c.l.b16 %v526
    %v2004 = vunpack.c.h.b16 %v526
    %v2005 = vunpack.c.l.b16 %v527
    %v2006 = vunpack.c.h.b16 %v527
    %v2007 = vunpack.c.l.b16 %v528
    %v2008 = vunpack.c.h.b16 %v528
    %v2009 = vunpack.c.l.b16 %v529
    %v2010 = vunpack.c.h.b16 %v529
    %v2011 = vunpack.c.l.b16 %v530
    %v2012 = vunpack.c.h.b16 %v530
    %v2013 = vunpack.c.l.b16 %v531
    %v2014 = vunpack.c.h.b16 %v531
    %v2015 = vunpack.c.l.b16 %v532
    %v2016 = vunpack.c.h.b16 %v532
    %v2017 = vunpack.c.l.b16 %v533
    %v2018 = vunpack.c.h.b16 %v533
    %v2019 = vunpack.c.l.b16 %v534
    %v2020 = vunpack.c.h.b16 %v534
    %v2021 = vunpack.c.l.b16 %v535
    %v2022 = vunpack.c.h.b16 %v535
    %v2023 = vunpack.c.l.b16 %v536
    %v2024 = vunpack.c.h.b16 %v536
    %v2025 = vunpack.c.l.b16 %v537
    %v2026 = vunpack.c.h.b16 %v537
    %v2027 = vunpack.c.l.b16 %v538
    %v2028 = vunpack.c.h.b16 %v538
    %v2029 = vunpack.c.l.b16 %v539
    %v2030 = vunpack.c.h.b16 %v539
    %v2031 = vunpack.c.l.b16 %v540
    %v2032 = vunpack.c.h.b16 %v540
    %v2033 = vunpack.c.l.b16 %v541
    %v2034 = vunpack.c.h.b16 %v541
    %v2035 = vunpack.c.l.b16 %v542
    %v2036 = vunpack.c.h.b16 %v542
    %v2037 = vunpack.c.l.b16 %v543
    %v2038 = vunpack.c.h.b16 %v543
    %v2039 = vunpack.c.l.b16 %v544
    %v2040 = vunpack.c.h.b16 %v544
    %v2041 = vunpack.c.l.b16 %v545
    %v2042 = vunpack.c.h.b16 %v545
    %v2043 = vunpack.c.l.b16 %v546
    %v2044 = vunpack.c.h.b16 %v546
    %v2045 = vunpack.c.l.b16 %v547
    %v2046 = vunpack.c.h.b16 %v547
    %v2047 = vunpack.c.l.b16 %v548
    %v2048 = vunpack.c.h.b16 %v548
    %v2049 = vunpack.c.l.b16 %v549
    %v2050 = vunpack.c.h.b16 %v549
    %v2051 = vunpack.c.l.b16 %v550
    %v2052 = vunpack.c.h.b16 %v550
    %v2053 = vunpack.c.l.b16 %v551
    %v2054 = vunpack.c.h.b16 %v551
    %v2055 = vunpack.c.l.b16 %v552
    %v2056 = vunpack.c.h.b16 %v552
    %v2057 = vunpack.c.l.b16 %v553
    %v2058 = vunpack.c.h.b16 %v553
    %v2059 = vunpack.c.l.b16 %v554
    %v2060 = vunpack.c.h.b16 %v554
    %v2061 = vunpack.c.l.b16 %v555
    %v2062 = vunpack.c.h.b16 %v555
    %v2063 = vunpack.c.l.b16 %v556
    %v2064 = vunpack.c.h.b16 %v556
    %v2065 = vunpack.c.l.b16 %v557
    %v2066 = vunpack.c.h.b16 %v557
    %v2067 = vunpack.c.l.b16 %v558
    %v2068 = vunpack.c.h.b16 %v558
    %v2069 = vunpack.c.l.b16 %v559
    %v2070 = vunpack.c.h.b16 %v559
    %v2071 = vunpack.c.l.b16 %v560
    %v2072 = vunpack.c.h.b16 %v560
    %v2073 = vunpack.c.l.b16 %v561
    %v2074 = vunpack.c.h.b16 %v561
    %v2075 = vunpack.c.l.b16 %v562
    %v2076 = vunpack.c.h.b16 %v562
    %v2077 = vunpack.c.l.b16 %v563
    %v2078 = vunpack.c.h.b16 %v563
    %v2079 = vunpack.c.l.b16 %v564
    %v2080 = vunpack.c.h.b16 %v564
    %v2081 = vunpack.c.l.b16 %v565
    %v2082 = vunpack.c.h.b16 %v565
    %v2083 = vunpack.c.l.b16 %v566
    %v2084 = vunpack.c.h.b16 %v566
    %v2085 = vunpack.c.l.b16 %v567
    %v2086 = vunpack.c.h.b16 %v567
    %v2087 = vunpack.c.l.b16 %v568
    %v2088 = vunpack.c.h.b16 %v568
    %v2089 = vunpack.c.l.b16 %v569
    %v2090 = vunpack.c.h.b16 %v569
    %v2091 = vunpack.c.l.b16 %v570
    %v2092 = vunpack.c.h.b16 %v570
    %v2093 = vunpack.c.l.b16 %v571
    %v2094 = vunpack.c.h.b16 %v571
    %v2095 = vunpack.c.l.b16 %v572
    %v2096 = vunpack.c.h.b16 %v572
    %v2097 = vunpack.c.l.b16 %v573
    %v2098 = vunpack.c.h.b16 %v573
    %v2099 = vunpack.c.l.b16 %v574
    %v2100 = vunpack.c.h.b16 %v574
    %v2101 = vunpack.c.l.b16 %v575
    %v2102 = vunpack.c.h.b16 %v575
    %v2103 = vunpack.c.l.b16 %v576
    %v2104 = vunpack.c.h.b16 %v576
    %v2105 = vunpack.c.l.b16 %v577
    %v2106 = vunpack.c.h.b16 %v577
    %v2107 = vunpack.c.l.b16 %v578
    %v2108 = vunpack.c.h.b16 %v578
    %v2109 = vunpack.c.l.b16 %v579
    %v2110 = vunpack.c.h.b16 %v579
    %v2111 = vunpack.c.l.b16 %v580
    %v2112 = vunpack.c.h.b16 %v580
    %v2113 = vunpack.c.l.b16 %v581
    %v2114 = vunpack.c.h.b16 %v581
    %v2115 = vunpack.c.l.b16 %v582
    %v2116 = vunpack.c.h.b16 %v582
    %v2117 = vunpack.c.l.b16 %v583
    %v2118 = vunpack.c.h.b16 %v583
    %v2119 = vunpack.c.l.b16 %v584
    %v2120 = vunpack.c.h.b16 %v584
    %v2121 = vunpack.c.l.b16 %v585
    %v2122 = vunpack.c.h.b16 %v585
    %v2123 = vunpack.c.l.b16 %v586
    %v2124 = vunpack.c.h.b16 %v586
    %v2125 = vunpack.c.l.b16 %v587
    %v2126 = vunpack.c.h.b16 %v587
    %v2127 = vunpack.c.l.b16 %v588
    %v2128 = vunpack.c.h.b16 %v588
    %v2129 = vunpack.c.l.b16 %v589
    %v2130 = vunpack.c.h.b16 %v589
    %v2131 = vunpack.c.l.b16 %v590
    %v2132 = vunpack.c.h.b16 %v590
    %v2133 = vunpack.c.l.b16 %v591
    %v2134 = vunpack.c.h.b16 %v591
    %v2135 = vunpack.c.l.b16 %v592
    %v2136 = vunpack.c.h.b16 %v592
    %v2137 = vunpack.c.l.b16 %v593
    %v2138 = vunpack.c.h.b16 %v593
    %v2139 = vunpack.c.l.b16 %v594
    %v2140 = vunpack.c.h.b16 %v594
    %v2141 = vunpack.c.l.b16 %v595
    %v2142 = vunpack.c.h.b16 %v595
    %v2143 = vunpack.c.l.b16 %v596
    %v2144 = vunpack.c.h.b16 %v596
    %v2145 = vunpack.c.l.b16 %v597
    %v2146 = vunpack.c.h.b16 %v597
    %v2147 = vunpack.c.l.b16 %v598
    %v2148 = vunpack.c.h.b16 %v598
    %v2149 = vunpack.c.l.b16 %v599
    %v2150 = vunpack.c.h.b16 %v599
    %v2151 = vunpack.c.l.b16 %v600
    %v2152 = vunpack.c.h.b16 %v600
    %v2153 = vunpack.c.l.b16 %v601
    %v2154 = vunpack.c.h.b16 %v601
    %v2155 = vunpack.c.l.b16 %v602
    %v2156 = vunpack.c.h.b16 %v602
    %v2157 = vunpack.c.l.b16 %v603
    %v2158 = vunpack.c.h.b16 %v603
    %v2159 = vunpack.c.l.b16 %v604
    %v2160 = vunpack.c.h.b16 %v604
    %v2161 = vunpack.c.l.b16 %v605
    %v2162 = vunpack.c.h.b16 %v605
    %v2163 = vunpack.c.l.b16 %v606
    %v2164 = vunpack.c.h.b16 %v606
    %v2165 = vunpack.c.l.b16 %v607
    %v2166 = vunpack.c.h.b16 %v607
    %v2167 = vunpack.c.l.b16 %v608
    %v2168 = vunpack.c.h.b16 %v608
    %v2169 = vunpack.c.l.b16 %v609
    %v2170 = vunpack.c.h.b16 %v609
    %v2171 = vunpack.c.l.b16 %v610
    %v2172 = vunpack.c.h.b16 %v610
    %v2173 = vunpack.c.l.b16 %v611
    %v2174 = vunpack.c.h.b16 %v611
    %v2175 = vunpack.c.l.b16 %v612
    %v2176 = vunpack.c.h.b16 %v612
    %v2177 = vunpack.c.l.b16 %v613
    %v2178 = vunpack.c.h.b16 %v613
    %v2179 = vunpack.c.l.b16 %v614
    %v2180 = vunpack.c.h.b16 %v614
    %v2181 = vunpack.c.l.b16 %v615
    %v2182 = vunpack.c.h.b16 %v615
    %v2183 = vunpack.c.l.b16 %v616
    %v2184 = vunpack.c.h.b16 %v616
    %v2185 = vunpack.c.l.b16 %v617
    %v2186 = vunpack.c.h.b16 %v617
    %v2187 = vunpack.c.l.b16 %v618
    %v2188 = vunpack.c.h.b16 %v618
    %v2189 = vunpack.c.l.b16 %v619
    %v2190 = vunpack.c.h.b16 %v619
    %v2191 = vunpack.c.l.b16 %v620
    %v2192 = vunpack.c.h.b16 %v620
    %v2193 = vunpack.c.l.b16 %v621
    %v2194 = vunpack.c.h.b16 %v621
    %v2195 = vunpack.c.l.b16 %v622
    %v2196 = vunpack.c.h.b16 %v622
    %v2197 = vunpack.c.l.b16 %v623
    %v2198 = vunpack.c.h.b16 %v623
    %v2199 = vunpack.c.l.b16 %v624
    %v2200 = vunpack.c.h.b16 %v624
    %v2201 = vunpack.c.l.b16 %v625
    %v2202 = vunpack.c.h.b16 %v625
    %v2203 = vunpack.c.l.b16 %v626
    %v2204 = vunpack.c.h.b16 %v626
    %v2205 = vunpack.c.l.b16 %v627
    %v2206 = vunpack.c.h.b16 %v627
    %v2207 = vunpack.c.l.b16 %v628
    %v2208 = vunpack.c.h.b16 %v628
    %v2209 = vunpack.c.l.b16 %v629
    %v2210 = vunpack.c.h.b16 %v629
    %v2211 = vunpack.c.l.b16 %v630
    %v2212 = vunpack.c.h.b16 %v630
    %v2213 = vunpack.c.l.b16 %v631
    %v2214 = vunpack.c.h.b16 %v631
    %v2215 = vunpack.c.l.b16 %v632
    %v2216 = vunpack.c.h.b16 %v632
    %v2217 = vunpack.c.l.b16 %v633
    %v2218 = vunpack.c.h.b16 %v633
    %v2219 = vunpack.c.l.b16 %v634
    %v2220 = vunpack.c.h.b16 %v634
    %v2221 = vunpack.c.l.b16 %v635
    %v2222 = vunpack.c.h.b16 %v635
    %v2223 = vunpack.c.l.b16 %v636
    %v2224 = vunpack.c.h.b16 %v636
    %v2225 = vunpack.c.l.b16 %v637
    %v2226 = vunpack.c.h.b16 %v637
    %v2227 = vunpack.c.l.b16 %v638
    %v2228 = vunpack.c.h.b16 %v638
    %v2229 = vunpack.c.l.b16 %v639
    %v2230 = vunpack.c.h.b16 %v639
    %v2231 = vunpack.c.l.b16 %v640
    %v2232 = vunpack.c.h.b16 %v640
    %v2233 = vunpack.c.l.b16 %v641
    %v2234 = vunpack.c.h.b16 %v641
    %v2235 = vunpack.c.l.b16 %v642
    %v2236 = vunpack.c.h.b16 %v642
    %v2237 = vunpack.c.l.b16 %v643
    %v2238 = vunpack.c.h.b16 %v643
    %v2239 = vunpack.c.l.b16 %v644
    %v2240 = vunpack.c.h.b16 %v644
    %v2241 = vunpack.c.l.b16 %v645
    %v2242 = vunpack.c.h.b16 %v645
    %v2243 = vunpack.c.l.b16 %v646
    %v2244 = vunpack.c.h.b16 %v646
    %v2245 = vunpack.c.l.b16 %v647
    %v2246 = vunpack.c.h.b16 %v647
    %v2247 = vunpack.c.l.b16 %v648
    %v2248 = vunpack.c.h.b16 %v648
    %v2249 = vunpack.c.l.b16 %v649
    %v2250 = vunpack.c.h.b16 %v649
    %v2251 = vunpack.c.l.b16 %v650
    %v2252 = vunpack.c.h.b16 %v650
    %v2253 = vunpack.c.l.b16 %v651
    %v2254 = vunpack.c.h.b16 %v651
    %v2255 = vunpack.c.l.b16 %v652
    %v2256 = vunpack.c.h.b16 %v652
    %v2257 = vunpack.c.l.b16 %v653
    %v2258 = vunpack.c.h.b16 %v653
    %v2259 = vunpack.c.l.b16 %v654
    %v2260 = vunpack.c.h.b16 %v654
    %v2261 = vunpack.c.l.b16 %v655
    %v2262 = vunpack.c.h.b16 %v655
    %v2263 = vunpack.c.l.b16 %v656
    %v2264 = vunpack.c.h.b16 %v656
    %v2265 = vunpack.c.l.b16 %v657
    %v2266 = vunpack.c.h.b16 %v657
    %v2267 = vunpack.c.l.b16 %v658
    %v2268 = vunpack.c.h.b16 %v658
    %v2269 = vunpack.c.l.b16 %v659
    %v2270 = vunpack.c.h.b16 %v659
    %v2271 = vunpack.c.l.b16 %v660
    %v2272 = vunpack.c.h.b16 %v660
    %v2273 = vunpack.c.l.b16 %v661
    %v2274 = vunpack.c.h.b16 %v661
    %v2275 = vunpack.c.l.b16 %v662
    %v2276 = vunpack.c.h.b16 %v662
    %v2277 = vunpack.c.l.b16 %v663
    %v2278 = vunpack.c.h.b16 %v663
    %v2279 = vunpack.c.l.b16 %v664
    %v2280 = vunpack.c.h.b16 %v664
    %v2281 = vunpack.c.l.b16 %v665
    %v2282 = vunpack.c.h.b16 %v665
    %v2283 = vunpack.c.l.b16 %v666
    %v2284 = vunpack.c.h.b16 %v666
    %v2285 = vunpack.c.l.b16 %v667
    %v2286 = vunpack.c.h.b16 %v667
    %v2287 = vunpack.c.l.b16 %v668
    %v2288 = vunpack.c.h.b16 %v668
    %v2289 = vunpack.c.l.b16 %v669
    %v2290 = vunpack.c.h.b16 %v669
    %v2291 = vunpack.c.l.b16 %v670
    %v2292 = vunpack.c.h.b16 %v670
    %v2293 = vunpack.c.l.b16 %v671
    %v2294 = vunpack.c.h.b16 %v671
    %v2295 = vunpack.c.l.b16 %v672
    %v2296 = vunpack.c.h.b16 %v672
    %v2297 = vunpack.c.l.b16 %v673
    %v2298 = vunpack.c.h.b16 %v673
    %v2299 = vunpack.c.l.b16 %v674
    %v2300 = vunpack.c.h.b16 %v674
    %v2301 = vunpack.c.l.b16 %v675
    %v2302 = vunpack.c.h.b16 %v675
    %v2303 = vunpack.c.l.b16 %v676
    %v2304 = vunpack.c.h.b16 %v676
    %v2305 = vunpack.c.l.b16 %v677
    %v2306 = vunpack.c.h.b16 %v677
    %v2307 = vunpack.c.l.b16 %v678
    %v2308 = vunpack.c.h.b16 %v678
    %v2309 = vunpack.c.l.b16 %v679
    %v2310 = vunpack.c.h.b16 %v679
    %v2311 = vunpack.c.l.b16 %v680
    %v2312 = vunpack.c.h.b16 %v680
    %v2313 = vunpack.c.l.b16 %v681
    %v2314 = vunpack.c.h.b16 %v681
    %v2315 = vunpack.c.l.b16 %v682
    %v2316 = vunpack.c.h.b16 %v682
    %v2317 = vunpack.c.l.b16 %v683
    %v2318 = vunpack.c.h.b16 %v683
    %v2319 = vunpack.c.l.b16 %v684
    %v2320 = vunpack.c.h.b16 %v684
    %v2321 = vunpack.c.l.b16 %v685
    %v2322 = vunpack.c.h.b16 %v685
    %v2323 = vunpack.c.l.b16 %v686
    %v2324 = vunpack.c.h.b16 %v686
    %v2325 = vunpack.c.l.b16 %v687
    %v2326 = vunpack.c.h.b16 %v687
    %v2327 = vunpack.c.l.b16 %v688
    %v2328 = vunpack.c.h.b16 %v688
    %v2329 = vunpack.c.l.b16 %v689
    %v2330 = vunpack.c.h.b16 %v689
    %v2331 = vunpack.c.l.b16 %v690
    %v2332 = vunpack.c.h.b16 %v690
    %v2333 = vunpack.c.l.b16 %v691
    %v2334 = vunpack.c.h.b16 %v691
    %v2335 = vunpack.c.l.b16 %v692
    %v2336 = vunpack.c.h.b16 %v692
    %v2337 = vunpack.c.l.b16 %v693
    %v2338 = vunpack.c.h.b16 %v693
    %v2339 = vunpack.c.l.b16 %v694
    %v2340 = vunpack.c.h.b16 %v694
    %v2341 = vunpack.c.l.b16 %v695
    %v2342 = vunpack.c.h.b16 %v695
    %v2343 = vunpack.c.l.b16 %v696
    %v2344 = vunpack.c.h.b16 %v696
    %v2345 = vunpack.c.l.b16 %v697
    %v2346 = vunpack.c.h.b16 %v697
    %v2347 = vunpack.c.l.b16 %v698
    %v2348 = vunpack.c.h.b16 %v698
    %v2349 = vunpack.c.l.b16 %v699
    %v2350 = vunpack.c.h.b16 %v699
    %v2351 = vunpack.c.l.b16 %v700
    %v2352 = vunpack.c.h.b16 %v700
    %v2353 = vunpack.c.l.b16 %v701
    %v2354 = vunpack.c.h.b16 %v701
    %v2355 = vunpack.c.l.b16 %v702
    %v2356 = vunpack.c.h.b16 %v702
    %v2357 = vunpack.c.l.b16 %v703
    %v2358 = vunpack.c.h.b16 %v703
    %v2359 = vunpack.c.l.b16 %v704
    %v2360 = vunpack.c.h.b16 %v704
    %v2361 = vunpack.c.l.b16 %v705
    %v2362 = vunpack.c.h.b16 %v705
    %v2363 = vunpack.c.l.b16 %v706
    %v2364 = vunpack.c.h.b16 %v706
    %v2365 = vunpack.c.l.b16 %v707
    %v2366 = vunpack.c.h.b16 %v707
    %v2367 = vunpack.c.l.b16 %v708
    %v2368 = vunpack.c.h.b16 %v708
    %v2369 = vunpack.c.l.b16 %v709
    %v2370 = vunpack.c.h.b16 %v709
    %v2371 = vunpack.c.l.b16 %v710
    %v2372 = vunpack.c.h.b16 %v710
    %v2373 = vunpack.c.l.b16 %v711
    %v2374 = vunpack.c.h.b16 %v711
    %v2375 = vunpack.c.l.b16 %v712
    %v2376 = vunpack.c.h.b16 %v712
    %v2377 = vunpack.c.l.b16 %v713
    %v2378 = vunpack.c.h.b16 %v713
    %v2379 = vunpack.c.l.b16 %v714
    %v2380 = vunpack.c.h.b16 %v714
    %v2381 = vunpack.c.l.b16 %v715
    %v2382 = vunpack.c.h.b16 %v715
    %v2383 = vunpack.c.l.b16 %v716
    %v2384 = vunpack.c.h.b16 %v716
    %v2385 = vunpack.c.l.b16 %v717
    %v2386 = vunpack.c.h.b16 %v717
    %v2387 = vunpack.c.l.b16 %v718
    %v2388 = vunpack.c.h.b16 %v718
    %v2389 = vunpack.c.l.b16 %v719
    %v2390 = vunpack.c.h.b16 %v719
    %v2391 = vunpack.c.l.b16 %v720
    %v2392 = vunpack.c.h.b16 %v720
    %v2393 = vunpack.c.l.b16 %v721
    %v2394 = vunpack.c.h.b16 %v721
    %v2395 = vunpack.c.l.b16 %v722
    %v2396 = vunpack.c.h.b16 %v722
    %v2397 = vunpack.c.l.b16 %v723
    %v2398 = vunpack.c.h.b16 %v723
    %v2399 = vunpack.c.l.b16 %v724
    %v2400 = vunpack.c.h.b16 %v724
    %v2401 = vunpack.c.l.b16 %v725
    %v2402 = vunpack.c.h.b16 %v725
    %v2403 = vunpack.c.l.b16 %v726
    %v2404 = vunpack.c.h.b16 %v726
    %v2405 = vunpack.c.l.b16 %v727
    %v2406 = vunpack.c.h.b16 %v727
    %v2407 = vunpack.c.l.b16 %v728
    %v2408 = vunpack.c.h.b16 %v728
    %v2409 = vunpack.c.l.b16 %v729
    %v2410 = vunpack.c.h.b16 %v729
    %v2411 = vunpack.c.l.b16 %v730
    %v2412 = vunpack.c.h.b16 %v730
    %v2413 = vunpack.c.l.b16 %v731
    %v2414 = vunpack.c.h.b16 %v731
    %v2415 = vunpack.c.l.b16 %v732
    %v2416 = vunpack.c.h.b16 %v732
    %v2417 = vunpack.c.l.b16 %v733
    %v2418 = vunpack.c.h.b16 %v733
    %v2419 = vunpack.c.l.b16 %v734
    %v2420 = vunpack.c.h.b16 %v734
    %v2421 = vunpack.c.l.b16 %v735
    %v2422 = vunpack.c.h.b16 %v735
    %v2423 = vunpack.c.l.b16 %v736
    %v2424 = vunpack.c.h.b16 %v736
    %v2425 = vunpack.c.l.b16 %v737
    %v2426 = vunpack.c.h.b16 %v737
    %v2427 = vunpack.c.l.b16 %v738
    %v2428 = vunpack.c.h.b16 %v738
    %v2429 = vunpack.c.l.b16 %v739
    %v2430 = vunpack.c.h.b16 %v739
    %v2431 = vunpack.c.l.b16 %v740
    %v2432 = vunpack.c.h.b16 %v740
    %v2433 = vunpack.c.l.b16 %v741
    %v2434 = vunpack.c.h.b16 %v741
    %v2435 = vunpack.c.l.b16 %v742
    %v2436 = vunpack.c.h.b16 %v742
    %v2437 = vunpack.c.l.b16 %v743
    %v2438 = vunpack.c.h.b16 %v743
    %v2439 = vunpack.c.l.b16 %v744
    %v2440 = vunpack.c.h.b16 %v744
    %v2441 = vunpack.c.l.b16 %v745
    %v2442 = vunpack.c.h.b16 %v745
    %v2443 = vunpack.c.l.b16 %v746
    %v2444 = vunpack.c.h.b16 %v746
    %v2445 = vunpack.c.l.b16 %v747
    %v2446 = vunpack.c.h.b16 %v747
    %v2447 = vunpack.c.l.b16 %v748
    %v2448 = vunpack.c.h.b16 %v748
    %v2449 = vunpack.c.l.b16 %v749
    %v2450 = vunpack.c.h.b16 %v749
    %v2451 = vunpack.c.l.b16 %v750
    %v2452 = vunpack.c.h.b16 %v750
    %v2453 = vunpack.c.l.b16 %v751
    %v2454 = vunpack.c.h.b16 %v751
    %v2455 = vunpack.c.l.b16 %v752
    %v2456 = vunpack.c.h.b16 %v752
    %v2457 = vunpack.c.l.b16 %v753
    %v2458 = vunpack.c.h.b16 %v753
    %v2459 = vunpack.c.l.b16 %v754
    %v2460 = vunpack.c.h.b16 %v754
    %v2461 = vunpack.c.l.b16 %v755
    %v2462 = vunpack.c.h.b16 %v755
    %v2463 = vunpack.c.l.b16 %v756
    %v2464 = vunpack.c.h.b16 %v756
    %v2465 = vunpack.c.l.b16 %v757
    %v2466 = vunpack.c.h.b16 %v757
    %v2467 = vunpack.c.l.b16 %v758
    %v2468 = vunpack.c.h.b16 %v758
    %v2469 = vunpack.c.l.b16 %v759
    %v2470 = vunpack.c.h.b16 %v759
    %v2471 = vunpack.c.l.b16 %v760
    %v2472 = vunpack.c.h.b16 %v760
    %v2473 = vunpack.c.l.b16 %v761
    %v2474 = vunpack.c.h.b16 %v761
    %v2475 = vunpack.c.l.b16 %v762
    %v2476 = vunpack.c.h.b16 %v762
    %v2477 = vunpack.c.l.b16 %v763
    %v2478 = vunpack.c.h.b16 %v763
    %v2479 = vunpack.c.l.b16 %v764
    %v2480 = vunpack.c.h.b16 %v764
    %v2481 = vunpack.c.l.b16 %v765
    %v2482 = vunpack.c.h.b16 %v765
    %v2483 = vunpack.c.l.b16 %v766
    %v2484 = vunpack.c.h.b16 %v766
    %v2485 = vunpack.c.l.b16 %v767
    %v2486 = vunpack.c.h.b16 %v767
    %v2487 = vunpack.c.l.b16 %v768
    %v2488 = vunpack.c.h.b16 %v768
    %v2489 = vunpack.c.l.b16 %v769
    %v2490 = vunpack.c.h.b16 %v769
    %v2491 = vunpack.c.l.b16 %v770
    %v2492 = vunpack.c.h.b16 %v770
    %v2493 = vunpack.c.l.b16 %v771
    %v2494 = vunpack.c.h.b16 %v771
    %v2495 = vunpack.c.l.b16 %v772
    %v2496 = vunpack.c.h.b16 %v772
    %v2497 = vunpack.c.l.b16 %v773
    %v2498 = vunpack.c.h.b16 %v773
    %v2499 = vunpack.c.l.b16 %v774
    %v2500 = vunpack.c.h.b16 %v774
    %v2501 = vunpack.c.l.b16 %v775
    %v2502 = vunpack.c.h.b16 %v775
    %v2503 = vunpack.c.l.b16 %v776
    %v2504 = vunpack.c.h.b16 %v776
    %v2505 = vunpack.c.l.b16 %v777
    %v2506 = vunpack.c.h.b16 %v777
    %v2507 = vunpack.c.l.b16 %v778
    %v2508 = vunpack.c.h.b16 %v778
    %v2509 = vunpack.c.l.b16 %v779
    %v2510 = vunpack.c.h.b16 %v779
    %v2511 = vunpack.c.l.b16 %v780
    %v2512 = vunpack.c.h.b16 %v780
    %v2513 = vunpack.c.l.b16 %v781
    %v2514 = vunpack.c.h.b16 %v781
    %v2515 = vunpack.c.l.b16 %v782
    %v2516 = vunpack.c.h.b16 %v782
    %v2517 = vunpack.c.l.b16 %v783
    %v2518 = vunpack.c.h.b16 %v783
    %v2519 = vunpack.c.l.b16 %v784
    %v2520 = vunpack.c.h.b16 %v784
    %v2521 = vunpack.c.l.b16 %v785
    %v2522 = vunpack.c.h.b16 %v785
    %v2523 = vunpack.c.l.b16 %v786
    %v2524 = vunpack.c.h.b16 %v786
    %v2525 = vunpack.c.l.b16 %v787
    %v2526 = vunpack.c.h.b16 %v787
    %v2527 = vunpack.c.l.b16 %v788
    %v2528 = vunpack.c.h.b16 %v788
    %v2529 = vunpack.c.l.b16 %v789
    %v2530 = vunpack.c.h.b16 %v789
    %v2531 = vunpack.c.l.b16 %v790
    %v2532 = vunpack.c.h.b16 %v790
    %v2533 = vunpack.c.l.b16 %v791
    %v2534 = vunpack.c.h.b16 %v791
    %v2535 = vunpack.c.l.b16 %v792
    %v2536 = vunpack.c.h.b16 %v792
    %v2537 = vunpack.c.l.b16 %v793
    %v2538 = vunpack.c.h.b16 %v793
    %v2539 = vunpack.c.l.b16 %v794
    %v2540 = vunpack.c.h.b16 %v794
    %v2541 = vunpack.c.l.b16 %v795
    %v2542 = vunpack.c.h.b16 %v795
    %v2543 = vunpack.c.l.b16 %v796
    %v2544 = vunpack.c.h.b16 %v796
    %v2545 = vunpack.c.l.b16 %v797
    %v2546 = vunpack.c.h.b16 %v797
    %v2547 = vunpack.c.l.b16 %v798
    %v2548 = vunpack.c.h.b16 %v798
    %v2549 = vunpack.c.l.b16 %v799
    %v2550 = vunpack.c.h.b16 %v799
    %v2551 = vunpack.c.l.b16 %v800
    %v2552 = vunpack.c.h.b16 %v800
    %v2553 = vunpack.c.l.b16 %v801
    %v2554 = vunpack.c.h.b16 %v801
    %v2555 = vunpack.c.l.b16 %v802
    %v2556 = vunpack.c.h.b16 %v802
    %v2557 = vunpack.c.l.b16 %v803
    %v2558 = vunpack.c.h.b16 %v803
    %v2559 = vunpack.c.l.b16 %v804
    %v2560 = vunpack.c.h.b16 %v804
    %v2561 = vunpack.c.l.b16 %v805
    %v2562 = vunpack.c.h.b16 %v805
    %v2563 = vunpack.c.l.b16 %v806
    %v2564 = vunpack.c.h.b16 %v806
    %v2565 = vunpack.c.l.b16 %v807
    %v2566 = vunpack.c.h.b16 %v807
    %v2567 = vunpack.c.l.b16 %v808
    %v2568 = vunpack.c.h.b16 %v808
    %v2569 = vunpack.c.l.b16 %v809
    %v2570 = vunpack.c.h.b16 %v809
    %v2571 = vunpack.c.l.b16 %v810
    %v2572 = vunpack.c.h.b16 %v810
    %v2573 = vunpack.c.l.b16 %v811
    %v2574 = vunpack.c.h.b16 %v811
    %v2575 = vunpack.c.l.b16 %v812
    %v2576 = vunpack.c.h.b16 %v812
    %v2577 = vunpack.c.l.b16 %v813
    %v2578 = vunpack.c.h.b16 %v813
    %v2579 = vunpack.c.l.b16 %v814
    %v2580 = vunpack.c.h.b16 %v814
    %v2581 = vunpack.c.l.b16 %v815
    %v2582 = vunpack.c.h.b16 %v815
    %v2583 = vunpack.c.l.b16 %v816
    %v2584 = vunpack.c.h.b16 %v816
    %v2585 = vunpack.c.l.b16 %v817
    %v2586 = vunpack.c.h.b16 %v817
    %v2587 = vunpack.c.l.b16 %v818
    %v2588 = vunpack.c.h.b16 %v818
    %v2589 = vunpack.c.l.b16 %v819
    %v2590 = vunpack.c.h.b16 %v819
    %v2591 = vunpack.c.l.b16 %v820
    %v2592 = vunpack.c.h.b16 %v820
    %v2593 = vunpack.c.l.b16 %v821
    %v2594 = vunpack.c.h.b16 %v821
    %v2595 = vunpack.c.l.b16 %v822
    %v2596 = vunpack.c.h.b16 %v822
    %v2597 = vunpack.c.l.b16 %v823
    %v2598 = vunpack.c.h.b16 %v823
    %v2599 = vunpack.c.l.b16 %v824
    %v2600 = vunpack.c.h.b16 %v824
    %v2601 = vunpack.c.l.b16 %v825
    %v2602 = vunpack.c.h.b16 %v825
    %v2603 = vunpack.c.l.b16 %v826
    %v2604 = vunpack.c.h.b16 %v826
    %v2605 = vunpack.c.l.b16 %v827
    %v2606 = vunpack.c.h.b16 %v827
    %v2607 = vunpack.c.l.b16 %v828
    %v2608 = vunpack.c.h.b16 %v828
    %v2609 = vunpack.c.l.b16 %v829
    %v2610 = vunpack.c.h.b16 %v829
    %v2611 = vunpack.c.l.b16 %v830
    %v2612 = vunpack.c.h.b16 %v830
    %v2613 = vunpack.c.l.b16 %v831
    %v2614 = vunpack.c.h.b16 %v831
    %v2615 = vunpack.c.l.b16 %v832
    %v2616 = vunpack.c.h.b16 %v832
    %v2617 = vunpack.c.l.b16 %v833
    %v2618 = vunpack.c.h.b16 %v833
    %v2619 = vunpack.c.l.b16 %v834
    %v2620 = vunpack.c.h.b16 %v834
    %v2621 = vpack.c.b16 %v1449, %v1445
    %v2622 = vpack.c.b16 %v1450, %v1446
    %v2623 = vpack.c.b16 %v1451, %v1447
    %v2624 = vpack.c.b16 %v1452, %v1448
    %v2625 = vpack.c.b16 %v1457, %v1453
    %v2626 = vpack.c.b16 %v1458, %v1454
    %v2627 = vpack.c.b16 %v1459, %v1455
    %v2628 = vpack.c.b16 %v1460, %v1456
    %v2629 = vpack.c.b16 %v1465, %v1461
    %v2630 = vpack.c.b16 %v1466, %v1462
    %v2631 = vpack.c.b16 %v1467, %v1463
    %v2632 = vpack.c.b16 %v1468, %v1464
    %v2633 = vpack.c.b16 %v1473, %v1469
    %v2634 = vpack.c.b16 %v1474, %v1470
    %v2635 = vpack.c.b16 %v1475, %v1471
    %v2636 = vpack.c.b16 %v1476, %v1472
    %v2637 = vpack.c.b16 %v1481, %v1477
    %v2638 = vpack.c.b16 %v1482, %v1478
    %v2639 = vpack.c.b16 %v1483, %v1479
    %v2640 = vpack.c.b16 %v1484, %v1480
    %v2641 = vpack.c.b16 %v1489, %v1485
    %v2642 = vpack.c.b16 %v1490, %v1486
    %v2643 = vpack.c.b16 %v1491, %v1487
    %v2644 = vpack.c.b16 %v1492, %v1488
    %v2645 = vpack.c.b16 %v1497, %v1493
    %v2646 = vpack.c.b16 %v1498, %v1494
    %v2647 = vpack.c.b16 %v1499, %v1495
    %v2648 = vpack.c.b16 %v1500, %v1496
    %v2649 = vpack.c.b16 %v1505, %v1501
    %v2650 = vpack.c.b16 %v1506, %v1502
    %v2651 = vpack.c.b16 %v1507, %v1503
    %v2652 = vpack.c.b16 %v1508, %v1504
    %v2653 = vpack.c.b16 %v1513, %v1509
    %v2654 = vpack.c.b16 %v1514, %v1510
    %v2655 = vpack.c.b16 %v1515, %v1511
    %v2656 = vpack.c.b16 %v1516, %v1512
    %v2657 = vpack.c.b16 %v1521, %v1517
    %v2658 = vpack.c.b16 %v1522, %v1518
    %v2659 = vpack.c.b16 %v1523, %v1519
    %v2660 = vpack.c.b16 %v1524, %v1520
    %v2661 = vpack.c.b16 %v1529, %v1525
    %v2662 = vpack.c.b16 %v1530, %v1526
    %v2663 = vpack.c.b16 %v1531, %v1527
    %v2664 = vpack.c.b16 %v1532, %v1528
    %v2665 = vpack.c.b16 %v1537, %v1533
    %v2666 = vpack.c.b16 %v1538, %v1534
    %v2667 = vpack.c.b16 %v1539, %v1535
    %v2668 = vpack.c.b16 %v1540, %v1536
    %v2669 = vpack.c.b16 %v1545, %v1541
    %v2670 = vpack.c.b16 %v1546, %v1542
    %v2671 = vpack.c.b16 %v1547, %v1543
    %v2672 = vpack.c.b16 %v1548, %v1544
    %v2673 = vpack.c.b16 %v1553, %v1549
    %v2674 = vpack.c.b16 %v1554, %v1550
    %v2675 = vpack.c.b16 %v1555, %v1551
    %v2676 = vpack.c.b16 %v1556, %v1552
    %v2677 = vpack.c.b16 %v1561, %v1557
    %v2678 = vpack.c.b16 %v1562, %v1558
    %v2679 = vpack.c.b16 %v1563, %v1559
    %v2680 = vpack.c.b16 %v1564, %v1560
    %v2681 = vpack.c.b16 %v1569, %v1565
    %v2682 = vpack.c.b16 %v1570, %v1566
    %v2683 = vpack.c.b16 %v1571, %v1567
    %v2684 = vpack.c.b16 %v1572, %v1568
    %v2685 = vpack.c.b16 %v1577, %v1573
    %v2686 = vpack.c.b16 %v1578, %v1574
    %v2687 = vpack.c.b16 %v1579, %v1575
    %v2688 = vpack.c.b16 %v1580, %v1576
    %v2689 = vpack.c.b16 %v1585, %v1581
    %v2690 = vpack.c.b16 %v1586, %v1582
    %v2691 = vpack.c.b16 %v1587, %v1583
    %v2692 = vpack.c.b16 %v1588, %v1584
    %v2693 = vpack.c.b16 %v1593, %v1589
    %v2694 = vpack.c.b16 %v1594, %v1590
    %v2695 = vpack.c.b16 %v1595, %v1591
    %v2696 = vpack.c.b16 %v1596, %v1592
    %v2697 = vpack.c.b16 %v1601, %v1597
    %v2698 = vpack.c.b16 %v1602, %v1598
    %v2699 = vpack.c.b16 %v1603, %v1599
    %v2700 = vpack.c.b16 %v1604, %v1600
    %v2701 = vpack.c.b16 %v1609, %v1605
    %v2702 = vpack.c.b16 %v1610, %v1606
    %v2703 = vpack.c.b16 %v1611, %v1607
    %v2704 = vpack.c.b16 %v1612, %v1608
    %v2705 = vpack.c.b16 %v1617, %v1613
    %v2706 = vpack.c.b16 %v1618, %v1614
    %v2707 = vpack.c.b16 %v1619, %v1615
    %v2708 = vpack.c.b16 %v1620, %v1616
    %v2709 = vpack.c.b16 %v1625, %v1621
    %v2710 = vpack.c.b16 %v1626, %v1622
    %v2711 = vpack.c.b16 %v1627, %v1623
    %v2712 = vpack.c.b16 %v1628, %v1624
    %v2713 = vpack.c.b16 %v1633, %v1629
    %v2714 = vpack.c.b16 %v1634, %v1630
    %v2715 = vpack.c.b16 %v1635, %v1631
    %v2716 = vpack.c.b16 %v1636, %v1632
    %v2717 = vpack.c.b16 %v1641, %v1637
    %v2718 = vpack.c.b16 %v1642, %v1638
    %v2719 = vpack.c.b16 %v1643, %v1639
    %v2720 = vpack.c.b16 %v1644, %v1640
    %v2721 = vpack.c.b16 %v1649, %v1645
    %v2722 = vpack.c.b16 %v1650, %v1646
    %v2723 = vpack.c.b16 %v1651, %v1647
    %v2724 = vpack.c.b16 %v1652, %v1648
    %v2725 = vpack.c.b16 %v1657, %v1653
    %v2726 = vpack.c.b16 %v1658, %v1654
    %v2727 = vpack.c.b16 %v1659, %v1655
    %v2728 = vpack.c.b16 %v1660, %v1656
    %v2729 = vpack.c.b16 %v1665, %v1661
    %v2730 = vpack.c.b16 %v1666, %v1662
    %v2731 = vpack.c.b16 %v1667, %v1663
    %v2732 = vpack.c.b16 %v1668, %v1664
    %v2733 = vpack.c.b16 %v1673, %v1669
    %v2734 = vpack.c.b16 %v1674, %v1670
    %v2735 = vpack.c.b16 %v1675, %v1671
    %v2736 = vpack.c.b16 %v1676, %v1672
    %v2737 = vpack.c.b16 %v1681, %v1677
    %v2738 = vpack.c.b16 %v1682, %v1678
    %v2739 = vpack.c.b16 %v1683, %v1679
    %v2740 = vpack.c.b16 %v1684, %v1680
    %v2741 = vpack.c.b16 %v1689, %v1685
    %v2742 = vpack.c.b16 %v1690, %v1686
    %v2743 = vpack.c.b16 %v1691, %v1687
    %v2744 = vpack.c.b16 %v1692, %v1688
    %v2745 = vpack.c.b16 %v1697, %v1693
    %v2746 = vpack.c.b16 %v1698, %v1694
    %v2747 = vpack.c.b16 %v1699, %v1695
    %v2748 = vpack.c.b16 %v1700, %v1696
    %v2749 = vpack.c.b16 %v1705, %v1701
    %v2750 = vpack.c.b16 %v1706, %v1702
    %v2751 = vpack.c.b16 %v1707, %v1703
    %v2752 = vpack.c.b16 %v1708, %v1704
    %v2753 = vpack.c.b16 %v1713, %v1709
    %v2754 = vpack.c.b16 %v1714, %v1710
    %v2755 = vpack.c.b16 %v1715, %v1711
    %v2756 = vpack.c.b16 %v1716, %v1712
    %v2757 = vpack.c.b16 %v1721, %v1717
    %v2758 = vpack.c.b16 %v1722, %v1718
    %v2759 = vpack.c.b16 %v1723, %v1719
    %v2760 = vpack.c.b16 %v1724, %v1720
    %v2761 = vpack.c.b16 %v1729, %v1725
    %v2762 = vpack.c.b16 %v1730, %v1726
    %v2763 = vpack.c.b16 %v1731, %v1727
    %v2764 = vpack.c.b16 %v1732, %v1728
    %v2765 = vpack.c.b16 %v1737, %v1733
    %v2766 = vpack.c.b16 %v1738, %v1734
    %v2767 = vpack.c.b16 %v1739, %v1735
    %v2768 = vpack.c.b16 %v1740, %v1736
    %v2769 = vpack.c.b16 %v1745, %v1741
    %v2770 = vpack.c.b16 %v1746, %v1742
    %v2771 = vpack.c.b16 %v1747, %v1743
    %v2772 = vpack.c.b16 %v1748, %v1744
    %v2773 = vpack.c.b16 %v1753, %v1749
    %v2774 = vpack.c.b16 %v1754, %v1750
    %v2775 = vpack.c.b16 %v1755, %v1751
    %v2776 = vpack.c.b16 %v1756, %v1752
    %v2777 = vpack.c.b16 %v1761, %v1757
    %v2778 = vpack.c.b16 %v1762, %v1758
    %v2779 = vpack.c.b16 %v1763, %v1759
    %v2780 = vpack.c.b16 %v1764, %v1760
    %v2781 = vpack.c.b16 %v1769, %v1765
    %v2782 = vpack.c.b16 %v1770, %v1766
    %v2783 = vpack.c.b16 %v1771, %v1767
    %v2784 = vpack.c.b16 %v1772, %v1768
    %v2785 = vpack.c.b16 %v1777, %v1773
    %v2786 = vpack.c.b16 %v1778, %v1774
    %v2787 = vpack.c.b16 %v1779, %v1775
    %v2788 = vpack.c.b16 %v1780, %v1776
    %v2789 = vpack.c.b16 %v1785, %v1781
    %v2790 = vpack.c.b16 %v1786, %v1782
    %v2791 = vpack.c.b16 %v1787, %v1783
    %v2792 = vpack.c.b16 %v1788, %v1784
    %v2793 = vpack.c.b16 %v1793, %v1789
    %v2794 = vpack.c.b16 %v1794, %v1790
    %v2795 = vpack.c.b16 %v1795, %v1791
    %v2796 = vpack.c.b16 %v1796, %v1792
    %v2797 = vpack.c.b16 %v1801, %v1797
    %v2798 = vpack.c.b16 %v1802, %v1798
    %v2799 = vpack.c.b16 %v1803, %v1799
    %v2800 = vpack.c.b16 %v1804, %v1800
    %v2801 = vpack.c.b16 %v1809, %v1805
    %v2802 = vpack.c.b16 %v1810, %v1806
    %v2803 = vpack.c.b16 %v1811, %v1807
    %v2804 = vpack.c.b16 %v1812, %v1808
    %v2805 = vpack.c.b16 %v1817, %v1813
    %v2806 = vpack.c.b16 %v1818, %v1814
    %v2807 = vpack.c.b16 %v1819, %v1815
    %v2808 = vpack.c.b16 %v1820, %v1816
    %v2809 = vpack.c.b16 %v1825, %v1821
    %v2810 = vpack.c.b16 %v1826, %v1822
    %v2811 = vpack.c.b16 %v1827, %v1823
    %v2812 = vpack.c.b16 %v1828, %v1824
    %v2813 = vpack.c.b16 %v1833, %v1829
    %v2814 = vpack.c.b16 %v1834, %v1830
    %v2815 = vpack.c.b16 %v1835, %v1831
    %v2816 = vpack.c.b16 %v1836, %v1832
    %v2817 = vpack.c.b16 %v1841, %v1837
    %v2818 = vpack.c.b16 %v1842, %v1838
    %v2819 = vpack.c.b16 %v1843, %v1839
    %v2820 = vpack.c.b16 %v1844, %v1840
    %v2821 = vpack.c.b16 %v1849, %v1845
    %v2822 = vpack.c.b16 %v1850, %v1846
    %v2823 = vpack.c.b16 %v1851, %v1847
    %v2824 = vpack.c.b16 %v1852, %v1848
    %v2825 = vpack.c.b16 %v1857, %v1853
    %v2826 = vpack.c.b16 %v1858, %v1854
    %v2827 = vpack.c.b16 %v1859, %v1855
    %v2828 = vpack.c.b16 %v1860, %v1856
    %v2829 = vpack.c.b16 %v1865, %v1861
    %v2830 = vpack.c.b16 %v1866, %v1862
    %v2831 = vpack.c.b16 %v1867, %v1863
    %v2832 = vpack.c.b16 %v1868, %v1864
    %v2833 = vpack.c.b16 %v1873, %v1869
    %v2834 = vpack.c.b16 %v1874, %v1870
    %v2835 = vpack.c.b16 %v1875, %v1871
    %v2836 = vpack.c.b16 %v1876, %v1872
    %v2837 = vpack.c.b16 %v1881, %v1877
    %v2838 = vpack.c.b16 %v1882, %v1878
    %v2839 = vpack.c.b16 %v1883, %v1879
    %v2840 = vpack.c.b16 %v1884, %v1880
    %v2841 = vpack.c.b16 %v1889, %v1885
    %v2842 = vpack.c.b16 %v1890, %v1886
    %v2843 = vpack.c.b16 %v1891, %v1887
    %v2844 = vpack.c.b16 %v1892, %v1888
    %v2845 = vpack.c.b16 %v1897, %v1893
    %v2846 = vpack.c.b16 %v1898, %v1894
    %v2847 = vpack.c.b16 %v1899, %v1895
    %v2848 = vpack.c.b16 %v1900, %v1896
    %v2849 = vpack.c.b16 %v1905, %v1901
    %v2850 = vpack.c.b16 %v1906, %v1902
    %v2851 = vpack.c.b16 %v1907, %v1903
    %v2852 = vpack.c.b16 %v1908, %v1904
    %v2853 = vpack.c.b16 %v1913, %v1909
    %v2854 = vpack.c.b16 %v1914, %v1910
    %v2855 = vpack.c.b16 %v1915, %v1911
    %v2856 = vpack.c.b16 %v1916, %v1912
    %v2857 = vpack.c.b16 %v1921, %v1917
    %v2858 = vpack.c.b16 %v1922, %v1918
    %v2859 = vpack.c.b16 %v1923, %v1919
    %v2860 = vpack.c.b16 %v1924, %v1920
    %v2861 = vpack.c.b16 %v1929, %v1925
    %v2862 = vpack.c.b16 %v1930, %v1926
    %v2863 = vpack.c.b16 %v1931, %v1927
    %v2864 = vpack.c.b16 %v1932, %v1928
    %v2865 = vpack.c.b16 %v1937, %v1933
    %v2866 = vpack.c.b16 %v1938, %v1934
    %v2867 = vpack.c.b16 %v1939, %v1935
    %v2868 = vpack.c.b16 %v1940, %v1936
    %v2869 = vpack.c.b16 %v1945, %v1941
    %v2870 = vpack.c.b16 %v1946, %v1942
    %v2871 = vpack.c.b16 %v1947, %v1943
    %v2872 = vpack.c.b16 %v1948, %v1944
    %v2873 = vpack.c.b16 %v1953, %v1949
    %v2874 = vpack.c.b16 %v1954, %v1950
    %v2875 = vpack.c.b16 %v1955, %v1951
    %v2876 = vpack.c.b16 %v1956, %v1952
    %v2877 = vpack.c.b16 %v1961, %v1957
    %v2878 = vpack.c.b16 %v1962, %v1958
    %v2879 = vpack.c.b16 %v1963, %v1959
    %v2880 = vpack.c.b16 %v1964, %v1960
    %v2881 = vpack.c.b16 %v1969, %v1965
    %v2882 = vpack.c.b16 %v1970, %v1966
    %v2883 = vpack.c.b16 %v1971, %v1967
    %v2884 = vpack.c.b16 %v1972, %v1968
    %v2885 = vpack.c.b16 %v1977, %v1973
    %v2886 = vpack.c.b16 %v1978, %v1974
    %v2887 = vpack.c.b16 %v1979, %v1975
    %v2888 = vpack.c.b16 %v1980, %v1976
    %v2889 = vpack.c.b16 %v1985, %v1981
    %v2890 = vpack.c.b16 %v1986, %v1982
    %v2891 = vpack.c.b16 %v1987, %v1983
    %v2892 = vpack.c.b16 %v1988, %v1984
    %v2893 = vpack.c.b16 %v1993, %v1989
    %v2894 = vpack.c.b16 %v1994, %v1990
    %v2895 = vpack.c.b16 %v1995, %v1991
    %v2896 = vpack.c.b16 %v1996, %v1992
    %v2897 = vpack.c.b16 %v2001, %v1997
    %v2898 = vpack.c.b16 %v2002, %v1998
    %v2899 = vpack.c.b16 %v2003, %v1999
    %v2900 = vpack.c.b16 %v2004, %v2000
    %v2901 = vpack.c.b16 %v2009, %v2005
    %v2902 = vpack.c.b16 %v2010, %v2006
    %v2903 = vpack.c.b16 %v2011, %v2007
    %v2904 = vpack.c.b16 %v2012, %v2008
    %v2905 = vpack.c.b16 %v2017, %v2013
    %v2906 = vpack.c.b16 %v2018, %v2014
    %v2907 = vpack.c.b16 %v2019, %v2015
    %v2908 = vpack.c.b16 %v2020, %v2016
    %v2909 = vpack.c.b16 %v2025, %v2021
    %v2910 = vpack.c.b16 %v2026, %v2022
    %v2911 = vpack.c.b16 %v2027, %v2023
    %v2912 = vpack.c.b16 %v2028, %v2024
    %v2913 = vpack.c.b16 %v2033, %v2029
    %v2914 = vpack.c.b16 %v2034, %v2030
    %v2915 = vpack.c.b16 %v2035, %v2031
    %v2916 = vpack.c.b16 %v2036, %v2032
    %v2917 = vpack.c.b16 %v2041, %v2037
    %v2918 = vpack.c.b16 %v2042, %v2038
    %v2919 = vpack.c.b16 %v2043, %v2039
    %v2920 = vpack.c.b16 %v2044, %v2040
    %v2921 = vpack.c.b16 %v2049, %v2045
    %v2922 = vpack.c.b16 %v2050, %v2046
    %v2923 = vpack.c.b16 %v2051, %v2047
    %v2924 = vpack.c.b16 %v2052, %v2048
    %v2925 = vpack.c.b16 %v2057, %v2053
    %v2926 = vpack.c.b16 %v2058, %v2054
    %v2927 = vpack.c.b16 %v2059, %v2055
    %v2928 = vpack.c.b16 %v2060, %v2056
    %v2929 = vpack.c.b16 %v2065, %v2061
    %v2930 = vpack.c.b16 %v2066, %v2062
    %v2931 = vpack.c.b16 %v2067, %v2063
    %v2932 = vpack.c.b16 %v2068, %v2064
    %v2933 = vpack.c.b16 %v2073, %v2069
    %v2934 = vpack.c.b16 %v2074, %v2070
    %v2935 = vpack.c.b16 %v2075, %v2071
    %v2936 = vpack.c.b16 %v2076, %v2072
    %v2937 = vpack.c.b16 %v2081, %v2077
    %v2938 = vpack.c.b16 %v2082, %v2078
    %v2939 = vpack.c.b16 %v2083, %v2079
    %v2940 = vpack.c.b16 %v2084, %v2080
    %v2941 = vpack.c.b16 %v2089, %v2085
    %v2942 = vpack.c.b16 %v2090, %v2086
    %v2943 = vpack.c.b16 %v2091, %v2087
    %v2944 = vpack.c.b16 %v2092, %v2088
    %v2945 = vpack.c.b16 %v2097, %v2093
    %v2946 = vpack.c.b16 %v2098, %v2094
    %v2947 = vpack.c.b16 %v2099, %v2095
    %v2948 = vpack.c.b16 %v2100, %v2096
    %v2949 = vpack.c.b16 %v2105, %v2101
    %v2950 = vpack.c.b16 %v2106, %v2102
    %v2951 = vpack.c.b16 %v2107, %v2103
    %v2952 = vpack.c.b16 %v2108, %v2104
    %v2953 = vpack.c.b16 %v2113, %v2109
    %v2954 = vpack.c.b16 %v2114, %v2110
    %v2955 = vpack.c.b16 %v2115, %v2111
    %v2956 = vpack.c.b16 %v2116, %v2112
    %v2957 = vpack.c.b16 %v2121, %v2117
    %v2958 = vpack.c.b16 %v2122, %v2118
    %v2959 = vpack.c.b16 %v2123, %v2119
    %v2960 = vpack.c.b16 %v2124, %v2120
    %v2961 = vpack.c.b16 %v2129, %v2125
    %v2962 = vpack.c.b16 %v2130, %v2126
    %v2963 = vpack.c.b16 %v2131, %v2127
    %v2964 = vpack.c.b16 %v2132, %v2128
    %v2965 = vpack.c.b16 %v2137, %v2133
    %v2966 = vpack.c.b16 %v2138, %v2134
    %v2967 = vpack.c.b16 %v2139, %v2135
    %v2968 = vpack.c.b16 %v2140, %v2136
    %v2969 = vpack.c.b16 %v2145, %v2141
    %v2970 = vpack.c.b16 %v2146, %v2142
    %v2971 = vpack.c.b16 %v2147, %v2143
    %v2972 = vpack.c.b16 %v2148, %v2144
    %v2973 = vpack.c.b16 %v2153, %v2149
    %v2974 = vpack.c.b16 %v2154, %v2150
    %v2975 = vpack.c.b16 %v2155, %v2151
    %v2976 = vpack.c.b16 %v2156, %v2152
    %v2977 = vpack.c.b16 %v2161, %v2157
    %v2978 = vpack.c.b16 %v2162, %v2158
    %v2979 = vpack.c.b16 %v2163, %v2159
    %v2980 = vpack.c.b16 %v2164, %v2160
    %v2981 = vpack.c.b16 %v2169, %v2165
    %v2982 = vpack.c.b16 %v2170, %v2166
    %v2983 = vpack.c.b16 %v2171, %v2167
    %v2984 = vpack.c.b16 %v2172, %v2168
    %v2985 = vpack.c.b16 %v2177, %v2173
    %v2986 = vpack.c.b16 %v2178, %v2174
    %v2987 = vpack.c.b16 %v2179, %v2175
    %v2988 = vpack.c.b16 %v2180, %v2176
    %v2989 = vpack.c.b16 %v2185, %v2181
    %v2990 = vpack.c.b16 %v2186, %v2182
    %v2991 = vpack.c.b16 %v2187, %v2183
    %v2992 = vpack.c.b16 %v2188, %v2184
    %v2993 = vpack.c.b16 %v2193, %v2189
    %v2994 = vpack.c.b16 %v2194, %v2190
    %v2995 = vpack.c.b16 %v2195, %v2191
    %v2996 = vpack.c.b16 %v2196, %v2192
    %v2997 = vpack.c.b16 %v2201, %v2197
    %v2998 = vpack.c.b16 %v2202, %v2198
    %v2999 = vpack.c.b16 %v2203, %v2199
    %v3000 = vpack.c.b16 %v2204, %v2200
    %v3001 = vpack.c.b16 %v2209, %v2205
    %v3002 = vpack.c.b16 %v2210, %v2206
    %v3003 = vpack.c.b16 %v2211, %v2207
    %v3004 = vpack.c.b16 %v2212, %v2208
    %v3005 = vpack.c.b16 %v2217, %v2213
    %v3006 = vpack.c.b16 %v2218, %v2214
    %v3007 = vpack.c.b16 %v2219, %v2215
    %v3008 = vpack.c.b16 %v2220, %v2216
    %v3009 = vpack.c.b16 %v2225, %v2221
    %v3010 = vpack.c.b16 %v2226, %v2222
    %v3011 = vpack.c.b16 %v2227, %v2223
    %v3012 = vpack.c.b16 %v2228, %v2224
    %v3013 = vpack.c.b16 %v2233, %v2229
    %v3014 = vpack.c.b16 %v2234, %v2230
    %v3015 = vpack.c.b16 %v2235, %v2231
    %v3016 = vpack.c.b16 %v2236, %v2232
    %v3017 = vpack.c.b16 %v2241, %v2237
    %v3018 = vpack.c.b16 %v2242, %v2238
    %v3019 = vpack.c.b16 %v2243, %v2239
    %v3020 = vpack.c.b16 %v2244, %v2240
    %v3021 = vpack.c.b16 %v2249, %v2245
    %v3022 = vpack.c.b16 %v2250, %v2246
    %v3023 = vpack.c.b16 %v2251, %v2247
    %v3024 = vpack.c.b16 %v2252, %v2248
    %v3025 = vpack.c.b16 %v2257, %v2253
    %v3026 = vpack.c.b16 %v2258, %v2254
    %v3027 = vpack.c.b16 %v2259, %v2255
    %v3028 = vpack.c.b16 %v2260, %v2256
    %v3029 = vpack.c.b16 %v2265, %v2261
    %v3030 = vpack.c.b16 %v2266, %v2262
    %v3031 = vpack.c.b16 %v2267, %v2263
    %v3032 = vpack.c.b16 %v2268, %v2264
    %v3033 = vpack.c.b16 %v2273, %v2269
    %v3034 = vpack.c.b16 %v2274, %v2270
    %v3035 = vpack.c.b16 %v2275, %v2271
    %v3036 = vpack.c.b16 %v2276, %v2272
    %v3037 = vpack.c.b16 %v2281, %v2277
    %v3038 = vpack.c.b16 %v2282, %v2278
    %v3039 = vpack.c.b16 %v2283, %v2279
    %v3040 = vpack.c.b16 %v2284, %v2280
    %v3041 = vpack.c.b16 %v2289, %v2285
    %v3042 = vpack.c.b16 %v2290, %v2286
    %v3043 = vpack.c.b16 %v2291, %v2287
    %v3044 = vpack.c.b16 %v2292, %v2288
    %v3045 = vpack.c.b16 %v2297, %v2293
    %v3046 = vpack.c.b16 %v2298, %v2294
    %v3047 = vpack.c.b16 %v2299, %v2295
    %v3048 = vpack.c.b16 %v2300, %v2296
    %v3049 = vpack.c.b16 %v2305, %v2301
    %v3050 = vpack.c.b16 %v2306, %v2302
    %v3051 = vpack.c.b16 %v2307, %v2303
    %v3052 = vpack.c.b16 %v2308, %v2304
    %v3053 = vpack.c.b16 %v2313, %v2309
    %v3054 = vpack.c.b16 %v2314, %v2310
    %v3055 = vpack.c.b16 %v2315, %v2311
    %v3056 = vpack.c.b16 %v2316, %v2312
    %v3057 = vpack.c.b16 %v2321, %v2317
    %v3058 = vpack.c.b16 %v2322, %v2318
    %v3059 = vpack.c.b16 %v2323, %v2319
    %v3060 = vpack.c.b16 %v2324, %v2320
    %v3061 = vpack.c.b16 %v2329, %v2325
    %v3062 = vpack.c.b16 %v2330, %v2326
    %v3063 = vpack.c.b16 %v2331, %v2327
    %v3064 = vpack.c.b16 %v2332, %v2328
    %v3065 = vpack.c.b16 %v2337, %v2333
    %v3066 = vpack.c.b16 %v2338, %v2334
    %v3067 = vpack.c.b16 %v2339, %v2335
    %v3068 = vpack.c.b16 %v2340, %v2336
    %v3069 = vpack.c.b16 %v2345, %v2341
    %v3070 = vpack.c.b16 %v2346, %v2342
    %v3071 = vpack.c.b16 %v2347, %v2343
    %v3072 = vpack.c.b16 %v2348, %v2344
    %v3073 = vpack.c.b16 %v2353, %v2349
    %v3074 = vpack.c.b16 %v2354, %v2350
    %v3075 = vpack.c.b16 %v2355, %v2351
    %v3076 = vpack.c.b16 %v2356, %v2352
    %v3077 = vpack.c.b16 %v2361, %v2357
    %v3078 = vpack.c.b16 %v2362, %v2358
    %v3079 = vpack.c.b16 %v2363, %v2359
    %v3080 = vpack.c.b16 %v2364, %v2360
    %v3081 = vpack.c.b16 %v2369, %v2365
    %v3082 = vpack.c.b16 %v2370, %v2366
    %v3083 = vpack.c.b16 %v2371, %v2367
    %v3084 = vpack.c.b16 %v2372, %v2368
    %v3085 = vpack.c.b16 %v2377, %v2373
    %v3086 = vpack.c.b16 %v2378, %v2374
    %v3087 = vpack.c.b16 %v2379, %v2375
    %v3088 = vpack.c.b16 %v2380, %v2376
    %v3089 = vpack.c.b16 %v2385, %v2381
    %v3090 = vpack.c.b16 %v2386, %v2382
    %v3091 = vpack.c.b16 %v2387, %v2383
    %v3092 = vpack.c.b16 %v2388, %v2384
    %v3093 = vpack.c.b16 %v2393, %v2389
    %v3094 = vpack.c.b16 %v2394, %v2390
    %v3095 = vpack.c.b16 %v2395, %v2391
    %v3096 = vpack.c.b16 %v2396, %v2392
    %v3097 = vpack.c.b16 %v2401, %v2397
    %v3098 = vpack.c.b16 %v2402, %v2398
    %v3099 = vpack.c.b16 %v2403, %v2399
    %v3100 = vpack.c.b16 %v2404, %v2400
    %v3101 = vpack.c.b16 %v2409, %v2405
    %v3102 = vpack.c.b16 %v2410, %v2406
    %v3103 = vpack.c.b16 %v2411, %v2407
    %v3104 = vpack.c.b16 %v2412, %v2408
    %v3105 = vpack.c.b16 %v2417, %v2413
    %v3106 = vpack.c.b16 %v2418, %v2414
    %v3107 = vpack.c.b16 %v2419, %v2415
    %v3108 = vpack.c.b16 %v2420, %v2416
    %v3109 = vpack.c.b16 %v2425, %v2421
    %v3110 = vpack.c.b16 %v2426, %v2422
    %v3111 = vpack.c.b16 %v2427, %v2423
    %v3112 = vpack.c.b16 %v2428, %v2424
    %v3113 = vpack.c.b16 %v2433, %v2429
    %v3114 = vpack.c.b16 %v2434, %v2430
    %v3115 = vpack.c.b16 %v2435, %v2431
    %v3116 = vpack.c.b16 %v2436, %v2432
    %v3117 = vpack.c.b16 %v2441, %v2437
    %v3118 = vpack.c.b16 %v2442, %v2438
    %v3119 = vpack.c.b16 %v2443, %v2439
    %v3120 = vpack.c.b16 %v2444, %v2440
    %v3121 = vpack.c.b16 %v2449, %v2445
    %v3122 = vpack.c.b16 %v2450, %v2446
    %v3123 = vpack.c.b16 %v2451, %v2447
    %v3124 = vpack.c.b16 %v2452, %v2448
    %v3125 = vpack.c.b16 %v2457, %v2453
    %v3126 = vpack.c.b16 %v2458, %v2454
    %v3127 = vpack.c.b16 %v2459, %v2455
    %v3128 = vpack.c.b16 %v2460, %v2456
    %v3129 = vpack.c.b16 %v2465, %v2461
    %v3130 = vpack.c.b16 %v2466, %v2462
    %v3131 = vpack.c.b16 %v2467, %v2463
    %v3132 = vpack.c.b16 %v2468, %v2464
    %v3133 = vpack.c.b16 %v2473, %v2469
    %v3134 = vpack.c.b16 %v2474, %v2470
    %v3135 = vpack.c.b16 %v2475, %v2471
    %v3136 = vpack.c.b16 %v2476, %v2472
    %v3137 = vpack.c.b16 %v2481, %v2477
    %v3138 = vpack.c.b16 %v2482, %v2478
    %v3139 = vpack.c.b16 %v2483, %v2479
    %v3140 = vpack.c.b16 %v2484, %v2480
    %v3141 = vpack.c.b16 %v2489, %v2485
    %v3142 = vpack.c.b16 %v2490, %v2486
    %v3143 = vpack.c.b16 %v2491, %v2487
    %v3144 = vpack.c.b16 %v2492, %v2488
    %v3145 = vpack.c.b16 %v2497, %v2493
    %v3146 = vpack.c.b16 %v2498, %v2494
    %v3147 = vpack.c.b16 %v2499, %v2495
    %v3148 = vpack.c.b16 %v2500, %v2496
    %v3149 = vpack.c.b16 %v2505, %v2501
    %v3150 = vpack.c.b16 %v2506, %v2502
    %v3151 = vpack.c.b16 %v2507, %v2503
    %v3152 = vpack.c.b16 %v2508, %v2504
    %v3153 = vpack.c.b16 %v2513, %v2509
    %v3154 = vpack.c.b16 %v2514, %v2510
    %v3155 = vpack.c.b16 %v2515, %v2511
    %v3156 = vpack.c.b16 %v2516, %v2512
    %v3157 = vpack.c.b16 %v2521, %v2517
    %v3158 = vpack.c.b16 %v2522, %v2518
    %v3159 = vpack.c.b16 %v2523, %v2519
    %v3160 = vpack.c.b16 %v2524, %v2520
    %v3161 = vpack.c.b16 %v2529, %v2525
    %v3162 = vpack.c.b16 %v2530, %v2526
    %v3163 = vpack.c.b16 %v2531, %v2527
    %v3164 = vpack.c.b16 %v2532, %v2528
    %v3165 = vpack.c.b16 %v2537, %v2533
    %v3166 = vpack.c.b16 %v2538, %v2534
    %v3167 = vpack.c.b16 %v2539, %v2535
    %v3168 = vpack.c.b16 %v2540, %v2536
    %v3169 = vpack.c.b16 %v2545, %v2541
    %v3170 = vpack.c.b16 %v2546, %v2542
    %v3171 = vpack.c.b16 %v2547, %v2543
    %v3172 = vpack.c.b16 %v2548, %v2544
    %v3173 = vpack.c.b16 %v2553, %v2549
    %v3174 = vpack.c.b16 %v2554, %v2550
    %v3175 = vpack.c.b16 %v2555, %v2551
    %v3176 = vpack.c.b16 %v2556, %v2552
    %v3177 = vpack.c.b16 %v2561, %v2557
    %v3178 = vpack.c.b16 %v2562, %v2558
    %v3179 = vpack.c.b16 %v2563, %v2559
    %v3180 = vpack.c.b16 %v2564, %v2560
    %v3181 = vpack.c.b16 %v2569, %v2565
    %v3182 = vpack.c.b16 %v2570, %v2566
    %v3183 = vpack.c.b16 %v2571, %v2567
    %v3184 = vpack.c.b16 %v2572, %v2568
    %v3185 = vpack.c.b16 %v2577, %v2573
    %v3186 = vpack.c.b16 %v2578, %v2574
    %v3187 = vpack.c.b16 %v2579, %v2575
    %v3188 = vpack.c.b16 %v2580, %v2576
    %v3189 = vpack.c.b16 %v2585, %v2581
    %v3190 = vpack.c.b16 %v2586, %v2582
    %v3191 = vpack.c.b16 %v2587, %v2583
    %v3192 = vpack.c.b16 %v2588, %v2584
    %v3193 = vpack.c.b16 %v2593, %v2589
    %v3194 = vpack.c.b16 %v2594, %v2590
    %v3195 = vpack.c.b16 %v2595, %v2591
    %v3196 = vpack.c.b16 %v2596, %v2592
    %v3197 = vpack.c.b16 %v2601, %v2597
    %v3198 = vpack.c.b16 %v2602, %v2598
    %v3199 = vpack.c.b16 %v2603, %v2599
    %v3200 = vpack.c.b16 %v2604, %v2600
    %v3201 = vpack.c.b16 %v2609, %v2605
    %v3202 = vpack.c.b16 %v2610, %v2606
    %v3203 = vpack.c.b16 %v2611, %v2607
    %v3204 = vpack.c.b16 %v2612, %v2608
    %v3205 = vpack.c.b16 %v2617, %v2613
    %v3206 = vpack.c.b16 %v2618, %v2614
    %v3207 = vpack.c.b16 %v2619, %v2615
    %v3208 = vpack.c.b16 %v2620, %v2616
    %vm3797 = vcmask 392192
    %v3799 = vsel %vm3797, %v246, 0
    %3801 = vmatprep.subr.bf16.mxu0 %v2622
    %3802 = vmatpush1.bf16.msra.mxu0 %v2621
    %3803 = vmatprep.subr.bf16.mxu0 %v2626
    %3804 = vmatpush1.bf16.msra.mxu0 %v2625
    %3805 = vmatprep.subr.bf16.mxu0 %v2630
    %3806 = vmatpush1.bf16.msra.mxu0 %v2629
    %3807 = vmatprep.subr.bf16.mxu0 %v2634
    %3808 = vmatpush1.bf16.msra.mxu0 %v2633
    %3809 = vmatprep.subr.bf16.mxu0 %v2638
    %3810 = vmatpush1.bf16.msra.mxu0 %v2637
    %3811 = vmatprep.subr.bf16.mxu0 %v2642
    %3812 = vmatpush1.bf16.msra.mxu0 %v2641
    %3813 = vmatprep.subr.bf16.mxu0 %v2646
    %3814 = vmatpush1.bf16.msra.mxu0 %v2645
    %3815 = vmatprep.subr.bf16.mxu0 %v2650
    %3816 = vmatpush1.bf16.msra.mxu0 %v2649
    %3817 = vmatprep.subr.bf16.mxu0 %v2654
    %3818 = vmatpush1.bf16.msra.mxu0 %v2653
    %3819 = vmatprep.subr.bf16.mxu0 %v2658
    %3820 = vmatpush1.bf16.msra.mxu0 %v2657
    %3821 = vmatprep.subr.bf16.mxu0 %v2662
    %3822 = vmatpush1.bf16.msra.mxu0 %v2661
    %3823 = vmatprep.subr.bf16.mxu0 %v2666
    %3824 = vmatpush1.bf16.msra.mxu0 %v2665
    %3825 = vmatprep.subr.bf16.mxu0 %v2670
    %3826 = vmatpush1.bf16.msra.mxu0 %v2669
    %3827 = vmatprep.subr.bf16.mxu0 %v2674
    %3828 = vmatpush1.bf16.msra.mxu0 %v2673
    %3829 = vmatprep.subr.bf16.mxu0 %v2678
    %3830 = vmatpush1.bf16.msra.mxu0 %v2677
    %3831 = vmatprep.subr.bf16.mxu0 %v2682
    %3832 = vmatpush1.bf16.msra.mxu0 %v2681
    %3833 = vmatprep.mubr.bf16.mxu0 %v229
    %3834 = vmatmul.mubr.bf16.gmra.mrb[0].mxu0 %v228
    %v3835 = vpop.f32.mrb[0].mxu0
    %v3836 = vadd.f32 %v840, %v3835
    %v3837 = vpop.f32.mrb[0].mxu0
    %v3838 = vadd.f32 %v844, %v3837
    %v3839 = vpop.f32.mrb[0].mxu0
    %v3840 = vpop.f32.mrb[0].mxu0
    %3841 = vdwg.mxu0
    %3842 = vmatprep.subr.bf16.mxu0 %v2686
    %3843 = vmatpush1.bf16.msra.mxu0 %v2685
    %3844 = vmatprep.subr.bf16.mxu0 %v2690
    %3845 = vmatpush1.bf16.msra.mxu0 %v2689
    %3846 = vmatprep.subr.bf16.mxu0 %v2694
    %3847 = vmatpush1.bf16.msra.mxu0 %v2693
    %3848 = vmatprep.subr.bf16.mxu0 %v2698
    %3849 = vmatpush1.bf16.msra.mxu0 %v2697
    %3850 = vmatprep.subr.bf16.mxu0 %v2702
    %3851 = vmatpush1.bf16.msra.mxu0 %v2701
    %3852 = vmatprep.subr.bf16.mxu0 %v2706
    %3853 = vmatpush1.bf16.msra.mxu0 %v2705
    %3854 = vmatprep.subr.bf16.mxu0 %v2710
    %3855 = vmatpush1.bf16.msra.mxu0 %v2709
    %3856 = vmatprep.subr.bf16.mxu0 %v2714
    %3857 = vmatpush1.bf16.msra.mxu0 %v2713
    %3858 = vmatprep.subr.bf16.mxu0 %v2718
    %3859 = vmatpush1.bf16.msra.mxu0 %v2717
    %3860 = vmatprep.subr.bf16.mxu0 %v2722
    %3861 = vmatpush1.bf16.msra.mxu0 %v2721
    %3862 = vmatprep.subr.bf16.mxu0 %v2726
    %3863 = vmatpush1.bf16.msra.mxu0 %v2725
    %3864 = vmatprep.subr.bf16.mxu0 %v2730
    %3865 = vmatpush1.bf16.msra.mxu0 %v2729
    %3866 = vmatprep.subr.bf16.mxu0 %v2734
    %3867 = vmatpush1.bf16.msra.mxu0 %v2733
    %3868 = vmatprep.subr.bf16.mxu0 %v2738
    %3869 = vmatpush1.bf16.msra.mxu0 %v2737
    %3870 = vmatprep.subr.bf16.mxu0 %v2742
    %3871 = vmatpush1.bf16.msra.mxu0 %v2741
    %3872 = vmatprep.subr.bf16.mxu0 %v2746
    %3873 = vmatpush1.bf16.msra.mxu0 %v2745
    %3874 = vmatprep.mubr.bf16.mxu0 %v231
    %3875 = vmatmul.mubr.bf16.gmra.mrb[0].mxu0 %v230
    %v3876 = vpop.f32.mrb[0].mxu0
    %v3877 = vadd.f32 %v3836, %v3876
    %v3878 = vpop.f32.mrb[0].mxu0
    %v3879 = vadd.f32 %v3838, %v3878
    %v3880 = vpop.f32.mrb[0].mxu0
    %v3881 = vpop.f32.mrb[0].mxu0
    %3882 = vdwg.mxu0
    %3883 = vmatprep.subr.bf16.mxu0 %v2750
    %3884 = vmatpush1.bf16.msra.mxu0 %v2749
    %3885 = vmatprep.subr.bf16.mxu0 %v2754
    %3886 = vmatpush1.bf16.msra.mxu0 %v2753
    %3887 = vmatprep.subr.bf16.mxu0 %v2758
    %3888 = vmatpush1.bf16.msra.mxu0 %v2757
    %3889 = vmatprep.subr.bf16.mxu0 %v2762
    %3890 = vmatpush1.bf16.msra.mxu0 %v2761
    %3891 = vmatprep.subr.bf16.mxu0 %v2766
    %3892 = vmatpush1.bf16.msra.mxu0 %v2765
    %3893 = vmatprep.subr.bf16.mxu0 %v2770
    %3894 = vmatpush1.bf16.msra.mxu0 %v2769
    %3895 = vmatprep.subr.bf16.mxu0 %v2774
    %3896 = vmatpush1.bf16.msra.mxu0 %v2773
    %3897 = vmatprep.subr.bf16.mxu0 %v2778
    %3898 = vmatpush1.bf16.msra.mxu0 %v2777
    %3899 = vmatprep.subr.bf16.mxu0 %v2782
    %3900 = vmatpush1.bf16.msra.mxu0 %v2781
    %3901 = vmatprep.subr.bf16.mxu0 %v2786
    %3902 = vmatpush1.bf16.msra.mxu0 %v2785
    %3903 = vmatprep.subr.bf16.mxu0 %v2790
    %3904 = vmatpush1.bf16.msra.mxu0 %v2789
    %3905 = vmatprep.subr.bf16.mxu0 %v2794
    %3906 = vmatpush1.bf16.msra.mxu0 %v2793
    %3907 = vmatprep.subr.bf16.mxu0 %v2798
    %3908 = vmatpush1.bf16.msra.mxu0 %v2797
    %3909 = vmatprep.subr.bf16.mxu0 %v2802
    %3910 = vmatpush1.bf16.msra.mxu0 %v2801
    %3911 = vmatprep.subr.bf16.mxu0 %v2806
    %3912 = vmatpush1.bf16.msra.mxu0 %v2805
    %3913 = vmatprep.subr.bf16.mxu0 %v2810
    %3914 = vmatpush1.bf16.msra.mxu0 %v2809
    %3915 = vmatprep.mubr.bf16.mxu0 %v233
    %3916 = vmatmul.mubr.bf16.gmra.mrb[0].mxu0 %v232
    %v3917 = vpop.f32.mrb[0].mxu0
    %v3918 = vadd.f32 %v3877, %v3917
    %v3919 = vpop.f32.mrb[0].mxu0
    %v3920 = vadd.f32 %v3879, %v3919
    %v3921 = vpop.f32.mrb[0].mxu0
    %v3922 = vpop.f32.mrb[0].mxu0
    %3923 = vdwg.mxu0
    %3924 = vmatprep.subr.bf16.mxu0 %v2814
    %3925 = vmatpush1.bf16.msra.mxu0 %v2813
    %3926 = vmatprep.subr.bf16.mxu0 %v2818
    %3927 = vmatpush1.bf16.msra.mxu0 %v2817
    %3928 = vmatprep.subr.bf16.mxu0 %v2822
    %3929 = vmatpush1.bf16.msra.mxu0 %v2821
    %3930 = vmatprep.subr.bf16.mxu0 %v2826
    %3931 = vmatpush1.bf16.msra.mxu0 %v2825
    %3932 = vmatprep.subr.bf16.mxu0 %v2830
    %3933 = vmatpush1.bf16.msra.mxu0 %v2829
    %3934 = vmatprep.subr.bf16.mxu0 %v2834
    %3935 = vmatpush1.bf16.msra.mxu0 %v2833
    %3936 = vmatprep.subr.bf16.mxu0 %v2838
    %3937 = vmatpush1.bf16.msra.mxu0 %v2837
    %3938 = vmatprep.subr.bf16.mxu0 %v2842
    %3939 = vmatpush1.bf16.msra.mxu0 %v2841
    %3940 = vmatprep.subr.bf16.mxu0 %v2846
    %3941 = vmatpush1.bf16.msra.mxu0 %v2845
    %3942 = vmatprep.subr.bf16.mxu0 %v2850
    %3943 = vmatpush1.bf16.msra.mxu0 %v2849
    %3944 = vmatprep.subr.bf16.mxu0 %v2854
    %3945 = vmatpush1.bf16.msra.mxu0 %v2853
    %3946 = vmatprep.subr.bf16.mxu0 %v2858
    %3947 = vmatpush1.bf16.msra.mxu0 %v2857
    %3948 = vmatprep.subr.bf16.mxu0 %v2862
    %3949 = vmatpush1.bf16.msra.mxu0 %v2861
    %3950 = vmatprep.subr.bf16.mxu0 %v2866
    %3951 = vmatpush1.bf16.msra.mxu0 %v2865
    %3952 = vmatprep.subr.bf16.mxu0 %v2870
    %3953 = vmatpush1.bf16.msra.mxu0 %v2869
    %3954 = vmatprep.subr.bf16.mxu0 %v2874
    %3955 = vmatpush1.bf16.msra.mxu0 %v2873
    %3956 = vmatprep.mubr.bf16.mxu0 %v235
    %3957 = vmatmul.mubr.bf16.gmra.mrb[0].mxu0 %v234
    %v3958 = vpop.f32.mrb[0].mxu0
    %v3959 = vadd.f32 %v3918, %v3958
    %v3960 = vpop.f32.mrb[0].mxu0
    %v3961 = vadd.f32 %v3920, %v3960
    %v3962 = vpop.f32.mrb[0].mxu0
    %v3963 = vpop.f32.mrb[0].mxu0
    %3964 = vdwg.mxu0
    %3965 = vmatprep.subr.bf16.mxu0 %v2878
    %3966 = vmatpush1.bf16.msra.mxu0 %v2877
    %3967 = vmatprep.subr.bf16.mxu0 %v2882
    %3968 = vmatpush1.bf16.msra.mxu0 %v2881
    %3969 = vmatprep.subr.bf16.mxu0 %v2886
    %3970 = vmatpush1.bf16.msra.mxu0 %v2885
    %3971 = vmatprep.subr.bf16.mxu0 %v2890
    %3972 = vmatpush1.bf16.msra.mxu0 %v2889
    %3973 = vmatprep.subr.bf16.mxu0 %v2894
    %3974 = vmatpush1.bf16.msra.mxu0 %v2893
    %3975 = vmatprep.subr.bf16.mxu0 %v2898
    %3976 = vmatpush1.bf16.msra.mxu0 %v2897
    %3977 = vmatprep.subr.bf16.mxu0 %v2902
    %3978 = vmatpush1.bf16.msra.mxu0 %v2901
    %3979 = vmatprep.subr.bf16.mxu0 %v2906
    %3980 = vmatpush1.bf16.msra.mxu0 %v2905
    %3981 = vmatprep.subr.bf16.mxu0 %v2910
    %3982 = vmatpush1.bf16.msra.mxu0 %v2909
    %3983 = vmatprep.subr.bf16.mxu0 %v2914
    %3984 = vmatpush1.bf16.msra.mxu0 %v2913
    %3985 = vmatprep.subr.bf16.mxu0 %v2918
    %3986 = vmatpush1.bf16.msra.mxu0 %v2917
    %3987 = vmatprep.subr.bf16.mxu0 %v2922
    %3988 = vmatpush1.bf16.msra.mxu0 %v2921
    %3989 = vmatprep.subr.bf16.mxu0 %v2926
    %3990 = vmatpush1.bf16.msra.mxu0 %v2925
    %3991 = vmatprep.subr.bf16.mxu0 %v2930
    %3992 = vmatpush1.bf16.msra.mxu0 %v2929
    %3993 = vmatprep.subr.bf16.mxu0 %v2934
    %3994 = vmatpush1.bf16.msra.mxu0 %v2933
    %3995 = vmatprep.subr.bf16.mxu0 %v2938
    %3996 = vmatpush1.bf16.msra.mxu0 %v2937
    %3997 = vmatprep.mubr.bf16.mxu0 %v237
    %3998 = vmatmul.mubr.bf16.gmra.mrb[0].mxu0 %v236
    %v3999 = vpop.f32.mrb[0].mxu0
    %v4000 = vadd.f32 %v3959, %v3999
    %v4001 = vpop.f32.mrb[0].mxu0
    %v4002 = vadd.f32 %v3961, %v4001
    %v4003 = vpop.f32.mrb[0].mxu0
    %v4004 = vpop.f32.mrb[0].mxu0
    %4005 = vdwg.mxu0
    %4006 = vmatprep.subr.bf16.mxu0 %v2942
    %4007 = vmatpush1.bf16.msra.mxu0 %v2941
    %4008 = vmatprep.subr.bf16.mxu0 %v2946
    %4009 = vmatpush1.bf16.msra.mxu0 %v2945
    %4010 = vmatprep.subr.bf16.mxu0 %v2950
    %4011 = vmatpush1.bf16.msra.mxu0 %v2949
    %4012 = vmatprep.subr.bf16.mxu0 %v2954
    %4013 = vmatpush1.bf16.msra.mxu0 %v2953
    %4014 = vmatprep.subr.bf16.mxu0 %v2958
    %4015 = vmatpush1.bf16.msra.mxu0 %v2957
    %4016 = vmatprep.subr.bf16.mxu0 %v2962
    %4017 = vmatpush1.bf16.msra.mxu0 %v2961
    %4018 = vmatprep.subr.bf16.mxu0 %v2966
    %4019 = vmatpush1.bf16.msra.mxu0 %v2965
    %4020 = vmatprep.subr.bf16.mxu0 %v2970
    %4021 = vmatpush1.bf16.msra.mxu0 %v2969
    %4022 = vmatprep.subr.bf16.mxu0 %v2974
    %4023 = vmatpush1.bf16.msra.mxu0 %v2973
    %4024 = vmatprep.subr.bf16.mxu0 %v2978
    %4025 = vmatpush1.bf16.msra.mxu0 %v2977
    %4026 = vmatprep.subr.bf16.mxu0 %v2982
    %4027 = vmatpush1.bf16.msra.mxu0 %v2981
    %4028 = vmatprep.subr.bf16.mxu0 %v2986
    %4029 = vmatpush1.bf16.msra.mxu0 %v2985
    %4030 = vmatprep.subr.bf16.mxu0 %v2990
    %4031 = vmatpush1.bf16.msra.mxu0 %v2989
    %4032 = vmatprep.subr.bf16.mxu0 %v2994
    %4033 = vmatpush1.bf16.msra.mxu0 %v2993
    %4034 = vmatprep.subr.bf16.mxu0 %v2998
    %4035 = vmatpush1.bf16.msra.mxu0 %v2997
    %4036 = vmatprep.subr.bf16.mxu0 %v3002
    %4037 = vmatpush1.bf16.msra.mxu0 %v3001
    %4038 = vmatprep.mubr.bf16.mxu0 %v239
    %4039 = vmatmul.mubr.bf16.gmra.mrb[0].mxu0 %v238
    %v4040 = vpop.f32.mrb[0].mxu0
    %v4041 = vadd.f32 %v4000, %v4040
    %v4042 = vpop.f32.mrb[0].mxu0
    %v4043 = vadd.f32 %v4002, %v4042
    %v4044 = vpop.f32.mrb[0].mxu0
    %v4045 = vpop.f32.mrb[0].mxu0
    %4046 = vdwg.mxu0
    %4047 = vmatprep.subr.bf16.mxu0 %v3006
    %4048 = vmatpush1.bf16.msra.mxu0 %v3005
    %4049 = vmatprep.subr.bf16.mxu0 %v3010
    %4050 = vmatpush1.bf16.msra.mxu0 %v3009
    %4051 = vmatprep.subr.bf16.mxu0 %v3014
    %4052 = vmatpush1.bf16.msra.mxu0 %v3013
    %4053 = vmatprep.subr.bf16.mxu0 %v3018
    %4054 = vmatpush1.bf16.msra.mxu0 %v3017
    %4055 = vmatprep.subr.bf16.mxu0 %v3022
    %4056 = vmatpush1.bf16.msra.mxu0 %v3021
    %4057 = vmatprep.subr.bf16.mxu0 %v3026
    %4058 = vmatpush1.bf16.msra.mxu0 %v3025
    %4059 = vmatprep.subr.bf16.mxu0 %v3030
    %4060 = vmatpush1.bf16.msra.mxu0 %v3029
    %4061 = vmatprep.subr.bf16.mxu0 %v3034
    %4062 = vmatpush1.bf16.msra.mxu0 %v3033
    %4063 = vmatprep.subr.bf16.mxu0 %v3038
    %4064 = vmatpush1.bf16.msra.mxu0 %v3037
    %4065 = vmatprep.subr.bf16.mxu0 %v3042
    %4066 = vmatpush1.bf16.msra.mxu0 %v3041
    %4067 = vmatprep.subr.bf16.mxu0 %v3046
    %4068 = vmatpush1.bf16.msra.mxu0 %v3045
    %4069 = vmatprep.subr.bf16.mxu0 %v3050
    %4070 = vmatpush1.bf16.msra.mxu0 %v3049
    %4071 = vmatprep.subr.bf16.mxu0 %v3054
    %4072 = vmatpush1.bf16.msra.mxu0 %v3053
    %4073 = vmatprep.subr.bf16.mxu0 %v3058
    %4074 = vmatpush1.bf16.msra.mxu0 %v3057
    %4075 = vmatprep.subr.bf16.mxu0 %v3062
    %4076 = vmatpush1.bf16.msra.mxu0 %v3061
    %4077 = vmatprep.subr.bf16.mxu0 %v3066
    %4078 = vmatpush1.bf16.msra.mxu0 %v3065
    %4079 = vmatprep.mubr.bf16.mxu0 %v241
    %4080 = vmatmul.mubr.bf16.gmra.mrb[0].mxu0 %v240
    %v4081 = vpop.f32.mrb[0].mxu0
    %v4082 = vadd.f32 %v4041, %v4081
    %v4083 = vpop.f32.mrb[0].mxu0
    %v4084 = vadd.f32 %v4043, %v4083
    %v4085 = vpop.f32.mrb[0].mxu0
    %v4086 = vpop.f32.mrb[0].mxu0
    %4087 = vdwg.mxu0
    %4088 = vmatprep.subr.bf16.mxu0 %v3070
    %4089 = vmatpush1.bf16.msra.mxu0 %v3069
    %4090 = vmatprep.subr.bf16.mxu0 %v3074
    %4091 = vmatpush1.bf16.msra.mxu0 %v3073
    %4092 = vmatprep.subr.bf16.mxu0 %v3078
    %4093 = vmatpush1.bf16.msra.mxu0 %v3077
    %4094 = vmatprep.subr.bf16.mxu0 %v3082
    %4095 = vmatpush1.bf16.msra.mxu0 %v3081
    %4096 = vmatprep.subr.bf16.mxu0 %v3086
    %4097 = vmatpush1.bf16.msra.mxu0 %v3085
    %4098 = vmatprep.subr.bf16.mxu0 %v3090
    %4099 = vmatpush1.bf16.msra.mxu0 %v3089
    %4100 = vmatprep.subr.bf16.mxu0 %v3094
    %4101 = vmatpush1.bf16.msra.mxu0 %v3093
    %4102 = vmatprep.subr.bf16.mxu0 %v3098
    %4103 = vmatpush1.bf16.msra.mxu0 %v3097
    %4104 = vmatprep.subr.bf16.mxu0 %v3102
    %4105 = vmatpush1.bf16.msra.mxu0 %v3101
    %4106 = vmatprep.subr.bf16.mxu0 %v3106
    %4107 = vmatpush1.bf16.msra.mxu0 %v3105
    %4108 = vmatprep.subr.bf16.mxu0 %v3110
    %4109 = vmatpush1.bf16.msra.mxu0 %v3109
    %4110 = vmatprep.subr.bf16.mxu0 %v3114
    %4111 = vmatpush1.bf16.msra.mxu0 %v3113
    %4112 = vmatprep.subr.bf16.mxu0 %v3118
    %4113 = vmatpush1.bf16.msra.mxu0 %v3117
    %4114 = vmatprep.subr.bf16.mxu0 %v3122
    %4115 = vmatpush1.bf16.msra.mxu0 %v3121
    %4116 = vmatprep.subr.bf16.mxu0 %v3126
    %4117 = vmatpush1.bf16.msra.mxu0 %v3125
    %4118 = vmatprep.subr.bf16.mxu0 %v3130
    %4119 = vmatpush1.bf16.msra.mxu0 %v3129
    %4120 = vmatprep.mubr.bf16.mxu0 %v243
    %4121 = vmatmul.mubr.bf16.gmra.mrb[0].mxu0 %v242
    %v4122 = vpop.f32.mrb[0].mxu0
    %v4123 = vadd.f32 %v4082, %v4122
    %v4124 = vpop.f32.mrb[0].mxu0
    %v4125 = vadd.f32 %v4084, %v4124
    %v4126 = vpop.f32.mrb[0].mxu0
    %v4127 = vpop.f32.mrb[0].mxu0
    %4128 = vdwg.mxu0
    %4129 = vmatprep.subr.bf16.mxu0 %v3134
    %4130 = vmatpush1.bf16.msra.mxu0 %v3133
    %4131 = vmatprep.subr.bf16.mxu0 %v3138
    %4132 = vmatpush1.bf16.msra.mxu0 %v3137
    %4133 = vmatprep.subr.bf16.mxu0 %v3142
    %4134 = vmatpush1.bf16.msra.mxu0 %v3141
    %4135 = vmatprep.subr.bf16.mxu0 %v3146
    %4136 = vmatpush1.bf16.msra.mxu0 %v3145
    %4137 = vmatprep.subr.bf16.mxu0 %v3150
    %4138 = vmatpush1.bf16.msra.mxu0 %v3149
    %4139 = vmatprep.subr.bf16.mxu0 %v3154
    %4140 = vmatpush1.bf16.msra.mxu0 %v3153
    %4141 = vmatprep.subr.bf16.mxu0 %v3158
    %4142 = vmatpush1.bf16.msra.mxu0 %v3157
    %4143 = vmatprep.subr.bf16.mxu0 %v3162
    %4144 = vmatpush1.bf16.msra.mxu0 %v3161
    %4145 = vmatprep.subr.bf16.mxu0 %v3166
    %4146 = vmatpush1.bf16.msra.mxu0 %v3165
    %4147 = vmatprep.subr.bf16.mxu0 %v3170
    %4148 = vmatpush1.bf16.msra.mxu0 %v3169
    %4149 = vmatprep.subr.bf16.mxu0 %v3174
    %4150 = vmatpush1.bf16.msra.mxu0 %v3173
    %4151 = vmatprep.subr.bf16.mxu0 %v3178
    %4152 = vmatpush1.bf16.msra.mxu0 %v3177
    %4153 = vmatprep.subr.bf16.mxu0 %v3182
    %4154 = vmatpush1.bf16.msra.mxu0 %v3181
    %4155 = vmatprep.subr.bf16.mxu0 %v3186
    %4156 = vmatpush1.bf16.msra.mxu0 %v3185
    %4157 = vmatprep.subr.bf16.mxu0 %v3190
    %4158 = vmatpush1.bf16.msra.mxu0 %v3189
    %4159 = vmatprep.subr.bf16.mxu0 %v3194
    %4160 = vmatpush1.bf16.msra.mxu0 %v3193
    %4161 = vmatprep.mubr.bf16.mxu0 %v245
    %4162 = vmatmul.mubr.bf16.gmra.mrb[0].mxu0 %v244
    %v4163 = vpop.f32.mrb[0].mxu0
    %v4164 = vadd.f32 %v4123, %v4163
    %v4165 = vpop.f32.mrb[0].mxu0
    %v4166 = vadd.f32 %v4125, %v4165
    %v4167 = vpop.f32.mrb[0].mxu0
    %v4168 = vpop.f32.mrb[0].mxu0
    %4169 = vdwg.mxu0
    %4170 = vmatprep.subr.bf16.mxu0 %v3198
    %4171 = vmatpush1.bf16.msra.mxu0 %v3197
    %4172 = vmatprep.subr.bf16.mxu0 %v3202
    %4173 = vmatpush1.bf16.msra.mxu0 %v3201
    %4174 = vmatprep.subr.bf16.mxu0 %v3206
    %4175 = vmatpush1.bf16.msra.mxu0 %v3205
    %4176 = vmatprep.subr.bf16.mxu0 0
    %4177 = vmatpush1.bf16.msra.mxu0 0
    %4178 = vmatprep.subr.bf16.mxu0 0
    %4179 = vmatpush1.bf16.msra.mxu0 0
    %4180 = vmatprep.subr.bf16.mxu0 0
    %4181 = vmatpush1.bf16.msra.mxu0 0
    %4182 = vmatprep.subr.bf16.mxu0 0
    %4183 = vmatpush1.bf16.msra.mxu0 0
    %4184 = vmatprep.subr.bf16.mxu0 0
    %4185 = vmatpush1.bf16.msra.mxu0 0
    %4186 = vmatprep.subr.bf16.mxu0 0
    %4187 = vmatpush1.bf16.msra.mxu0 0
    %4188 = vmatprep.subr.bf16.mxu0 0
    %4189 = vmatpush1.bf16.msra.mxu0 0
    %4190 = vmatprep.subr.bf16.mxu0 0
    %4191 = vmatpush1.bf16.msra.mxu0 0
    %4192 = vmatprep.subr.bf16.mxu0 0
    %4193 = vmatpush1.bf16.msra.mxu0 0
    %4194 = vmatprep.subr.bf16.mxu0 0
    %4195 = vmatpush1.bf16.msra.mxu0 0
    %4196 = vmatprep.subr.bf16.mxu0 0
    %4197 = vmatpush1.bf16.msra.mxu0 0
    %4198 = vmatprep.subr.bf16.mxu0 0
    %4199 = vmatpush1.bf16.msra.mxu0 0
    %4200 = vmatprep.subr.bf16.mxu0 0
    %4201 = vmatpush1.bf16.msra.mxu0 0
    %4202 = vmatprep.mubr.bf16.mxu0 0
    %4203 = vmatmul.mubr.bf16.gmra.mrb[0].mxu0 %v3799
    %v4204 = vpop.f32.mrb[0].mxu0
    %v4205 = vadd.f32 %v4164, %v4204
    %v4206 = vpop.f32.mrb[0].mxu0
    %v4207 = vadd.f32 %v4166, %v4206
    %v4208 = vpop.f32.mrb[0].mxu0
    %v4209 = vpop.f32.mrb[0].mxu0
    %4210 = vdwg.mxu0
    %4211 = vmatprep.subr.bf16.mxu0 %v2624
    %4212 = vmatpush1.bf16.msra.mxu0 %v2623
    %4213 = vmatprep.subr.bf16.mxu0 %v2628
    %4214 = vmatpush1.bf16.msra.mxu0 %v2627
    %4215 = vmatprep.subr.bf16.mxu0 %v2632
    %4216 = vmatpush1.bf16.msra.mxu0 %v2631
    %4217 = vmatprep.subr.bf16.mxu0 %v2636
    %4218 = vmatpush1.bf16.msra.mxu0 %v2635
    %4219 = vmatprep.subr.bf16.mxu0 %v2640
    %4220 = vmatpush1.bf16.msra.mxu0 %v2639
    %4221 = vmatprep.subr.bf16.mxu0 %v2644
    %4222 = vmatpush1.bf16.msra.mxu0 %v2643
    %4223 = vmatprep.subr.bf16.mxu0 %v2648
    %4224 = vmatpush1.bf16.msra.mxu0 %v2647
    %4225 = vmatprep.subr.bf16.mxu0 %v2652
    %4226 = vmatpush1.bf16.msra.mxu0 %v2651
    %4227 = vmatprep.subr.bf16.mxu0 %v2656
    %4228 = vmatpush1.bf16.msra.mxu0 %v2655
    %4229 = vmatprep.subr.bf16.mxu0 %v2660
    %4230 = vmatpush1.bf16.msra.mxu0 %v2659
    %4231 = vmatprep.subr.bf16.mxu0 %v2664
    %4232 = vmatpush1.bf16.msra.mxu0 %v2663
    %4233 = vmatprep.subr.bf16.mxu0 %v2668
    %4234 = vmatpush1.bf16.msra.mxu0 %v2667
    %4235 = vmatprep.subr.bf16.mxu0 %v2672
    %4236 = vmatpush1.bf16.msra.mxu0 %v2671
    %4237 = vmatprep.subr.bf16.mxu0 %v2676
    %4238 = vmatpush1.bf16.msra.mxu0 %v2675
    %4239 = vmatprep.subr.bf16.mxu0 %v2680
    %4240 = vmatpush1.bf16.msra.mxu0 %v2679
    %4241 = vmatprep.subr.bf16.mxu0 %v2684
    %4242 = vmatpush1.bf16.msra.mxu0 %v2683
    %4243 = vmatprep.mubr.bf16.mxu0 %v229
    %4244 = vmatmul.mubr.bf16.gmra.mrb[0].mxu0 %v228
    %v4245 = vpop.f32.mrb[0].mxu0
    %v4246 = vadd.f32 %v848, %v4245
    %v4247 = vpop.f32.mrb[0].mxu0
    %v4248 = vadd.f32 %v852, %v4247
    %v4249 = vpop.f32.mrb[0].mxu0
    %v4250 = vpop.f32.mrb[0].mxu0
    %4251 = vdwg.mxu0
    %4252 = vmatprep.subr.bf16.mxu0 %v2688
    %4253 = vmatpush1.bf16.msra.mxu0 %v2687
    %4254 = vmatprep.subr.bf16.mxu0 %v2692
    %4255 = vmatpush1.bf16.msra.mxu0 %v2691
    %4256 = vmatprep.subr.bf16.mxu0 %v2696
    %4257 = vmatpush1.bf16.msra.mxu0 %v2695
    %4258 = vmatprep.subr.bf16.mxu0 %v2700
    %4259 = vmatpush1.bf16.msra.mxu0 %v2699
    %4260 = vmatprep.subr.bf16.mxu0 %v2704
    %4261 = vmatpush1.bf16.msra.mxu0 %v2703
    %4262 = vmatprep.subr.bf16.mxu0 %v2708
    %4263 = vmatpush1.bf16.msra.mxu0 %v2707
    %4264 = vmatprep.subr.bf16.mxu0 %v2712
    %4265 = vmatpush1.bf16.msra.mxu0 %v2711
    %4266 = vmatprep.subr.bf16.mxu0 %v2716
    %4267 = vmatpush1.bf16.msra.mxu0 %v2715
    %4268 = vmatprep.subr.bf16.mxu0 %v2720
    %4269 = vmatpush1.bf16.msra.mxu0 %v2719
    %4270 = vmatprep.subr.bf16.mxu0 %v2724
    %4271 = vmatpush1.bf16.msra.mxu0 %v2723
    %4272 = vmatprep.subr.bf16.mxu0 %v2728
    %4273 = vmatpush1.bf16.msra.mxu0 %v2727
    %4274 = vmatprep.subr.bf16.mxu0 %v2732
    %4275 = vmatpush1.bf16.msra.mxu0 %v2731
    %4276 = vmatprep.subr.bf16.mxu0 %v2736
    %4277 = vmatpush1.bf16.msra.mxu0 %v2735
    %4278 = vmatprep.subr.bf16.mxu0 %v2740
    %4279 = vmatpush1.bf16.msra.mxu0 %v2739
    %4280 = vmatprep.subr.bf16.mxu0 %v2744
    %4281 = vmatpush1.bf16.msra.mxu0 %v2743
    %4282 = vmatprep.subr.bf16.mxu0 %v2748
    %4283 = vmatpush1.bf16.msra.mxu0 %v2747
    %4284 = vmatprep.mubr.bf16.mxu0 %v231
    %4285 = vmatmul.mubr.bf16.gmra.mrb[0].mxu0 %v230
    %v4286 = vpop.f32.mrb[0].mxu0
    %v4287 = vadd.f32 %v4246, %v4286
    %v4288 = vpop.f32.mrb[0].mxu0
    %v4289 = vadd.f32 %v4248, %v4288
    %v4290 = vpop.f32.mrb[0].mxu0
    %v4291 = vpop.f32.mrb[0].mxu0
    %4292 = vdwg.mxu0
    %4293 = vmatprep.subr.bf16.mxu0 %v2752
    %4294 = vmatpush1.bf16.msra.mxu0 %v2751
    %4295 = vmatprep.subr.bf16.mxu0 %v2756
    %4296 = vmatpush1.bf16.msra.mxu0 %v2755
    %4297 = vmatprep.subr.bf16.mxu0 %v2760
    %4298 = vmatpush1.bf16.msra.mxu0 %v2759
    %4299 = vmatprep.subr.bf16.mxu0 %v2764
    %4300 = vmatpush1.bf16.msra.mxu0 %v2763
    %4301 = vmatprep.subr.bf16.mxu0 %v2768
    %4302 = vmatpush1.bf16.msra.mxu0 %v2767
    %4303 = vmatprep.subr.bf16.mxu0 %v2772
    %4304 = vmatpush1.bf16.msra.mxu0 %v2771
    %4305 = vmatprep.subr.bf16.mxu0 %v2776
    %4306 = vmatpush1.bf16.msra.mxu0 %v2775
    %4307 = vmatprep.subr.bf16.mxu0 %v2780
    %4308 = vmatpush1.bf16.msra.mxu0 %v2779
    %4309 = vmatprep.subr.bf16.mxu0 %v2784
    %4310 = vmatpush1.bf16.msra.mxu0 %v2783
    %4311 = vmatprep.subr.bf16.mxu0 %v2788
    %4312 = vmatpush1.bf16.msra.mxu0 %v2787
    %4313 = vmatprep.subr.bf16.mxu0 %v2792
    %4314 = vmatpush1.bf16.msra.mxu0 %v2791
    %4315 = vmatprep.subr.bf16.mxu0 %v2796
    %4316 = vmatpush1.bf16.msra.mxu0 %v2795
    %4317 = vmatprep.subr.bf16.mxu0 %v2800
    %4318 = vmatpush1.bf16.msra.mxu0 %v2799
    %4319 = vmatprep.subr.bf16.mxu0 %v2804
    %4320 = vmatpush1.bf16.msra.mxu0 %v2803
    %4321 = vmatprep.subr.bf16.mxu0 %v2808
    %4322 = vmatpush1.bf16.msra.mxu0 %v2807
    %4323 = vmatprep.subr.bf16.mxu0 %v2812
    %4324 = vmatpush1.bf16.msra.mxu0 %v2811
    %4325 = vmatprep.mubr.bf16.mxu0 %v233
    %4326 = vmatmul.mubr.bf16.gmra.mrb[0].mxu0 %v232
    %v4327 = vpop.f32.mrb[0].mxu0
    %v4328 = vadd.f32 %v4287, %v4327
    %v4329 = vpop.f32.mrb[0].mxu0
    %v4330 = vadd.f32 %v4289, %v4329
    %v4331 = vpop.f32.mrb[0].mxu0
    %v4332 = vpop.f32.mrb[0].mxu0
    %4333 = vdwg.mxu0
    %4334 = vmatprep.subr.bf16.mxu0 %v2816
    %4335 = vmatpush1.bf16.msra.mxu0 %v2815
    %4336 = vmatprep.subr.bf16.mxu0 %v2820
    %4337 = vmatpush1.bf16.msra.mxu0 %v2819
    %4338 = vmatprep.subr.bf16.mxu0 %v2824
    %4339 = vmatpush1.bf16.msra.mxu0 %v2823
    %4340 = vmatprep.subr.bf16.mxu0 %v2828
    %4341 = vmatpush1.bf16.msra.mxu0 %v2827
    %4342 = vmatprep.subr.bf16.mxu0 %v2832
    %4343 = vmatpush1.bf16.msra.mxu0 %v2831
    %4344 = vmatprep.subr.bf16.mxu0 %v2836
    %4345 = vmatpush1.bf16.msra.mxu0 %v2835
    %4346 = vmatprep.subr.bf16.mxu0 %v2840
    %4347 = vmatpush1.bf16.msra.mxu0 %v2839
    %4348 = vmatprep.subr.bf16.mxu0 %v2844
    %4349 = vmatpush1.bf16.msra.mxu0 %v2843
    %4350 = vmatprep.subr.bf16.mxu0 %v2848
    %4351 = vmatpush1.bf16.msra.mxu0 %v2847
    %4352 = vmatprep.subr.bf16.mxu0 %v2852
    %4353 = vmatpush1.bf16.msra.mxu0 %v2851
    %4354 = vmatprep.subr.bf16.mxu0 %v2856
    %4355 = vmatpush1.bf16.msra.mxu0 %v2855
    %4356 = vmatprep.subr.bf16.mxu0 %v2860
    %4357 = vmatpush1.bf16.msra.mxu0 %v2859
    %4358 = vmatprep.subr.bf16.mxu0 %v2864
    %4359 = vmatpush1.bf16.msra.mxu0 %v2863
    %4360 = vmatprep.subr.bf16.mxu0 %v2868
    %4361 = vmatpush1.bf16.msra.mxu0 %v2867
    %4362 = vmatprep.subr.bf16.mxu0 %v2872
    %4363 = vmatpush1.bf16.msra.mxu0 %v2871
    %4364 = vmatprep.subr.bf16.mxu0 %v2876
    %4365 = vmatpush1.bf16.msra.mxu0 %v2875
    %4366 = vmatprep.mubr.bf16.mxu0 %v235
    %4367 = vmatmul.mubr.bf16.gmra.mrb[0].mxu0 %v234
    %v4368 = vpop.f32.mrb[0].mxu0
    %v4369 = vadd.f32 %v4328, %v4368
    %v4370 = vpop.f32.mrb[0].mxu0
    %v4371 = vadd.f32 %v4330, %v4370
    %v4372 = vpop.f32.mrb[0].mxu0
    %v4373 = vpop.f32.mrb[0].mxu0
    %4374 = vdwg.mxu0
    %4375 = vmatprep.subr.bf16.mxu0 %v2880
    %4376 = vmatpush1.bf16.msra.mxu0 %v2879
    %4377 = vmatprep.subr.bf16.mxu0 %v2884
    %4378 = vmatpush1.bf16.msra.mxu0 %v2883
    %4379 = vmatprep.subr.bf16.mxu0 %v2888
    %4380 = vmatpush1.bf16.msra.mxu0 %v2887
    %4381 = vmatprep.subr.bf16.mxu0 %v2892
    %4382 = vmatpush1.bf16.msra.mxu0 %v2891
    %4383 = vmatprep.subr.bf16.mxu0 %v2896
    %4384 = vmatpush1.bf16.msra.mxu0 %v2895
    %4385 = vmatprep.subr.bf16.mxu0 %v2900
    %4386 = vmatpush1.bf16.msra.mxu0 %v2899
    %4387 = vmatprep.subr.bf16.mxu0 %v2904
    %4388 = vmatpush1.bf16.msra.mxu0 %v2903
    %4389 = vmatprep.subr.bf16.mxu0 %v2908
    %4390 = vmatpush1.bf16.msra.mxu0 %v2907
    %4391 = vmatprep.subr.bf16.mxu0 %v2912
    %4392 = vmatpush1.bf16.msra.mxu0 %v2911
    %4393 = vmatprep.subr.bf16.mxu0 %v2916
    %4394 = vmatpush1.bf16.msra.mxu0 %v2915
    %4395 = vmatprep.subr.bf16.mxu0 %v2920
    %4396 = vmatpush1.bf16.msra.mxu0 %v2919
    %4397 = vmatprep.subr.bf16.mxu0 %v2924
    %4398 = vmatpush1.bf16.msra.mxu0 %v2923
    %4399 = vmatprep.subr.bf16.mxu0 %v2928
    %4400 = vmatpush1.bf16.msra.mxu0 %v2927
    %4401 = vmatprep.subr.bf16.mxu0 %v2932
    %4402 = vmatpush1.bf16.msra.mxu0 %v2931
    %4403 = vmatprep.subr.bf16.mxu0 %v2936
    %4404 = vmatpush1.bf16.msra.mxu0 %v2935
    %4405 = vmatprep.subr.bf16.mxu0 %v2940
    %4406 = vmatpush1.bf16.msra.mxu0 %v2939
    %4407 = vmatprep.mubr.bf16.mxu0 %v237
    %4408 = vmatmul.mubr.bf16.gmra.mrb[0].mxu0 %v236
    %v4409 = vpop.f32.mrb[0].mxu0
    %v4410 = vadd.f32 %v4369, %v4409
    %v4411 = vpop.f32.mrb[0].mxu0
    %v4412 = vadd.f32 %v4371, %v4411
    %v4413 = vpop.f32.mrb[0].mxu0
    %v4414 = vpop.f32.mrb[0].mxu0
    %4415 = vdwg.mxu0
    %4416 = vmatprep.subr.bf16.mxu0 %v2944
    %4417 = vmatpush1.bf16.msra.mxu0 %v2943
    %4418 = vmatprep.subr.bf16.mxu0 %v2948
    %4419 = vmatpush1.bf16.msra.mxu0 %v2947
    %4420 = vmatprep.subr.bf16.mxu0 %v2952
    %4421 = vmatpush1.bf16.msra.mxu0 %v2951
    %4422 = vmatprep.subr.bf16.mxu0 %v2956
    %4423 = vmatpush1.bf16.msra.mxu0 %v2955
    %4424 = vmatprep.subr.bf16.mxu0 %v2960
    %4425 = vmatpush1.bf16.msra.mxu0 %v2959
    %4426 = vmatprep.subr.bf16.mxu0 %v2964
    %4427 = vmatpush1.bf16.msra.mxu0 %v2963
    %4428 = vmatprep.subr.bf16.mxu0 %v2968
    %4429 = vmatpush1.bf16.msra.mxu0 %v2967
    %4430 = vmatprep.subr.bf16.mxu0 %v2972
    %4431 = vmatpush1.bf16.msra.mxu0 %v2971
    %4432 = vmatprep.subr.bf16.mxu0 %v2976
    %4433 = vmatpush1.bf16.msra.mxu0 %v2975
    %4434 = vmatprep.subr.bf16.mxu0 %v2980
    %4435 = vmatpush1.bf16.msra.mxu0 %v2979
    %4436 = vmatprep.subr.bf16.mxu0 %v2984
    %4437 = vmatpush1.bf16.msra.mxu0 %v2983
    %4438 = vmatprep.subr.bf16.mxu0 %v2988
    %4439 = vmatpush1.bf16.msra.mxu0 %v2987
    %4440 = vmatprep.subr.bf16.mxu0 %v2992
    %4441 = vmatpush1.bf16.msra.mxu0 %v2991
    %4442 = vmatprep.subr.bf16.mxu0 %v2996
    %4443 = vmatpush1.bf16.msra.mxu0 %v2995
    %4444 = vmatprep.subr.bf16.mxu0 %v3000
    %4445 = vmatpush1.bf16.msra.mxu0 %v2999
    %4446 = vmatprep.subr.bf16.mxu0 %v3004
    %4447 = vmatpush1.bf16.msra.mxu0 %v3003
    %4448 = vmatprep.mubr.bf16.mxu0 %v239
    %4449 = vmatmul.mubr.bf16.gmra.mrb[0].mxu0 %v238
    %v4450 = vpop.f32.mrb[0].mxu0
    %v4451 = vadd.f32 %v4410, %v4450
    %v4452 = vpop.f32.mrb[0].mxu0
    %v4453 = vadd.f32 %v4412, %v4452
    %v4454 = vpop.f32.mrb[0].mxu0
    %v4455 = vpop.f32.mrb[0].mxu0
    %4456 = vdwg.mxu0
    %4457 = vmatprep.subr.bf16.mxu0 %v3008
    %4458 = vmatpush1.bf16.msra.mxu0 %v3007
    %4459 = vmatprep.subr.bf16.mxu0 %v3012
    %4460 = vmatpush1.bf16.msra.mxu0 %v3011
    %4461 = vmatprep.subr.bf16.mxu0 %v3016
    %4462 = vmatpush1.bf16.msra.mxu0 %v3015
    %4463 = vmatprep.subr.bf16.mxu0 %v3020
    %4464 = vmatpush1.bf16.msra.mxu0 %v3019
    %4465 = vmatprep.subr.bf16.mxu0 %v3024
    %4466 = vmatpush1.bf16.msra.mxu0 %v3023
    %4467 = vmatprep.subr.bf16.mxu0 %v3028
    %4468 = vmatpush1.bf16.msra.mxu0 %v3027
    %4469 = vmatprep.subr.bf16.mxu0 %v3032
    %4470 = vmatpush1.bf16.msra.mxu0 %v3031
    %4471 = vmatprep.subr.bf16.mxu0 %v3036
    %4472 = vmatpush1.bf16.msra.mxu0 %v3035
    %4473 = vmatprep.subr.bf16.mxu0 %v3040
    %4474 = vmatpush1.bf16.msra.mxu0 %v3039
    %4475 = vmatprep.subr.bf16.mxu0 %v3044
    %4476 = vmatpush1.bf16.msra.mxu0 %v3043
    %4477 = vmatprep.subr.bf16.mxu0 %v3048
    %4478 = vmatpush1.bf16.msra.mxu0 %v3047
    %4479 = vmatprep.subr.bf16.mxu0 %v3052
    %4480 = vmatpush1.bf16.msra.mxu0 %v3051
    %4481 = vmatprep.subr.bf16.mxu0 %v3056
    %4482 = vmatpush1.bf16.msra.mxu0 %v3055
    %4483 = vmatprep.subr.bf16.mxu0 %v3060
    %4484 = vmatpush1.bf16.msra.mxu0 %v3059
    %4485 = vmatprep.subr.bf16.mxu0 %v3064
    %4486 = vmatpush1.bf16.msra.mxu0 %v3063
    %4487 = vmatprep.subr.bf16.mxu0 %v3068
    %4488 = vmatpush1.bf16.msra.mxu0 %v3067
    %4489 = vmatprep.mubr.bf16.mxu0 %v241
    %4490 = vmatmul.mubr.bf16.gmra.mrb[0].mxu0 %v240
    %v4491 = vpop.f32.mrb[0].mxu0
    %v4492 = vadd.f32 %v4451, %v4491
    %v4493 = vpop.f32.mrb[0].mxu0
    %v4494 = vadd.f32 %v4453, %v4493
    %v4495 = vpop.f32.mrb[0].mxu0
    %v4496 = vpop.f32.mrb[0].mxu0
    %4497 = vdwg.mxu0
    %4498 = vmatprep.subr.bf16.mxu0 %v3072
    %4499 = vmatpush1.bf16.msra.mxu0 %v3071
    %4500 = vmatprep.subr.bf16.mxu0 %v3076
    %4501 = vmatpush1.bf16.msra.mxu0 %v3075
    %4502 = vmatprep.subr.bf16.mxu0 %v3080
    %4503 = vmatpush1.bf16.msra.mxu0 %v3079
    %4504 = vmatprep.subr.bf16.mxu0 %v3084
    %4505 = vmatpush1.bf16.msra.mxu0 %v3083
    %4506 = vmatprep.subr.bf16.mxu0 %v3088
    %4507 = vmatpush1.bf16.msra.mxu0 %v3087
    %4508 = vmatprep.subr.bf16.mxu0 %v3092
    %4509 = vmatpush1.bf16.msra.mxu0 %v3091
    %4510 = vmatprep.subr.bf16.mxu0 %v3096
    %4511 = vmatpush1.bf16.msra.mxu0 %v3095
    %4512 = vmatprep.subr.bf16.mxu0 %v3100
    %4513 = vmatpush1.bf16.msra.mxu0 %v3099
    %4514 = vmatprep.subr.bf16.mxu0 %v3104
    %4515 = vmatpush1.bf16.msra.mxu0 %v3103
    %4516 = vmatprep.subr.bf16.mxu0 %v3108
    %4517 = vmatpush1.bf16.msra.mxu0 %v3107
    %4518 = vmatprep.subr.bf16.mxu0 %v3112
    %4519 = vmatpush1.bf16.msra.mxu0 %v3111
    %4520 = vmatprep.subr.bf16.mxu0 %v3116
    %4521 = vmatpush1.bf16.msra.mxu0 %v3115
    %4522 = vmatprep.subr.bf16.mxu0 %v3120
    %4523 = vmatpush1.bf16.msra.mxu0 %v3119
    %4524 = vmatprep.subr.bf16.mxu0 %v3124
    %4525 = vmatpush1.bf16.msra.mxu0 %v3123
    %4526 = vmatprep.subr.bf16.mxu0 %v3128
    %4527 = vmatpush1.bf16.msra.mxu0 %v3127
    %4528 = vmatprep.subr.bf16.mxu0 %v3132
    %4529 = vmatpush1.bf16.msra.mxu0 %v3131
    %4530 = vmatprep.mubr.bf16.mxu0 %v243
    %4531 = vmatmul.mubr.bf16.gmra.mrb[0].mxu0 %v242
    %v4532 = vpop.f32.mrb[0].mxu0
    %v4533 = vadd.f32 %v4492, %v4532
    %v4534 = vpop.f32.mrb[0].mxu0
    %v4535 = vadd.f32 %v4494, %v4534
    %v4536 = vpop.f32.mrb[0].mxu0
    %v4537 = vpop.f32.mrb[0].mxu0
    %4538 = vdwg.mxu0
    %4539 = vmatprep.subr.bf16.mxu0 %v3136
    %4540 = vmatpush1.bf16.msra.mxu0 %v3135
    %4541 = vmatprep.subr.bf16.mxu0 %v3140
    %4542 = vmatpush1.bf16.msra.mxu0 %v3139
    %4543 = vmatprep.subr.bf16.mxu0 %v3144
    %4544 = vmatpush1.bf16.msra.mxu0 %v3143
    %4545 = vmatprep.subr.bf16.mxu0 %v3148
    %4546 = vmatpush1.bf16.msra.mxu0 %v3147
    %4547 = vmatprep.subr.bf16.mxu0 %v3152
    %4548 = vmatpush1.bf16.msra.mxu0 %v3151
    %4549 = vmatprep.subr.bf16.mxu0 %v3156
    %4550 = vmatpush1.bf16.msra.mxu0 %v3155
    %4551 = vmatprep.subr.bf16.mxu0 %v3160
    %4552 = vmatpush1.bf16.msra.mxu0 %v3159
    %4553 = vmatprep.subr.bf16.mxu0 %v3164
    %4554 = vmatpush1.bf16.msra.mxu0 %v3163
    %4555 = vmatprep.subr.bf16.mxu0 %v3168
    %4556 = vmatpush1.bf16.msra.mxu0 %v3167
    %4557 = vmatprep.subr.bf16.mxu0 %v3172
    %4558 = vmatpush1.bf16.msra.mxu0 %v3171
    %4559 = vmatprep.subr.bf16.mxu0 %v3176
    %4560 = vmatpush1.bf16.msra.mxu0 %v3175
    %4561 = vmatprep.subr.bf16.mxu0 %v3180
    %4562 = vmatpush1.bf16.msra.mxu0 %v3179
    %4563 = vmatprep.subr.bf16.mxu0 %v3184
    %4564 = vmatpush1.bf16.msra.mxu0 %v3183
    %4565 = vmatprep.subr.bf16.mxu0 %v3188
    %4566 = vmatpush1.bf16.msra.mxu0 %v3187
    %4567 = vmatprep.subr.bf16.mxu0 %v3192
    %4568 = vmatpush1.bf16.msra.mxu0 %v3191
    %4569 = vmatprep.subr.bf16.mxu0 %v3196
    %4570 = vmatpush1.bf16.msra.mxu0 %v3195
    %4571 = vmatprep.mubr.bf16.mxu0 %v245
    %4572 = vmatmul.mubr.bf16.gmra.mrb[0].mxu0 %v244
    %v4573 = vpop.f32.mrb[0].mxu0
    %v4574 = vadd.f32 %v4533, %v4573
    %v4575 = vpop.f32.mrb[0].mxu0
    %v4576 = vadd.f32 %v4535, %v4575
    %v4577 = vpop.f32.mrb[0].mxu0
    %v4578 = vpop.f32.mrb[0].mxu0
    %4579 = vdwg.mxu0
    %4580 = vmatprep.subr.bf16.mxu0 %v3200
    %4581 = vmatpush1.bf16.msra.mxu0 %v3199
    %4582 = vmatprep.subr.bf16.mxu0 %v3204
    %4583 = vmatpush1.bf16.msra.mxu0 %v3203
    %4584 = vmatprep.subr.bf16.mxu0 %v3208
    %4585 = vmatpush1.bf16.msra.mxu0 %v3207
    %4586 = vmatprep.subr.bf16.mxu0 0
    %4587 = vmatpush1.bf16.msra.mxu0 0
    %4588 = vmatprep.subr.bf16.mxu0 0
    %4589 = vmatpush1.bf16.msra.mxu0 0
    %4590 = vmatprep.subr.bf16.mxu0 0
    %4591 = vmatpush1.bf16.msra.mxu0 0
    %4592 = vmatprep.subr.bf16.mxu0 0
    %4593 = vmatpush1.bf16.msra.mxu0 0
    %4594 = vmatprep.subr.bf16.mxu0 0
    %4595 = vmatpush1.bf16.msra.mxu0 0
    %4596 = vmatprep.subr.bf16.mxu0 0
    %4597 = vmatpush1.bf16.msra.mxu0 0
    %4598 = vmatprep.subr.bf16.mxu0 0
    %4599 = vmatpush1.bf16.msra.mxu0 0
    %4600 = vmatprep.subr.bf16.mxu0 0
    %4601 = vmatpush1.bf16.msra.mxu0 0
    %4602 = vmatprep.subr.bf16.mxu0 0
    %4603 = vmatpush1.bf16.msra.mxu0 0
    %4604 = vmatprep.subr.bf16.mxu0 0
    %4605 = vmatpush1.bf16.msra.mxu0 0
    %4606 = vmatprep.subr.bf16.mxu0 0
    %4607 = vmatpush1.bf16.msra.mxu0 0
    %4608 = vmatprep.subr.bf16.mxu0 0
    %4609 = vmatpush1.bf16.msra.mxu0 0
    %4610 = vmatprep.subr.bf16.mxu0 0
    %4611 = vmatpush1.bf16.msra.mxu0 0
    %4612 = vmatprep.mubr.bf16.mxu0 0
    %4613 = vmatmul.mubr.bf16.gmra.mrb[0].mxu0 %v3799
    %v4614 = vpop.f32.mrb[0].mxu0
    %v4615 = vadd.f32 %v4574, %v4614
    %v4616 = vpop.f32.mrb[0].mxu0
    %v4617 = vadd.f32 %v4576, %v4616
    %v4618 = vpop.f32.mrb[0].mxu0
    %v4619 = vpop.f32.mrb[0].mxu0
    %4620 = vdwg.mxu0
    %v4621 = vmul.f32 %v4205, 0.01
    %v4622 = vmul.f32 %v4207, 0.01
    %v4623 = vmul.f32 %v4615, 0.01
    %v4624 = vmul.f32 %v4617, 0.01
    %v4625 = vmax.f32 %v4205, %v4621
    %v4626 = vmax.f32 %v4207, %v4622
    %v4627 = vmax.f32 %v4615, %v4623
    %v4628 = vmax.f32 %v4617, %v4624
    %v4629 = vpack.c.bf16 %v4625, %v4625
    %v4630 = vpack.c.bf16 %v4626, %v4626
    %v4631 = vpack.c.bf16 %v4627, %v4627
    %v4632 = vpack.c.bf16 %v4628, %v4628
    %v4633 = vld [vmem:[#allocation8] sm:$0xff]
    %v4634 = vld [vmem:[#allocation8 + $0x8] sm:$0xff]
    %v4635 = vld [vmem:[#allocation8 + $0x10] sm:$0xff]
    %v4636 = vld [vmem:[#allocation8 + $0x18] sm:$0xff]
    %v4637 = vld [vmem:[#allocation8 + $0x20] sm:$0xff]
    %v4638 = vld [vmem:[#allocation8 + $0x28] sm:$0xff]
    %v4639 = vld [vmem:[#allocation8 + $0x30] sm:$0xff]
    %v4640 = vld [vmem:[#allocation8 + $0x38] sm:$0xff]
    %v4641 = vld [vmem:[#allocation8 + $0x40] sm:$0xff]
    %v4642 = vld [vmem:[#allocation8 + $0x48] sm:$0xff]
    %v4643 = vld [vmem:[#allocation8 + $0x50] sm:$0xff]
    %v4644 = vld [vmem:[#allocation8 + $0x58] sm:$0xff]
    %v4645 = vld [vmem:[#allocation8 + $0x60] sm:$0xff]
    %v4646 = vld [vmem:[#allocation8 + $0x68] sm:$0xff]
    %v4647 = vld [vmem:[#allocation8 + $0x70] sm:$0xff]
    %v4648 = vld [vmem:[#allocation8 + $0x78] sm:$0xff]
    %v4649 = vld [vmem:[#allocation8 + $0x80] sm:$0xff]
    %v4650 = vld [vmem:[#allocation8 + $0x88] sm:$0xff]
    %v4651 = vld [vmem:[#allocation8 + $0x90] sm:$0xff]
    %v4652 = vld [vmem:[#allocation8 + $0x98] sm:$0xff]
    %v4653 = vld [vmem:[#allocation8 + $0xa0] sm:$0xff]
    %v4654 = vld [vmem:[#allocation8 + $0xa8] sm:$0xff]
    %v4655 = vld [vmem:[#allocation8 + $0xb0] sm:$0xff]
    %v4656 = vld [vmem:[#allocation8 + $0xb8] sm:$0xff]
    %v4657 = vld [vmem:[#allocation8 + $0xc0] sm:$0xff]
    %v4658 = vld [vmem:[#allocation8 + $0xc8] sm:$0xff]
    %v4659 = vld [vmem:[#allocation8 + $0xd0] sm:$0xff]
    %v4660 = vld [vmem:[#allocation8 + $0xd8] sm:$0xff]
    %v4661 = vld [vmem:[#allocation8 + $0xe0] sm:$0xff]
    %v4662 = vld [vmem:[#allocation8 + $0xe8] sm:$0xff]
    %v4663 = vld [vmem:[#allocation8 + $0xf0] sm:$0xff]
    %v4664 = vld [vmem:[#allocation8 + $0xf8] sm:$0xff]
    %v4665 = vld [vmem:[#allocation8 + $0x100] sm:$0xff]
    %v4666 = vld [vmem:[#allocation8 + $0x108] sm:$0xff]
    %v4667 = vld [vmem:[#allocation8 + $0x110] sm:$0xff]
    %v4668 = vld [vmem:[#allocation8 + $0x118] sm:$0xff]
    %v4669 = vld [vmem:[#allocation8 + $0x120] sm:$0xff]
    %v4670 = vld [vmem:[#allocation8 + $0x128] sm:$0xff]
    %v4671 = vld [vmem:[#allocation8 + $0x130] sm:$0xff]
    %v4672 = vld [vmem:[#allocation8 + $0x138] sm:$0xff]
    %v4673 = vld [vmem:[#allocation8 + $0x140] sm:$0xff]
    %v4674 = vld [vmem:[#allocation8 + $0x148] sm:$0xff]
    %v4675 = vld [vmem:[#allocation8 + $0x150] sm:$0xff]
    %v4676 = vld [vmem:[#allocation8 + $0x158] sm:$0xff]
    %v4677 = vld [vmem:[#allocation8 + $0x160] sm:$0xff]
    %v4678 = vld [vmem:[#allocation8 + $0x168] sm:$0xff]
    %v4679 = vld [vmem:[#allocation8 + $0x170] sm:$0xff]
    %v4680 = vld [vmem:[#allocation8 + $0x178] sm:$0xff]
    %v4681 = vld [vmem:[#allocation8 + $0x180] sm:$0xff]
    %v4682 = vld [vmem:[#allocation8 + $0x188] sm:$0xff]
    %v4683 = vld [vmem:[#allocation8 + $0x190] sm:$0xff]
    %v4684 = vld [vmem:[#allocation8 + $0x198] sm:$0xff]
    %v4685 = vld [vmem:[#allocation8 + $0x1a0] sm:$0xff]
    %v4686 = vld [vmem:[#allocation8 + $0x1a8] sm:$0xff]
    %v4687 = vld [vmem:[#allocation8 + $0x1b0] sm:$0xff]
    %v4688 = vld [vmem:[#allocation8 + $0x1b8] sm:$0xff]
    %v4689 = vld [vmem:[#allocation8 + $0x1c0] sm:$0xff]
    %v4690 = vld [vmem:[#allocation8 + $0x1c8] sm:$0xff]
    %v4691 = vld [vmem:[#allocation8 + $0x1d0] sm:$0xff]
    %v4692 = vld [vmem:[#allocation8 + $0x1d8] sm:$0xff]
    %v4693 = vld [vmem:[#allocation8 + $0x1e0] sm:$0xff]
    %v4694 = vld [vmem:[#allocation8 + $0x1e8] sm:$0xff]
    %v4695 = vld [vmem:[#allocation8 + $0x1f0] sm:$0xff]
    %v4696 = vld [vmem:[#allocation8 + $0x1f8] sm:$0xff]
    %v4697 = vld [vmem:[#allocation8 + $0x200] sm:$0xff]
    %v4698 = vld [vmem:[#allocation8 + $0x208] sm:$0xff]
    %v4699 = vld [vmem:[#allocation8 + $0x210] sm:$0xff]
    %v4700 = vld [vmem:[#allocation8 + $0x218] sm:$0xff]
    %v4701 = vld [vmem:[#allocation8 + $0x220] sm:$0xff]
    %v4702 = vld [vmem:[#allocation8 + $0x228] sm:$0xff]
    %v4703 = vld [vmem:[#allocation8 + $0x230] sm:$0xff]
    %v4704 = vld [vmem:[#allocation8 + $0x238] sm:$0xff]
    %v4705 = vld [vmem:[#allocation8 + $0x240] sm:$0xff]
    %v4706 = vld [vmem:[#allocation8 + $0x248] sm:$0xff]
    %v4707 = vld [vmem:[#allocation8 + $0x250] sm:$0xff]
    %v4708 = vld [vmem:[#allocation8 + $0x258] sm:$0xff]
    %v4709 = vld [vmem:[#allocation8 + $0x260] sm:$0xff]
    %v4710 = vld [vmem:[#allocation8 + $0x268] sm:$0xff]
    %v4711 = vld [vmem:[#allocation8 + $0x270] sm:$0xff]
    %v4712 = vld [vmem:[#allocation8 + $0x278] sm:$0xff]
    %v4713 = vld [vmem:[#allocation8 + $0x280] sm:$0xff]
    %v4714 = vld [vmem:[#allocation8 + $0x288] sm:$0xff]
    %v4715 = vld [vmem:[#allocation8 + $0x290] sm:$0xff]
    %v4716 = vld [vmem:[#allocation8 + $0x298] sm:$0xff]
    %v4717 = vld [vmem:[#allocation8 + $0x2a0] sm:$0xff]
    %v4718 = vld [vmem:[#allocation8 + $0x2a8] sm:$0xff]
    %v4719 = vld [vmem:[#allocation8 + $0x2b0] sm:$0xff]
    %v4720 = vld [vmem:[#allocation8 + $0x2b8] sm:$0xff]
    %v4721 = vld [vmem:[#allocation8 + $0x2c0] sm:$0xff]
    %v4722 = vld [vmem:[#allocation8 + $0x2c8] sm:$0xff]
    %v4723 = vld [vmem:[#allocation8 + $0x2d0] sm:$0xff]
    %v4724 = vld [vmem:[#allocation8 + $0x2d8] sm:$0xff]
    %v4725 = vld [vmem:[#allocation8 + $0x2e0] sm:$0xff]
    %v4726 = vld [vmem:[#allocation8 + $0x2e8] sm:$0xff]
    %v4727 = vld [vmem:[#allocation8 + $0x2f0] sm:$0xff]
    %v4728 = vld [vmem:[#allocation8 + $0x2f8] sm:$0xff]
    %v4729 = vld [vmem:[#allocation8 + $0x300] sm:$0xff]
    %v4730 = vld [vmem:[#allocation8 + $0x308] sm:$0xff]
    %v4731 = vld [vmem:[#allocation8 + $0x310] sm:$0xff]
    %v4732 = vld [vmem:[#allocation8 + $0x318] sm:$0xff]
    %v4733 = vld [vmem:[#allocation8 + $0x320] sm:$0xff]
    %v4734 = vld [vmem:[#allocation8 + $0x328] sm:$0xff]
    %v4735 = vld [vmem:[#allocation8 + $0x330] sm:$0xff]
    %v4736 = vld [vmem:[#allocation8 + $0x338] sm:$0xff]
    %v4737 = vld [vmem:[#allocation8 + $0x340] sm:$0xff]
    %v4738 = vld [vmem:[#allocation8 + $0x348] sm:$0xff]
    %v4739 = vld [vmem:[#allocation8 + $0x350] sm:$0xff]
    %v4740 = vld [vmem:[#allocation8 + $0x358] sm:$0xff]
    %v4741 = vld [vmem:[#allocation8 + $0x360] sm:$0xff]
    %v4742 = vld [vmem:[#allocation8 + $0x368] sm:$0xff]
    %v4743 = vld [vmem:[#allocation8 + $0x370] sm:$0xff]
    %v4744 = vld [vmem:[#allocation8 + $0x378] sm:$0xff]
    %v4745 = vld [vmem:[#allocation8 + $0x380] sm:$0xff]
    %v4746 = vld [vmem:[#allocation8 + $0x388] sm:$0xff]
    %v4747 = vld [vmem:[#allocation8 + $0x390] sm:$0xff]
    %v4748 = vld [vmem:[#allocation8 + $0x398] sm:$0xff]
    %v4749 = vld [vmem:[#allocation8 + $0x3a0] sm:$0xff]
    %v4750 = vld [vmem:[#allocation8 + $0x3a8] sm:$0xff]
    %v4751 = vld [vmem:[#allocation8 + $0x3b0] sm:$0xff]
    %v4752 = vld [vmem:[#allocation8 + $0x3b8] sm:$0xff]
    %v4753 = vld [vmem:[#allocation8 + $0x3c0] sm:$0xff]
    %v4754 = vld [vmem:[#allocation8 + $0x3c8] sm:$0xff]
    %v4755 = vld [vmem:[#allocation8 + $0x3d0] sm:$0xff]
    %v4756 = vld [vmem:[#allocation8 + $0x3d8] sm:$0xff]
    %v4757 = vld [vmem:[#allocation8 + $0x3e0] sm:$0xff]
    %v4758 = vld [vmem:[#allocation8 + $0x3e8] sm:$0xff]
    %v4759 = vld [vmem:[#allocation8 + $0x3f0] sm:$0xff]
    %v4760 = vld [vmem:[#allocation8 + $0x3f8] sm:$0xff]
    %v4761 = vld [vmem:[#allocation10] sm:$0xf]
    %v4763 = vlaneseq
    %v4764 = vshrl.u32 %v4763, 7
    %v4765 = vsub.s32 0, %v4764
    %v4766 = vrot.slane %v4761, %v4765
    %v4767 = vlaneseq
    %v4768 = vshrl.u32 %v4767, 7
    %v4769 = vsub.s32 1, %v4768
    %v4770 = vrot.slane %v4761, %v4769
    %v4771 = vlaneseq
    %v4772 = vshrl.u32 %v4771, 7
    %v4773 = vsub.s32 2, %v4772
    %v4774 = vrot.slane %v4761, %v4773
    %v4775 = vlaneseq
    %v4776 = vshrl.u32 %v4775, 7
    %v4777 = vsub.s32 3, %v4776
    %v4778 = vrot.slane %v4761, %v4777
    %v4911 = vunpack.c.l.b16 %v4633
    %v4912 = vunpack.c.h.b16 %v4633
    %v4913 = vunpack.c.l.b16 %v4634
    %v4914 = vunpack.c.h.b16 %v4634
    %v4915 = vunpack.c.l.b16 %v4635
    %v4916 = vunpack.c.h.b16 %v4635
    %v4917 = vunpack.c.l.b16 %v4636
    %v4918 = vunpack.c.h.b16 %v4636
    %v4919 = vunpack.c.l.b16 %v4637
    %v4920 = vunpack.c.h.b16 %v4637
    %v4921 = vunpack.c.l.b16 %v4638
    %v4922 = vunpack.c.h.b16 %v4638
    %v4923 = vunpack.c.l.b16 %v4639
    %v4924 = vunpack.c.h.b16 %v4639
    %v4925 = vunpack.c.l.b16 %v4640
    %v4926 = vunpack.c.h.b16 %v4640
    %v4927 = vunpack.c.l.b16 %v4641
    %v4928 = vunpack.c.h.b16 %v4641
    %v4929 = vunpack.c.l.b16 %v4642
    %v4930 = vunpack.c.h.b16 %v4642
    %v4931 = vunpack.c.l.b16 %v4643
    %v4932 = vunpack.c.h.b16 %v4643
    %v4933 = vunpack.c.l.b16 %v4644
    %v4934 = vunpack.c.h.b16 %v4644
    %v4935 = vunpack.c.l.b16 %v4645
    %v4936 = vunpack.c.h.b16 %v4645
    %v4937 = vunpack.c.l.b16 %v4646
    %v4938 = vunpack.c.h.b16 %v4646
    %v4939 = vunpack.c.l.b16 %v4647
    %v4940 = vunpack.c.h.b16 %v4647
    %v4941 = vunpack.c.l.b16 %v4648
    %v4942 = vunpack.c.h.b16 %v4648
    %v4943 = vunpack.c.l.b16 %v4649
    %v4944 = vunpack.c.h.b16 %v4649
    %v4945 = vunpack.c.l.b16 %v4650
    %v4946 = vunpack.c.h.b16 %v4650
    %v4947 = vunpack.c.l.b16 %v4651
    %v4948 = vunpack.c.h.b16 %v4651
    %v4949 = vunpack.c.l.b16 %v4652
    %v4950 = vunpack.c.h.b16 %v4652
    %v4951 = vunpack.c.l.b16 %v4653
    %v4952 = vunpack.c.h.b16 %v4653
    %v4953 = vunpack.c.l.b16 %v4654
    %v4954 = vunpack.c.h.b16 %v4654
    %v4955 = vunpack.c.l.b16 %v4655
    %v4956 = vunpack.c.h.b16 %v4655
    %v4957 = vunpack.c.l.b16 %v4656
    %v4958 = vunpack.c.h.b16 %v4656
    %v4959 = vunpack.c.l.b16 %v4657
    %v4960 = vunpack.c.h.b16 %v4657
    %v4961 = vunpack.c.l.b16 %v4658
    %v4962 = vunpack.c.h.b16 %v4658
    %v4963 = vunpack.c.l.b16 %v4659
    %v4964 = vunpack.c.h.b16 %v4659
    %v4965 = vunpack.c.l.b16 %v4660
    %v4966 = vunpack.c.h.b16 %v4660
    %v4967 = vunpack.c.l.b16 %v4661
    %v4968 = vunpack.c.h.b16 %v4661
    %v4969 = vunpack.c.l.b16 %v4662
    %v4970 = vunpack.c.h.b16 %v4662
    %v4971 = vunpack.c.l.b16 %v4663
    %v4972 = vunpack.c.h.b16 %v4663
    %v4973 = vunpack.c.l.b16 %v4664
    %v4974 = vunpack.c.h.b16 %v4664
    %v4975 = vunpack.c.l.b16 %v4665
    %v4976 = vunpack.c.h.b16 %v4665
    %v4977 = vunpack.c.l.b16 %v4666
    %v4978 = vunpack.c.h.b16 %v4666
    %v4979 = vunpack.c.l.b16 %v4667
    %v4980 = vunpack.c.h.b16 %v4667
    %v4981 = vunpack.c.l.b16 %v4668
    %v4982 = vunpack.c.h.b16 %v4668
    %v4983 = vunpack.c.l.b16 %v4669
    %v4984 = vunpack.c.h.b16 %v4669
    %v4985 = vunpack.c.l.b16 %v4670
    %v4986 = vunpack.c.h.b16 %v4670
    %v4987 = vunpack.c.l.b16 %v4671
    %v4988 = vunpack.c.h.b16 %v4671
    %v4989 = vunpack.c.l.b16 %v4672
    %v4990 = vunpack.c.h.b16 %v4672
    %v4991 = vunpack.c.l.b16 %v4673
    %v4992 = vunpack.c.h.b16 %v4673
    %v4993 = vunpack.c.l.b16 %v4674
    %v4994 = vunpack.c.h.b16 %v4674
    %v4995 = vunpack.c.l.b16 %v4675
    %v4996 = vunpack.c.h.b16 %v4675
    %v4997 = vunpack.c.l.b16 %v4676
    %v4998 = vunpack.c.h.b16 %v4676
    %v4999 = vunpack.c.l.b16 %v4677
    %v5000 = vunpack.c.h.b16 %v4677
    %v5001 = vunpack.c.l.b16 %v4678
    %v5002 = vunpack.c.h.b16 %v4678
    %v5003 = vunpack.c.l.b16 %v4679
    %v5004 = vunpack.c.h.b16 %v4679
    %v5005 = vunpack.c.l.b16 %v4680
    %v5006 = vunpack.c.h.b16 %v4680
    %v5007 = vunpack.c.l.b16 %v4681
    %v5008 = vunpack.c.h.b16 %v4681
    %v5009 = vunpack.c.l.b16 %v4682
    %v5010 = vunpack.c.h.b16 %v4682
    %v5011 = vunpack.c.l.b16 %v4683
    %v5012 = vunpack.c.h.b16 %v4683
    %v5013 = vunpack.c.l.b16 %v4684
    %v5014 = vunpack.c.h.b16 %v4684
    %v5015 = vunpack.c.l.b16 %v4685
    %v5016 = vunpack.c.h.b16 %v4685
    %v5017 = vunpack.c.l.b16 %v4686
    %v5018 = vunpack.c.h.b16 %v4686
    %v5019 = vunpack.c.l.b16 %v4687
    %v5020 = vunpack.c.h.b16 %v4687
    %v5021 = vunpack.c.l.b16 %v4688
    %v5022 = vunpack.c.h.b16 %v4688
    %v5023 = vunpack.c.l.b16 %v4689
    %v5024 = vunpack.c.h.b16 %v4689
    %v5025 = vunpack.c.l.b16 %v4690
    %v5026 = vunpack.c.h.b16 %v4690
    %v5027 = vunpack.c.l.b16 %v4691
    %v5028 = vunpack.c.h.b16 %v4691
    %v5029 = vunpack.c.l.b16 %v4692
    %v5030 = vunpack.c.h.b16 %v4692
    %v5031 = vunpack.c.l.b16 %v4693
    %v5032 = vunpack.c.h.b16 %v4693
    %v5033 = vunpack.c.l.b16 %v4694
    %v5034 = vunpack.c.h.b16 %v4694
    %v5035 = vunpack.c.l.b16 %v4695
    %v5036 = vunpack.c.h.b16 %v4695
    %v5037 = vunpack.c.l.b16 %v4696
    %v5038 = vunpack.c.h.b16 %v4696
    %v5039 = vunpack.c.l.b16 %v4697
    %v5040 = vunpack.c.h.b16 %v4697
    %v5041 = vunpack.c.l.b16 %v4698
    %v5042 = vunpack.c.h.b16 %v4698
    %v5043 = vunpack.c.l.b16 %v4699
    %v5044 = vunpack.c.h.b16 %v4699
    %v5045 = vunpack.c.l.b16 %v4700
    %v5046 = vunpack.c.h.b16 %v4700
    %v5047 = vunpack.c.l.b16 %v4701
    %v5048 = vunpack.c.h.b16 %v4701
    %v5049 = vunpack.c.l.b16 %v4702
    %v5050 = vunpack.c.h.b16 %v4702
    %v5051 = vunpack.c.l.b16 %v4703
    %v5052 = vunpack.c.h.b16 %v4703
    %v5053 = vunpack.c.l.b16 %v4704
    %v5054 = vunpack.c.h.b16 %v4704
    %v5055 = vunpack.c.l.b16 %v4705
    %v5056 = vunpack.c.h.b16 %v4705
    %v5057 = vunpack.c.l.b16 %v4706
    %v5058 = vunpack.c.h.b16 %v4706
    %v5059 = vunpack.c.l.b16 %v4707
    %v5060 = vunpack.c.h.b16 %v4707
    %v5061 = vunpack.c.l.b16 %v4708
    %v5062 = vunpack.c.h.b16 %v4708
    %v5063 = vunpack.c.l.b16 %v4709
    %v5064 = vunpack.c.h.b16 %v4709
    %v5065 = vunpack.c.l.b16 %v4710
    %v5066 = vunpack.c.h.b16 %v4710
    %v5067 = vunpack.c.l.b16 %v4711
    %v5068 = vunpack.c.h.b16 %v4711
    %v5069 = vunpack.c.l.b16 %v4712
    %v5070 = vunpack.c.h.b16 %v4712
    %v5071 = vunpack.c.l.b16 %v4713
    %v5072 = vunpack.c.h.b16 %v4713
    %v5073 = vunpack.c.l.b16 %v4714
    %v5074 = vunpack.c.h.b16 %v4714
    %v5075 = vunpack.c.l.b16 %v4715
    %v5076 = vunpack.c.h.b16 %v4715
    %v5077 = vunpack.c.l.b16 %v4716
    %v5078 = vunpack.c.h.b16 %v4716
    %v5079 = vunpack.c.l.b16 %v4717
    %v5080 = vunpack.c.h.b16 %v4717
    %v5081 = vunpack.c.l.b16 %v4718
    %v5082 = vunpack.c.h.b16 %v4718
    %v5083 = vunpack.c.l.b16 %v4719
    %v5084 = vunpack.c.h.b16 %v4719
    %v5085 = vunpack.c.l.b16 %v4720
    %v5086 = vunpack.c.h.b16 %v4720
    %v5087 = vunpack.c.l.b16 %v4721
    %v5088 = vunpack.c.h.b16 %v4721
    %v5089 = vunpack.c.l.b16 %v4722
    %v5090 = vunpack.c.h.b16 %v4722
    %v5091 = vunpack.c.l.b16 %v4723
    %v5092 = vunpack.c.h.b16 %v4723
    %v5093 = vunpack.c.l.b16 %v4724
    %v5094 = vunpack.c.h.b16 %v4724
    %v5095 = vunpack.c.l.b16 %v4725
    %v5096 = vunpack.c.h.b16 %v4725
    %v5097 = vunpack.c.l.b16 %v4726
    %v5098 = vunpack.c.h.b16 %v4726
    %v5099 = vunpack.c.l.b16 %v4727
    %v5100 = vunpack.c.h.b16 %v4727
    %v5101 = vunpack.c.l.b16 %v4728
    %v5102 = vunpack.c.h.b16 %v4728
    %v5103 = vunpack.c.l.b16 %v4729
    %v5104 = vunpack.c.h.b16 %v4729
    %v5105 = vunpack.c.l.b16 %v4730
    %v5106 = vunpack.c.h.b16 %v4730
    %v5107 = vunpack.c.l.b16 %v4731
    %v5108 = vunpack.c.h.b16 %v4731
    %v5109 = vunpack.c.l.b16 %v4732
    %v5110 = vunpack.c.h.b16 %v4732
    %v5111 = vunpack.c.l.b16 %v4733
    %v5112 = vunpack.c.h.b16 %v4733
    %v5113 = vunpack.c.l.b16 %v4734
    %v5114 = vunpack.c.h.b16 %v4734
    %v5115 = vunpack.c.l.b16 %v4735
    %v5116 = vunpack.c.h.b16 %v4735
    %v5117 = vunpack.c.l.b16 %v4736
    %v5118 = vunpack.c.h.b16 %v4736
    %v5119 = vunpack.c.l.b16 %v4737
    %v5120 = vunpack.c.h.b16 %v4737
    %v5121 = vunpack.c.l.b16 %v4738
    %v5122 = vunpack.c.h.b16 %v4738
    %v5123 = vunpack.c.l.b16 %v4739
    %v5124 = vunpack.c.h.b16 %v4739
    %v5125 = vunpack.c.l.b16 %v4740
    %v5126 = vunpack.c.h.b16 %v4740
    %v5127 = vunpack.c.l.b16 %v4741
    %v5128 = vunpack.c.h.b16 %v4741
    %v5129 = vunpack.c.l.b16 %v4742
    %v5130 = vunpack.c.h.b16 %v4742
    %v5131 = vunpack.c.l.b16 %v4743
    %v5132 = vunpack.c.h.b16 %v4743
    %v5133 = vunpack.c.l.b16 %v4744
    %v5134 = vunpack.c.h.b16 %v4744
    %v5135 = vunpack.c.l.b16 %v4745
    %v5136 = vunpack.c.h.b16 %v4745
    %v5137 = vunpack.c.l.b16 %v4746
    %v5138 = vunpack.c.h.b16 %v4746
    %v5139 = vunpack.c.l.b16 %v4747
    %v5140 = vunpack.c.h.b16 %v4747
    %v5141 = vunpack.c.l.b16 %v4748
    %v5142 = vunpack.c.h.b16 %v4748
    %v5143 = vunpack.c.l.b16 %v4749
    %v5144 = vunpack.c.h.b16 %v4749
    %v5145 = vunpack.c.l.b16 %v4750
    %v5146 = vunpack.c.h.b16 %v4750
    %v5147 = vunpack.c.l.b16 %v4751
    %v5148 = vunpack.c.h.b16 %v4751
    %v5149 = vunpack.c.l.b16 %v4752
    %v5150 = vunpack.c.h.b16 %v4752
    %v5151 = vunpack.c.l.b16 %v4753
    %v5152 = vunpack.c.h.b16 %v4753
    %v5153 = vunpack.c.l.b16 %v4754
    %v5154 = vunpack.c.h.b16 %v4754
    %v5155 = vunpack.c.l.b16 %v4755
    %v5156 = vunpack.c.h.b16 %v4755
    %v5157 = vunpack.c.l.b16 %v4756
    %v5158 = vunpack.c.h.b16 %v4756
    %v5159 = vunpack.c.l.b16 %v4757
    %v5160 = vunpack.c.h.b16 %v4757
    %v5161 = vunpack.c.l.b16 %v4758
    %v5162 = vunpack.c.h.b16 %v4758
    %v5163 = vunpack.c.l.b16 %v4759
    %v5164 = vunpack.c.h.b16 %v4759
    %v5165 = vunpack.c.l.b16 %v4760
    %v5166 = vunpack.c.h.b16 %v4760
    %v5167 = vpack.c.b16 %v4915, %v4911
    %v5168 = vpack.c.b16 %v4916, %v4912
    %v5169 = vpack.c.b16 %v4917, %v4913
    %v5170 = vpack.c.b16 %v4918, %v4914
    %v5171 = vpack.c.b16 %v4923, %v4919
    %v5172 = vpack.c.b16 %v4924, %v4920
    %v5173 = vpack.c.b16 %v4925, %v4921
    %v5174 = vpack.c.b16 %v4926, %v4922
    %v5175 = vpack.c.b16 %v4931, %v4927
    %v5176 = vpack.c.b16 %v4932, %v4928
    %v5177 = vpack.c.b16 %v4933, %v4929
    %v5178 = vpack.c.b16 %v4934, %v4930
    %v5179 = vpack.c.b16 %v4939, %v4935
    %v5180 = vpack.c.b16 %v4940, %v4936
    %v5181 = vpack.c.b16 %v4941, %v4937
    %v5182 = vpack.c.b16 %v4942, %v4938
    %v5183 = vpack.c.b16 %v4947, %v4943
    %v5184 = vpack.c.b16 %v4948, %v4944
    %v5185 = vpack.c.b16 %v4949, %v4945
    %v5186 = vpack.c.b16 %v4950, %v4946
    %v5187 = vpack.c.b16 %v4955, %v4951
    %v5188 = vpack.c.b16 %v4956, %v4952
    %v5189 = vpack.c.b16 %v4957, %v4953
    %v5190 = vpack.c.b16 %v4958, %v4954
    %v5191 = vpack.c.b16 %v4963, %v4959
    %v5192 = vpack.c.b16 %v4964, %v4960
    %v5193 = vpack.c.b16 %v4965, %v4961
    %v5194 = vpack.c.b16 %v4966, %v4962
    %v5195 = vpack.c.b16 %v4971, %v4967
    %v5196 = vpack.c.b16 %v4972, %v4968
    %v5197 = vpack.c.b16 %v4973, %v4969
    %v5198 = vpack.c.b16 %v4974, %v4970
    %v5199 = vpack.c.b16 %v4979, %v4975
    %v5200 = vpack.c.b16 %v4980, %v4976
    %v5201 = vpack.c.b16 %v4981, %v4977
    %v5202 = vpack.c.b16 %v4982, %v4978
    %v5203 = vpack.c.b16 %v4987, %v4983
    %v5204 = vpack.c.b16 %v4988, %v4984
    %v5205 = vpack.c.b16 %v4989, %v4985
    %v5206 = vpack.c.b16 %v4990, %v4986
    %v5207 = vpack.c.b16 %v4995, %v4991
    %v5208 = vpack.c.b16 %v4996, %v4992
    %v5209 = vpack.c.b16 %v4997, %v4993
    %v5210 = vpack.c.b16 %v4998, %v4994
    %v5211 = vpack.c.b16 %v5003, %v4999
    %v5212 = vpack.c.b16 %v5004, %v5000
    %v5213 = vpack.c.b16 %v5005, %v5001
    %v5214 = vpack.c.b16 %v5006, %v5002
    %v5215 = vpack.c.b16 %v5011, %v5007
    %v5216 = vpack.c.b16 %v5012, %v5008
    %v5217 = vpack.c.b16 %v5013, %v5009
    %v5218 = vpack.c.b16 %v5014, %v5010
    %v5219 = vpack.c.b16 %v5019, %v5015
    %v5220 = vpack.c.b16 %v5020, %v5016
    %v5221 = vpack.c.b16 %v5021, %v5017
    %v5222 = vpack.c.b16 %v5022, %v5018
    %v5223 = vpack.c.b16 %v5027, %v5023
    %v5224 = vpack.c.b16 %v5028, %v5024
    %v5225 = vpack.c.b16 %v5029, %v5025
    %v5226 = vpack.c.b16 %v5030, %v5026
    %v5227 = vpack.c.b16 %v5035, %v5031
    %v5228 = vpack.c.b16 %v5036, %v5032
    %v5229 = vpack.c.b16 %v5037, %v5033
    %v5230 = vpack.c.b16 %v5038, %v5034
    %v5231 = vpack.c.b16 %v5043, %v5039
    %v5232 = vpack.c.b16 %v5044, %v5040
    %v5233 = vpack.c.b16 %v5045, %v5041
    %v5234 = vpack.c.b16 %v5046, %v5042
    %v5235 = vpack.c.b16 %v5051, %v5047
    %v5236 = vpack.c.b16 %v5052, %v5048
    %v5237 = vpack.c.b16 %v5053, %v5049
    %v5238 = vpack.c.b16 %v5054, %v5050
    %v5239 = vpack.c.b16 %v5059, %v5055
    %v5240 = vpack.c.b16 %v5060, %v5056
    %v5241 = vpack.c.b16 %v5061, %v5057
    %v5242 = vpack.c.b16 %v5062, %v5058
    %v5243 = vpack.c.b16 %v5067, %v5063
    %v5244 = vpack.c.b16 %v5068, %v5064
    %v5245 = vpack.c.b16 %v5069, %v5065
    %v5246 = vpack.c.b16 %v5070, %v5066
    %v5247 = vpack.c.b16 %v5075, %v5071
    %v5248 = vpack.c.b16 %v5076, %v5072
    %v5249 = vpack.c.b16 %v5077, %v5073
    %v5250 = vpack.c.b16 %v5078, %v5074
    %v5251 = vpack.c.b16 %v5083, %v5079
    %v5252 = vpack.c.b16 %v5084, %v5080
    %v5253 = vpack.c.b16 %v5085, %v5081
    %v5254 = vpack.c.b16 %v5086, %v5082
    %v5255 = vpack.c.b16 %v5091, %v5087
    %v5256 = vpack.c.b16 %v5092, %v5088
    %v5257 = vpack.c.b16 %v5093, %v5089
    %v5258 = vpack.c.b16 %v5094, %v5090
    %v5259 = vpack.c.b16 %v5099, %v5095
    %v5260 = vpack.c.b16 %v5100, %v5096
    %v5261 = vpack.c.b16 %v5101, %v5097
    %v5262 = vpack.c.b16 %v5102, %v5098
    %v5263 = vpack.c.b16 %v5107, %v5103
    %v5264 = vpack.c.b16 %v5108, %v5104
    %v5265 = vpack.c.b16 %v5109, %v5105
    %v5266 = vpack.c.b16 %v5110, %v5106
    %v5267 = vpack.c.b16 %v5115, %v5111
    %v5268 = vpack.c.b16 %v5116, %v5112
    %v5269 = vpack.c.b16 %v5117, %v5113
    %v5270 = vpack.c.b16 %v5118, %v5114
    %v5271 = vpack.c.b16 %v5123, %v5119
    %v5272 = vpack.c.b16 %v5124, %v5120
    %v5273 = vpack.c.b16 %v5125, %v5121
    %v5274 = vpack.c.b16 %v5126, %v5122
    %v5275 = vpack.c.b16 %v5131, %v5127
    %v5276 = vpack.c.b16 %v5132, %v5128
    %v5277 = vpack.c.b16 %v5133, %v5129
    %v5278 = vpack.c.b16 %v5134, %v5130
    %v5279 = vpack.c.b16 %v5139, %v5135
    %v5280 = vpack.c.b16 %v5140, %v5136
    %v5281 = vpack.c.b16 %v5141, %v5137
    %v5282 = vpack.c.b16 %v5142, %v5138
    %v5283 = vpack.c.b16 %v5147, %v5143
    %v5284 = vpack.c.b16 %v5148, %v5144
    %v5285 = vpack.c.b16 %v5149, %v5145
    %v5286 = vpack.c.b16 %v5150, %v5146
    %v5287 = vpack.c.b16 %v5155, %v5151
    %v5288 = vpack.c.b16 %v5156, %v5152
    %v5289 = vpack.c.b16 %v5157, %v5153
    %v5290 = vpack.c.b16 %v5158, %v5154
    %v5291 = vpack.c.b16 %v5163, %v5159
    %v5292 = vpack.c.b16 %v5164, %v5160
    %v5293 = vpack.c.b16 %v5165, %v5161
    %v5294 = vpack.c.b16 %v5166, %v5162
    %5423 = vmatprep.subr.bf16.mxu0 %v5168
    %5424 = vmatpush1.bf16.msra.mxu0 %v5167
    %5425 = vmatprep.subr.bf16.mxu0 %v5172
    %5426 = vmatpush1.bf16.msra.mxu0 %v5171
    %5427 = vmatprep.subr.bf16.mxu0 %v5176
    %5428 = vmatpush1.bf16.msra.mxu0 %v5175
    %5429 = vmatprep.subr.bf16.mxu0 %v5180
    %5430 = vmatpush1.bf16.msra.mxu0 %v5179
    %5431 = vmatprep.subr.bf16.mxu0 %v5184
    %5432 = vmatpush1.bf16.msra.mxu0 %v5183
    %5433 = vmatprep.subr.bf16.mxu0 %v5188
    %5434 = vmatpush1.bf16.msra.mxu0 %v5187
    %5435 = vmatprep.subr.bf16.mxu0 %v5192
    %5436 = vmatpush1.bf16.msra.mxu0 %v5191
    %5437 = vmatprep.subr.bf16.mxu0 %v5196
    %5438 = vmatpush1.bf16.msra.mxu0 %v5195
    %5439 = vmatprep.subr.bf16.mxu0 %v5200
    %5440 = vmatpush1.bf16.msra.mxu0 %v5199
    %5441 = vmatprep.subr.bf16.mxu0 %v5204
    %5442 = vmatpush1.bf16.msra.mxu0 %v5203
    %5443 = vmatprep.subr.bf16.mxu0 %v5208
    %5444 = vmatpush1.bf16.msra.mxu0 %v5207
    %5445 = vmatprep.subr.bf16.mxu0 %v5212
    %5446 = vmatpush1.bf16.msra.mxu0 %v5211
    %5447 = vmatprep.subr.bf16.mxu0 %v5216
    %5448 = vmatpush1.bf16.msra.mxu0 %v5215
    %5449 = vmatprep.subr.bf16.mxu0 %v5220
    %5450 = vmatpush1.bf16.msra.mxu0 %v5219
    %5451 = vmatprep.subr.bf16.mxu0 %v5224
    %5452 = vmatpush1.bf16.msra.mxu0 %v5223
    %5453 = vmatprep.subr.bf16.mxu0 %v5228
    %5454 = vmatpush1.bf16.msra.mxu0 %v5227
    %5455 = vmatprep.mubr.bf16.mxu0 %v4630
    %5456 = vmatmul.mubr.bf16.gmra.mrb[0].mxu0 %v4629
    %v5457 = vpop.f32.mrb[0].mxu0
    %v5458 = vadd.f32 %v4766, %v5457
    %v5459 = vpop.f32.mrb[0].mxu0
    %v5460 = vadd.f32 %v4770, %v5459
    %v5461 = vpop.f32.mrb[0].mxu0
    %v5462 = vpop.f32.mrb[0].mxu0
    %5463 = vdwg.mxu0
    %5464 = vmatprep.subr.bf16.mxu0 %v5232
    %5465 = vmatpush1.bf16.msra.mxu0 %v5231
    %5466 = vmatprep.subr.bf16.mxu0 %v5236
    %5467 = vmatpush1.bf16.msra.mxu0 %v5235
    %5468 = vmatprep.subr.bf16.mxu0 %v5240
    %5469 = vmatpush1.bf16.msra.mxu0 %v5239
    %5470 = vmatprep.subr.bf16.mxu0 %v5244
    %5471 = vmatpush1.bf16.msra.mxu0 %v5243
    %5472 = vmatprep.subr.bf16.mxu0 %v5248
    %5473 = vmatpush1.bf16.msra.mxu0 %v5247
    %5474 = vmatprep.subr.bf16.mxu0 %v5252
    %5475 = vmatpush1.bf16.msra.mxu0 %v5251
    %5476 = vmatprep.subr.bf16.mxu0 %v5256
    %5477 = vmatpush1.bf16.msra.mxu0 %v5255
    %5478 = vmatprep.subr.bf16.mxu0 %v5260
    %5479 = vmatpush1.bf16.msra.mxu0 %v5259
    %5480 = vmatprep.subr.bf16.mxu0 %v5264
    %5481 = vmatpush1.bf16.msra.mxu0 %v5263
    %5482 = vmatprep.subr.bf16.mxu0 %v5268
    %5483 = vmatpush1.bf16.msra.mxu0 %v5267
    %5484 = vmatprep.subr.bf16.mxu0 %v5272
    %5485 = vmatpush1.bf16.msra.mxu0 %v5271
    %5486 = vmatprep.subr.bf16.mxu0 %v5276
    %5487 = vmatpush1.bf16.msra.mxu0 %v5275
    %5488 = vmatprep.subr.bf16.mxu0 %v5280
    %5489 = vmatpush1.bf16.msra.mxu0 %v5279
    %5490 = vmatprep.subr.bf16.mxu0 %v5284
    %5491 = vmatpush1.bf16.msra.mxu0 %v5283
    %5492 = vmatprep.subr.bf16.mxu0 %v5288
    %5493 = vmatpush1.bf16.msra.mxu0 %v5287
    %5494 = vmatprep.subr.bf16.mxu0 %v5292
    %5495 = vmatpush1.bf16.msra.mxu0 %v5291
    %5496 = vmatprep.mubr.bf16.mxu0 %v4632
    %5497 = vmatmul.mubr.bf16.gmra.mrb[0].mxu0 %v4631
    %v5498 = vpop.f32.mrb[0].mxu0
    %v5499 = vadd.f32 %v5458, %v5498
    %v5500 = vpop.f32.mrb[0].mxu0
    %v5501 = vadd.f32 %v5460, %v5500
    %v5502 = vpop.f32.mrb[0].mxu0
    %v5503 = vpop.f32.mrb[0].mxu0
    %5504 = vdwg.mxu0
    %5505 = vmatprep.subr.bf16.mxu0 %v5170
    %5506 = vmatpush1.bf16.msra.mxu0 %v5169
    %5507 = vmatprep.subr.bf16.mxu0 %v5174
    %5508 = vmatpush1.bf16.msra.mxu0 %v5173
    %5509 = vmatprep.subr.bf16.mxu0 %v5178
    %5510 = vmatpush1.bf16.msra.mxu0 %v5177
    %5511 = vmatprep.subr.bf16.mxu0 %v5182
    %5512 = vmatpush1.bf16.msra.mxu0 %v5181
    %5513 = vmatprep.subr.bf16.mxu0 %v5186
    %5514 = vmatpush1.bf16.msra.mxu0 %v5185
    %5515 = vmatprep.subr.bf16.mxu0 %v5190
    %5516 = vmatpush1.bf16.msra.mxu0 %v5189
    %5517 = vmatprep.subr.bf16.mxu0 %v5194
    %5518 = vmatpush1.bf16.msra.mxu0 %v5193
    %5519 = vmatprep.subr.bf16.mxu0 %v5198
    %5520 = vmatpush1.bf16.msra.mxu0 %v5197
    %5521 = vmatprep.subr.bf16.mxu0 %v5202
    %5522 = vmatpush1.bf16.msra.mxu0 %v5201
    %5523 = vmatprep.subr.bf16.mxu0 %v5206
    %5524 = vmatpush1.bf16.msra.mxu0 %v5205
    %5525 = vmatprep.subr.bf16.mxu0 %v5210
    %5526 = vmatpush1.bf16.msra.mxu0 %v5209
    %5527 = vmatprep.subr.bf16.mxu0 %v5214
    %5528 = vmatpush1.bf16.msra.mxu0 %v5213
    %5529 = vmatprep.subr.bf16.mxu0 %v5218
    %5530 = vmatpush1.bf16.msra.mxu0 %v5217
    %5531 = vmatprep.subr.bf16.mxu0 %v5222
    %5532 = vmatpush1.bf16.msra.mxu0 %v5221
    %5533 = vmatprep.subr.bf16.mxu0 %v5226
    %5534 = vmatpush1.bf16.msra.mxu0 %v5225
    %5535 = vmatprep.subr.bf16.mxu0 %v5230
    %5536 = vmatpush1.bf16.msra.mxu0 %v5229
    %5537 = vmatprep.mubr.bf16.mxu0 %v4630
    %5538 = vmatmul.mubr.bf16.gmra.mrb[0].mxu0 %v4629
    %v5539 = vpop.f32.mrb[0].mxu0
    %v5540 = vadd.f32 %v4774, %v5539
    %v5541 = vpop.f32.mrb[0].mxu0
    %v5542 = vadd.f32 %v4778, %v5541
    %v5543 = vpop.f32.mrb[0].mxu0
    %v5544 = vpop.f32.mrb[0].mxu0
    %5545 = vdwg.mxu0
    %5546 = vmatprep.subr.bf16.mxu0 %v5234
    %5547 = vmatpush1.bf16.msra.mxu0 %v5233
    %5548 = vmatprep.subr.bf16.mxu0 %v5238
    %5549 = vmatpush1.bf16.msra.mxu0 %v5237
    %5550 = vmatprep.subr.bf16.mxu0 %v5242
    %5551 = vmatpush1.bf16.msra.mxu0 %v5241
    %5552 = vmatprep.subr.bf16.mxu0 %v5246
    %5553 = vmatpush1.bf16.msra.mxu0 %v5245
    %5554 = vmatprep.subr.bf16.mxu0 %v5250
    %5555 = vmatpush1.bf16.msra.mxu0 %v5249
    %5556 = vmatprep.subr.bf16.mxu0 %v5254
    %5557 = vmatpush1.bf16.msra.mxu0 %v5253
    %5558 = vmatprep.subr.bf16.mxu0 %v5258
    %5559 = vmatpush1.bf16.msra.mxu0 %v5257
    %5560 = vmatprep.subr.bf16.mxu0 %v5262
    %5561 = vmatpush1.bf16.msra.mxu0 %v5261
    %5562 = vmatprep.subr.bf16.mxu0 %v5266
    %5563 = vmatpush1.bf16.msra.mxu0 %v5265
    %5564 = vmatprep.subr.bf16.mxu0 %v5270
    %5565 = vmatpush1.bf16.msra.mxu0 %v5269
    %5566 = vmatprep.subr.bf16.mxu0 %v5274
    %5567 = vmatpush1.bf16.msra.mxu0 %v5273
    %5568 = vmatprep.subr.bf16.mxu0 %v5278
    %5569 = vmatpush1.bf16.msra.mxu0 %v5277
    %5570 = vmatprep.subr.bf16.mxu0 %v5282
    %5571 = vmatpush1.bf16.msra.mxu0 %v5281
    %5572 = vmatprep.subr.bf16.mxu0 %v5286
    %5573 = vmatpush1.bf16.msra.mxu0 %v5285
    %5574 = vmatprep.subr.bf16.mxu0 %v5290
    %5575 = vmatpush1.bf16.msra.mxu0 %v5289
    %5576 = vmatprep.subr.bf16.mxu0 %v5294
    %5577 = vmatpush1.bf16.msra.mxu0 %v5293
    %5578 = vmatprep.mubr.bf16.mxu0 %v4632
    %5579 = vmatmul.mubr.bf16.gmra.mrb[0].mxu0 %v4631
    %v5580 = vpop.f32.mrb[0].mxu0
    %v5581 = vadd.f32 %v5540, %v5580
    %v5582 = vpop.f32.mrb[0].mxu0
    %v5583 = vadd.f32 %v5542, %v5582
    %v5584 = vpop.f32.mrb[0].mxu0
    %v5585 = vpop.f32.mrb[0].mxu0
    %5586 = vdwg.mxu0
    %v5587 = vmul.f32 %v5499, 0.01
    %v5588 = vmul.f32 %v5501, 0.01
    %v5589 = vmul.f32 %v5581, 0.01
    %v5590 = vmul.f32 %v5583, 0.01
    %v5591 = vmax.f32 %v5499, %v5587
    %v5592 = vmax.f32 %v5501, %v5588
    %v5593 = vmax.f32 %v5581, %v5589
    %v5594 = vmax.f32 %v5583, %v5590
    %v5595 = vpack.c.bf16 %v5591, %v5591
    %v5596 = vpack.c.bf16 %v5592, %v5592
    %v5597 = vpack.c.bf16 %v5593, %v5593
    %v5598 = vpack.c.bf16 %v5594, %v5594
    %v5599 = vld [vmem:[#allocation11] sm:$0xf]
    %v5600 = vld [vmem:[#allocation11 + $0x4] sm:$0xf]
    %v5601 = vld [vmem:[#allocation11 + $0x8] sm:$0xf]
    %v5602 = vld [vmem:[#allocation11 + $0xc] sm:$0xf]
    %v5603 = vld [vmem:[#allocation11 + $0x10] sm:$0xf]
    %v5604 = vld [vmem:[#allocation11 + $0x14] sm:$0xf]
    %v5605 = vld [vmem:[#allocation11 + $0x18] sm:$0xf]
    %v5606 = vld [vmem:[#allocation11 + $0x1c] sm:$0xf]
    %v5607 = vld [vmem:[#allocation11 + $0x20] sm:$0xf]
    %v5608 = vld [vmem:[#allocation11 + $0x24] sm:$0xf]
    %v5609 = vld [vmem:[#allocation11 + $0x28] sm:$0xf]
    %v5610 = vld [vmem:[#allocation11 + $0x2c] sm:$0xf]
    %v5611 = vld [vmem:[#allocation11 + $0x30] sm:$0xf]
    %v5612 = vld [vmem:[#allocation11 + $0x34] sm:$0xf]
    %v5613 = vld [vmem:[#allocation11 + $0x38] sm:$0xf]
    %v5614 = vld [vmem:[#allocation11 + $0x3c] sm:$0xf]
    %v5615 = vld [vmem:[#allocation11 + $0x40] sm:$0xf]
    %v5616 = vld [vmem:[#allocation11 + $0x44] sm:$0xf]
    %v5617 = vld [vmem:[#allocation11 + $0x48] sm:$0xf]
    %v5618 = vld [vmem:[#allocation11 + $0x4c] sm:$0xf]
    %v5619 = vld [vmem:[#allocation11 + $0x50] sm:$0xf]
    %v5620 = vld [vmem:[#allocation11 + $0x54] sm:$0xf]
    %v5621 = vld [vmem:[#allocation11 + $0x58] sm:$0xf]
    %v5622 = vld [vmem:[#allocation11 + $0x5c] sm:$0xf]
    %v5623 = vld [vmem:[#allocation11 + $0x60] sm:$0xf]
    %v5624 = vld [vmem:[#allocation11 + $0x64] sm:$0xf]
    %v5625 = vld [vmem:[#allocation11 + $0x68] sm:$0xf]
    %v5626 = vld [vmem:[#allocation11 + $0x6c] sm:$0xf]
    %v5627 = vld [vmem:[#allocation11 + $0x70] sm:$0xf]
    %v5628 = vld [vmem:[#allocation11 + $0x74] sm:$0xf]
    %v5629 = vld [vmem:[#allocation11 + $0x78] sm:$0xf]
    %v5630 = vld [vmem:[#allocation11 + $0x7c] sm:$0xf]
    %v5631 = vld [vmem:[#allocation11 + $0x80] sm:$0xf]
    %v5632 = vld [vmem:[#allocation11 + $0x84] sm:$0xf]
    %v5633 = vld [vmem:[#allocation11 + $0x88] sm:$0xf]
    %v5634 = vld [vmem:[#allocation11 + $0x8c] sm:$0xf]
    %v5635 = vld [vmem:[#allocation11 + $0x90] sm:$0xf]
    %v5636 = vld [vmem:[#allocation11 + $0x94] sm:$0xf]
    %v5637 = vld [vmem:[#allocation11 + $0x98] sm:$0xf]
    %v5638 = vld [vmem:[#allocation11 + $0x9c] sm:$0xf]
    %v5639 = vld [vmem:[#allocation11 + $0xa0] sm:$0xf]
    %v5640 = vld [vmem:[#allocation11 + $0xa4] sm:$0xf]
    %v5641 = vld [vmem:[#allocation11 + $0xa8] sm:$0xf]
    %v5642 = vld [vmem:[#allocation11 + $0xac] sm:$0xf]
    %v5643 = vld [vmem:[#allocation11 + $0xb0] sm:$0xf]
    %v5644 = vld [vmem:[#allocation11 + $0xb4] sm:$0xf]
    %v5645 = vld [vmem:[#allocation11 + $0xb8] sm:$0xf]
    %v5646 = vld [vmem:[#allocation11 + $0xbc] sm:$0xf]
    %v5647 = vld [vmem:[#allocation11 + $0xc0] sm:$0xf]
    %v5648 = vld [vmem:[#allocation11 + $0xc4] sm:$0xf]
    %v5649 = vld [vmem:[#allocation11 + $0xc8] sm:$0xf]
    %v5650 = vld [vmem:[#allocation11 + $0xcc] sm:$0xf]
    %v5651 = vld [vmem:[#allocation11 + $0xd0] sm:$0xf]
    %v5652 = vld [vmem:[#allocation11 + $0xd4] sm:$0xf]
    %v5653 = vld [vmem:[#allocation11 + $0xd8] sm:$0xf]
    %v5654 = vld [vmem:[#allocation11 + $0xdc] sm:$0xf]
    %v5655 = vld [vmem:[#allocation11 + $0xe0] sm:$0xf]
    %v5656 = vld [vmem:[#allocation11 + $0xe4] sm:$0xf]
    %v5657 = vld [vmem:[#allocation11 + $0xe8] sm:$0xf]
    %v5658 = vld [vmem:[#allocation11 + $0xec] sm:$0xf]
    %v5659 = vld [vmem:[#allocation11 + $0xf0] sm:$0xf]
    %v5660 = vld [vmem:[#allocation11 + $0xf4] sm:$0xf]
    %v5661 = vld [vmem:[#allocation11 + $0xf8] sm:$0xf]
    %v5662 = vld [vmem:[#allocation11 + $0xfc] sm:$0xf]
    %v5663 = vld [vmem:[#allocation13] sm:$0x1]
    %v5665 = vlaneseq
    %v5666 = vshrl.u32 %v5665, 7
    %v5667 = vsub.s32 0, %v5666
    %v5668 = vrot.slane %v5663, %v5667
    %v5734 = vunpack.c.l.b16 %v5599
    %v5735 = vunpack.c.l.b16 %v5600
    %v5736 = vunpack.c.l.b16 %v5601
    %v5737 = vunpack.c.l.b16 %v5602
    %v5738 = vunpack.c.l.b16 %v5603
    %v5739 = vunpack.c.l.b16 %v5604
    %v5740 = vunpack.c.l.b16 %v5605
    %v5741 = vunpack.c.l.b16 %v5606
    %v5742 = vunpack.c.l.b16 %v5607
    %v5743 = vunpack.c.l.b16 %v5608
    %v5744 = vunpack.c.l.b16 %v5609
    %v5745 = vunpack.c.l.b16 %v5610
    %v5746 = vunpack.c.l.b16 %v5611
    %v5747 = vunpack.c.l.b16 %v5612
    %v5748 = vunpack.c.l.b16 %v5613
    %v5749 = vunpack.c.l.b16 %v5614
    %v5750 = vunpack.c.l.b16 %v5615
    %v5751 = vunpack.c.l.b16 %v5616
    %v5752 = vunpack.c.l.b16 %v5617
    %v5753 = vunpack.c.l.b16 %v5618
    %v5754 = vunpack.c.l.b16 %v5619
    %v5755 = vunpack.c.l.b16 %v5620
    %v5756 = vunpack.c.l.b16 %v5621
    %v5757 = vunpack.c.l.b16 %v5622
    %v5758 = vunpack.c.l.b16 %v5623
    %v5759 = vunpack.c.l.b16 %v5624
    %v5760 = vunpack.c.l.b16 %v5625
    %v5761 = vunpack.c.l.b16 %v5626
    %v5762 = vunpack.c.l.b16 %v5627
    %v5763 = vunpack.c.l.b16 %v5628
    %v5764 = vunpack.c.l.b16 %v5629
    %v5765 = vunpack.c.l.b16 %v5630
    %v5766 = vunpack.c.l.b16 %v5631
    %v5767 = vunpack.c.l.b16 %v5632
    %v5768 = vunpack.c.l.b16 %v5633
    %v5769 = vunpack.c.l.b16 %v5634
    %v5770 = vunpack.c.l.b16 %v5635
    %v5771 = vunpack.c.l.b16 %v5636
    %v5772 = vunpack.c.l.b16 %v5637
    %v5773 = vunpack.c.l.b16 %v5638
    %v5774 = vunpack.c.l.b16 %v5639
    %v5775 = vunpack.c.l.b16 %v5640
    %v5776 = vunpack.c.l.b16 %v5641
    %v5777 = vunpack.c.l.b16 %v5642
    %v5778 = vunpack.c.l.b16 %v5643
    %v5779 = vunpack.c.l.b16 %v5644
    %v5780 = vunpack.c.l.b16 %v5645
    %v5781 = vunpack.c.l.b16 %v5646
    %v5782 = vunpack.c.l.b16 %v5647
    %v5783 = vunpack.c.l.b16 %v5648
    %v5784 = vunpack.c.l.b16 %v5649
    %v5785 = vunpack.c.l.b16 %v5650
    %v5786 = vunpack.c.l.b16 %v5651
    %v5787 = vunpack.c.l.b16 %v5652
    %v5788 = vunpack.c.l.b16 %v5653
    %v5789 = vunpack.c.l.b16 %v5654
    %v5790 = vunpack.c.l.b16 %v5655
    %v5791 = vunpack.c.l.b16 %v5656
    %v5792 = vunpack.c.l.b16 %v5657
    %v5793 = vunpack.c.l.b16 %v5658
    %v5794 = vunpack.c.l.b16 %v5659
    %v5795 = vunpack.c.l.b16 %v5660
    %v5796 = vunpack.c.l.b16 %v5661
    %v5797 = vunpack.c.l.b16 %v5662
    %v5798 = vpack.c.b16 %v5735, %v5734
    %v5799 = vpack.c.b16 %v5737, %v5736
    %v5800 = vpack.c.b16 %v5739, %v5738
    %v5801 = vpack.c.b16 %v5741, %v5740
    %v5802 = vpack.c.b16 %v5743, %v5742
    %v5803 = vpack.c.b16 %v5745, %v5744
    %v5804 = vpack.c.b16 %v5747, %v5746
    %v5805 = vpack.c.b16 %v5749, %v5748
    %v5806 = vpack.c.b16 %v5751, %v5750
    %v5807 = vpack.c.b16 %v5753, %v5752
    %v5808 = vpack.c.b16 %v5755, %v5754
    %v5809 = vpack.c.b16 %v5757, %v5756
    %v5810 = vpack.c.b16 %v5759, %v5758
    %v5811 = vpack.c.b16 %v5761, %v5760
    %v5812 = vpack.c.b16 %v5763, %v5762
    %v5813 = vpack.c.b16 %v5765, %v5764
    %v5814 = vpack.c.b16 %v5767, %v5766
    %v5815 = vpack.c.b16 %v5769, %v5768
    %v5816 = vpack.c.b16 %v5771, %v5770
    %v5817 = vpack.c.b16 %v5773, %v5772
    %v5818 = vpack.c.b16 %v5775, %v5774
    %v5819 = vpack.c.b16 %v5777, %v5776
    %v5820 = vpack.c.b16 %v5779, %v5778
    %v5821 = vpack.c.b16 %v5781, %v5780
    %v5822 = vpack.c.b16 %v5783, %v5782
    %v5823 = vpack.c.b16 %v5785, %v5784
    %v5824 = vpack.c.b16 %v5787, %v5786
    %v5825 = vpack.c.b16 %v5789, %v5788
    %v5826 = vpack.c.b16 %v5791, %v5790
    %v5827 = vpack.c.b16 %v5793, %v5792
    %v5828 = vpack.c.b16 %v5795, %v5794
    %v5829 = vpack.c.b16 %v5797, %v5796
    %5862 = vmatprep.subr.bf16.mxu0 0
    %5863 = vmatpush1.bf16.msra.mxu0 %v5798
    %5864 = vmatprep.subr.bf16.mxu0 0
    %5865 = vmatpush1.bf16.msra.mxu0 %v5799
    %5866 = vmatprep.subr.bf16.mxu0 0
    %5867 = vmatpush1.bf16.msra.mxu0 %v5800
    %5868 = vmatprep.subr.bf16.mxu0 0
    %5869 = vmatpush1.bf16.msra.mxu0 %v5801
    %5870 = vmatprep.subr.bf16.mxu0 0
    %5871 = vmatpush1.bf16.msra.mxu0 %v5802
    %5872 = vmatprep.subr.bf16.mxu0 0
    %5873 = vmatpush1.bf16.msra.mxu0 %v5803
    %5874 = vmatprep.subr.bf16.mxu0 0
    %5875 = vmatpush1.bf16.msra.mxu0 %v5804
    %5876 = vmatprep.subr.bf16.mxu0 0
    %5877 = vmatpush1.bf16.msra.mxu0 %v5805
    %5878 = vmatprep.subr.bf16.mxu0 0
    %5879 = vmatpush1.bf16.msra.mxu0 %v5806
    %5880 = vmatprep.subr.bf16.mxu0 0
    %5881 = vmatpush1.bf16.msra.mxu0 %v5807
    %5882 = vmatprep.subr.bf16.mxu0 0
    %5883 = vmatpush1.bf16.msra.mxu0 %v5808
    %5884 = vmatprep.subr.bf16.mxu0 0
    %5885 = vmatpush1.bf16.msra.mxu0 %v5809
    %5886 = vmatprep.subr.bf16.mxu0 0
    %5887 = vmatpush1.bf16.msra.mxu0 %v5810
    %5888 = vmatprep.subr.bf16.mxu0 0
    %5889 = vmatpush1.bf16.msra.mxu0 %v5811
    %5890 = vmatprep.subr.bf16.mxu0 0
    %5891 = vmatpush1.bf16.msra.mxu0 %v5812
    %5892 = vmatprep.subr.bf16.mxu0 0
    %5893 = vmatpush1.bf16.msra.mxu0 %v5813
    %5894 = vmatprep.mubr.bf16.mxu0 %v5596
    %5895 = vmatmul.mubr.bf16.gmra.mrb[0].mxu0 %v5595
    %v5896 = vpop.f32.mrb[0].mxu0
    %v5897 = vadd.f32 %v5668, %v5896
    %v5898 = vpop.f32.mrb[0].mxu0
    %v5899 = vpop.f32.mrb[0].mxu0
    %v5900 = vpop.f32.mrb[0].mxu0
    %5901 = vdwg.mxu0
    %5902 = vmatprep.subr.bf16.mxu0 0
    %5903 = vmatpush1.bf16.msra.mxu0 %v5814
    %5904 = vmatprep.subr.bf16.mxu0 0
    %5905 = vmatpush1.bf16.msra.mxu0 %v5815
    %5906 = vmatprep.subr.bf16.mxu0 0
    %5907 = vmatpush1.bf16.msra.mxu0 %v5816
    %5908 = vmatprep.subr.bf16.mxu0 0
    %5909 = vmatpush1.bf16.msra.mxu0 %v5817
    %5910 = vmatprep.subr.bf16.mxu0 0
    %5911 = vmatpush1.bf16.msra.mxu0 %v5818
    %5912 = vmatprep.subr.bf16.mxu0 0
    %5913 = vmatpush1.bf16.msra.mxu0 %v5819
    %5914 = vmatprep.subr.bf16.mxu0 0
    %5915 = vmatpush1.bf16.msra.mxu0 %v5820
    %5916 = vmatprep.subr.bf16.mxu0 0
    %5917 = vmatpush1.bf16.msra.mxu0 %v5821
    %5918 = vmatprep.subr.bf16.mxu0 0
    %5919 = vmatpush1.bf16.msra.mxu0 %v5822
    %5920 = vmatprep.subr.bf16.mxu0 0
    %5921 = vmatpush1.bf16.msra.mxu0 %v5823
    %5922 = vmatprep.subr.bf16.mxu0 0
    %5923 = vmatpush1.bf16.msra.mxu0 %v5824
    %5924 = vmatprep.subr.bf16.mxu0 0
    %5925 = vmatpush1.bf16.msra.mxu0 %v5825
    %5926 = vmatprep.subr.bf16.mxu0 0
    %5927 = vmatpush1.bf16.msra.mxu0 %v5826
    %5928 = vmatprep.subr.bf16.mxu0 0
    %5929 = vmatpush1.bf16.msra.mxu0 %v5827
    %5930 = vmatprep.subr.bf16.mxu0 0
    %5931 = vmatpush1.bf16.msra.mxu0 %v5828
    %5932 = vmatprep.subr.bf16.mxu0 0
    %5933 = vmatpush1.bf16.msra.mxu0 %v5829
    %5934 = vmatprep.mubr.bf16.mxu0 %v5598
    %5935 = vmatmul.mubr.bf16.gmra.mrb[0].mxu0 %v5597
    %v5936 = vpop.f32.mrb[0].mxu0
    %v5937 = vadd.f32 %v5897, %v5936
    %v5938 = vpop.f32.mrb[0].mxu0
    %v5939 = vpop.f32.mrb[0].mxu0
    %v5940 = vpop.f32.mrb[0].mxu0
    %5941 = vdwg.mxu0
    %5942 = vst [vmem:[#allocation14] sm:$0x3] %v5937
    // Predicated region
    $region58: #{tpu_custom_call.1} parent=1 // pred_check
      _
    $region59: #{tpu_custom_call.1} parent=1 // pred_check_branch
      %5944 = sbr.rel (0) target = $region61
    $region60: #{tpu_custom_call.1} parent=1 // pred_region
      %s5946 = ssub.s32 32, 32
      %5947 = vsyncadd [#allocation4], %s5946
      %s5949 = sshll.u32 [#allocation14], 4
      %s5950 = int_to_ptr.vmem [resolvable:$true] %s5949
      %5952 = dma.vmem_to_hbm [thread:$0]  %s5950, 32, %s7, [#allocation4]
    $region61: #{tpu_custom_call.1} parent=1 // pred_fallthru
      _
    // Predicated region
    $region62: #{tpu_custom_call.1} parent=1 // pred_check
      _
    $region63: #{tpu_custom_call.1} parent=1 // pred_check_branch
      %5954 = sbr.rel (0) target = $region65
    $region64: #{tpu_custom_call.1} parent=1 // pred_region
      %5955 = dma.done [#allocation4], 32
    $region65: #{tpu_custom_call.1} parent=1 // pred_fallthru
      _
    %5956 = vsyncpa [#allocation3], 1
    %5957 = vsyncpa [#allocation6], 1
    %5958 = vsyncpa [#allocation9], 1
    %5959 = vsyncpa [#allocation12], 1
    %5960 = vsyncpa [#allocation4], 1

// kernel: tpu_custom_call.1
$region0: #{tpu_custom_call.1}
  #allocation0 [shape = 'u32[]', space=smem, size = 0x4, offset = 0x4, fixed_abs, tag = 'smem constant byte address 0x4 - core index']
  #allocation1 [shape = 'u32[144,128]{1,0:T(1,128)}', space=vmem, size = 0x12000, scoped, tag = 'internal scratch']
  %s0 = inlined_call_operand.hbm [shape: f32[2,2352], index: 0, kind: input, shape index: {}]
  %s1 = inlined_call_operand.hbm [shape: bf16[2352,512], index: 1, kind: input, shape index: {}]
  %s2 = inlined_call_operand.hbm [shape: f32[1,512], index: 2, kind: input, shape index: {}]
  %s3 = inlined_call_operand.hbm [shape: bf16[512,512], index: 3, kind: input, shape index: {}]
  %s4 = inlined_call_operand.hbm [shape: f32[1,512], index: 4, kind: input, shape index: {}]
  %s5 = inlined_call_operand.hbm [shape: bf16[512,128], index: 5, kind: input, shape index: {}]
  %s6 = inlined_call_operand.hbm [shape: f32[1,128], index: 6, kind: input, shape index: {}]
  %s7 = inlined_call_operand.hbm [shape: f32[2,128], index: 7, kind: output, shape index: {}]
  %s8 = sld [smem:[#allocation0]]
  $region66: #{tpu_custom_call.1} parent=0
    _
  %s10 = ssub.s32 1, %s8
  %s11 = scalar_select 0, %s10, %s8
  $region1: #{tpu_custom_call.1} parent=0
    #allocation2 [shape = 'u8[19456]{0}', space=vmem, size = 0x4c00, scoped, tag = 'input window, operand 0, single buffered']
    #allocation3 [shape = 's32[1]{0}', space=sflag, size = 0x4, scoped, tag = 'scoped memory for tpu_custom_call.1']
    #allocation4 [shape = 's32[1]{0}', space=sflag, size = 0x4, scoped, tag = 'scoped memory for tpu_custom_call.1']
    #allocation5 [shape = 'u8[2408448]{0}', space=vmem, size = 0x24c000, scoped, tag = 'input window, operand 1, single buffered']
    #allocation6 [shape = 's32[1]{0}', space=sflag, size = 0x4, scoped, tag = 'scoped memory for tpu_custom_call.1']
    #allocation7 [shape = 'u8[2048]{0}', space=vmem, size = 0x800, scoped, tag = 'input window, operand 2, single buffered']
    #allocation8 [shape = 'u8[524288]{0}', space=vmem, size = 0x80000, scoped, tag = 'input window, operand 3, single buffered']
    #allocation9 [shape = 's32[1]{0}', space=sflag, size = 0x4, scoped, tag = 'scoped memory for tpu_custom_call.1']
    #allocation10 [shape = 'u8[2048]{0}', space=vmem, size = 0x800, scoped, tag = 'input window, operand 4, single buffered']
    #allocation11 [shape = 'u8[131072]{0}', space=vmem, size = 0x20000, scoped, tag = 'input window, operand 5, single buffered']
    #allocation12 [shape = 's32[1]{0}', space=sflag, size = 0x4, scoped, tag = 'scoped memory for tpu_custom_call.1']
    #allocation13 [shape = 'u8[512]{0}', space=vmem, size = 0x400, scoped, tag = 'input window, operand 6, single buffered']
    #allocation14 [shape = 'u8[1024]{0}', space=vmem, size = 0x400, scoped, tag = 'output window, operand 0, single buffered']
    %12 = vsyncpa [#allocation3], 0
    %13 = vsyncpa [#allocation6], 0
    %14 = vsyncpa [#allocation9], 0
    %15 = vsyncpa [#allocation12], 0
    %16 = vsyncpa [#allocation4], 0
    // Predicated region
    $region2: #{tpu_custom_call.1} parent=1 // pred_check
      _
    $region3: #{tpu_custom_call.1} parent=1 // pred_check_branch
      %18 = sbr.rel (0) target = $region5
    $region4: #{tpu_custom_call.1} parent=1 // pred_region
      %s20 = ssub.s32 608, 608
      %21 = vsyncadd [#allocation3], %s20
      %s23 = sshll.u32 [#allocation2], 4
      %s24 = int_to_ptr.vmem [resolvable:$true] %s23
      %26 = dma.hbm_to_vmem [thread:$0]  %s0, 608, %s24, [#allocation3]
    $region5: #{tpu_custom_call.1} parent=1 // pred_fallthru
      _
    // Predicated region
    $region6: #{tpu_custom_call.1} parent=1 // pred_check
      _
    $region7: #{tpu_custom_call.1} parent=1 // pred_check_branch
      %28 = sbr.rel (0) target = $region9
    $region8: #{tpu_custom_call.1} parent=1 // pred_region
      %s30 = ssub.s32 75264, 75264
      %31 = vsyncadd [#allocation6], %s30
      %s32 = sshll.u32 [#allocation5], 4
      %s33 = int_to_ptr.vmem [resolvable:$true] %s32
      %38 = dma.hbm_to_vmem [thread:$0]  %s1, 75264, %s33, [#allocation6], 256, 256, 16
    $region9: #{tpu_custom_call.1} parent=1 // pred_fallthru
      _
    // Predicated region
    $region10: #{tpu_custom_call.1} parent=1 // pred_check
      _
    $region11: #{tpu_custom_call.1} parent=1 // pred_check_branch
      %40 = sbr.rel (0) target = $region13
    $region12: #{tpu_custom_call.1} parent=1 // pred_region
      %s42 = ssub.s32 64, 64
      %43 = vsyncadd [#allocation6], %s42
      %s45 = sshll.u32 [#allocation7], 4
      %s46 = int_to_ptr.vmem [resolvable:$true] %s45
      %48 = dma.hbm_to_vmem [thread:$0]  %s2, 64, %s46, [#allocation6]
    $region13: #{tpu_custom_call.1} parent=1 // pred_fallthru
      _
    // Predicated region
    $region14: #{tpu_custom_call.1} parent=1 // pred_check
      _
    $region15: #{tpu_custom_call.1} parent=1 // pred_check_branch
      %50 = sbr.rel (0) target = $region17
    $region16: #{tpu_custom_call.1} parent=1 // pred_region
      %s52 = ssub.s32 16384, 16384
      %53 = vsyncadd [#allocation9], %s52
      %s54 = sshll.u32 [#allocation8], 4
      %s55 = int_to_ptr.vmem [resolvable:$true] %s54
      %60 = dma.hbm_to_vmem [thread:$0]  %s3, 16384, %s55, [#allocation9], 256, 256, 16
    $region17: #{tpu_custom_call.1} parent=1 // pred_fallthru
      _
    // Predicated region
    $region18: #{tpu_custom_call.1} parent=1 // pred_check
      _
    $region19: #{tpu_custom_call.1} parent=1 // pred_check_branch
      %62 = sbr.rel (0) target = $region21
    $region20: #{tpu_custom_call.1} parent=1 // pred_region
      %s64 = ssub.s32 64, 64
      %65 = vsyncadd [#allocation9], %s64
      %s67 = sshll.u32 [#allocation10], 4
      %s68 = int_to_ptr.vmem [resolvable:$true] %s67
      %70 = dma.hbm_to_vmem [thread:$0]  %s4, 64, %s68, [#allocation9]
    $region21: #{tpu_custom_call.1} parent=1 // pred_fallthru
      _
    // Predicated region
    $region22: #{tpu_custom_call.1} parent=1 // pred_check
      _
    $region23: #{tpu_custom_call.1} parent=1 // pred_check_branch
      %72 = sbr.rel (0) target = $region25
    $region24: #{tpu_custom_call.1} parent=1 // pred_region
      %s74 = ssub.s32 4096, 4096
      %75 = vsyncadd [#allocation12], %s74
      %s76 = sshll.u32 [#allocation11], 4
      %s77 = int_to_ptr.vmem [resolvable:$true] %s76
      %82 = dma.hbm_to_vmem [thread:$0]  %s5, 4096, %s77, [#allocation12], 64, 64, 4
    $region25: #{tpu_custom_call.1} parent=1 // pred_fallthru
      _
    // Predicated region
    $region26: #{tpu_custom_call.1} parent=1 // pred_check
      _
    $region27: #{tpu_custom_call.1} parent=1 // pred_check_branch
      %84 = sbr.rel (0) target = $region29
    $region28: #{tpu_custom_call.1} parent=1 // pred_region
      %s86 = ssub.s32 16, 16
      %87 = vsyncadd [#allocation12], %s86
      %s89 = sshll.u32 [#allocation13], 4
      %s90 = int_to_ptr.vmem [resolvable:$true] %s89
      %92 = dma.hbm_to_vmem [thread:$0]  %s6, 16, %s90, [#allocation12]
    $region29: #{tpu_custom_call.1} parent=1 // pred_fallthru
      _
    // Predicated region
    $region30: #{tpu_custom_call.1} parent=1 // pred_check
      _
    $region31: #{tpu_custom_call.1} parent=1 // pred_check_branch
      %94 = sbr.rel (0) target = $region33
    $region32: #{tpu_custom_call.1} parent=1 // pred_region
      %95 = dma.done [#allocation3], 608
    $region33: #{tpu_custom_call.1} parent=1 // pred_fallthru
      _
    // Predicated region
    $region34: #{tpu_custom_call.1} parent=1 // pred_check
      _
    $region35: #{tpu_custom_call.1} parent=1 // pred_check_branch
      %97 = sbr.rel (0) target = $region37
    $region36: #{tpu_custom_call.1} parent=1 // pred_region
      %98 = dma.done [#allocation6], 75264
    $region37: #{tpu_custom_call.1} parent=1 // pred_fallthru
      _
    // Predicated region
    $region38: #{tpu_custom_call.1} parent=1 // pred_check
      _
    $region39: #{tpu_custom_call.1} parent=1 // pred_check_branch
      %100 = sbr.rel (0) target = $region41
    $region40: #{tpu_custom_call.1} parent=1 // pred_region
      %101 = dma.done [#allocation6], 64
    $region41: #{tpu_custom_call.1} parent=1 // pred_fallthru
      _
    // Predicated region
    $region42: #{tpu_custom_call.1} parent=1 // pred_check
      _
    $region43: #{tpu_custom_call.1} parent=1 // pred_check_branch
      %103 = sbr.rel (0) target = $region45
    $region44: #{tpu_custom_call.1} parent=1 // pred_region
      %104 = dma.done [#allocation9], 16384
    $region45: #{tpu_custom_call.1} parent=1 // pred_fallthru
      _
    // Predicated region
    $region46: #{tpu_custom_call.1} parent=1 // pred_check
      _
    $region47: #{tpu_custom_call.1} parent=1 // pred_check_branch
      %106 = sbr.rel (0) target = $region49
    $region48: #{tpu_custom_call.1} parent=1 // pred_region
      %107 = dma.done [#allocation9], 64
    $region49: #{tpu_custom_call.1} parent=1 // pred_fallthru
      _
    // Predicated region
    $region50: #{tpu_custom_call.1} parent=1 // pred_check
      _
    $region51: #{tpu_custom_call.1} parent=1 // pred_check_branch
      %109 = sbr.rel (0) target = $region53
    $region52: #{tpu_custom_call.1} parent=1 // pred_region
      %110 = dma.done [#allocation12], 4096
    $region53: #{tpu_custom_call.1} parent=1 // pred_fallthru
      _
    // Predicated region
    $region54: #{tpu_custom_call.1} parent=1 // pred_check
      _
    $region55: #{tpu_custom_call.1} parent=1 // pred_check_branch
      %112 = sbr.rel (0) target = $region57
    $region56: #{tpu_custom_call.1} parent=1 // pred_region
      %113 = dma.done [#allocation12], 16
    $region57: #{tpu_custom_call.1} parent=1 // pred_fallthru
      _
    %v115 = vld [vmem:[#allocation2] sm:$0xff]
    %v116 = vld [vmem:[#allocation2 + $0x8] sm:$0xff]
    %v117 = vld [vmem:[#allocation2 + $0x10] sm:$0xff]
    %v118 = vld [vmem:[#allocation2 + $0x18] sm:$0xff]
    %v119 = vld [vmem:[#allocation2 + $0x20] sm:$0x3f]
    %v125 = vcombine.high %v115, %v115
    %v127 = vunpack.c.l.s4 1983009808
    %v128 = vunpack.c.0.s8 %v127
    %v129 = vlaneseq
    %v130 = vshrl.u32 %v129, 7
    %v131 = vsub.s32 %v128, %v130
    %v132 = vrot.slane %v115, %v131
    %v134 = vunpack.c.l.s4 1983009808
    %v135 = vunpack.c.0.s8 %v134
    %v136 = vlaneseq
    %v137 = vshrl.u32 %v136, 7
    %v138 = vsub.s32 %v135, %v137
    %v139 = vrot.slane %v125, %v138
    %v140 = vcombine.high %v132, %v132
    %v141 = vcombine.high %v139, %v139
    %v142 = vcombine.high %v116, %v116
    %v144 = vunpack.c.l.s4 1983009808
    %v145 = vunpack.c.0.s8 %v144
    %v146 = vlaneseq
    %v147 = vshrl.u32 %v146, 7
    %v148 = vsub.s32 %v145, %v147
    %v149 = vrot.slane %v116, %v148
    %v151 = vunpack.c.l.s4 1983009808
    %v152 = vunpack.c.0.s8 %v151
    %v153 = vlaneseq
    %v154 = vshrl.u32 %v153, 7
    %v155 = vsub.s32 %v152, %v154
    %v156 = vrot.slane %v142, %v155
    %v157 = vcombine.high %v149, %v149
    %v158 = vcombine.high %v156, %v156
    %v159 = vcombine.high %v117, %v117
    %v161 = vunpack.c.l.s4 1983009808
    %v162 = vunpack.c.0.s8 %v161
    %v163 = vlaneseq
    %v164 = vshrl.u32 %v163, 7
    %v165 = vsub.s32 %v162, %v164
    %v166 = vrot.slane %v117, %v165
    %v168 = vunpack.c.l.s4 1983009808
    %v169 = vunpack.c.0.s8 %v168
    %v170 = vlaneseq
    %v171 = vshrl.u32 %v170, 7
    %v172 = vsub.s32 %v169, %v171
    %v173 = vrot.slane %v159, %v172
    %v174 = vcombine.high %v166, %v166
    %v175 = vcombine.high %v173, %v173
    %v176 = vcombine.high %v118, %v118
    %v178 = vunpack.c.l.s4 1983009808
    %v179 = vunpack.c.0.s8 %v178
    %v180 = vlaneseq
    %v181 = vshrl.u32 %v180, 7
    %v182 = vsub.s32 %v179, %v181
    %v183 = vrot.slane %v118, %v182
    %v185 = vunpack.c.l.s4 1983009808
    %v186 = vunpack.c.0.s8 %v185
    %v187 = vlaneseq
    %v188 = vshrl.u32 %v187, 7
    %v189 = vsub.s32 %v186, %v188
    %v190 = vrot.slane %v176, %v189
    %v191 = vcombine.high %v183, %v183
    %v192 = vcombine.high %v190, %v190
    %v193 = vcombine.high %v119, %v119
    %v195 = vunpack.c.l.s4 1983009808
    %v196 = vunpack.c.0.s8 %v195
    %v197 = vlaneseq
    %v198 = vshrl.u32 %v197, 7
    %v199 = vsub.s32 %v196, %v198
    %v200 = vrot.slane %v119, %v199
    %v202 = vunpack.c.l.s4 1983009808
    %v203 = vunpack.c.0.s8 %v202
    %v204 = vlaneseq
    %v205 = vshrl.u32 %v204, 7
    %v206 = vsub.s32 %v203, %v205
    %v207 = vrot.slane %v193, %v206
    %v208 = vcombine.high %v200, %v200
    %v228 = vpack.c.bf16 %v132, %v132
    %v229 = vpack.c.bf16 %v140, %v140
    %v230 = vpack.c.bf16 %v139, %v139
    %v231 = vpack.c.bf16 %v141, %v141
    %v232 = vpack.c.bf16 %v149, %v149
    %v233 = vpack.c.bf16 %v157, %v157
    %v234 = vpack.c.bf16 %v156, %v156
    %v235 = vpack.c.bf16 %v158, %v158
    %v236 = vpack.c.bf16 %v166, %v166
    %v237 = vpack.c.bf16 %v174, %v174
    %v238 = vpack.c.bf16 %v173, %v173
    %v239 = vpack.c.bf16 %v175, %v175
    %v240 = vpack.c.bf16 %v183, %v183
    %v241 = vpack.c.bf16 %v191, %v191
    %v242 = vpack.c.bf16 %v190, %v190
    %v243 = vpack.c.bf16 %v192, %v192
    %v244 = vpack.c.bf16 %v200, %v200
    %v245 = vpack.c.bf16 %v208, %v208
    %v246 = vpack.c.bf16 %v207, %v207
    %v247 = vld [vmem:[#allocation5] sm:$0xff]
    %v248 = vld [vmem:[#allocation5 + $0x8] sm:$0xff]
    %v249 = vld [vmem:[#allocation5 + $0x10] sm:$0xff]
    %v250 = vld [vmem:[#allocation5 + $0x18] sm:$0xff]
    %v251 = vld [vmem:[#allocation5 + $0x20] sm:$0xff]
    %v252 = vld [vmem:[#allocation5 + $0x28] sm:$0xff]
    %v253 = vld [vmem:[#allocation5 + $0x30] sm:$0xff]
    %v254 = vld [vmem:[#allocation5 + $0x38] sm:$0xff]
    %v255 = vld [vmem:[#allocation5 + $0x40] sm:$0xff]
    %v256 = vld [vmem:[#allocation5 + $0x48] sm:$0xff]
    %v257 = vld [vmem:[#allocation5 + $0x50] sm:$0xff]
    %v258 = vld [vmem:[#allocation5 + $0x58] sm:$0xff]
    %v259 = vld [vmem:[#allocation5 + $0x60] sm:$0xff]
    %v260 = vld [vmem:[#allocation5 + $0x68] sm:$0xff]
    %v261 = vld [vmem:[#allocation5 + $0x70] sm:$0xff]
    %v262 = vld [vmem:[#allocation5 + $0x78] sm:$0xff]
    %v263 = vld [vmem:[#allocation5 + $0x80] sm:$0xff]
    %v264 = vld [vmem:[#allocation5 + $0x88] sm:$0xff]
    %v265 = vld [vmem:[#allocation5 + $0x90] sm:$0xff]
    %v266 = vld [vmem:[#allocation5 + $0x98] sm:$0xff]
    %v267 = vld [vmem:[#allocation5 + $0xa0] sm:$0xff]
    %v268 = vld [vmem:[#allocation5 + $0xa8] sm:$0xff]
    %v269 = vld [vmem:[#allocation5 + $0xb0] sm:$0xff]
    %v270 = vld [vmem:[#allocation5 + $0xb8] sm:$0xff]
    %v271 = vld [vmem:[#allocation5 + $0xc0] sm:$0xff]
    %v272 = vld [vmem:[#allocation5 + $0xc8] sm:$0xff]
    %v273 = vld [vmem:[#allocation5 + $0xd0] sm:$0xff]
    %v274 = vld [vmem:[#allocation5 + $0xd8] sm:$0xff]
    %v275 = vld [vmem:[#allocation5 + $0xe0] sm:$0xff]
    %v276 = vld [vmem:[#allocation5 + $0xe8] sm:$0xff]
    %v277 = vld [vmem:[#allocation5 + $0xf0] sm:$0xff]
    %v278 = vld [vmem:[#allocation5 + $0xf8] sm:$0xff]
    %v279 = vld [vmem:[#allocation5 + $0x100] sm:$0xff]
    %v280 = vld [vmem:[#allocation5 + $0x108] sm:$0xff]
    %v281 = vld [vmem:[#allocation5 + $0x110] sm:$0xff]
    %v282 = vld [vmem:[#allocation5 + $0x118] sm:$0xff]
    %v283 = vld [vmem:[#allocation5 + $0x120] sm:$0xff]
    %v284 = vld [vmem:[#allocation5 + $0x128] sm:$0xff]
    %v285 = vld [vmem:[#allocation5 + $0x130] sm:$0xff]
    %v286 = vld [vmem:[#allocation5 + $0x138] sm:$0xff]
    %v287 = vld [vmem:[#allocation5 + $0x140] sm:$0xff]
    %v288 = vld [vmem:[#allocation5 + $0x148] sm:$0xff]
    %v289 = vld [vmem:[#allocation5 + $0x150] sm:$0xff]
    %v290 = vld [vmem:[#allocation5 + $0x158] sm:$0xff]
    %v291 = vld [vmem:[#allocation5 + $0x160] sm:$0xff]
    %v292 = vld [vmem:[#allocation5 + $0x168] sm:$0xff]
    %v293 = vld [vmem:[#allocation5 + $0x170] sm:$0xff]
    %v294 = vld [vmem:[#allocation5 + $0x178] sm:$0xff]
    %v295 = vld [vmem:[#allocation5 + $0x180] sm:$0xff]
    %v296 = vld [vmem:[#allocation5 + $0x188] sm:$0xff]
    %v297 = vld [vmem:[#allocation5 + $0x190] sm:$0xff]
    %v298 = vld [vmem:[#allocation5 + $0x198] sm:$0xff]
    %v299 = vld [vmem:[#allocation5 + $0x1a0] sm:$0xff]
    %v300 = vld [vmem:[#allocation5 + $0x1a8] sm:$0xff]
    %v301 = vld [vmem:[#allocation5 + $0x1b0] sm:$0xff]
    %v302 = vld [vmem:[#allocation5 + $0x1b8] sm:$0xff]
    %v303 = vld [vmem:[#allocation5 + $0x1c0] sm:$0xff]
    %v304 = vld [vmem:[#allocation5 + $0x1c8] sm:$0xff]
    %v305 = vld [vmem:[#allocation5 + $0x1d0] sm:$0xff]
    %v306 = vld [vmem:[#allocation5 + $0x1d8] sm:$0xff]
    %v307 = vld [vmem:[#allocation5 + $0x1e0] sm:$0xff]
    %v308 = vld [vmem:[#allocation5 + $0x1e8] sm:$0xff]
    %v309 = vld [vmem:[#allocation5 + $0x1f0] sm:$0xff]
    %v310 = vld [vmem:[#allocation5 + $0x1f8] sm:$0xff]
    %v311 = vld [vmem:[#allocation5 + $0x200] sm:$0xff]
    %v312 = vld [vmem:[#allocation5 + $0x208] sm:$0xff]
    %v313 = vld [vmem:[#allocation5 + $0x210] sm:$0xff]
    %v314 = vld [vmem:[#allocation5 + $0x218] sm:$0xff]
    %v315 = vld [vmem:[#allocation5 + $0x220] sm:$0xff]
    %v316 = vld [vmem:[#allocation5 + $0x228] sm:$0xff]
    %v317 = vld [vmem:[#allocation5 + $0x230] sm:$0xff]
    %v318 = vld [vmem:[#allocation5 + $0x238] sm:$0xff]
    %v319 = vld [vmem:[#allocation5 + $0x240] sm:$0xff]
    %v320 = vld [vmem:[#allocation5 + $0x248] sm:$0xff]
    %v321 = vld [vmem:[#allocation5 + $0x250] sm:$0xff]
    %v322 = vld [vmem:[#allocation5 + $0x258] sm:$0xff]
    %v323 = vld [vmem:[#allocation5 + $0x260] sm:$0xff]
    %v324 = vld [vmem:[#allocation5 + $0x268] sm:$0xff]
    %v325 = vld [vmem:[#allocation5 + $0x270] sm:$0xff]
    %v326 = vld [vmem:[#allocation5 + $0x278] sm:$0xff]
    %v327 = vld [vmem:[#allocation5 + $0x280] sm:$0xff]
    %v328 = vld [vmem:[#allocation5 + $0x288] sm:$0xff]
    %v329 = vld [vmem:[#allocation5 + $0x290] sm:$0xff]
    %v330 = vld [vmem:[#allocation5 + $0x298] sm:$0xff]
    %v331 = vld [vmem:[#allocation5 + $0x2a0] sm:$0xff]
    %v332 = vld [vmem:[#allocation5 + $0x2a8] sm:$0xff]
    %v333 = vld [vmem:[#allocation5 + $0x2b0] sm:$0xff]
    %v334 = vld [vmem:[#allocation5 + $0x2b8] sm:$0xff]
    %v335 = vld [vmem:[#allocation5 + $0x2c0] sm:$0xff]
    %v336 = vld [vmem:[#allocation5 + $0x2c8] sm:$0xff]
    %v337 = vld [vmem:[#allocation5 + $0x2d0] sm:$0xff]
    %v338 = vld [vmem:[#allocation5 + $0x2d8] sm:$0xff]
    %v339 = vld [vmem:[#allocation5 + $0x2e0] sm:$0xff]
    %v340 = vld [vmem:[#allocation5 + $0x2e8] sm:$0xff]
    %v341 = vld [vmem:[#allocation5 + $0x2f0] sm:$0xff]
    %v342 = vld [vmem:[#allocation5 + $0x2f8] sm:$0xff]
    %v343 = vld [vmem:[#allocation5 + $0x300] sm:$0xff]
    %v344 = vld [vmem:[#allocation5 + $0x308] sm:$0xff]
    %v345 = vld [vmem:[#allocation5 + $0x310] sm:$0xff]
    %v346 = vld [vmem:[#allocation5 + $0x318] sm:$0xff]
    %v347 = vld [vmem:[#allocation5 + $0x320] sm:$0xff]
    %v348 = vld [vmem:[#allocation5 + $0x328] sm:$0xff]
    %v349 = vld [vmem:[#allocation5 + $0x330] sm:$0xff]
    %v350 = vld [vmem:[#allocation5 + $0x338] sm:$0xff]
    %v351 = vld [vmem:[#allocation5 + $0x340] sm:$0xff]
    %v352 = vld [vmem:[#allocation5 + $0x348] sm:$0xff]
    %v353 = vld [vmem:[#allocation5 + $0x350] sm:$0xff]
    %v354 = vld [vmem:[#allocation5 + $0x358] sm:$0xff]
    %v355 = vld [vmem:[#allocation5 + $0x360] sm:$0xff]
    %v356 = vld [vmem:[#allocation5 + $0x368] sm:$0xff]
    %v357 = vld [vmem:[#allocation5 + $0x370] sm:$0xff]
    %v358 = vld [vmem:[#allocation5 + $0x378] sm:$0xff]
    %v359 = vld [vmem:[#allocation5 + $0x380] sm:$0xff]
    %v360 = vld [vmem:[#allocation5 + $0x388] sm:$0xff]
    %v361 = vld [vmem:[#allocation5 + $0x390] sm:$0xff]
    %v362 = vld [vmem:[#allocation5 + $0x398] sm:$0xff]
    %v363 = vld [vmem:[#allocation5 + $0x3a0] sm:$0xff]
    %v364 = vld [vmem:[#allocation5 + $0x3a8] sm:$0xff]
    %v365 = vld [vmem:[#allocation5 + $0x3b0] sm:$0xff]
    %v366 = vld [vmem:[#allocation5 + $0x3b8] sm:$0xff]
    %v367 = vld [vmem:[#allocation5 + $0x3c0] sm:$0xff]
    %v368 = vld [vmem:[#allocation5 + $0x3c8] sm:$0xff]
    %v369 = vld [vmem:[#allocation5 + $0x3d0] sm:$0xff]
    %v370 = vld [vmem:[#allocation5 + $0x3d8] sm:$0xff]
    %v371 = vld [vmem:[#allocation5 + $0x3e0] sm:$0xff]
    %v372 = vld [vmem:[#allocation5 + $0x3e8] sm:$0xff]
    %v373 = vld [vmem:[#allocation5 + $0x3f0] sm:$0xff]
    %v374 = vld [vmem:[#allocation5 + $0x3f8] sm:$0xff]
    %v375 = vld [vmem:[#allocation5 + $0x400] sm:$0xff]
    %v376 = vld [vmem:[#allocation5 + $0x408] sm:$0xff]
    %v377 = vld [vmem:[#allocation5 + $0x410] sm:$0xff]
    %v378 = vld [vmem:[#allocation5 + $0x418] sm:$0xff]
    %v379 = vld [vmem:[#allocation5 + $0x420] sm:$0xff]
    %v380 = vld [vmem:[#allocation5 + $0x428] sm:$0xff]
    %v381 = vld [vmem:[#allocation5 + $0x430] sm:$0xff]
    %v382 = vld [vmem:[#allocation5 + $0x438] sm:$0xff]
    %v383 = vld [vmem:[#allocation5 + $0x440] sm:$0xff]
    %v384 = vld [vmem:[#allocation5 + $0x448] sm:$0xff]
    %v385 = vld [vmem:[#allocation5 + $0x450] sm:$0xff]
    %v386 = vld [vmem:[#allocation5 + $0x458] sm:$0xff]
    %v387 = vld [vmem:[#allocation5 + $0x460] sm:$0xff]
    %v388 = vld [vmem:[#allocation5 + $0x468] sm:$0xff]
    %v389 = vld [vmem:[#allocation5 + $0x470] sm:$0xff]
    %v390 = vld [vmem:[#allocation5 + $0x478] sm:$0xff]
    %v391 = vld [vmem:[#allocation5 + $0x480] sm:$0xff]
    %v392 = vld [vmem:[#allocation5 + $0x488] sm:$0xff]
    %v393 = vld [vmem:[#allocation5 + $0x490] sm:$0xff]
    %v394 = vld [vmem:[#allocation5 + $0x498] sm:$0xff]
    %v395 = vld [vmem:[#allocation5 + $0x4a0] sm:$0xff]
    %v396 = vld [vmem:[#allocation5 + $0x4a8] sm:$0xff]
    %v397 = vld [vmem:[#allocation5 + $0x4b0] sm:$0xff]
    %v398 = vld [vmem:[#allocation5 + $0x4b8] sm:$0xff]
    %v399 = vld [vmem:[#allocation5 + $0x4c0] sm:$0xff]
    %v400 = vld [vmem:[#allocation5 + $0x4c8] sm:$0xff]
    %v401 = vld [vmem:[#allocation5 + $0x4d0] sm:$0xff]
    %v402 = vld [vmem:[#allocation5 + $0x4d8] sm:$0xff]
    %v403 = vld [vmem:[#allocation5 + $0x4e0] sm:$0xff]
    %v404 = vld [vmem:[#allocation5 + $0x4e8] sm:$0xff]
    %v405 = vld [vmem:[#allocation5 + $0x4f0] sm:$0xff]
    %v406 = vld [vmem:[#allocation5 + $0x4f8] sm:$0xff]
    %v407 = vld [vmem:[#allocation5 + $0x500] sm:$0xff]
    %v408 = vld [vmem:[#allocation5 + $0x508] sm:$0xff]
    %v409 = vld [vmem:[#allocation5 + $0x510] sm:$0xff]
    %v410 = vld [vmem:[#allocation5 + $0x518] sm:$0xff]
    %v411 = vld [vmem:[#allocation5 + $0x520] sm:$0xff]
    %v412 = vld [vmem:[#allocation5 + $0x528] sm:$0xff]
    %v413 = vld [vmem:[#allocation5 + $0x530] sm:$0xff]
    %v414 = vld [vmem:[#allocation5 + $0x538] sm:$0xff]
    %v415 = vld [vmem:[#allocation5 + $0x540] sm:$0xff]
    %v416 = vld [vmem:[#allocation5 + $0x548] sm:$0xff]
    %v417 = vld [vmem:[#allocation5 + $0x550] sm:$0xff]
    %v418 = vld [vmem:[#allocation5 + $0x558] sm:$0xff]
    %v419 = vld [vmem:[#allocation5 + $0x560] sm:$0xff]
    %v420 = vld [vmem:[#allocation5 + $0x568] sm:$0xff]
    %v421 = vld [vmem:[#allocation5 + $0x570] sm:$0xff]
    %v422 = vld [vmem:[#allocation5 + $0x578] sm:$0xff]
    %v423 = vld [vmem:[#allocation5 + $0x580] sm:$0xff]
    %v424 = vld [vmem:[#allocation5 + $0x588] sm:$0xff]
    %v425 = vld [vmem:[#allocation5 + $0x590] sm:$0xff]
    %v426 = vld [vmem:[#allocation5 + $0x598] sm:$0xff]
    %v427 = vld [vmem:[#allocation5 + $0x5a0] sm:$0xff]
    %v428 = vld [vmem:[#allocation5 + $0x5a8] sm:$0xff]
    %v429 = vld [vmem:[#allocation5 + $0x5b0] sm:$0xff]
    %v430 = vld [vmem:[#allocation5 + $0x5b8] sm:$0xff]
    %v431 = vld [vmem:[#allocation5 + $0x5c0] sm:$0xff]
    %v432 = vld [vmem:[#allocation5 + $0x5c8] sm:$0xff]
    %v433 = vld [vmem:[#allocation5 + $0x5d0] sm:$0xff]
    %v434 = vld [vmem:[#allocation5 + $0x5d8] sm:$0xff]
    %v435 = vld [vmem:[#allocation5 + $0x5e0] sm:$0xff]
    %v436 = vld [vmem:[#allocation5 + $0x5e8] sm:$0xff]
    %v437 = vld [vmem:[#allocation5 + $0x5f0] sm:$0xff]
    %v438 = vld [vmem:[#allocation5 + $0x5f8] sm:$0xff]
    %v439 = vld [vmem:[#allocation5 + $0x600] sm:$0xff]
    %v440 = vld [vmem:[#allocation5 + $0x608] sm:$0xff]
    %v441 = vld [vmem:[#allocation5 + $0x610] sm:$0xff]
    %v442 = vld [vmem:[#allocation5 + $0x618] sm:$0xff]
    %v443 = vld [vmem:[#allocation5 + $0x620] sm:$0xff]
    %v444 = vld [vmem:[#allocation5 + $0x628] sm:$0xff]
    %v445 = vld [vmem:[#allocation5 + $0x630] sm:$0xff]
    %v446 = vld [vmem:[#allocation5 + $0x638] sm:$0xff]
    %v447 = vld [vmem:[#allocation5 + $0x640] sm:$0xff]
    %v448 = vld [vmem:[#allocation5 + $0x648] sm:$0xff]
    %v449 = vld [vmem:[#allocation5 + $0x650] sm:$0xff]
    %v450 = vld [vmem:[#allocation5 + $0x658] sm:$0xff]
    %v451 = vld [vmem:[#allocation5 + $0x660] sm:$0xff]
    %v452 = vld [vmem:[#allocation5 + $0x668] sm:$0xff]
    %v453 = vld [vmem:[#allocation5 + $0x670] sm:$0xff]
    %v454 = vld [vmem:[#allocation5 + $0x678] sm:$0xff]
    %v455 = vld [vmem:[#allocation5 + $0x680] sm:$0xff]
    %v456 = vld [vmem:[#allocation5 + $0x688] sm:$0xff]
    %v457 = vld [vmem:[#allocation5 + $0x690] sm:$0xff]
    %v458 = vld [vmem:[#allocation5 + $0x698] sm:$0xff]
    %v459 = vld [vmem:[#allocation5 + $0x6a0] sm:$0xff]
    %v460 = vld [vmem:[#allocation5 + $0x6a8] sm:$0xff]
    %v461 = vld [vmem:[#allocation5 + $0x6b0] sm:$0xff]
    %v462 = vld [vmem:[#allocation5 + $0x6b8] sm:$0xff]
    %v463 = vld [vmem:[#allocation5 + $0x6c0] sm:$0xff]
    %v464 = vld [vmem:[#allocation5 + $0x6c8] sm:$0xff]
    %v465 = vld [vmem:[#allocation5 + $0x6d0] sm:$0xff]
    %v466 = vld [vmem:[#allocation5 + $0x6d8] sm:$0xff]
    %v467 = vld [vmem:[#allocation5 + $0x6e0] sm:$0xff]
    %v468 = vld [vmem:[#allocation5 + $0x6e8] sm:$0xff]
    %v469 = vld [vmem:[#allocation5 + $0x6f0] sm:$0xff]
    %v470 = vld [vmem:[#allocation5 + $0x6f8] sm:$0xff]
    %v471 = vld [vmem:[#allocation5 + $0x700] sm:$0xff]
    %v472 = vld [vmem:[#allocation5 + $0x708] sm:$0xff]
    %v473 = vld [vmem:[#allocation5 + $0x710] sm:$0xff]
    %v474 = vld [vmem:[#allocation5 + $0x718] sm:$0xff]
    %v475 = vld [vmem:[#allocation5 + $0x720] sm:$0xff]
    %v476 = vld [vmem:[#allocation5 + $0x728] sm:$0xff]
    %v477 = vld [vmem:[#allocation5 + $0x730] sm:$0xff]
    %v478 = vld [vmem:[#allocation5 + $0x738] sm:$0xff]
    %v479 = vld [vmem:[#allocation5 + $0x740] sm:$0xff]
    %v480 = vld [vmem:[#allocation5 + $0x748] sm:$0xff]
    %v481 = vld [vmem:[#allocation5 + $0x750] sm:$0xff]
    %v482 = vld [vmem:[#allocation5 + $0x758] sm:$0xff]
    %v483 = vld [vmem:[#allocation5 + $0x760] sm:$0xff]
    %v484 = vld [vmem:[#allocation5 + $0x768] sm:$0xff]
    %v485 = vld [vmem:[#allocation5 + $0x770] sm:$0xff]
    %v486 = vld [vmem:[#allocation5 + $0x778] sm:$0xff]
    %v487 = vld [vmem:[#allocation5 + $0x780] sm:$0xff]
    %v488 = vld [vmem:[#allocation5 + $0x788] sm:$0xff]
    %v489 = vld [vmem:[#allocation5 + $0x790] sm:$0xff]
    %v490 = vld [vmem:[#allocation5 + $0x798] sm:$0xff]
    %v491 = vld [vmem:[#allocation5 + $0x7a0] sm:$0xff]
    %v492 = vld [vmem:[#allocation5 + $0x7a8] sm:$0xff]
    %v493 = vld [vmem:[#allocation5 + $0x7b0] sm:$0xff]
    %v494 = vld [vmem:[#allocation5 + $0x7b8] sm:$0xff]
    %v495 = vld [vmem:[#allocation5 + $0x7c0] sm:$0xff]
    %v496 = vld [vmem:[#allocation5 + $0x7c8] sm:$0xff]
    %v497 = vld [vmem:[#allocation5 + $0x7d0] sm:$0xff]
    %v498 = vld [vmem:[#allocation5 + $0x7d8] sm:$0xff]
    %v499 = vld [vmem:[#allocation5 + $0x7e0] sm:$0xff]
    %v500 = vld [vmem:[#allocation5 + $0x7e8] sm:$0xff]
    %v501 = vld [vmem:[#allocation5 + $0x7f0] sm:$0xff]
    %v502 = vld [vmem:[#allocation5 + $0x7f8] sm:$0xff]
    %v503 = vld [vmem:[#allocation5 + $0x800] sm:$0xff]
    %v504 = vld [vmem:[#allocation5 + $0x808] sm:$0xff]
    %v505 = vld [vmem:[#allocation5 + $0x810] sm:$0xff]
    %v506 = vld [vmem:[#allocation5 + $0x818] sm:$0xff]
    %v507 = vld [vmem:[#allocation5 + $0x820] sm:$0xff]
    %v508 = vld [vmem:[#allocation5 + $0x828] sm:$0xff]
    %v509 = vld [vmem:[#allocation5 + $0x830] sm:$0xff]
    %v510 = vld [vmem:[#allocation5 + $0x838] sm:$0xff]
    %v511 = vld [vmem:[#allocation5 + $0x840] sm:$0xff]
    %v512 = vld [vmem:[#allocation5 + $0x848] sm:$0xff]
    %v513 = vld [vmem:[#allocation5 + $0x850] sm:$0xff]
    %v514 = vld [vmem:[#allocation5 + $0x858] sm:$0xff]
    %v515 = vld [vmem:[#allocation5 + $0x860] sm:$0xff]
    %v516 = vld [vmem:[#allocation5 + $0x868] sm:$0xff]
    %v517 = vld [vmem:[#allocation5 + $0x870] sm:$0xff]
    %v518 = vld [vmem:[#allocation5 + $0x878] sm:$0xff]
    %v519 = vld [vmem:[#allocation5 + $0x880] sm:$0xff]
    %v520 = vld [vmem:[#allocation5 + $0x888] sm:$0xff]
    %v521 = vld [vmem:[#allocation5 + $0x890] sm:$0xff]
    %v522 = vld [vmem:[#allocation5 + $0x898] sm:$0xff]
    %v523 = vld [vmem:[#allocation5 + $0x8a0] sm:$0xff]
    %v524 = vld [vmem:[#allocation5 + $0x8a8] sm:$0xff]
    %v525 = vld [vmem:[#allocation5 + $0x8b0] sm:$0xff]
    %v526 = vld [vmem:[#allocation5 + $0x8b8] sm:$0xff]
    %v527 = vld [vmem:[#allocation5 + $0x8c0] sm:$0xff]
    %v528 = vld [vmem:[#allocation5 + $0x8c8] sm:$0xff]
    %v529 = vld [vmem:[#allocation5 + $0x8d0] sm:$0xff]
    %v530 = vld [vmem:[#allocation5 + $0x8d8] sm:$0xff]
    %v531 = vld [vmem:[#allocation5 + $0x8e0] sm:$0xff]
    %v532 = vld [vmem:[#allocation5 + $0x8e8] sm:$0xff]
    %v533 = vld [vmem:[#allocation5 + $0x8f0] sm:$0xff]
    %v534 = vld [vmem:[#allocation5 + $0x8f8] sm:$0xff]
    %v535 = vld [vmem:[#allocation5 + $0x900] sm:$0xff]
    %v536 = vld [vmem:[#allocation5 + $0x908] sm:$0xff]
    %v537 = vld [vmem:[#allocation5 + $0x910] sm:$0xff]
    %v538 = vld [vmem:[#allocation5 + $0x918] sm:$0xff]
    %v539 = vld [vmem:[#allocation5 + $0x920] sm:$0xff]
    %v540 = vld [vmem:[#allocation5 + $0x928] sm:$0xff]
    %v541 = vld [vmem:[#allocation5 + $0x930] sm:$0xff]
    %v542 = vld [vmem:[#allocation5 + $0x938] sm:$0xff]
    %v543 = vld [vmem:[#allocation5 + $0x940] sm:$0xff]
    %v544 = vld [vmem:[#allocation5 + $0x948] sm:$0xff]
    %v545 = vld [vmem:[#allocation5 + $0x950] sm:$0xff]
    %v546 = vld [vmem:[#allocation5 + $0x958] sm:$0xff]
    %v547 = vld [vmem:[#allocation5 + $0x960] sm:$0xff]
    %v548 = vld [vmem:[#allocation5 + $0x968] sm:$0xff]
    %v549 = vld [vmem:[#allocation5 + $0x970] sm:$0xff]
    %v550 = vld [vmem:[#allocation5 + $0x978] sm:$0xff]
    %v551 = vld [vmem:[#allocation5 + $0x980] sm:$0xff]
    %v552 = vld [vmem:[#allocation5 + $0x988] sm:$0xff]
    %v553 = vld [vmem:[#allocation5 + $0x990] sm:$0xff]
    %v554 = vld [vmem:[#allocation5 + $0x998] sm:$0xff]
    %v555 = vld [vmem:[#allocation5 + $0x9a0] sm:$0xff]
    %v556 = vld [vmem:[#allocation5 + $0x9a8] sm:$0xff]
    %v557 = vld [vmem:[#allocation5 + $0x9b0] sm:$0xff]
    %v558 = vld [vmem:[#allocation5 + $0x9b8] sm:$0xff]
    %v559 = vld [vmem:[#allocation5 + $0x9c0] sm:$0xff]
    %v560 = vld [vmem:[#allocation5 + $0x9c8] sm:$0xff]
    %v561 = vld [vmem:[#allocation5 + $0x9d0] sm:$0xff]
    %v562 = vld [vmem:[#allocation5 + $0x9d8] sm:$0xff]
    %v563 = vld [vmem:[#allocation5 + $0x9e0] sm:$0xff]
    %v564 = vld [vmem:[#allocation5 + $0x9e8] sm:$0xff]
    %v565 = vld [vmem:[#allocation5 + $0x9f0] sm:$0xff]
    %v566 = vld [vmem:[#allocation5 + $0x9f8] sm:$0xff]
    %v567 = vld [vmem:[#allocation5 + $0xa00] sm:$0xff]
    %v568 = vld [vmem:[#allocation5 + $0xa08] sm:$0xff]
    %v569 = vld [vmem:[#allocation5 + $0xa10] sm:$0xff]
    %v570 = vld [vmem:[#allocation5 + $0xa18] sm:$0xff]
    %v571 = vld [vmem:[#allocation5 + $0xa20] sm:$0xff]
    %v572 = vld [vmem:[#allocation5 + $0xa28] sm:$0xff]
    %v573 = vld [vmem:[#allocation5 + $0xa30] sm:$0xff]
    %v574 = vld [vmem:[#allocation5 + $0xa38] sm:$0xff]
    %v575 = vld [vmem:[#allocation5 + $0xa40] sm:$0xff]
    %v576 = vld [vmem:[#allocation5 + $0xa48] sm:$0xff]
    %v577 = vld [vmem:[#allocation5 + $0xa50] sm:$0xff]
    %v578 = vld [vmem:[#allocation5 + $0xa58] sm:$0xff]
    %v579 = vld [vmem:[#allocation5 + $0xa60] sm:$0xff]
    %v580 = vld [vmem:[#allocation5 + $0xa68] sm:$0xff]
    %v581 = vld [vmem:[#allocation5 + $0xa70] sm:$0xff]
    %v582 = vld [vmem:[#allocation5 + $0xa78] sm:$0xff]
    %v583 = vld [vmem:[#allocation5 + $0xa80] sm:$0xff]
    %v584 = vld [vmem:[#allocation5 + $0xa88] sm:$0xff]
    %v585 = vld [vmem:[#allocation5 + $0xa90] sm:$0xff]
    %v586 = vld [vmem:[#allocation5 + $0xa98] sm:$0xff]
    %v587 = vld [vmem:[#allocation5 + $0xaa0] sm:$0xff]
    %v588 = vld [vmem:[#allocation5 + $0xaa8] sm:$0xff]
    %v589 = vld [vmem:[#allocation5 + $0xab0] sm:$0xff]
    %v590 = vld [vmem:[#allocation5 + $0xab8] sm:$0xff]
    %v591 = vld [vmem:[#allocation5 + $0xac0] sm:$0xff]
    %v592 = vld [vmem:[#allocation5 + $0xac8] sm:$0xff]
    %v593 = vld [vmem:[#allocation5 + $0xad0] sm:$0xff]
    %v594 = vld [vmem:[#allocation5 + $0xad8] sm:$0xff]
    %v595 = vld [vmem:[#allocation5 + $0xae0] sm:$0xff]
    %v596 = vld [vmem:[#allocation5 + $0xae8] sm:$0xff]
    %v597 = vld [vmem:[#allocation5 + $0xaf0] sm:$0xff]
    %v598 = vld [vmem:[#allocation5 + $0xaf8] sm:$0xff]
    %v599 = vld [vmem:[#allocation5 + $0xb00] sm:$0xff]
    %v600 = vld [vmem:[#allocation5 + $0xb08] sm:$0xff]
    %v601 = vld [vmem:[#allocation5 + $0xb10] sm:$0xff]
    %v602 = vld [vmem:[#allocation5 + $0xb18] sm:$0xff]
    %v603 = vld [vmem:[#allocation5 + $0xb20] sm:$0xff]
    %v604 = vld [vmem:[#allocation5 + $0xb28] sm:$0xff]
    %v605 = vld [vmem:[#allocation5 + $0xb30] sm:$0xff]
    %v606 = vld [vmem:[#allocation5 + $0xb38] sm:$0xff]
    %v607 = vld [vmem:[#allocation5 + $0xb40] sm:$0xff]
    %v608 = vld [vmem:[#allocation5 + $0xb48] sm:$0xff]
    %v609 = vld [vmem:[#allocation5 + $0xb50] sm:$0xff]
    %v610 = vld [vmem:[#allocation5 + $0xb58] sm:$0xff]
    %v611 = vld [vmem:[#allocation5 + $0xb60] sm:$0xff]
    %v612 = vld [vmem:[#allocation5 + $0xb68] sm:$0xff]
    %v613 = vld [vmem:[#allocation5 + $0xb70] sm:$0xff]
    %v614 = vld [vmem:[#allocation5 + $0xb78] sm:$0xff]
    %v615 = vld [vmem:[#allocation5 + $0xb80] sm:$0xff]
    %v616 = vld [vmem:[#allocation5 + $0xb88] sm:$0xff]
    %v617 = vld [vmem:[#allocation5 + $0xb90] sm:$0xff]
    %v618 = vld [vmem:[#allocation5 + $0xb98] sm:$0xff]
    %v619 = vld [vmem:[#allocation5 + $0xba0] sm:$0xff]
    %v620 = vld [vmem:[#allocation5 + $0xba8] sm:$0xff]
    %v621 = vld [vmem:[#allocation5 + $0xbb0] sm:$0xff]
    %v622 = vld [vmem:[#allocation5 + $0xbb8] sm:$0xff]
    %v623 = vld [vmem:[#allocation5 + $0xbc0] sm:$0xff]
    %v624 = vld [vmem:[#allocation5 + $0xbc8] sm:$0xff]
    %v625 = vld [vmem:[#allocation5 + $0xbd0] sm:$0xff]
    %v626 = vld [vmem:[#allocation5 + $0xbd8] sm:$0xff]
    %v627 = vld [vmem:[#allocation5 + $0xbe0] sm:$0xff]
    %v628 = vld [vmem:[#allocation5 + $0xbe8] sm:$0xff]
    %v629 = vld [vmem:[#allocation5 + $0xbf0] sm:$0xff]
    %v630 = vld [vmem:[#allocation5 + $0xbf8] sm:$0xff]
    %v631 = vld [vmem:[#allocation5 + $0xc00] sm:$0xff]
    %v632 = vld [vmem:[#allocation5 + $0xc08] sm:$0xff]
    %v633 = vld [vmem:[#allocation5 + $0xc10] sm:$0xff]
    %v634 = vld [vmem:[#allocation5 + $0xc18] sm:$0xff]
    %v635 = vld [vmem:[#allocation5 + $0xc20] sm:$0xff]
    %v636 = vld [vmem:[#allocation5 + $0xc28] sm:$0xff]
    %v637 = vld [vmem:[#allocation5 + $0xc30] sm:$0xff]
    %v638 = vld [vmem:[#allocation5 + $0xc38] sm:$0xff]
    %v639 = vld [vmem:[#allocation5 + $0xc40] sm:$0xff]
    %v640 = vld [vmem:[#allocation5 + $0xc48] sm:$0xff]
    %v641 = vld [vmem:[#allocation5 + $0xc50] sm:$0xff]
    %v642 = vld [vmem:[#allocation5 + $0xc58] sm:$0xff]
    %v643 = vld [vmem:[#allocation5 + $0xc60] sm:$0xff]
    %v644 = vld [vmem:[#allocation5 + $0xc68] sm:$0xff]
    %v645 = vld [vmem:[#allocation5 + $0xc70] sm:$0xff]
    %v646 = vld [vmem:[#allocation5 + $0xc78] sm:$0xff]
    %v647 = vld [vmem:[#allocation5 + $0xc80] sm:$0xff]
    %v648 = vld [vmem:[#allocation5 + $0xc88] sm:$0xff]
    %v649 = vld [vmem:[#allocation5 + $0xc90] sm:$0xff]
    %v650 = vld [vmem:[#allocation5 + $0xc98] sm:$0xff]
    %v651 = vld [vmem:[#allocation5 + $0xca0] sm:$0xff]
    %v652 = vld [vmem:[#allocation5 + $0xca8] sm:$0xff]
    %v653 = vld [vmem:[#allocation5 + $0xcb0] sm:$0xff]
    %v654 = vld [vmem:[#allocation5 + $0xcb8] sm:$0xff]
    %v655 = vld [vmem:[#allocation5 + $0xcc0] sm:$0xff]
    %v656 = vld [vmem:[#allocation5 + $0xcc8] sm:$0xff]
    %v657 = vld [vmem:[#allocation5 + $0xcd0] sm:$0xff]
    %v658 = vld [vmem:[#allocation5 + $0xcd8] sm:$0xff]
    %v659 = vld [vmem:[#allocation5 + $0xce0] sm:$0xff]
    %v660 = vld [vmem:[#allocation5 + $0xce8] sm:$0xff]
    %v661 = vld [vmem:[#allocation5 + $0xcf0] sm:$0xff]
    %v662 = vld [vmem:[#allocation5 + $0xcf8] sm:$0xff]
    %v663 = vld [vmem:[#allocation5 + $0xd00] sm:$0xff]
    %v664 = vld [vmem:[#allocation5 + $0xd08] sm:$0xff]
    %v665 = vld [vmem:[#allocation5 + $0xd10] sm:$0xff]
    %v666 = vld [vmem:[#allocation5 + $0xd18] sm:$0xff]
    %v667 = vld [vmem:[#allocation5 + $0xd20] sm:$0xff]
    %v668 = vld [vmem:[#allocation5 + $0xd28] sm:$0xff]
    %v669 = vld [vmem:[#allocation5 + $0xd30] sm:$0xff]
    %v670 = vld [vmem:[#allocation5 + $0xd38] sm:$0xff]
    %v671 = vld [vmem:[#allocation5 + $0xd40] sm:$0xff]
    %v672 = vld [vmem:[#allocation5 + $0xd48] sm:$0xff]
    %v673 = vld [vmem:[#allocation5 + $0xd50] sm:$0xff]
    %v674 = vld [vmem:[#allocation5 + $0xd58] sm:$0xff]
    %v675 = vld [vmem:[#allocation5 + $0xd60] sm:$0xff]
    %v676 = vld [vmem:[#allocation5 + $0xd68] sm:$0xff]
    %v677 = vld [vmem:[#allocation5 + $0xd70] sm:$0xff]
    %v678 = vld [vmem:[#allocation5 + $0xd78] sm:$0xff]
    %v679 = vld [vmem:[#allocation5 + $0xd80] sm:$0xff]
    %v680 = vld [vmem:[#allocation5 + $0xd88] sm:$0xff]
    %v681 = vld [vmem:[#allocation5 + $0xd90] sm:$0xff]
    %v682 = vld [vmem:[#allocation5 + $0xd98] sm:$0xff]
    %v683 = vld [vmem:[#allocation5 + $0xda0] sm:$0xff]
    %v684 = vld [vmem:[#allocation5 + $0xda8] sm:$0xff]
    %v685 = vld [vmem:[#allocation5 + $0xdb0] sm:$0xff]
    %v686 = vld [vmem:[#allocation5 + $0xdb8] sm:$0xff]
    %v687 = vld [vmem:[#allocation5 + $0xdc0] sm:$0xff]
    %v688 = vld [vmem:[#allocation5 + $0xdc8] sm:$0xff]
    %v689 = vld [vmem:[#allocation5 + $0xdd0] sm:$0xff]
    %v690 = vld [vmem:[#allocation5 + $0xdd8] sm:$0xff]
    %v691 = vld [vmem:[#allocation5 + $0xde0] sm:$0xff]
    %v692 = vld [vmem:[#allocation5 + $0xde8] sm:$0xff]
    %v693 = vld [vmem:[#allocation5 + $0xdf0] sm:$0xff]
    %v694 = vld [vmem:[#allocation5 + $0xdf8] sm:$0xff]
    %v695 = vld [vmem:[#allocation5 + $0xe00] sm:$0xff]
    %v696 = vld [vmem:[#allocation5 + $0xe08] sm:$0xff]
    %v697 = vld [vmem:[#allocation5 + $0xe10] sm:$0xff]
    %v698 = vld [vmem:[#allocation5 + $0xe18] sm:$0xff]
    %v699 = vld [vmem:[#allocation5 + $0xe20] sm:$0xff]
    %v700 = vld [vmem:[#allocation5 + $0xe28] sm:$0xff]
    %v701 = vld [vmem:[#allocation5 + $0xe30] sm:$0xff]
    %v702 = vld [vmem:[#allocation5 + $0xe38] sm:$0xff]
    %v703 = vld [vmem:[#allocation5 + $0xe40] sm:$0xff]
    %v704 = vld [vmem:[#allocation5 + $0xe48] sm:$0xff]
    %v705 = vld [vmem:[#allocation5 + $0xe50] sm:$0xff]
    %v706 = vld [vmem:[#allocation5 + $0xe58] sm:$0xff]
    %v707 = vld [vmem:[#allocation5 + $0xe60] sm:$0xff]
    %v708 = vld [vmem:[#allocation5 + $0xe68] sm:$0xff]
    %v709 = vld [vmem:[#allocation5 + $0xe70] sm:$0xff]
    %v710 = vld [vmem:[#allocation5 + $0xe78] sm:$0xff]
    %v711 = vld [vmem:[#allocation5 + $0xe80] sm:$0xff]
    %v712 = vld [vmem:[#allocation5 + $0xe88] sm:$0xff]
    %v713 = vld [vmem:[#allocation5 + $0xe90] sm:$0xff]
    %v714 = vld [vmem:[#allocation5 + $0xe98] sm:$0xff]
    %v715 = vld [vmem:[#allocation5 + $0xea0] sm:$0xff]
    %v716 = vld [vmem:[#allocation5 + $0xea8] sm:$0xff]
    %v717 = vld [vmem:[#allocation5 + $0xeb0] sm:$0xff]
    %v718 = vld [vmem:[#allocation5 + $0xeb8] sm:$0xff]
    %v719 = vld [vmem:[#allocation5 + $0xec0] sm:$0xff]
    %v720 = vld [vmem:[#allocation5 + $0xec8] sm:$0xff]
    %v721 = vld [vmem:[#allocation5 + $0xed0] sm:$0xff]
    %v722 = vld [vmem:[#allocation5 + $0xed8] sm:$0xff]
    %v723 = vld [vmem:[#allocation5 + $0xee0] sm:$0xff]
    %v724 = vld [vmem:[#allocation5 + $0xee8] sm:$0xff]
    %v725 = vld [vmem:[#allocation5 + $0xef0] sm:$0xff]
    %v726 = vld [vmem:[#allocation5 + $0xef8] sm:$0xff]
    %v727 = vld [vmem:[#allocation5 + $0xf00] sm:$0xff]
    %v728 = vld [vmem:[#allocation5 + $0xf08] sm:$0xff]
    %v729 = vld [vmem:[#allocation5 + $0xf10] sm:$0xff]
    %v730 = vld [vmem:[#allocation5 + $0xf18] sm:$0xff]
    %v731 = vld [vmem:[#allocation5 + $0xf20] sm:$0xff]
    %v732 = vld [vmem:[#allocation5 + $0xf28] sm:$0xff]
    %v733 = vld [vmem:[#allocation5 + $0xf30] sm:$0xff]
    %v734 = vld [vmem:[#allocation5 + $0xf38] sm:$0xff]
    %v735 = vld [vmem:[#allocation5 + $0xf40] sm:$0xff]
    %v736 = vld [vmem:[#allocation5 + $0xf48] sm:$0xff]
    %v737 = vld [vmem:[#allocation5 + $0xf50] sm:$0xff]
    %v738 = vld [vmem:[#allocation5 + $0xf58] sm:$0xff]
    %v739 = vld [vmem:[#allocation5 + $0xf60] sm:$0xff]
    %v740 = vld [vmem:[#allocation5 + $0xf68] sm:$0xff]
    %v741 = vld [vmem:[#allocation5 + $0xf70] sm:$0xff]
    %v742 = vld [vmem:[#allocation5 + $0xf78] sm:$0xff]
    %v743 = vld [vmem:[#allocation5 + $0xf80] sm:$0xff]
    %v744 = vld [vmem:[#allocation5 + $0xf88] sm:$0xff]
    %v745 = vld [vmem:[#allocation5 + $0xf90] sm:$0xff]
    %v746 = vld [vmem:[#allocation5 + $0xf98] sm:$0xff]
    %v747 = vld [vmem:[#allocation5 + $0xfa0] sm:$0xff]
    %v748 = vld [vmem:[#allocation5 + $0xfa8] sm:$0xff]
    %v749 = vld [vmem:[#allocation5 + $0xfb0] sm:$0xff]
    %v750 = vld [vmem:[#allocation5 + $0xfb8] sm:$0xff]
    %v751 = vld [vmem:[#allocation5 + $0xfc0] sm:$0xff]
    %v752 = vld [vmem:[#allocation5 + $0xfc8] sm:$0xff]
    %v753 = vld [vmem:[#allocation5 + $0xfd0] sm:$0xff]
    %v754 = vld [vmem:[#allocation5 + $0xfd8] sm:$0xff]
    %v755 = vld [vmem:[#allocation5 + $0xfe0] sm:$0xff]
    %v756 = vld [vmem:[#allocation5 + $0xfe8] sm:$0xff]
    %v757 = vld [vmem:[#allocation5 + $0xff0] sm:$0xff]
    %v758 = vld [vmem:[#allocation5 + $0xff8] sm:$0xff]
    %v759 = vld [vmem:[#allocation5 + $0x1000] sm:$0xff]
    %v760 = vld [vmem:[#allocation5 + $0x1008] sm:$0xff]
    %v761 = vld [vmem:[#allocation5 + $0x1010] sm:$0xff]
    %v762 = vld [vmem:[#allocation5 + $0x1018] sm:$0xff]
    %v763 = vld [vmem:[#allocation5 + $0x1020] sm:$0xff]
    %v764 = vld [vmem:[#allocation5 + $0x1028] sm:$0xff]
    %v765 = vld [vmem:[#allocation5 + $0x1030] sm:$0xff]
    %v766 = vld [vmem:[#allocation5 + $0x1038] sm:$0xff]
    %v767 = vld [vmem:[#allocation5 + $0x1040] sm:$0xff]
    %v768 = vld [vmem:[#allocation5 + $0x1048] sm:$0xff]
    %v769 = vld [vmem:[#allocation5 + $0x1050] sm:$0xff]
    %v770 = vld [vmem:[#allocation5 + $0x1058] sm:$0xff]
    %v771 = vld [vmem:[#allocation5 + $0x1060] sm:$0xff]
    %v772 = vld [vmem:[#allocation5 + $0x1068] sm:$0xff]
    %v773 = vld [vmem:[#allocation5 + $0x1070] sm:$0xff]
    %v774 = vld [vmem:[#allocation5 + $0x1078] sm:$0xff]
    %v775 = vld [vmem:[#allocation5 + $0x1080] sm:$0xff]
    %v776 = vld [vmem:[#allocation5 + $0x1088] sm:$0xff]
    %v777 = vld [vmem:[#allocation5 + $0x1090] sm:$0xff]
    %v778 = vld [vmem:[#allocation5 + $0x1098] sm:$0xff]
    %v779 = vld [vmem:[#allocation5 + $0x10a0] sm:$0xff]
    %v780 = vld [vmem:[#allocation5 + $0x10a8] sm:$0xff]
    %v781 = vld [vmem:[#allocation5 + $0x10b0] sm:$0xff]
    %v782 = vld [vmem:[#allocation5 + $0x10b8] sm:$0xff]
    %v783 = vld [vmem:[#allocation5 + $0x10c0] sm:$0xff]
    %v784 = vld [vmem:[#allocation5 + $0x10c8] sm:$0xff]
    %v785 = vld [vmem:[#allocation5 + $0x10d0] sm:$0xff]
    %v786 = vld [vmem:[#allocation5 + $0x10d8] sm:$0xff]
    %v787 = vld [vmem:[#allocation5 + $0x10e0] sm:$0xff]
    %v788 = vld [vmem:[#allocation5 + $0x10e8] sm:$0xff]
    %v789 = vld [vmem:[#allocation5 + $0x10f0] sm:$0xff]
    %v790 = vld [vmem:[#allocation5 + $0x10f8] sm:$0xff]
    %v791 = vld [vmem:[#allocation5 + $0x1100] sm:$0xff]
    %v792 = vld [vmem:[#allocation5 + $0x1108] sm:$0xff]
    %v793 = vld [vmem:[#allocation5 + $0x1110] sm:$0xff]
    %v794 = vld [vmem:[#allocation5 + $0x1118] sm:$0xff]
    %v795 = vld [vmem:[#allocation5 + $0x1120] sm:$0xff]
    %v796 = vld [vmem:[#allocation5 + $0x1128] sm:$0xff]
    %v797 = vld [vmem:[#allocation5 + $0x1130] sm:$0xff]
    %v798 = vld [vmem:[#allocation5 + $0x1138] sm:$0xff]
    %v799 = vld [vmem:[#allocation5 + $0x1140] sm:$0xff]
    %v800 = vld [vmem:[#allocation5 + $0x1148] sm:$0xff]
    %v801 = vld [vmem:[#allocation5 + $0x1150] sm:$0xff]
    %v802 = vld [vmem:[#allocation5 + $0x1158] sm:$0xff]
    %v803 = vld [vmem:[#allocation5 + $0x1160] sm:$0xff]
    %v804 = vld [vmem:[#allocation5 + $0x1168] sm:$0xff]
    %v805 = vld [vmem:[#allocation5 + $0x1170] sm:$0xff]
    %v806 = vld [vmem:[#allocation5 + $0x1178] sm:$0xff]
    %v807 = vld [vmem:[#allocation5 + $0x1180] sm:$0xff]
    %v808 = vld [vmem:[#allocation5 + $0x1188] sm:$0xff]
    %v809 = vld [vmem:[#allocation5 + $0x1190] sm:$0xff]
    %v810 = vld [vmem:[#allocation5 + $0x1198] sm:$0xff]
    %v811 = vld [vmem:[#allocation5 + $0x11a0] sm:$0xff]
    %v812 = vld [vmem:[#allocation5 + $0x11a8] sm:$0xff]
    %v813 = vld [vmem:[#allocation5 + $0x11b0] sm:$0xff]
    %v814 = vld [vmem:[#allocation5 + $0x11b8] sm:$0xff]
    %v815 = vld [vmem:[#allocation5 + $0x11c0] sm:$0xff]
    %v816 = vld [vmem:[#allocation5 + $0x11c8] sm:$0xff]
    %v817 = vld [vmem:[#allocation5 + $0x11d0] sm:$0xff]
    %v818 = vld [vmem:[#allocation5 + $0x11d8] sm:$0xff]
    %v819 = vld [vmem:[#allocation5 + $0x11e0] sm:$0xff]
    %v820 = vld [vmem:[#allocation5 + $0x11e8] sm:$0xff]
    %v821 = vld [vmem:[#allocation5 + $0x11f0] sm:$0xff]
    %v822 = vld [vmem:[#allocation5 + $0x11f8] sm:$0xff]
    %v823 = vld [vmem:[#allocation5 + $0x1200] sm:$0xff]
    %v824 = vld [vmem:[#allocation5 + $0x1208] sm:$0xff]
    %v825 = vld [vmem:[#allocation5 + $0x1210] sm:$0xff]
    %v826 = vld [vmem:[#allocation5 + $0x1218] sm:$0xff]
    %v827 = vld [vmem:[#allocation5 + $0x1220] sm:$0xff]
    %v828 = vld [vmem:[#allocation5 + $0x1228] sm:$0xff]
    %v829 = vld [vmem:[#allocation5 + $0x1230] sm:$0xff]
    %v830 = vld [vmem:[#allocation5 + $0x1238] sm:$0xff]
    %v831 = vld [vmem:[#allocation5 + $0x1240] sm:$0xff]
    %v832 = vld [vmem:[#allocation5 + $0x1248] sm:$0xff]
    %v833 = vld [vmem:[#allocation5 + $0x1250] sm:$0xff]
    %v834 = vld [vmem:[#allocation5 + $0x1258] sm:$0xff]
    %v835 = vld [vmem:[#allocation7] sm:$0xf]
    %v837 = vlaneseq
    %v838 = vshrl.u32 %v837, 7
    %v839 = vsub.s32 0, %v838
    %v840 = vrot.slane %v835, %v839
    %v841 = vlaneseq
    %v842 = vshrl.u32 %v841, 7
    %v843 = vsub.s32 1, %v842
    %v844 = vrot.slane %v835, %v843
    %v845 = vlaneseq
    %v846 = vshrl.u32 %v845, 7
    %v847 = vsub.s32 2, %v846
    %v848 = vrot.slane %v835, %v847
    %v849 = vlaneseq
    %v850 = vshrl.u32 %v849, 7
    %v851 = vsub.s32 3, %v850
    %v852 = vrot.slane %v835, %v851
    %v1445 = vunpack.c.l.b16 %v247
    %v1446 = vunpack.c.h.b16 %v247
    %v1447 = vunpack.c.l.b16 %v248
    %v1448 = vunpack.c.h.b16 %v248
    %v1449 = vunpack.c.l.b16 %v249
    %v1450 = vunpack.c.h.b16 %v249
    %v1451 = vunpack.c.l.b16 %v250
    %v1452 = vunpack.c.h.b16 %v250
    %v1453 = vunpack.c.l.b16 %v251
    %v1454 = vunpack.c.h.b16 %v251
    %v1455 = vunpack.c.l.b16 %v252
    %v1456 = vunpack.c.h.b16 %v252
    %v1457 = vunpack.c.l.b16 %v253
    %v1458 = vunpack.c.h.b16 %v253
    %v1459 = vunpack.c.l.b16 %v254
    %v1460 = vunpack.c.h.b16 %v254
    %v1461 = vunpack.c.l.b16 %v255
    %v1462 = vunpack.c.h.b16 %v255
    %v1463 = vunpack.c.l.b16 %v256
    %v1464 = vunpack.c.h.b16 %v256
    %v1465 = vunpack.c.l.b16 %v257
    %v1466 = vunpack.c.h.b16 %v257
    %v1467 = vunpack.c.l.b16 %v258
    %v1468 = vunpack.c.h.b16 %v258
    %v1469 = vunpack.c.l.b16 %v259
    %v1470 = vunpack.c.h.b16 %v259
    %v1471 = vunpack.c.l.b16 %v260
    %v1472 = vunpack.c.h.b16 %v260
    %v1473 = vunpack.c.l.b16 %v261
    %v1474 = vunpack.c.h.b16 %v261
    %v1475 = vunpack.c.l.b16 %v262
    %v1476 = vunpack.c.h.b16 %v262
    %v1477 = vunpack.c.l.b16 %v263
    %v1478 = vunpack.c.h.b16 %v263
    %v1479 = vunpack.c.l.b16 %v264
    %v1480 = vunpack.c.h.b16 %v264
    %v1481 = vunpack.c.l.b16 %v265
    %v1482 = vunpack.c.h.b16 %v265
    %v1483 = vunpack.c.l.b16 %v266
    %v1484 = vunpack.c.h.b16 %v266
    %v1485 = vunpack.c.l.b16 %v267
    %v1486 = vunpack.c.h.b16 %v267
    %v1487 = vunpack.c.l.b16 %v268
    %v1488 = vunpack.c.h.b16 %v268
    %v1489 = vunpack.c.l.b16 %v269
    %v1490 = vunpack.c.h.b16 %v269
    %v1491 = vunpack.c.l.b16 %v270
    %v1492 = vunpack.c.h.b16 %v270
    %v1493 = vunpack.c.l.b16 %v271
    %v1494 = vunpack.c.h.b16 %v271
    %v1495 = vunpack.c.l.b16 %v272
    %v1496 = vunpack.c.h.b16 %v272
    %v1497 = vunpack.c.l.b16 %v273
    %v1498 = vunpack.c.h.b16 %v273
    %v1499 = vunpack.c.l.b16 %v274
    %v1500 = vunpack.c.h.b16 %v274
    %v1501 = vunpack.c.l.b16 %v275
    %v1502 = vunpack.c.h.b16 %v275
    %v1503 = vunpack.c.l.b16 %v276
    %v1504 = vunpack.c.h.b16 %v276
    %v1505 = vunpack.c.l.b16 %v277
    %v1506 = vunpack.c.h.b16 %v277
    %v1507 = vunpack.c.l.b16 %v278
    %v1508 = vunpack.c.h.b16 %v278
    %v1509 = vunpack.c.l.b16 %v279
    %v1510 = vunpack.c.h.b16 %v279
    %v1511 = vunpack.c.l.b16 %v280
    %v1512 = vunpack.c.h.b16 %v280
    %v1513 = vunpack.c.l.b16 %v281
    %v1514 = vunpack.c.h.b16 %v281
    %v1515 = vunpack.c.l.b16 %v282
    %v1516 = vunpack.c.h.b16 %v282
    %v1517 = vunpack.c.l.b16 %v283
    %v1518 = vunpack.c.h.b16 %v283
    %v1519 = vunpack.c.l.b16 %v284
    %v1520 = vunpack.c.h.b16 %v284
    %v1521 = vunpack.c.l.b16 %v285
    %v1522 = vunpack.c.h.b16 %v285
    %v1523 = vunpack.c.l.b16 %v286
    %v1524 = vunpack.c.h.b16 %v286
    %v1525 = vunpack.c.l.b16 %v287
    %v1526 = vunpack.c.h.b16 %v287
    %v1527 = vunpack.c.l.b16 %v288
    %v1528 = vunpack.c.h.b16 %v288
    %v1529 = vunpack.c.l.b16 %v289
    %v1530 = vunpack.c.h.b16 %v289
    %v1531 = vunpack.c.l.b16 %v290
    %v1532 = vunpack.c.h.b16 %v290
    %v1533 = vunpack.c.l.b16 %v291
    %v1534 = vunpack.c.h.b16 %v291
    %v1535 = vunpack.c.l.b16 %v292
    %v1536 = vunpack.c.h.b16 %v292
    %v1537 = vunpack.c.l.b16 %v293
    %v1538 = vunpack.c.h.b16 %v293
    %v1539 = vunpack.c.l.b16 %v294
    %v1540 = vunpack.c.h.b16 %v294
    %v1541 = vunpack.c.l.b16 %v295
    %v1542 = vunpack.c.h.b16 %v295
    %v1543 = vunpack.c.l.b16 %v296
    %v1544 = vunpack.c.h.b16 %v296
    %v1545 = vunpack.c.l.b16 %v297
    %v1546 = vunpack.c.h.b16 %v297
    %v1547 = vunpack.c.l.b16 %v298
    %v1548 = vunpack.c.h.b16 %v298
    %v1549 = vunpack.c.l.b16 %v299
    %v1550 = vunpack.c.h.b16 %v299
    %v1551 = vunpack.c.l.b16 %v300
    %v1552 = vunpack.c.h.b16 %v300
    %v1553 = vunpack.c.l.b16 %v301
    %v1554 = vunpack.c.h.b16 %v301
    %v1555 = vunpack.c.l.b16 %v302
    %v1556 = vunpack.c.h.b16 %v302
    %v1557 = vunpack.c.l.b16 %v303
    %v1558 = vunpack.c.h.b16 %v303
    %v1559 = vunpack.c.l.b16 %v304
    %v1560 = vunpack.c.h.b16 %v304
    %v1561 = vunpack.c.l.b16 %v305
    %v1562 = vunpack.c.h.b16 %v305
    %v1563 = vunpack.c.l.b16 %v306
    %v1564 = vunpack.c.h.b16 %v306
    %v1565 = vunpack.c.l.b16 %v307
    %v1566 = vunpack.c.h.b16 %v307
    %v1567 = vunpack.c.l.b16 %v308
    %v1568 = vunpack.c.h.b16 %v308
    %v1569 = vunpack.c.l.b16 %v309
    %v1570 = vunpack.c.h.b16 %v309
    %v1571 = vunpack.c.l.b16 %v310
    %v1572 = vunpack.c.h.b16 %v310
    %v1573 = vunpack.c.l.b16 %v311
    %v1574 = vunpack.c.h.b16 %v311
    %v1575 = vunpack.c.l.b16 %v312
    %v1576 = vunpack.c.h.b16 %v312
    %v1577 = vunpack.c.l.b16 %v313
    %v1578 = vunpack.c.h.b16 %v313
    %v1579 = vunpack.c.l.b16 %v314
    %v1580 = vunpack.c.h.b16 %v314
    %v1581 = vunpack.c.l.b16 %v315
    %v1582 = vunpack.c.h.b16 %v315
    %v1583 = vunpack.c.l.b16 %v316
    %v1584 = vunpack.c.h.b16 %v316
    %v1585 = vunpack.c.l.b16 %v317
    %v1586 = vunpack.c.h.b16 %v317
    %v1587 = vunpack.c.l.b16 %v318
    %v1588 = vunpack.c.h.b16 %v318
    %v1589 = vunpack.c.l.b16 %v319
    %v1590 = vunpack.c.h.b16 %v319
    %v1591 = vunpack.c.l.b16 %v320
    %v1592 = vunpack.c.h.b16 %v320
    %v1593 = vunpack.c.l.b16 %v321
    %v1594 = vunpack.c.h.b16 %v321
    %v1595 = vunpack.c.l.b16 %v322
    %v1596 = vunpack.c.h.b16 %v322
    %v1597 = vunpack.c.l.b16 %v323
    %v1598 = vunpack.c.h.b16 %v323
    %v1599 = vunpack.c.l.b16 %v324
    %v1600 = vunpack.c.h.b16 %v324
    %v1601 = vunpack.c.l.b16 %v325
    %v1602 = vunpack.c.h.b16 %v325
    %v1603 = vunpack.c.l.b16 %v326
    %v1604 = vunpack.c.h.b16 %v326
    %v1605 = vunpack.c.l.b16 %v327
    %v1606 = vunpack.c.h.b16 %v327
    %v1607 = vunpack.c.l.b16 %v328
    %v1608 = vunpack.c.h.b16 %v328
    %v1609 = vunpack.c.l.b16 %v329
    %v1610 = vunpack.c.h.b16 %v329
    %v1611 = vunpack.c.l.b16 %v330
    %v1612 = vunpack.c.h.b16 %v330
    %v1613 = vunpack.c.l.b16 %v331
    %v1614 = vunpack.c.h.b16 %v331
    %v1615 = vunpack.c.l.b16 %v332
    %v1616 = vunpack.c.h.b16 %v332
    %v1617 = vunpack.c.l.b16 %v333
    %v1618 = vunpack.c.h.b16 %v333
    %v1619 = vunpack.c.l.b16 %v334
    %v1620 = vunpack.c.h.b16 %v334
    %v1621 = vunpack.c.l.b16 %v335
    %v1622 = vunpack.c.h.b16 %v335
    %v1623 = vunpack.c.l.b16 %v336
    %v1624 = vunpack.c.h.b16 %v336
    %v1625 = vunpack.c.l.b16 %v337
    %v1626 = vunpack.c.h.b16 %v337
    %v1627 = vunpack.c.l.b16 %v338
    %v1628 = vunpack.c.h.b16 %v338
    %v1629 = vunpack.c.l.b16 %v339
    %v1630 = vunpack.c.h.b16 %v339
    %v1631 = vunpack.c.l.b16 %v340
    %v1632 = vunpack.c.h.b16 %v340
    %v1633 = vunpack.c.l.b16 %v341
    %v1634 = vunpack.c.h.b16 %v341
    %v1635 = vunpack.c.l.b16 %v342
    %v1636 = vunpack.c.h.b16 %v342
    %v1637 = vunpack.c.l.b16 %v343
    %v1638 = vunpack.c.h.b16 %v343
    %v1639 = vunpack.c.l.b16 %v344
    %v1640 = vunpack.c.h.b16 %v344
    %v1641 = vunpack.c.l.b16 %v345
    %v1642 = vunpack.c.h.b16 %v345
    %v1643 = vunpack.c.l.b16 %v346
    %v1644 = vunpack.c.h.b16 %v346
    %v1645 = vunpack.c.l.b16 %v347
    %v1646 = vunpack.c.h.b16 %v347
    %v1647 = vunpack.c.l.b16 %v348
    %v1648 = vunpack.c.h.b16 %v348
    %v1649 = vunpack.c.l.b16 %v349
    %v1650 = vunpack.c.h.b16 %v349
    %v1651 = vunpack.c.l.b16 %v350
    %v1652 = vunpack.c.h.b16 %v350
    %v1653 = vunpack.c.l.b16 %v351
    %v1654 = vunpack.c.h.b16 %v351
    %v1655 = vunpack.c.l.b16 %v352
    %v1656 = vunpack.c.h.b16 %v352
    %v1657 = vunpack.c.l.b16 %v353
    %v1658 = vunpack.c.h.b16 %v353
    %v1659 = vunpack.c.l.b16 %v354
    %v1660 = vunpack.c.h.b16 %v354
    %v1661 = vunpack.c.l.b16 %v355
    %v1662 = vunpack.c.h.b16 %v355
    %v1663 = vunpack.c.l.b16 %v356
    %v1664 = vunpack.c.h.b16 %v356
    %v1665 = vunpack.c.l.b16 %v357
    %v1666 = vunpack.c.h.b16 %v357
    %v1667 = vunpack.c.l.b16 %v358
    %v1668 = vunpack.c.h.b16 %v358
    %v1669 = vunpack.c.l.b16 %v359
    %v1670 = vunpack.c.h.b16 %v359
    %v1671 = vunpack.c.l.b16 %v360
    %v1672 = vunpack.c.h.b16 %v360
    %v1673 = vunpack.c.l.b16 %v361
    %v1674 = vunpack.c.h.b16 %v361
    %v1675 = vunpack.c.l.b16 %v362
    %v1676 = vunpack.c.h.b16 %v362
    %v1677 = vunpack.c.l.b16 %v363
    %v1678 = vunpack.c.h.b16 %v363
    %v1679 = vunpack.c.l.b16 %v364
    %v1680 = vunpack.c.h.b16 %v364
    %v1681 = vunpack.c.l.b16 %v365
    %v1682 = vunpack.c.h.b16 %v365
    %v1683 = vunpack.c.l.b16 %v366
    %v1684 = vunpack.c.h.b16 %v366
    %v1685 = vunpack.c.l.b16 %v367
    %v1686 = vunpack.c.h.b16 %v367
    %v1687 = vunpack.c.l.b16 %v368
    %v1688 = vunpack.c.h.b16 %v368
    %v1689 = vunpack.c.l.b16 %v369
    %v1690 = vunpack.c.h.b16 %v369
    %v1691 = vunpack.c.l.b16 %v370
    %v1692 = vunpack.c.h.b16 %v370
    %v1693 = vunpack.c.l.b16 %v371
    %v1694 = vunpack.c.h.b16 %v371
    %v1695 = vunpack.c.l.b16 %v372
    %v1696 = vunpack.c.h.b16 %v372
    %v1697 = vunpack.c.l.b16 %v373
    %v1698 = vunpack.c.h.b16 %v373
    %v1699 = vunpack.c.l.b16 %v374
    %v1700 = vunpack.c.h.b16 %v374
    %v1701 = vunpack.c.l.b16 %v375
    %v1702 = vunpack.c.h.b16 %v375
    %v1703 = vunpack.c.l.b16 %v376
    %v1704 = vunpack.c.h.b16 %v376
    %v1705 = vunpack.c.l.b16 %v377
    %v1706 = vunpack.c.h.b16 %v377
    %v1707 = vunpack.c.l.b16 %v378
    %v1708 = vunpack.c.h.b16 %v378
    %v1709 = vunpack.c.l.b16 %v379
    %v1710 = vunpack.c.h.b16 %v379
    %v1711 = vunpack.c.l.b16 %v380
    %v1712 = vunpack.c.h.b16 %v380
    %v1713 = vunpack.c.l.b16 %v381
    %v1714 = vunpack.c.h.b16 %v381
    %v1715 = vunpack.c.l.b16 %v382
    %v1716 = vunpack.c.h.b16 %v382
    %v1717 = vunpack.c.l.b16 %v383
    %v1718 = vunpack.c.h.b16 %v383
    %v1719 = vunpack.c.l.b16 %v384
    %v1720 = vunpack.c.h.b16 %v384
    %v1721 = vunpack.c.l.b16 %v385
    %v1722 = vunpack.c.h.b16 %v385
    %v1723 = vunpack.c.l.b16 %v386
    %v1724 = vunpack.c.h.b16 %v386
    %v1725 = vunpack.c.l.b16 %v387
    %v1726 = vunpack.c.h.b16 %v387
    %v1727 = vunpack.c.l.b16 %v388
    %v1728 = vunpack.c.h.b16 %v388
    %v1729 = vunpack.c.l.b16 %v389
    %v1730 = vunpack.c.h.b16 %v389
    %v1731 = vunpack.c.l.b16 %v390
    %v1732 = vunpack.c.h.b16 %v390
    %v1733 = vunpack.c.l.b16 %v391
    %v1734 = vunpack.c.h.b16 %v391
    %v1735 = vunpack.c.l.b16 %v392
    %v1736 = vunpack.c.h.b16 %v392
    %v1737 = vunpack.c.l.b16 %v393
    %v1738 = vunpack.c.h.b16 %v393
    %v1739 = vunpack.c.l.b16 %v394
    %v1740 = vunpack.c.h.b16 %v394
    %v1741 = vunpack.c.l.b16 %v395
    %v1742 = vunpack.c.h.b16 %v395
    %v1743 = vunpack.c.l.b16 %v396
    %v1744 = vunpack.c.h.b16 %v396
    %v1745 = vunpack.c.l.b16 %v397
    %v1746 = vunpack.c.h.b16 %v397
    %v1747 = vunpack.c.l.b16 %v398
    %v1748 = vunpack.c.h.b16 %v398
    %v1749 = vunpack.c.l.b16 %v399
    %v1750 = vunpack.c.h.b16 %v399
    %v1751 = vunpack.c.l.b16 %v400
    %v1752 = vunpack.c.h.b16 %v400
    %v1753 = vunpack.c.l.b16 %v401
    %v1754 = vunpack.c.h.b16 %v401
    %v1755 = vunpack.c.l.b16 %v402
    %v1756 = vunpack.c.h.b16 %v402
    %v1757 = vunpack.c.l.b16 %v403
    %v1758 = vunpack.c.h.b16 %v403
    %v1759 = vunpack.c.l.b16 %v404
    %v1760 = vunpack.c.h.b16 %v404
    %v1761 = vunpack.c.l.b16 %v405
    %v1762 = vunpack.c.h.b16 %v405
    %v1763 = vunpack.c.l.b16 %v406
    %v1764 = vunpack.c.h.b16 %v406
    %v1765 = vunpack.c.l.b16 %v407
    %v1766 = vunpack.c.h.b16 %v407
    %v1767 = vunpack.c.l.b16 %v408
    %v1768 = vunpack.c.h.b16 %v408
    %v1769 = vunpack.c.l.b16 %v409
    %v1770 = vunpack.c.h.b16 %v409
    %v1771 = vunpack.c.l.b16 %v410
    %v1772 = vunpack.c.h.b16 %v410
    %v1773 = vunpack.c.l.b16 %v411
    %v1774 = vunpack.c.h.b16 %v411
    %v1775 = vunpack.c.l.b16 %v412
    %v1776 = vunpack.c.h.b16 %v412
    %v1777 = vunpack.c.l.b16 %v413
    %v1778 = vunpack.c.h.b16 %v413
    %v1779 = vunpack.c.l.b16 %v414
    %v1780 = vunpack.c.h.b16 %v414
    %v1781 = vunpack.c.l.b16 %v415
    %v1782 = vunpack.c.h.b16 %v415
    %v1783 = vunpack.c.l.b16 %v416
    %v1784 = vunpack.c.h.b16 %v416
    %v1785 = vunpack.c.l.b16 %v417
    %v1786 = vunpack.c.h.b16 %v417
    %v1787 = vunpack.c.l.b16 %v418
    %v1788 = vunpack.c.h.b16 %v418
    %v1789 = vunpack.c.l.b16 %v419
    %v1790 = vunpack.c.h.b16 %v419
    %v1791 = vunpack.c.l.b16 %v420
    %v1792 = vunpack.c.h.b16 %v420
    %v1793 = vunpack.c.l.b16 %v421
    %v1794 = vunpack.c.h.b16 %v421
    %v1795 = vunpack.c.l.b16 %v422
    %v1796 = vunpack.c.h.b16 %v422
    %v1797 = vunpack.c.l.b16 %v423
    %v1798 = vunpack.c.h.b16 %v423
    %v1799 = vunpack.c.l.b16 %v424
    %v1800 = vunpack.c.h.b16 %v424
    %v1801 = vunpack.c.l.b16 %v425
    %v1802 = vunpack.c.h.b16 %v425
    %v1803 = vunpack.c.l.b16 %v426
    %v1804 = vunpack.c.h.b16 %v426
    %v1805 = vunpack.c.l.b16 %v427
    %v1806 = vunpack.c.h.b16 %v427
    %v1807 = vunpack.c.l.b16 %v428
    %v1808 = vunpack.c.h.b16 %v428
    %v1809 = vunpack.c.l.b16 %v429
    %v1810 = vunpack.c.h.b16 %v429
    %v1811 = vunpack.c.l.b16 %v430
    %v1812 = vunpack.c.h.b16 %v430
    %v1813 = vunpack.c.l.b16 %v431
    %v1814 = vunpack.c.h.b16 %v431
    %v1815 = vunpack.c.l.b16 %v432
    %v1816 = vunpack.c.h.b16 %v432
    %v1817 = vunpack.c.l.b16 %v433
    %v1818 = vunpack.c.h.b16 %v433
    %v1819 = vunpack.c.l.b16 %v434
    %v1820 = vunpack.c.h.b16 %v434
    %v1821 = vunpack.c.l.b16 %v435
    %v1822 = vunpack.c.h.b16 %v435
    %v1823 = vunpack.c.l.b16 %v436
    %v1824 = vunpack.c.h.b16 %v436
    %v1825 = vunpack.c.l.b16 %v437
    %v1826 = vunpack.c.h.b16 %v437
    %v1827 = vunpack.c.l.b16 %v438
    %v1828 = vunpack.c.h.b16 %v438
    %v1829 = vunpack.c.l.b16 %v439
    %v1830 = vunpack.c.h.b16 %v439
    %v1831 = vunpack.c.l.b16 %v440
    %v1832 = vunpack.c.h.b16 %v440
    %v1833 = vunpack.c.l.b16 %v441
    %v1834 = vunpack.c.h.b16 %v441
    %v1835 = vunpack.c.l.b16 %v442
    %v1836 = vunpack.c.h.b16 %v442
    %v1837 = vunpack.c.l.b16 %v443
    %v1838 = vunpack.c.h.b16 %v443
    %v1839 = vunpack.c.l.b16 %v444
    %v1840 = vunpack.c.h.b16 %v444
    %v1841 = vunpack.c.l.b16 %v445
    %v1842 = vunpack.c.h.b16 %v445
    %v1843 = vunpack.c.l.b16 %v446
    %v1844 = vunpack.c.h.b16 %v446
    %v1845 = vunpack.c.l.b16 %v447
    %v1846 = vunpack.c.h.b16 %v447
    %v1847 = vunpack.c.l.b16 %v448
    %v1848 = vunpack.c.h.b16 %v448
    %v1849 = vunpack.c.l.b16 %v449
    %v1850 = vunpack.c.h.b16 %v449
    %v1851 = vunpack.c.l.b16 %v450
    %v1852 = vunpack.c.h.b16 %v450
    %v1853 = vunpack.c.l.b16 %v451
    %v1854 = vunpack.c.h.b16 %v451
    %v1855 = vunpack.c.l.b16 %v452
    %v1856 = vunpack.c.h.b16 %v452
    %v1857 = vunpack.c.l.b16 %v453
    %v1858 = vunpack.c.h.b16 %v453
    %v1859 = vunpack.c.l.b16 %v454
    %v1860 = vunpack.c.h.b16 %v454
    %v1861 = vunpack.c.l.b16 %v455
    %v1862 = vunpack.c.h.b16 %v455
    %v1863 = vunpack.c.l.b16 %v456
    %v1864 = vunpack.c.h.b16 %v456
    %v1865 = vunpack.c.l.b16 %v457
    %v1866 = vunpack.c.h.b16 %v457
    %v1867 = vunpack.c.l.b16 %v458
    %v1868 = vunpack.c.h.b16 %v458
    %v1869 = vunpack.c.l.b16 %v459
    %v1870 = vunpack.c.h.b16 %v459
    %v1871 = vunpack.c.l.b16 %v460
    %v1872 = vunpack.c.h.b16 %v460
    %v1873 = vunpack.c.l.b16 %v461
    %v1874 = vunpack.c.h.b16 %v461
    %v1875 = vunpack.c.l.b16 %v462
    %v1876 = vunpack.c.h.b16 %v462
    %v1877 = vunpack.c.l.b16 %v463
    %v1878 = vunpack.c.h.b16 %v463
    %v1879 = vunpack.c.l.b16 %v464
    %v1880 = vunpack.c.h.b16 %v464
    %v1881 = vunpack.c.l.b16 %v465
    %v1882 = vunpack.c.h.b16 %v465
    %v1883 = vunpack.c.l.b16 %v466
    %v1884 = vunpack.c.h.b16 %v466
    %v1885 = vunpack.c.l.b16 %v467
    %v1886 = vunpack.c.h.b16 %v467
    %v1887 = vunpack.c.l.b16 %v468
    %v1888 = vunpack.c.h.b16 %v468
    %v1889 = vunpack.c.l.b16 %v469
    %v1890 = vunpack.c.h.b16 %v469
    %v1891 = vunpack.c.l.b16 %v470
    %v1892 = vunpack.c.h.b16 %v470
    %v1893 = vunpack.c.l.b16 %v471
    %v1894 = vunpack.c.h.b16 %v471
    %v1895 = vunpack.c.l.b16 %v472
    %v1896 = vunpack.c.h.b16 %v472
    %v1897 = vunpack.c.l.b16 %v473
    %v1898 = vunpack.c.h.b16 %v473
    %v1899 = vunpack.c.l.b16 %v474
    %v1900 = vunpack.c.h.b16 %v474
    %v1901 = vunpack.c.l.b16 %v475
    %v1902 = vunpack.c.h.b16 %v475
    %v1903 = vunpack.c.l.b16 %v476
    %v1904 = vunpack.c.h.b16 %v476
    %v1905 = vunpack.c.l.b16 %v477
    %v1906 = vunpack.c.h.b16 %v477
    %v1907 = vunpack.c.l.b16 %v478
    %v1908 = vunpack.c.h.b16 %v478
    %v1909 = vunpack.c.l.b16 %v479
    %v1910 = vunpack.c.h.b16 %v479
    %v1911 = vunpack.c.l.b16 %v480
    %v1912 = vunpack.c.h.b16 %v480
    %v1913 = vunpack.c.l.b16 %v481
    %v1914 = vunpack.c.h.b16 %v481
    %v1915 = vunpack.c.l.b16 %v482
    %v1916 = vunpack.c.h.b16 %v482
    %v1917 = vunpack.c.l.b16 %v483
    %v1918 = vunpack.c.h.b16 %v483
    %v1919 = vunpack.c.l.b16 %v484
    %v1920 = vunpack.c.h.b16 %v484
    %v1921 = vunpack.c.l.b16 %v485
    %v1922 = vunpack.c.h.b16 %v485
    %v1923 = vunpack.c.l.b16 %v486
    %v1924 = vunpack.c.h.b16 %v486
    %v1925 = vunpack.c.l.b16 %v487
    %v1926 = vunpack.c.h.b16 %v487
    %v1927 = vunpack.c.l.b16 %v488
    %v1928 = vunpack.c.h.b16 %v488
    %v1929 = vunpack.c.l.b16 %v489
    %v1930 = vunpack.c.h.b16 %v489
    %v1931 = vunpack.c.l.b16 %v490
    %v1932 = vunpack.c.h.b16 %v490
    %v1933 = vunpack.c.l.b16 %v491
    %v1934 = vunpack.c.h.b16 %v491
    %v1935 = vunpack.c.l.b16 %v492
    %v1936 = vunpack.c.h.b16 %v492
    %v1937 = vunpack.c.l.b16 %v493
    %v1938 = vunpack.c.h.b16 %v493
    %v1939 = vunpack.c.l.b16 %v494
    %v1940 = vunpack.c.h.b16 %v494
    %v1941 = vunpack.c.l.b16 %v495
    %v1942 = vunpack.c.h.b16 %v495
    %v1943 = vunpack.c.l.b16 %v496
    %v1944 = vunpack.c.h.b16 %v496
    %v1945 = vunpack.c.l.b16 %v497
    %v1946 = vunpack.c.h.b16 %v497
    %v1947 = vunpack.c.l.b16 %v498
    %v1948 = vunpack.c.h.b16 %v498
    %v1949 = vunpack.c.l.b16 %v499
    %v1950 = vunpack.c.h.b16 %v499
    %v1951 = vunpack.c.l.b16 %v500
    %v1952 = vunpack.c.h.b16 %v500
    %v1953 = vunpack.c.l.b16 %v501
    %v1954 = vunpack.c.h.b16 %v501
    %v1955 = vunpack.c.l.b16 %v502
    %v1956 = vunpack.c.h.b16 %v502
    %v1957 = vunpack.c.l.b16 %v503
    %v1958 = vunpack.c.h.b16 %v503
    %v1959 = vunpack.c.l.b16 %v504
    %v1960 = vunpack.c.h.b16 %v504
    %v1961 = vunpack.c.l.b16 %v505
    %v1962 = vunpack.c.h.b16 %v505
    %v1963 = vunpack.c.l.b16 %v506
    %v1964 = vunpack.c.h.b16 %v506
    %v1965 = vunpack.c.l.b16 %v507
    %v1966 = vunpack.c.h.b16 %v507
    %v1967 = vunpack.c.l.b16 %v508
    %v1968 = vunpack.c.h.b16 %v508
    %v1969 = vunpack.c.l.b16 %v509
    %v1970 = vunpack.c.h.b16 %v509
    %v1971 = vunpack.c.l.b16 %v510
    %v1972 = vunpack.c.h.b16 %v510
    %v1973 = vunpack.c.l.b16 %v511
    %v1974 = vunpack.c.h.b16 %v511
    %v1975 = vunpack.c.l.b16 %v512
    %v1976 = vunpack.c.h.b16 %v512
    %v1977 = vunpack.c.l.b16 %v513
    %v1978 = vunpack.c.h.b16 %v513
    %v1979 = vunpack.c.l.b16 %v514
    %v1980 = vunpack.c.h.b16 %v514
    %v1981 = vunpack.c.l.b16 %v515
    %v1982 = vunpack.c.h.b16 %v515
    %v1983 = vunpack.c.l.b16 %v516
    %v1984 = vunpack.c.h.b16 %v516
    %v1985 = vunpack.c.l.b16 %v517
    %v1986 = vunpack.c.h.b16 %v517
    %v1987 = vunpack.c.l.b16 %v518
    %v1988 = vunpack.c.h.b16 %v518
    %v1989 = vunpack.c.l.b16 %v519
    %v1990 = vunpack.c.h.b16 %v519
    %v1991 = vunpack.c.l.b16 %v520
    %v1992 = vunpack.c.h.b16 %v520
    %v1993 = vunpack.c.l.b16 %v521
    %v1994 = vunpack.c.h.b16 %v521
    %v1995 = vunpack.c.l.b16 %v522
    %v1996 = vunpack.c.h.b16 %v522
    %v1997 = vunpack.c.l.b16 %v523
    %v1998 = vunpack.c.h.b16 %v523
    %v1999 = vunpack.c.l.b16 %v524
    %v2000 = vunpack.c.h.b16 %v524
    %v2001 = vunpack.c.l.b16 %v525
    %v2002 = vunpack.c.h.b16 %v525
    %v2003 = vunpack.c.l.b16 %v526
    %v2004 = vunpack.c.h.b16 %v526
    %v2005 = vunpack.c.l.b16 %v527
    %v2006 = vunpack.c.h.b16 %v527
    %v2007 = vunpack.c.l.b16 %v528
    %v2008 = vunpack.c.h.b16 %v528
    %v2009 = vunpack.c.l.b16 %v529
    %v2010 = vunpack.c.h.b16 %v529
    %v2011 = vunpack.c.l.b16 %v530
    %v2012 = vunpack.c.h.b16 %v530
    %v2013 = vunpack.c.l.b16 %v531
    %v2014 = vunpack.c.h.b16 %v531
    %v2015 = vunpack.c.l.b16 %v532
    %v2016 = vunpack.c.h.b16 %v532
    %v2017 = vunpack.c.l.b16 %v533
    %v2018 = vunpack.c.h.b16 %v533
    %v2019 = vunpack.c.l.b16 %v534
    %v2020 = vunpack.c.h.b16 %v534
    %v2021 = vunpack.c.l.b16 %v535
    %v2022 = vunpack.c.h.b16 %v535
    %v2023 = vunpack.c.l.b16 %v536
    %v2024 = vunpack.c.h.b16 %v536
    %v2025 = vunpack.c.l.b16 %v537
    %v2026 = vunpack.c.h.b16 %v537
    %v2027 = vunpack.c.l.b16 %v538
    %v2028 = vunpack.c.h.b16 %v538
    %v2029 = vunpack.c.l.b16 %v539
    %v2030 = vunpack.c.h.b16 %v539
    %v2031 = vunpack.c.l.b16 %v540
    %v2032 = vunpack.c.h.b16 %v540
    %v2033 = vunpack.c.l.b16 %v541
    %v2034 = vunpack.c.h.b16 %v541
    %v2035 = vunpack.c.l.b16 %v542
    %v2036 = vunpack.c.h.b16 %v542
    %v2037 = vunpack.c.l.b16 %v543
    %v2038 = vunpack.c.h.b16 %v543
    %v2039 = vunpack.c.l.b16 %v544
    %v2040 = vunpack.c.h.b16 %v544
    %v2041 = vunpack.c.l.b16 %v545
    %v2042 = vunpack.c.h.b16 %v545
    %v2043 = vunpack.c.l.b16 %v546
    %v2044 = vunpack.c.h.b16 %v546
    %v2045 = vunpack.c.l.b16 %v547
    %v2046 = vunpack.c.h.b16 %v547
    %v2047 = vunpack.c.l.b16 %v548
    %v2048 = vunpack.c.h.b16 %v548
    %v2049 = vunpack.c.l.b16 %v549
    %v2050 = vunpack.c.h.b16 %v549
    %v2051 = vunpack.c.l.b16 %v550
    %v2052 = vunpack.c.h.b16 %v550
    %v2053 = vunpack.c.l.b16 %v551
    %v2054 = vunpack.c.h.b16 %v551
    %v2055 = vunpack.c.l.b16 %v552
    %v2056 = vunpack.c.h.b16 %v552
    %v2057 = vunpack.c.l.b16 %v553
    %v2058 = vunpack.c.h.b16 %v553
    %v2059 = vunpack.c.l.b16 %v554
    %v2060 = vunpack.c.h.b16 %v554
    %v2061 = vunpack.c.l.b16 %v555
    %v2062 = vunpack.c.h.b16 %v555
    %v2063 = vunpack.c.l.b16 %v556
    %v2064 = vunpack.c.h.b16 %v556
    %v2065 = vunpack.c.l.b16 %v557
    %v2066 = vunpack.c.h.b16 %v557
    %v2067 = vunpack.c.l.b16 %v558
    %v2068 = vunpack.c.h.b16 %v558
    %v2069 = vunpack.c.l.b16 %v559
    %v2070 = vunpack.c.h.b16 %v559
    %v2071 = vunpack.c.l.b16 %v560
    %v2072 = vunpack.c.h.b16 %v560
    %v2073 = vunpack.c.l.b16 %v561
    %v2074 = vunpack.c.h.b16 %v561
    %v2075 = vunpack.c.l.b16 %v562
    %v2076 = vunpack.c.h.b16 %v562
    %v2077 = vunpack.c.l.b16 %v563
    %v2078 = vunpack.c.h.b16 %v563
    %v2079 = vunpack.c.l.b16 %v564
    %v2080 = vunpack.c.h.b16 %v564
    %v2081 = vunpack.c.l.b16 %v565
    %v2082 = vunpack.c.h.b16 %v565
    %v2083 = vunpack.c.l.b16 %v566
    %v2084 = vunpack.c.h.b16 %v566
    %v2085 = vunpack.c.l.b16 %v567
    %v2086 = vunpack.c.h.b16 %v567
    %v2087 = vunpack.c.l.b16 %v568
    %v2088 = vunpack.c.h.b16 %v568
    %v2089 = vunpack.c.l.b16 %v569
    %v2090 = vunpack.c.h.b16 %v569
    %v2091 = vunpack.c.l.b16 %v570
    %v2092 = vunpack.c.h.b16 %v570
    %v2093 = vunpack.c.l.b16 %v571
    %v2094 = vunpack.c.h.b16 %v571
    %v2095 = vunpack.c.l.b16 %v572
    %v2096 = vunpack.c.h.b16 %v572
    %v2097 = vunpack.c.l.b16 %v573
    %v2098 = vunpack.c.h.b16 %v573
    %v2099 = vunpack.c.l.b16 %v574
    %v2100 = vunpack.c.h.b16 %v574
    %v2101 = vunpack.c.l.b16 %v575
    %v2102 = vunpack.c.h.b16 %v575
    %v2103 = vunpack.c.l.b16 %v576
    %v2104 = vunpack.c.h.b16 %v576
    %v2105 = vunpack.c.l.b16 %v577
    %v2106 = vunpack.c.h.b16 %v577
    %v2107 = vunpack.c.l.b16 %v578
    %v2108 = vunpack.c.h.b16 %v578
    %v2109 = vunpack.c.l.b16 %v579
    %v2110 = vunpack.c.h.b16 %v579
    %v2111 = vunpack.c.l.b16 %v580
    %v2112 = vunpack.c.h.b16 %v580
    %v2113 = vunpack.c.l.b16 %v581
    %v2114 = vunpack.c.h.b16 %v581
    %v2115 = vunpack.c.l.b16 %v582
    %v2116 = vunpack.c.h.b16 %v582
    %v2117 = vunpack.c.l.b16 %v583
    %v2118 = vunpack.c.h.b16 %v583
    %v2119 = vunpack.c.l.b16 %v584
    %v2120 = vunpack.c.h.b16 %v584
    %v2121 = vunpack.c.l.b16 %v585
    %v2122 = vunpack.c.h.b16 %v585
    %v2123 = vunpack.c.l.b16 %v586
    %v2124 = vunpack.c.h.b16 %v586
    %v2125 = vunpack.c.l.b16 %v587
    %v2126 = vunpack.c.h.b16 %v587
    %v2127 = vunpack.c.l.b16 %v588
    %v2128 = vunpack.c.h.b16 %v588
    %v2129 = vunpack.c.l.b16 %v589
    %v2130 = vunpack.c.h.b16 %v589
    %v2131 = vunpack.c.l.b16 %v590
    %v2132 = vunpack.c.h.b16 %v590
    %v2133 = vunpack.c.l.b16 %v591
    %v2134 = vunpack.c.h.b16 %v591
    %v2135 = vunpack.c.l.b16 %v592
    %v2136 = vunpack.c.h.b16 %v592
    %v2137 = vunpack.c.l.b16 %v593
    %v2138 = vunpack.c.h.b16 %v593
    %v2139 = vunpack.c.l.b16 %v594
    %v2140 = vunpack.c.h.b16 %v594
    %v2141 = vunpack.c.l.b16 %v595
    %v2142 = vunpack.c.h.b16 %v595
    %v2143 = vunpack.c.l.b16 %v596
    %v2144 = vunpack.c.h.b16 %v596
    %v2145 = vunpack.c.l.b16 %v597
    %v2146 = vunpack.c.h.b16 %v597
    %v2147 = vunpack.c.l.b16 %v598
    %v2148 = vunpack.c.h.b16 %v598
    %v2149 = vunpack.c.l.b16 %v599
    %v2150 = vunpack.c.h.b16 %v599
    %v2151 = vunpack.c.l.b16 %v600
    %v2152 = vunpack.c.h.b16 %v600
    %v2153 = vunpack.c.l.b16 %v601
    %v2154 = vunpack.c.h.b16 %v601
    %v2155 = vunpack.c.l.b16 %v602
    %v2156 = vunpack.c.h.b16 %v602
    %v2157 = vunpack.c.l.b16 %v603
    %v2158 = vunpack.c.h.b16 %v603
    %v2159 = vunpack.c.l.b16 %v604
    %v2160 = vunpack.c.h.b16 %v604
    %v2161 = vunpack.c.l.b16 %v605
    %v2162 = vunpack.c.h.b16 %v605
    %v2163 = vunpack.c.l.b16 %v606
    %v2164 = vunpack.c.h.b16 %v606
    %v2165 = vunpack.c.l.b16 %v607
    %v2166 = vunpack.c.h.b16 %v607
    %v2167 = vunpack.c.l.b16 %v608
    %v2168 = vunpack.c.h.b16 %v608
    %v2169 = vunpack.c.l.b16 %v609
    %v2170 = vunpack.c.h.b16 %v609
    %v2171 = vunpack.c.l.b16 %v610
    %v2172 = vunpack.c.h.b16 %v610
    %v2173 = vunpack.c.l.b16 %v611
    %v2174 = vunpack.c.h.b16 %v611
    %v2175 = vunpack.c.l.b16 %v612
    %v2176 = vunpack.c.h.b16 %v612
    %v2177 = vunpack.c.l.b16 %v613
    %v2178 = vunpack.c.h.b16 %v613
    %v2179 = vunpack.c.l.b16 %v614
    %v2180 = vunpack.c.h.b16 %v614
    %v2181 = vunpack.c.l.b16 %v615
    %v2182 = vunpack.c.h.b16 %v615
    %v2183 = vunpack.c.l.b16 %v616
    %v2184 = vunpack.c.h.b16 %v616
    %v2185 = vunpack.c.l.b16 %v617
    %v2186 = vunpack.c.h.b16 %v617
    %v2187 = vunpack.c.l.b16 %v618
    %v2188 = vunpack.c.h.b16 %v618
    %v2189 = vunpack.c.l.b16 %v619
    %v2190 = vunpack.c.h.b16 %v619
    %v2191 = vunpack.c.l.b16 %v620
    %v2192 = vunpack.c.h.b16 %v620
    %v2193 = vunpack.c.l.b16 %v621
    %v2194 = vunpack.c.h.b16 %v621
    %v2195 = vunpack.c.l.b16 %v622
    %v2196 = vunpack.c.h.b16 %v622
    %v2197 = vunpack.c.l.b16 %v623
    %v2198 = vunpack.c.h.b16 %v623
    %v2199 = vunpack.c.l.b16 %v624
    %v2200 = vunpack.c.h.b16 %v624
    %v2201 = vunpack.c.l.b16 %v625
    %v2202 = vunpack.c.h.b16 %v625
    %v2203 = vunpack.c.l.b16 %v626
    %v2204 = vunpack.c.h.b16 %v626
    %v2205 = vunpack.c.l.b16 %v627
    %v2206 = vunpack.c.h.b16 %v627
    %v2207 = vunpack.c.l.b16 %v628
    %v2208 = vunpack.c.h.b16 %v628
    %v2209 = vunpack.c.l.b16 %v629
    %v2210 = vunpack.c.h.b16 %v629
    %v2211 = vunpack.c.l.b16 %v630
    %v2212 = vunpack.c.h.b16 %v630
    %v2213 = vunpack.c.l.b16 %v631
    %v2214 = vunpack.c.h.b16 %v631
    %v2215 = vunpack.c.l.b16 %v632
    %v2216 = vunpack.c.h.b16 %v632
    %v2217 = vunpack.c.l.b16 %v633
    %v2218 = vunpack.c.h.b16 %v633
    %v2219 = vunpack.c.l.b16 %v634
    %v2220 = vunpack.c.h.b16 %v634
    %v2221 = vunpack.c.l.b16 %v635
    %v2222 = vunpack.c.h.b16 %v635
    %v2223 = vunpack.c.l.b16 %v636
    %v2224 = vunpack.c.h.b16 %v636
    %v2225 = vunpack.c.l.b16 %v637
    %v2226 = vunpack.c.h.b16 %v637
    %v2227 = vunpack.c.l.b16 %v638
    %v2228 = vunpack.c.h.b16 %v638
    %v2229 = vunpack.c.l.b16 %v639
    %v2230 = vunpack.c.h.b16 %v639
    %v2231 = vunpack.c.l.b16 %v640
    %v2232 = vunpack.c.h.b16 %v640
    %v2233 = vunpack.c.l.b16 %v641
    %v2234 = vunpack.c.h.b16 %v641
    %v2235 = vunpack.c.l.b16 %v642
    %v2236 = vunpack.c.h.b16 %v642
    %v2237 = vunpack.c.l.b16 %v643
    %v2238 = vunpack.c.h.b16 %v643
    %v2239 = vunpack.c.l.b16 %v644
    %v2240 = vunpack.c.h.b16 %v644
    %v2241 = vunpack.c.l.b16 %v645
    %v2242 = vunpack.c.h.b16 %v645
    %v2243 = vunpack.c.l.b16 %v646
    %v2244 = vunpack.c.h.b16 %v646
    %v2245 = vunpack.c.l.b16 %v647
    %v2246 = vunpack.c.h.b16 %v647
    %v2247 = vunpack.c.l.b16 %v648
    %v2248 = vunpack.c.h.b16 %v648
    %v2249 = vunpack.c.l.b16 %v649
    %v2250 = vunpack.c.h.b16 %v649
    %v2251 = vunpack.c.l.b16 %v650
    %v2252 = vunpack.c.h.b16 %v650
    %v2253 = vunpack.c.l.b16 %v651
    %v2254 = vunpack.c.h.b16 %v651
    %v2255 = vunpack.c.l.b16 %v652
    %v2256 = vunpack.c.h.b16 %v652
    %v2257 = vunpack.c.l.b16 %v653
    %v2258 = vunpack.c.h.b16 %v653
    %v2259 = vunpack.c.l.b16 %v654
    %v2260 = vunpack.c.h.b16 %v654
    %v2261 = vunpack.c.l.b16 %v655
    %v2262 = vunpack.c.h.b16 %v655
    %v2263 = vunpack.c.l.b16 %v656
    %v2264 = vunpack.c.h.b16 %v656
    %v2265 = vunpack.c.l.b16 %v657
    %v2266 = vunpack.c.h.b16 %v657
    %v2267 = vunpack.c.l.b16 %v658
    %v2268 = vunpack.c.h.b16 %v658
    %v2269 = vunpack.c.l.b16 %v659
    %v2270 = vunpack.c.h.b16 %v659
    %v2271 = vunpack.c.l.b16 %v660
    %v2272 = vunpack.c.h.b16 %v660
    %v2273 = vunpack.c.l.b16 %v661
    %v2274 = vunpack.c.h.b16 %v661
    %v2275 = vunpack.c.l.b16 %v662
    %v2276 = vunpack.c.h.b16 %v662
    %v2277 = vunpack.c.l.b16 %v663
    %v2278 = vunpack.c.h.b16 %v663
    %v2279 = vunpack.c.l.b16 %v664
    %v2280 = vunpack.c.h.b16 %v664
    %v2281 = vunpack.c.l.b16 %v665
    %v2282 = vunpack.c.h.b16 %v665
    %v2283 = vunpack.c.l.b16 %v666
    %v2284 = vunpack.c.h.b16 %v666
    %v2285 = vunpack.c.l.b16 %v667
    %v2286 = vunpack.c.h.b16 %v667
    %v2287 = vunpack.c.l.b16 %v668
    %v2288 = vunpack.c.h.b16 %v668
    %v2289 = vunpack.c.l.b16 %v669
    %v2290 = vunpack.c.h.b16 %v669
    %v2291 = vunpack.c.l.b16 %v670
    %v2292 = vunpack.c.h.b16 %v670
    %v2293 = vunpack.c.l.b16 %v671
    %v2294 = vunpack.c.h.b16 %v671
    %v2295 = vunpack.c.l.b16 %v672
    %v2296 = vunpack.c.h.b16 %v672
    %v2297 = vunpack.c.l.b16 %v673
    %v2298 = vunpack.c.h.b16 %v673
    %v2299 = vunpack.c.l.b16 %v674
    %v2300 = vunpack.c.h.b16 %v674
    %v2301 = vunpack.c.l.b16 %v675
    %v2302 = vunpack.c.h.b16 %v675
    %v2303 = vunpack.c.l.b16 %v676
    %v2304 = vunpack.c.h.b16 %v676
    %v2305 = vunpack.c.l.b16 %v677
    %v2306 = vunpack.c.h.b16 %v677
    %v2307 = vunpack.c.l.b16 %v678
    %v2308 = vunpack.c.h.b16 %v678
    %v2309 = vunpack.c.l.b16 %v679
    %v2310 = vunpack.c.h.b16 %v679
    %v2311 = vunpack.c.l.b16 %v680
    %v2312 = vunpack.c.h.b16 %v680
    %v2313 = vunpack.c.l.b16 %v681
    %v2314 = vunpack.c.h.b16 %v681
    %v2315 = vunpack.c.l.b16 %v682
    %v2316 = vunpack.c.h.b16 %v682
    %v2317 = vunpack.c.l.b16 %v683
    %v2318 = vunpack.c.h.b16 %v683
    %v2319 = vunpack.c.l.b16 %v684
    %v2320 = vunpack.c.h.b16 %v684
    %v2321 = vunpack.c.l.b16 %v685
    %v2322 = vunpack.c.h.b16 %v685
    %v2323 = vunpack.c.l.b16 %v686
    %v2324 = vunpack.c.h.b16 %v686
    %v2325 = vunpack.c.l.b16 %v687
    %v2326 = vunpack.c.h.b16 %v687
    %v2327 = vunpack.c.l.b16 %v688
    %v2328 = vunpack.c.h.b16 %v688
    %v2329 = vunpack.c.l.b16 %v689
    %v2330 = vunpack.c.h.b16 %v689
    %v2331 = vunpack.c.l.b16 %v690
    %v2332 = vunpack.c.h.b16 %v690
    %v2333 = vunpack.c.l.b16 %v691
    %v2334 = vunpack.c.h.b16 %v691
    %v2335 = vunpack.c.l.b16 %v692
    %v2336 = vunpack.c.h.b16 %v692
    %v2337 = vunpack.c.l.b16 %v693
    %v2338 = vunpack.c.h.b16 %v693
    %v2339 = vunpack.c.l.b16 %v694
    %v2340 = vunpack.c.h.b16 %v694
    %v2341 = vunpack.c.l.b16 %v695
    %v2342 = vunpack.c.h.b16 %v695
    %v2343 = vunpack.c.l.b16 %v696
    %v2344 = vunpack.c.h.b16 %v696
    %v2345 = vunpack.c.l.b16 %v697
    %v2346 = vunpack.c.h.b16 %v697
    %v2347 = vunpack.c.l.b16 %v698
    %v2348 = vunpack.c.h.b16 %v698
    %v2349 = vunpack.c.l.b16 %v699
    %v2350 = vunpack.c.h.b16 %v699
    %v2351 = vunpack.c.l.b16 %v700
    %v2352 = vunpack.c.h.b16 %v700
    %v2353 = vunpack.c.l.b16 %v701
    %v2354 = vunpack.c.h.b16 %v701
    %v2355 = vunpack.c.l.b16 %v702
    %v2356 = vunpack.c.h.b16 %v702
    %v2357 = vunpack.c.l.b16 %v703
    %v2358 = vunpack.c.h.b16 %v703
    %v2359 = vunpack.c.l.b16 %v704
    %v2360 = vunpack.c.h.b16 %v704
    %v2361 = vunpack.c.l.b16 %v705
    %v2362 = vunpack.c.h.b16 %v705
    %v2363 = vunpack.c.l.b16 %v706
    %v2364 = vunpack.c.h.b16 %v706
    %v2365 = vunpack.c.l.b16 %v707
    %v2366 = vunpack.c.h.b16 %v707
    %v2367 = vunpack.c.l.b16 %v708
    %v2368 = vunpack.c.h.b16 %v708
    %v2369 = vunpack.c.l.b16 %v709
    %v2370 = vunpack.c.h.b16 %v709
    %v2371 = vunpack.c.l.b16 %v710
    %v2372 = vunpack.c.h.b16 %v710
    %v2373 = vunpack.c.l.b16 %v711
    %v2374 = vunpack.c.h.b16 %v711
    %v2375 = vunpack.c.l.b16 %v712
    %v2376 = vunpack.c.h.b16 %v712
    %v2377 = vunpack.c.l.b16 %v713
    %v2378 = vunpack.c.h.b16 %v713
    %v2379 = vunpack.c.l.b16 %v714
    %v2380 = vunpack.c.h.b16 %v714
    %v2381 = vunpack.c.l.b16 %v715
    %v2382 = vunpack.c.h.b16 %v715
    %v2383 = vunpack.c.l.b16 %v716
    %v2384 = vunpack.c.h.b16 %v716
    %v2385 = vunpack.c.l.b16 %v717
    %v2386 = vunpack.c.h.b16 %v717
    %v2387 = vunpack.c.l.b16 %v718
    %v2388 = vunpack.c.h.b16 %v718
    %v2389 = vunpack.c.l.b16 %v719
    %v2390 = vunpack.c.h.b16 %v719
    %v2391 = vunpack.c.l.b16 %v720
    %v2392 = vunpack.c.h.b16 %v720
    %v2393 = vunpack.c.l.b16 %v721
    %v2394 = vunpack.c.h.b16 %v721
    %v2395 = vunpack.c.l.b16 %v722
    %v2396 = vunpack.c.h.b16 %v722
    %v2397 = vunpack.c.l.b16 %v723
    %v2398 = vunpack.c.h.b16 %v723
    %v2399 = vunpack.c.l.b16 %v724
    %v2400 = vunpack.c.h.b16 %v724
    %v2401 = vunpack.c.l.b16 %v725
    %v2402 = vunpack.c.h.b16 %v725
    %v2403 = vunpack.c.l.b16 %v726
    %v2404 = vunpack.c.h.b16 %v726
    %v2405 = vunpack.c.l.b16 %v727
    %v2406 = vunpack.c.h.b16 %v727
    %v2407 = vunpack.c.l.b16 %v728
    %v2408 = vunpack.c.h.b16 %v728
    %v2409 = vunpack.c.l.b16 %v729
    %v2410 = vunpack.c.h.b16 %v729
    %v2411 = vunpack.c.l.b16 %v730
    %v2412 = vunpack.c.h.b16 %v730
    %v2413 = vunpack.c.l.b16 %v731
    %v2414 = vunpack.c.h.b16 %v731
    %v2415 = vunpack.c.l.b16 %v732
    %v2416 = vunpack.c.h.b16 %v732
    %v2417 = vunpack.c.l.b16 %v733
    %v2418 = vunpack.c.h.b16 %v733
    %v2419 = vunpack.c.l.b16 %v734
    %v2420 = vunpack.c.h.b16 %v734
    %v2421 = vunpack.c.l.b16 %v735
    %v2422 = vunpack.c.h.b16 %v735
    %v2423 = vunpack.c.l.b16 %v736
    %v2424 = vunpack.c.h.b16 %v736
    %v2425 = vunpack.c.l.b16 %v737
    %v2426 = vunpack.c.h.b16 %v737
    %v2427 = vunpack.c.l.b16 %v738
    %v2428 = vunpack.c.h.b16 %v738
    %v2429 = vunpack.c.l.b16 %v739
    %v2430 = vunpack.c.h.b16 %v739
    %v2431 = vunpack.c.l.b16 %v740
    %v2432 = vunpack.c.h.b16 %v740
    %v2433 = vunpack.c.l.b16 %v741
    %v2434 = vunpack.c.h.b16 %v741
    %v2435 = vunpack.c.l.b16 %v742
    %v2436 = vunpack.c.h.b16 %v742
    %v2437 = vunpack.c.l.b16 %v743
    %v2438 = vunpack.c.h.b16 %v743
    %v2439 = vunpack.c.l.b16 %v744
    %v2440 = vunpack.c.h.b16 %v744
    %v2441 = vunpack.c.l.b16 %v745
    %v2442 = vunpack.c.h.b16 %v745
    %v2443 = vunpack.c.l.b16 %v746
    %v2444 = vunpack.c.h.b16 %v746
    %v2445 = vunpack.c.l.b16 %v747
    %v2446 = vunpack.c.h.b16 %v747
    %v2447 = vunpack.c.l.b16 %v748
    %v2448 = vunpack.c.h.b16 %v748
    %v2449 = vunpack.c.l.b16 %v749
    %v2450 = vunpack.c.h.b16 %v749
    %v2451 = vunpack.c.l.b16 %v750
    %v2452 = vunpack.c.h.b16 %v750
    %v2453 = vunpack.c.l.b16 %v751
    %v2454 = vunpack.c.h.b16 %v751
    %v2455 = vunpack.c.l.b16 %v752
    %v2456 = vunpack.c.h.b16 %v752
    %v2457 = vunpack.c.l.b16 %v753
    %v2458 = vunpack.c.h.b16 %v753
    %v2459 = vunpack.c.l.b16 %v754
    %v2460 = vunpack.c.h.b16 %v754
    %v2461 = vunpack.c.l.b16 %v755
    %v2462 = vunpack.c.h.b16 %v755
    %v2463 = vunpack.c.l.b16 %v756
    %v2464 = vunpack.c.h.b16 %v756
    %v2465 = vunpack.c.l.b16 %v757
    %v2466 = vunpack.c.h.b16 %v757
    %v2467 = vunpack.c.l.b16 %v758
    %v2468 = vunpack.c.h.b16 %v758
    %v2469 = vunpack.c.l.b16 %v759
    %v2470 = vunpack.c.h.b16 %v759
    %v2471 = vunpack.c.l.b16 %v760
    %v2472 = vunpack.c.h.b16 %v760
    %v2473 = vunpack.c.l.b16 %v761
    %v2474 = vunpack.c.h.b16 %v761
    %v2475 = vunpack.c.l.b16 %v762
    %v2476 = vunpack.c.h.b16 %v762
    %v2477 = vunpack.c.l.b16 %v763
    %v2478 = vunpack.c.h.b16 %v763
    %v2479 = vunpack.c.l.b16 %v764
    %v2480 = vunpack.c.h.b16 %v764
    %v2481 = vunpack.c.l.b16 %v765
    %v2482 = vunpack.c.h.b16 %v765
    %v2483 = vunpack.c.l.b16 %v766
    %v2484 = vunpack.c.h.b16 %v766
    %v2485 = vunpack.c.l.b16 %v767
    %v2486 = vunpack.c.h.b16 %v767
    %v2487 = vunpack.c.l.b16 %v768
    %v2488 = vunpack.c.h.b16 %v768
    %v2489 = vunpack.c.l.b16 %v769
    %v2490 = vunpack.c.h.b16 %v769
    %v2491 = vunpack.c.l.b16 %v770
    %v2492 = vunpack.c.h.b16 %v770
    %v2493 = vunpack.c.l.b16 %v771
    %v2494 = vunpack.c.h.b16 %v771
    %v2495 = vunpack.c.l.b16 %v772
    %v2496 = vunpack.c.h.b16 %v772
    %v2497 = vunpack.c.l.b16 %v773
    %v2498 = vunpack.c.h.b16 %v773
    %v2499 = vunpack.c.l.b16 %v774
    %v2500 = vunpack.c.h.b16 %v774
    %v2501 = vunpack.c.l.b16 %v775
    %v2502 = vunpack.c.h.b16 %v775
    %v2503 = vunpack.c.l.b16 %v776
    %v2504 = vunpack.c.h.b16 %v776
    %v2505 = vunpack.c.l.b16 %v777
    %v2506 = vunpack.c.h.b16 %v777
    %v2507 = vunpack.c.l.b16 %v778
    %v2508 = vunpack.c.h.b16 %v778
    %v2509 = vunpack.c.l.b16 %v779
    %v2510 = vunpack.c.h.b16 %v779
    %v2511 = vunpack.c.l.b16 %v780
    %v2512 = vunpack.c.h.b16 %v780
    %v2513 = vunpack.c.l.b16 %v781
    %v2514 = vunpack.c.h.b16 %v781
    %v2515 = vunpack.c.l.b16 %v782
    %v2516 = vunpack.c.h.b16 %v782
    %v2517 = vunpack.c.l.b16 %v783
    %v2518 = vunpack.c.h.b16 %v783
    %v2519 = vunpack.c.l.b16 %v784
    %v2520 = vunpack.c.h.b16 %v784
    %v2521 = vunpack.c.l.b16 %v785
    %v2522 = vunpack.c.h.b16 %v785
    %v2523 = vunpack.c.l.b16 %v786
    %v2524 = vunpack.c.h.b16 %v786
    %v2525 = vunpack.c.l.b16 %v787
    %v2526 = vunpack.c.h.b16 %v787
    %v2527 = vunpack.c.l.b16 %v788
    %v2528 = vunpack.c.h.b16 %v788
    %v2529 = vunpack.c.l.b16 %v789
    %v2530 = vunpack.c.h.b16 %v789
    %v2531 = vunpack.c.l.b16 %v790
    %v2532 = vunpack.c.h.b16 %v790
    %v2533 = vunpack.c.l.b16 %v791
    %v2534 = vunpack.c.h.b16 %v791
    %v2535 = vunpack.c.l.b16 %v792
    %v2536 = vunpack.c.h.b16 %v792
    %v2537 = vunpack.c.l.b16 %v793
    %v2538 = vunpack.c.h.b16 %v793
    %v2539 = vunpack.c.l.b16 %v794
    %v2540 = vunpack.c.h.b16 %v794
    %v2541 = vunpack.c.l.b16 %v795
    %v2542 = vunpack.c.h.b16 %v795
    %v2543 = vunpack.c.l.b16 %v796
    %v2544 = vunpack.c.h.b16 %v796
    %v2545 = vunpack.c.l.b16 %v797
    %v2546 = vunpack.c.h.b16 %v797
    %v2547 = vunpack.c.l.b16 %v798
    %v2548 = vunpack.c.h.b16 %v798
    %v2549 = vunpack.c.l.b16 %v799
    %v2550 = vunpack.c.h.b16 %v799
    %v2551 = vunpack.c.l.b16 %v800
    %v2552 = vunpack.c.h.b16 %v800
    %v2553 = vunpack.c.l.b16 %v801
    %v2554 = vunpack.c.h.b16 %v801
    %v2555 = vunpack.c.l.b16 %v802
    %v2556 = vunpack.c.h.b16 %v802
    %v2557 = vunpack.c.l.b16 %v803
    %v2558 = vunpack.c.h.b16 %v803
    %v2559 = vunpack.c.l.b16 %v804
    %v2560 = vunpack.c.h.b16 %v804
    %v2561 = vunpack.c.l.b16 %v805
    %v2562 = vunpack.c.h.b16 %v805
    %v2563 = vunpack.c.l.b16 %v806
    %v2564 = vunpack.c.h.b16 %v806
    %v2565 = vunpack.c.l.b16 %v807
    %v2566 = vunpack.c.h.b16 %v807
    %v2567 = vunpack.c.l.b16 %v808
    %v2568 = vunpack.c.h.b16 %v808
    %v2569 = vunpack.c.l.b16 %v809
    %v2570 = vunpack.c.h.b16 %v809
    %v2571 = vunpack.c.l.b16 %v810
    %v2572 = vunpack.c.h.b16 %v810
    %v2573 = vunpack.c.l.b16 %v811
    %v2574 = vunpack.c.h.b16 %v811
    %v2575 = vunpack.c.l.b16 %v812
    %v2576 = vunpack.c.h.b16 %v812
    %v2577 = vunpack.c.l.b16 %v813
    %v2578 = vunpack.c.h.b16 %v813
    %v2579 = vunpack.c.l.b16 %v814
    %v2580 = vunpack.c.h.b16 %v814
    %v2581 = vunpack.c.l.b16 %v815
    %v2582 = vunpack.c.h.b16 %v815
    %v2583 = vunpack.c.l.b16 %v816
    %v2584 = vunpack.c.h.b16 %v816
    %v2585 = vunpack.c.l.b16 %v817
    %v2586 = vunpack.c.h.b16 %v817
    %v2587 = vunpack.c.l.b16 %v818
    %v2588 = vunpack.c.h.b16 %v818
    %v2589 = vunpack.c.l.b16 %v819
    %v2590 = vunpack.c.h.b16 %v819
    %v2591 = vunpack.c.l.b16 %v820
    %v2592 = vunpack.c.h.b16 %v820
    %v2593 = vunpack.c.l.b16 %v821
    %v2594 = vunpack.c.h.b16 %v821
    %v2595 = vunpack.c.l.b16 %v822
    %v2596 = vunpack.c.h.b16 %v822
    %v2597 = vunpack.c.l.b16 %v823
    %v2598 = vunpack.c.h.b16 %v823
    %v2599 = vunpack.c.l.b16 %v824
    %v2600 = vunpack.c.h.b16 %v824
    %v2601 = vunpack.c.l.b16 %v825
    %v2602 = vunpack.c.h.b16 %v825
    %v2603 = vunpack.c.l.b16 %v826
    %v2604 = vunpack.c.h.b16 %v826
    %v2605 = vunpack.c.l.b16 %v827
    %v2606 = vunpack.c.h.b16 %v827
    %v2607 = vunpack.c.l.b16 %v828
    %v2608 = vunpack.c.h.b16 %v828
    %v2609 = vunpack.c.l.b16 %v829
    %v2610 = vunpack.c.h.b16 %v829
    %v2611 = vunpack.c.l.b16 %v830
    %v2612 = vunpack.c.h.b16 %v830
    %v2613 = vunpack.c.l.b16 %v831
    %v2614 = vunpack.c.h.b16 %v831
    %v2615 = vunpack.c.l.b16 %v832
    %v2616 = vunpack.c.h.b16 %v832
    %v2617 = vunpack.c.l.b16 %v833
    %v2618 = vunpack.c.h.b16 %v833
    %v2619 = vunpack.c.l.b16 %v834
    %v2620 = vunpack.c.h.b16 %v834
    %v2621 = vpack.c.b16 %v1449, %v1445
    %v2622 = vpack.c.b16 %v1450, %v1446
    %v2623 = vpack.c.b16 %v1451, %v1447
    %v2624 = vpack.c.b16 %v1452, %v1448
    %v2625 = vpack.c.b16 %v1457, %v1453
    %v2626 = vpack.c.b16 %v1458, %v1454
    %v2627 = vpack.c.b16 %v1459, %v1455
    %v2628 = vpack.c.b16 %v1460, %v1456
    %v2629 = vpack.c.b16 %v1465, %v1461
    %v2630 = vpack.c.b16 %v1466, %v1462
    %v2631 = vpack.c.b16 %v1467, %v1463
    %v2632 = vpack.c.b16 %v1468, %v1464
    %v2633 = vpack.c.b16 %v1473, %v1469
    %v2634 = vpack.c.b16 %v1474, %v1470
    %v2635 = vpack.c.b16 %v1475, %v1471
    %v2636 = vpack.c.b16 %v1476, %v1472
    %v2637 = vpack.c.b16 %v1481, %v1477
    %v2638 = vpack.c.b16 %v1482, %v1478
    %v2639 = vpack.c.b16 %v1483, %v1479
    %v2640 = vpack.c.b16 %v1484, %v1480
    %v2641 = vpack.c.b16 %v1489, %v1485
    %v2642 = vpack.c.b16 %v1490, %v1486
    %v2643 = vpack.c.b16 %v1491, %v1487
    %v2644 = vpack.c.b16 %v1492, %v1488
    %v2645 = vpack.c.b16 %v1497, %v1493
    %v2646 = vpack.c.b16 %v1498, %v1494
    %v2647 = vpack.c.b16 %v1499, %v1495
    %v2648 = vpack.c.b16 %v1500, %v1496
    %v2649 = vpack.c.b16 %v1505, %v1501
    %v2650 = vpack.c.b16 %v1506, %v1502
    %v2651 = vpack.c.b16 %v1507, %v1503
    %v2652 = vpack.c.b16 %v1508, %v1504
    %v2653 = vpack.c.b16 %v1513, %v1509
    %v2654 = vpack.c.b16 %v1514, %v1510
    %v2655 = vpack.c.b16 %v1515, %v1511
    %v2656 = vpack.c.b16 %v1516, %v1512
    %v2657 = vpack.c.b16 %v1521, %v1517
    %v2658 = vpack.c.b16 %v1522, %v1518
    %v2659 = vpack.c.b16 %v1523, %v1519
    %v2660 = vpack.c.b16 %v1524, %v1520
    %v2661 = vpack.c.b16 %v1529, %v1525
    %v2662 = vpack.c.b16 %v1530, %v1526
    %v2663 = vpack.c.b16 %v1531, %v1527
    %v2664 = vpack.c.b16 %v1532, %v1528
    %v2665 = vpack.c.b16 %v1537, %v1533
    %v2666 = vpack.c.b16 %v1538, %v1534
    %v2667 = vpack.c.b16 %v1539, %v1535
    %v2668 = vpack.c.b16 %v1540, %v1536
    %v2669 = vpack.c.b16 %v1545, %v1541
    %v2670 = vpack.c.b16 %v1546, %v1542
    %v2671 = vpack.c.b16 %v1547, %v1543
    %v2672 = vpack.c.b16 %v1548, %v1544
    %v2673 = vpack.c.b16 %v1553, %v1549
    %v2674 = vpack.c.b16 %v1554, %v1550
    %v2675 = vpack.c.b16 %v1555, %v1551
    %v2676 = vpack.c.b16 %v1556, %v1552
    %v2677 = vpack.c.b16 %v1561, %v1557
    %v2678 = vpack.c.b16 %v1562, %v1558
    %v2679 = vpack.c.b16 %v1563, %v1559
    %v2680 = vpack.c.b16 %v1564, %v1560
    %v2681 = vpack.c.b16 %v1569, %v1565
    %v2682 = vpack.c.b16 %v1570, %v1566
    %v2683 = vpack.c.b16 %v1571, %v1567
    %v2684 = vpack.c.b16 %v1572, %v1568
    %v2685 = vpack.c.b16 %v1577, %v1573
    %v2686 = vpack.c.b16 %v1578, %v1574
    %v2687 = vpack.c.b16 %v1579, %v1575
    %v2688 = vpack.c.b16 %v1580, %v1576
    %v2689 = vpack.c.b16 %v1585, %v1581
    %v2690 = vpack.c.b16 %v1586, %v1582
    %v2691 = vpack.c.b16 %v1587, %v1583
    %v2692 = vpack.c.b16 %v1588, %v1584
    %v2693 = vpack.c.b16 %v1593, %v1589
    %v2694 = vpack.c.b16 %v1594, %v1590
    %v2695 = vpack.c.b16 %v1595, %v1591
    %v2696 = vpack.c.b16 %v1596, %v1592
    %v2697 = vpack.c.b16 %v1601, %v1597
    %v2698 = vpack.c.b16 %v1602, %v1598
    %v2699 = vpack.c.b16 %v1603, %v1599
    %v2700 = vpack.c.b16 %v1604, %v1600
    %v2701 = vpack.c.b16 %v1609, %v1605
    %v2702 = vpack.c.b16 %v1610, %v1606
    %v2703 = vpack.c.b16 %v1611, %v1607
    %v2704 = vpack.c.b16 %v1612, %v1608
    %v2705 = vpack.c.b16 %v1617, %v1613
    %v2706 = vpack.c.b16 %v1618, %v1614
    %v2707 = vpack.c.b16 %v1619, %v1615
    %v2708 = vpack.c.b16 %v1620, %v1616
    %v2709 = vpack.c.b16 %v1625, %v1621
    %v2710 = vpack.c.b16 %v1626, %v1622
    %v2711 = vpack.c.b16 %v1627, %v1623
    %v2712 = vpack.c.b16 %v1628, %v1624
    %v2713 = vpack.c.b16 %v1633, %v1629
    %v2714 = vpack.c.b16 %v1634, %v1630
    %v2715 = vpack.c.b16 %v1635, %v1631
    %v2716 = vpack.c.b16 %v1636, %v1632
    %v2717 = vpack.c.b16 %v1641, %v1637
    %v2718 = vpack.c.b16 %v1642, %v1638
    %v2719 = vpack.c.b16 %v1643, %v1639
    %v2720 = vpack.c.b16 %v1644, %v1640
    %v2721 = vpack.c.b16 %v1649, %v1645
    %v2722 = vpack.c.b16 %v1650, %v1646
    %v2723 = vpack.c.b16 %v1651, %v1647
    %v2724 = vpack.c.b16 %v1652, %v1648
    %v2725 = vpack.c.b16 %v1657, %v1653
    %v2726 = vpack.c.b16 %v1658, %v1654
    %v2727 = vpack.c.b16 %v1659, %v1655
    %v2728 = vpack.c.b16 %v1660, %v1656
    %v2729 = vpack.c.b16 %v1665, %v1661
    %v2730 = vpack.c.b16 %v1666, %v1662
    %v2731 = vpack.c.b16 %v1667, %v1663
    %v2732 = vpack.c.b16 %v1668, %v1664
    %v2733 = vpack.c.b16 %v1673, %v1669
    %v2734 = vpack.c.b16 %v1674, %v1670
    %v2735 = vpack.c.b16 %v1675, %v1671
    %v2736 = vpack.c.b16 %v1676, %v1672
    %v2737 = vpack.c.b16 %v1681, %v1677
    %v2738 = vpack.c.b16 %v1682, %v1678
    %v2739 = vpack.c.b16 %v1683, %v1679
    %v2740 = vpack.c.b16 %v1684, %v1680
    %v2741 = vpack.c.b16 %v1689, %v1685
    %v2742 = vpack.c.b16 %v1690, %v1686
    %v2743 = vpack.c.b16 %v1691, %v1687
    %v2744 = vpack.c.b16 %v1692, %v1688
    %v2745 = vpack.c.b16 %v1697, %v1693
    %v2746 = vpack.c.b16 %v1698, %v1694
    %v2747 = vpack.c.b16 %v1699, %v1695
    %v2748 = vpack.c.b16 %v1700, %v1696
    %v2749 = vpack.c.b16 %v1705, %v1701
    %v2750 = vpack.c.b16 %v1706, %v1702
    %v2751 = vpack.c.b16 %v1707, %v1703
    %v2752 = vpack.c.b16 %v1708, %v1704
    %v2753 = vpack.c.b16 %v1713, %v1709
    %v2754 = vpack.c.b16 %v1714, %v1710
    %v2755 = vpack.c.b16 %v1715, %v1711
    %v2756 = vpack.c.b16 %v1716, %v1712
    %v2757 = vpack.c.b16 %v1721, %v1717
    %v2758 = vpack.c.b16 %v1722, %v1718
    %v2759 = vpack.c.b16 %v1723, %v1719
    %v2760 = vpack.c.b16 %v1724, %v1720
    %v2761 = vpack.c.b16 %v1729, %v1725
    %v2762 = vpack.c.b16 %v1730, %v1726
    %v2763 = vpack.c.b16 %v1731, %v1727
    %v2764 = vpack.c.b16 %v1732, %v1728
    %v2765 = vpack.c.b16 %v1737, %v1733
    %v2766 = vpack.c.b16 %v1738, %v1734
    %v2767 = vpack.c.b16 %v1739, %v1735
    %v2768 = vpack.c.b16 %v1740, %v1736
    %v2769 = vpack.c.b16 %v1745, %v1741
    %v2770 = vpack.c.b16 %v1746, %v1742
    %v2771 = vpack.c.b16 %v1747, %v1743
    %v2772 = vpack.c.b16 %v1748, %v1744
    %v2773 = vpack.c.b16 %v1753, %v1749
    %v2774 = vpack.c.b16 %v1754, %v1750
    %v2775 = vpack.c.b16 %v1755, %v1751
    %v2776 = vpack.c.b16 %v1756, %v1752
    %v2777 = vpack.c.b16 %v1761, %v1757
    %v2778 = vpack.c.b16 %v1762, %v1758
    %v2779 = vpack.c.b16 %v1763, %v1759
    %v2780 = vpack.c.b16 %v1764, %v1760
    %v2781 = vpack.c.b16 %v1769, %v1765
    %v2782 = vpack.c.b16 %v1770, %v1766
    %v2783 = vpack.c.b16 %v1771, %v1767
    %v2784 = vpack.c.b16 %v1772, %v1768
    %v2785 = vpack.c.b16 %v1777, %v1773
    %v2786 = vpack.c.b16 %v1778, %v1774
    %v2787 = vpack.c.b16 %v1779, %v1775
    %v2788 = vpack.c.b16 %v1780, %v1776
    %v2789 = vpack.c.b16 %v1785, %v1781
    %v2790 = vpack.c.b16 %v1786, %v1782
    %v2791 = vpack.c.b16 %v1787, %v1783
    %v2792 = vpack.c.b16 %v1788, %v1784
    %v2793 = vpack.c.b16 %v1793, %v1789
    %v2794 = vpack.c.b16 %v1794, %v1790
    %v2795 = vpack.c.b16 %v1795, %v1791
    %v2796 = vpack.c.b16 %v1796, %v1792
    %v2797 = vpack.c.b16 %v1801, %v1797
    %v2798 = vpack.c.b16 %v1802, %v1798
    %v2799 = vpack.c.b16 %v1803, %v1799
    %v2800 = vpack.c.b16 %v1804, %v1800
    %v2801 = vpack.c.b16 %v1809, %v1805
    %v2802 = vpack.c.b16 %v1810, %v1806
    %v2803 = vpack.c.b16 %v1811, %v1807
    %v2804 = vpack.c.b16 %v1812, %v1808
    %v2805 = vpack.c.b16 %v1817, %v1813
    %v2806 = vpack.c.b16 %v1818, %v1814
    %v2807 = vpack.c.b16 %v1819, %v1815
    %v2808 = vpack.c.b16 %v1820, %v1816
    %v2809 = vpack.c.b16 %v1825, %v1821
    %v2810 = vpack.c.b16 %v1826, %v1822
    %v2811 = vpack.c.b16 %v1827, %v1823
    %v2812 = vpack.c.b16 %v1828, %v1824
    %v2813 = vpack.c.b16 %v1833, %v1829
    %v2814 = vpack.c.b16 %v1834, %v1830
    %v2815 = vpack.c.b16 %v1835, %v1831
    %v2816 = vpack.c.b16 %v1836, %v1832
    %v2817 = vpack.c.b16 %v1841, %v1837
    %v2818 = vpack.c.b16 %v1842, %v1838
    %v2819 = vpack.c.b16 %v1843, %v1839
    %v2820 = vpack.c.b16 %v1844, %v1840
    %v2821 = vpack.c.b16 %v1849, %v1845
    %v2822 = vpack.c.b16 %v1850, %v1846
    %v2823 = vpack.c.b16 %v1851, %v1847
    %v2824 = vpack.c.b16 %v1852, %v1848
    %v2825 = vpack.c.b16 %v1857, %v1853
    %v2826 = vpack.c.b16 %v1858, %v1854
    %v2827 = vpack.c.b16 %v1859, %v1855
    %v2828 = vpack.c.b16 %v1860, %v1856
    %v2829 = vpack.c.b16 %v1865, %v1861
    %v2830 = vpack.c.b16 %v1866, %v1862
    %v2831 = vpack.c.b16 %v1867, %v1863
    %v2832 = vpack.c.b16 %v1868, %v1864
    %v2833 = vpack.c.b16 %v1873, %v1869
    %v2834 = vpack.c.b16 %v1874, %v1870
    %v2835 = vpack.c.b16 %v1875, %v1871
    %v2836 = vpack.c.b16 %v1876, %v1872
    %v2837 = vpack.c.b16 %v1881, %v1877
    %v2838 = vpack.c.b16 %v1882, %v1878
    %v2839 = vpack.c.b16 %v1883, %v1879
    %v2840 = vpack.c.b16 %v1884, %v1880
    %v2841 = vpack.c.b16 %v1889, %v1885
    %v2842 = vpack.c.b16 %v1890, %v1886
    %v2843 = vpack.c.b16 %v1891, %v1887
    %v2844 = vpack.c.b16 %v1892, %v1888
    %v2845 = vpack.c.b16 %v1897, %v1893
    %v2846 = vpack.c.b16 %v1898, %v1894
    %v2847 = vpack.c.b16 %v1899, %v1895
    %v2848 = vpack.c.b16 %v1900, %v1896
    %v2849 = vpack.c.b16 %v1905, %v1901
    %v2850 = vpack.c.b16 %v1906, %v1902
    %v2851 = vpack.c.b16 %v1907, %v1903
    %v2852 = vpack.c.b16 %v1908, %v1904
    %v2853 = vpack.c.b16 %v1913, %v1909
    %v2854 = vpack.c.b16 %v1914, %v1910
    %v2855 = vpack.c.b16 %v1915, %v1911
    %v2856 = vpack.c.b16 %v1916, %v1912
    %v2857 = vpack.c.b16 %v1921, %v1917
    %v2858 = vpack.c.b16 %v1922, %v1918
    %v2859 = vpack.c.b16 %v1923, %v1919
    %v2860 = vpack.c.b16 %v1924, %v1920
    %v2861 = vpack.c.b16 %v1929, %v1925
    %v2862 = vpack.c.b16 %v1930, %v1926
    %v2863 = vpack.c.b16 %v1931, %v1927
    %v2864 = vpack.c.b16 %v1932, %v1928
    %v2865 = vpack.c.b16 %v1937, %v1933
    %v2866 = vpack.c.b16 %v1938, %v1934
    %v2867 = vpack.c.b16 %v1939, %v1935
    %v2868 = vpack.c.b16 %v1940, %v1936
    %v2869 = vpack.c.b16 %v1945, %v1941
    %v2870 = vpack.c.b16 %v1946, %v1942
    %v2871 = vpack.c.b16 %v1947, %v1943
    %v2872 = vpack.c.b16 %v1948, %v1944
    %v2873 = vpack.c.b16 %v1953, %v1949
    %v2874 = vpack.c.b16 %v1954, %v1950
    %v2875 = vpack.c.b16 %v1955, %v1951
    %v2876 = vpack.c.b16 %v1956, %v1952
    %v2877 = vpack.c.b16 %v1961, %v1957
    %v2878 = vpack.c.b16 %v1962, %v1958
    %v2879 = vpack.c.b16 %v1963, %v1959
    %v2880 = vpack.c.b16 %v1964, %v1960
    %v2881 = vpack.c.b16 %v1969, %v1965
    %v2882 = vpack.c.b16 %v1970, %v1966
    %v2883 = vpack.c.b16 %v1971, %v1967
    %v2884 = vpack.c.b16 %v1972, %v1968
    %v2885 = vpack.c.b16 %v1977, %v1973
    %v2886 = vpack.c.b16 %v1978, %v1974
    %v2887 = vpack.c.b16 %v1979, %v1975
    %v2888 = vpack.c.b16 %v1980, %v1976
    %v2889 = vpack.c.b16 %v1985, %v1981
    %v2890 = vpack.c.b16 %v1986, %v1982
    %v2891 = vpack.c.b16 %v1987, %v1983
    %v2892 = vpack.c.b16 %v1988, %v1984
    %v2893 = vpack.c.b16 %v1993, %v1989
    %v2894 = vpack.c.b16 %v1994, %v1990
    %v2895 = vpack.c.b16 %v1995, %v1991
    %v2896 = vpack.c.b16 %v1996, %v1992
    %v2897 = vpack.c.b16 %v2001, %v1997
    %v2898 = vpack.c.b16 %v2002, %v1998
    %v2899 = vpack.c.b16 %v2003, %v1999
    %v2900 = vpack.c.b16 %v2004, %v2000
    %v2901 = vpack.c.b16 %v2009, %v2005
    %v2902 = vpack.c.b16 %v2010, %v2006
    %v2903 = vpack.c.b16 %v2011, %v2007
    %v2904 = vpack.c.b16 %v2012, %v2008
    %v2905 = vpack.c.b16 %v2017, %v2013
    %v2906 = vpack.c.b16 %v2018, %v2014
    %v2907 = vpack.c.b16 %v2019, %v2015
    %v2908 = vpack.c.b16 %v2020, %v2016
    %v2909 = vpack.c.b16 %v2025, %v2021
    %v2910 = vpack.c.b16 %v2026, %v2022
    %v2911 = vpack.c.b16 %v2027, %v2023
    %v2912 = vpack.c.b16 %v2028, %v2024
    %v2913 = vpack.c.b16 %v2033, %v2029
    %v2914 = vpack.c.b16 %v2034, %v2030
    %v2915 = vpack.c.b16 %v2035, %v2031
    %v2916 = vpack.c.b16 %v2036, %v2032
    %v2917 = vpack.c.b16 %v2041, %v2037
    %v2918 = vpack.c.b16 %v2042, %v2038
    %v2919 = vpack.c.b16 %v2043, %v2039
    %v2920 = vpack.c.b16 %v2044, %v2040
    %v2921 = vpack.c.b16 %v2049, %v2045
    %v2922 = vpack.c.b16 %v2050, %v2046
    %v2923 = vpack.c.b16 %v2051, %v2047
    %v2924 = vpack.c.b16 %v2052, %v2048
    %v2925 = vpack.c.b16 %v2057, %v2053
    %v2926 = vpack.c.b16 %v2058, %v2054
    %v2927 = vpack.c.b16 %v2059, %v2055
    %v2928 = vpack.c.b16 %v2060, %v2056
    %v2929 = vpack.c.b16 %v2065, %v2061
    %v2930 = vpack.c.b16 %v2066, %v2062
    %v2931 = vpack.c.b16 %v2067, %v2063
    %v2932 = vpack.c.b16 %v2068, %v2064
    %v2933 = vpack.c.b16 %v2073, %v2069
    %v2934 = vpack.c.b16 %v2074, %v2070
    %v2935 = vpack.c.b16 %v2075, %v2071
    %v2936 = vpack.c.b16 %v2076, %v2072
    %v2937 = vpack.c.b16 %v2081, %v2077
    %v2938 = vpack.c.b16 %v2082, %v2078
    %v2939 = vpack.c.b16 %v2083, %v2079
    %v2940 = vpack.c.b16 %v2084, %v2080
    %v2941 = vpack.c.b16 %v2089, %v2085
    %v2942 = vpack.c.b16 %v2090, %v2086
    %v2943 = vpack.c.b16 %v2091, %v2087
    %v2944 = vpack.c.b16 %v2092, %v2088
    %v2945 = vpack.c.b16 %v2097, %v2093
    %v2946 = vpack.c.b16 %v2098, %v2094
    %v2947 = vpack.c.b16 %v2099, %v2095
    %v2948 = vpack.c.b16 %v2100, %v2096
    %v2949 = vpack.c.b16 %v2105, %v2101
    %v2950 = vpack.c.b16 %v2106, %v2102
    %v2951 = vpack.c.b16 %v2107, %v2103
    %v2952 = vpack.c.b16 %v2108, %v2104
    %v2953 = vpack.c.b16 %v2113, %v2109
    %v2954 = vpack.c.b16 %v2114, %v2110
    %v2955 = vpack.c.b16 %v2115, %v2111
    %v2956 = vpack.c.b16 %v2116, %v2112
    %v2957 = vpack.c.b16 %v2121, %v2117
    %v2958 = vpack.c.b16 %v2122, %v2118
    %v2959 = vpack.c.b16 %v2123, %v2119
    %v2960 = vpack.c.b16 %v2124, %v2120
    %v2961 = vpack.c.b16 %v2129, %v2125
    %v2962 = vpack.c.b16 %v2130, %v2126
    %v2963 = vpack.c.b16 %v2131, %v2127
    %v2964 = vpack.c.b16 %v2132, %v2128
    %v2965 = vpack.c.b16 %v2137, %v2133
    %v2966 = vpack.c.b16 %v2138, %v2134
    %v2967 = vpack.c.b16 %v2139, %v2135
    %v2968 = vpack.c.b16 %v2140, %v2136
    %v2969 = vpack.c.b16 %v2145, %v2141
    %v2970 = vpack.c.b16 %v2146, %v2142
    %v2971 = vpack.c.b16 %v2147, %v2143
    %v2972 = vpack.c.b16 %v2148, %v2144
    %v2973 = vpack.c.b16 %v2153, %v2149
    %v2974 = vpack.c.b16 %v2154, %v2150
    %v2975 = vpack.c.b16 %v2155, %v2151
    %v2976 = vpack.c.b16 %v2156, %v2152
    %v2977 = vpack.c.b16 %v2161, %v2157
    %v2978 = vpack.c.b16 %v2162, %v2158
    %v2979 = vpack.c.b16 %v2163, %v2159
    %v2980 = vpack.c.b16 %v2164, %v2160
    %v2981 = vpack.c.b16 %v2169, %v2165
    %v2982 = vpack.c.b16 %v2170, %v2166
    %v2983 = vpack.c.b16 %v2171, %v2167
    %v2984 = vpack.c.b16 %v2172, %v2168
    %v2985 = vpack.c.b16 %v2177, %v2173
    %v2986 = vpack.c.b16 %v2178, %v2174
    %v2987 = vpack.c.b16 %v2179, %v2175
    %v2988 = vpack.c.b16 %v2180, %v2176
    %v2989 = vpack.c.b16 %v2185, %v2181
    %v2990 = vpack.c.b16 %v2186, %v2182
    %v2991 = vpack.c.b16 %v2187, %v2183
    %v2992 = vpack.c.b16 %v2188, %v2184
    %v2993 = vpack.c.b16 %v2193, %v2189
    %v2994 = vpack.c.b16 %v2194, %v2190
    %v2995 = vpack.c.b16 %v2195, %v2191
    %v2996 = vpack.c.b16 %v2196, %v2192
    %v2997 = vpack.c.b16 %v2201, %v2197
    %v2998 = vpack.c.b16 %v2202, %v2198
    %v2999 = vpack.c.b16 %v2203, %v2199
    %v3000 = vpack.c.b16 %v2204, %v2200
    %v3001 = vpack.c.b16 %v2209, %v2205
    %v3002 = vpack.c.b16 %v2210, %v2206
    %v3003 = vpack.c.b16 %v2211, %v2207
    %v3004 = vpack.c.b16 %v2212, %v2208
    %v3005 = vpack.c.b16 %v2217, %v2213
    %v3006 = vpack.c.b16 %v2218, %v2214
    %v3007 = vpack.c.b16 %v2219, %v2215
    %v3008 = vpack.c.b16 %v2220, %v2216
    %v3009 = vpack.c.b16 %v2225, %v2221
    %v3010 = vpack.c.b16 %v2226, %v2222
    %v3011 = vpack.c.b16 %v2227, %v2223
    %v3012 = vpack.c.b16 %v2228, %v2224
    %v3013 = vpack.c.b16 %v2233, %v2229
    %v3014 = vpack.c.b16 %v2234, %v2230
    %v3015 = vpack.c.b16 %v2235, %v2231
    %v3016 = vpack.c.b16 %v2236, %v2232
    %v3017 = vpack.c.b16 %v2241, %v2237
    %v3018 = vpack.c.b16 %v2242, %v2238
    %v3019 = vpack.c.b16 %v2243, %v2239
    %v3020 = vpack.c.b16 %v2244, %v2240
    %v3021 = vpack.c.b16 %v2249, %v2245
    %v3022 = vpack.c.b16 %v2250, %v2246
    %v3023 = vpack.c.b16 %v2251, %v2247
    %v3024 = vpack.c.b16 %v2252, %v2248
    %v3025 = vpack.c.b16 %v2257, %v2253
    %v3026 = vpack.c.b16 %v2258, %v2254
    %v3027 = vpack.c.b16 %v2259, %v2255
    %v3028 = vpack.c.b16 %v2260, %v2256
    %v3029 = vpack.c.b16 %v2265, %v2261
    %v3030 = vpack.c.b16 %v2266, %v2262
    %v3031 = vpack.c.b16 %v2267, %v2263
    %v3032 = vpack.c.b16 %v2268, %v2264
    %v3033 = vpack.c.b16 %v2273, %v2269
    %v3034 = vpack.c.b16 %v2274, %v2270
    %v3035 = vpack.c.b16 %v2275, %v2271
    %v3036 = vpack.c.b16 %v2276, %v2272
    %v3037 = vpack.c.b16 %v2281, %v2277
    %v3038 = vpack.c.b16 %v2282, %v2278
    %v3039 = vpack.c.b16 %v2283, %v2279
    %v3040 = vpack.c.b16 %v2284, %v2280
    %v3041 = vpack.c.b16 %v2289, %v2285
    %v3042 = vpack.c.b16 %v2290, %v2286
    %v3043 = vpack.c.b16 %v2291, %v2287
    %v3044 = vpack.c.b16 %v2292, %v2288
    %v3045 = vpack.c.b16 %v2297, %v2293
    %v3046 = vpack.c.b16 %v2298, %v2294
    %v3047 = vpack.c.b16 %v2299, %v2295
    %v3048 = vpack.c.b16 %v2300, %v2296
    %v3049 = vpack.c.b16 %v2305, %v2301
    %v3050 = vpack.c.b16 %v2306, %v2302
    %v3051 = vpack.c.b16 %v2307, %v2303
    %v3052 = vpack.c.b16 %v2308, %v2304
    %v3053 = vpack.c.b16 %v2313, %v2309
    %v3054 = vpack.c.b16 %v2314, %v2310
    %v3055 = vpack.c.b16 %v2315, %v2311
    %v3056 = vpack.c.b16 %v2316, %v2312
    %v3057 = vpack.c.b16 %v2321, %v2317
    %v3058 = vpack.c.b16 %v2322, %v2318
    %v3059 = vpack.c.b16 %v2323, %v2319
    %v3060 = vpack.c.b16 %v2324, %v2320
    %v3061 = vpack.c.b16 %v2329, %v2325
    %v3062 = vpack.c.b16 %v2330, %v2326
    %v3063 = vpack.c.b16 %v2331, %v2327
    %v3064 = vpack.c.b16 %v2332, %v2328
    %v3065 = vpack.c.b16 %v2337, %v2333
    %v3066 = vpack.c.b16 %v2338, %v2334
    %v3067 = vpack.c.b16 %v2339, %v2335
    %v3068 = vpack.c.b16 %v2340, %v2336
    %v3069 = vpack.c.b16 %v2345, %v2341
    %v3070 = vpack.c.b16 %v2346, %v2342
    %v3071 = vpack.c.b16 %v2347, %v2343
    %v3072 = vpack.c.b16 %v2348, %v2344
    %v3073 = vpack.c.b16 %v2353, %v2349
    %v3074 = vpack.c.b16 %v2354, %v2350
    %v3075 = vpack.c.b16 %v2355, %v2351
    %v3076 = vpack.c.b16 %v2356, %v2352
    %v3077 = vpack.c.b16 %v2361, %v2357
    %v3078 = vpack.c.b16 %v2362, %v2358
    %v3079 = vpack.c.b16 %v2363, %v2359
    %v3080 = vpack.c.b16 %v2364, %v2360
    %v3081 = vpack.c.b16 %v2369, %v2365
    %v3082 = vpack.c.b16 %v2370, %v2366
    %v3083 = vpack.c.b16 %v2371, %v2367
    %v3084 = vpack.c.b16 %v2372, %v2368
    %v3085 = vpack.c.b16 %v2377, %v2373
    %v3086 = vpack.c.b16 %v2378, %v2374
    %v3087 = vpack.c.b16 %v2379, %v2375
    %v3088 = vpack.c.b16 %v2380, %v2376
    %v3089 = vpack.c.b16 %v2385, %v2381
    %v3090 = vpack.c.b16 %v2386, %v2382
    %v3091 = vpack.c.b16 %v2387, %v2383
    %v3092 = vpack.c.b16 %v2388, %v2384
    %v3093 = vpack.c.b16 %v2393, %v2389
    %v3094 = vpack.c.b16 %v2394, %v2390
    %v3095 = vpack.c.b16 %v2395, %v2391
    %v3096 = vpack.c.b16 %v2396, %v2392
    %v3097 = vpack.c.b16 %v2401, %v2397
    %v3098 = vpack.c.b16 %v2402, %v2398
    %v3099 = vpack.c.b16 %v2403, %v2399
    %v3100 = vpack.c.b16 %v2404, %v2400
    %v3101 = vpack.c.b16 %v2409, %v2405
    %v3102 = vpack.c.b16 %v2410, %v2406
    %v3103 = vpack.c.b16 %v2411, %v2407
    %v3104 = vpack.c.b16 %v2412, %v2408
    %v3105 = vpack.c.b16 %v2417, %v2413
    %v3106 = vpack.c.b16 %v2418, %v2414
    %v3107 = vpack.c.b16 %v2419, %v2415
    %v3108 = vpack.c.b16 %v2420, %v2416
    %v3109 = vpack.c.b16 %v2425, %v2421
    %v3110 = vpack.c.b16 %v2426, %v2422
    %v3111 = vpack.c.b16 %v2427, %v2423
    %v3112 = vpack.c.b16 %v2428, %v2424
    %v3113 = vpack.c.b16 %v2433, %v2429
    %v3114 = vpack.c.b16 %v2434, %v2430
    %v3115 = vpack.c.b16 %v2435, %v2431
    %v3116 = vpack.c.b16 %v2436, %v2432
    %v3117 = vpack.c.b16 %v2441, %v2437
    %v3118 = vpack.c.b16 %v2442, %v2438
    %v3119 = vpack.c.b16 %v2443, %v2439
    %v3120 = vpack.c.b16 %v2444, %v2440
    %v3121 = vpack.c.b16 %v2449, %v2445
    %v3122 = vpack.c.b16 %v2450, %v2446
    %v3123 = vpack.c.b16 %v2451, %v2447
    %v3124 = vpack.c.b16 %v2452, %v2448
    %v3125 = vpack.c.b16 %v2457, %v2453
    %v3126 = vpack.c.b16 %v2458, %v2454
    %v3127 = vpack.c.b16 %v2459, %v2455
    %v3128 = vpack.c.b16 %v2460, %v2456
    %v3129 = vpack.c.b16 %v2465, %v2461
    %v3130 = vpack.c.b16 %v2466, %v2462
    %v3131 = vpack.c.b16 %v2467, %v2463
    %v3132 = vpack.c.b16 %v2468, %v2464
    %v3133 = vpack.c.b16 %v2473, %v2469
    %v3134 = vpack.c.b16 %v2474, %v2470
    %v3135 = vpack.c.b16 %v2475, %v2471
    %v3136 = vpack.c.b16 %v2476, %v2472
    %v3137 = vpack.c.b16 %v2481, %v2477
    %v3138 = vpack.c.b16 %v2482, %v2478
    %v3139 = vpack.c.b16 %v2483, %v2479
    %v3140 = vpack.c.b16 %v2484, %v2480
    %v3141 = vpack.c.b16 %v2489, %v2485
    %v3142 = vpack.c.b16 %v2490, %v2486
    %v3143 = vpack.c.b16 %v2491, %v2487
    %v3144 = vpack.c.b16 %v2492, %v2488
    %v3145 = vpack.c.b16 %v2497, %v2493
    %v3146 = vpack.c.b16 %v2498, %v2494
    %v3147 = vpack.c.b16 %v2499, %v2495
    %v3148 = vpack.c.b16 %v2500, %v2496
    %v3149 = vpack.c.b16 %v2505, %v2501
    %v3150 = vpack.c.b16 %v2506, %v2502
    %v3151 = vpack.c.b16 %v2507, %v2503
    %v3152 = vpack.c.b16 %v2508, %v2504
    %v3153 = vpack.c.b16 %v2513, %v2509
    %v3154 = vpack.c.b16 %v2514, %v2510
    %v3155 = vpack.c.b16 %v2515, %v2511
    %v3156 = vpack.c.b16 %v2516, %v2512
    %v3157 = vpack.c.b16 %v2521, %v2517
    %v3158 = vpack.c.b16 %v2522, %v2518
    %v3159 = vpack.c.b16 %v2523, %v2519
    %v3160 = vpack.c.b16 %v2524, %v2520
    %v3161 = vpack.c.b16 %v2529, %v2525
    %v3162 = vpack.c.b16 %v2530, %v2526
    %v3163 = vpack.c.b16 %v2531, %v2527
    %v3164 = vpack.c.b16 %v2532, %v2528
    %v3165 = vpack.c.b16 %v2537, %v2533
    %v3166 = vpack.c.b16 %v2538, %v2534
    %v3167 = vpack.c.b16 %v2539, %v2535
    %v3168 = vpack.c.b16 %v2540, %v2536
    %v3169 = vpack.c.b16 %v2545, %v2541
    %v3170 = vpack.c.b16 %v2546, %v2542
    %v3171 = vpack.c.b16 %v2547, %v2543
    %v3172 = vpack.c.b16 %v2548, %v2544
    %v3173 = vpack.c.b16 %v2553, %v2549
    %v3174 = vpack.c.b16 %v2554, %v2550
    %v3175 = vpack.c.b16 %v2555, %v2551
    %v3176 = vpack.c.b16 %v2556, %v2552
    %v3177 = vpack.c.b16 %v2561, %v2557
    %v3178 = vpack.c.b16 %v2562, %v2558
    %v3179 = vpack.c.b16 %v2563, %v2559
    %v3180 = vpack.c.b16 %v2564, %v2560
    %v3181 = vpack.c.b16 %v2569, %v2565
    %v3182 = vpack.c.b16 %v2570, %v2566
    %v3183 = vpack.c.b16 %v2571, %v2567
    %v3184 = vpack.c.b16 %v2572, %v2568
    %v3185 = vpack.c.b16 %v2577, %v2573
    %v3186 = vpack.c.b16 %v2578, %v2574
    %v3187 = vpack.c.b16 %v2579, %v2575
    %v3188 = vpack.c.b16 %v2580, %v2576
    %v3189 = vpack.c.b16 %v2585, %v2581
    %v3190 = vpack.c.b16 %v2586, %v2582
    %v3191 = vpack.c.b16 %v2587, %v2583
    %v3192 = vpack.c.b16 %v2588, %v2584
    %v3193 = vpack.c.b16 %v2593, %v2589
    %v3194 = vpack.c.b16 %v2594, %v2590
    %v3195 = vpack.c.b16 %v2595, %v2591
    %v3196 = vpack.c.b16 %v2596, %v2592
    %v3197 = vpack.c.b16 %v2601, %v2597
    %v3198 = vpack.c.b16 %v2602, %v2598
    %v3199 = vpack.c.b16 %v2603, %v2599
    %v3200 = vpack.c.b16 %v2604, %v2600
    %v3201 = vpack.c.b16 %v2609, %v2605
    %v3202 = vpack.c.b16 %v2610, %v2606
    %v3203 = vpack.c.b16 %v2611, %v2607
    %v3204 = vpack.c.b16 %v2612, %v2608
    %v3205 = vpack.c.b16 %v2617, %v2613
    %v3206 = vpack.c.b16 %v2618, %v2614
    %v3207 = vpack.c.b16 %v2619, %v2615
    %v3208 = vpack.c.b16 %v2620, %v2616
    %vm3797 = vcmask 392192
    %v3799 = vsel %vm3797, %v246, 0
    %3801 = vmatprep.subr.bf16.mxu0 %v2622
    %3802 = vmatpush1.bf16.msra.mxu0 %v2621
    %3803 = vmatprep.subr.bf16.mxu0 %v2626
    %3804 = vmatpush1.bf16.msra.mxu0 %v2625
    %3805 = vmatprep.subr.bf16.mxu0 %v2630
    %3806 = vmatpush1.bf16.msra.mxu0 %v2629
    %3807 = vmatprep.subr.bf16.mxu0 %v2634
    %3808 = vmatpush1.bf16.msra.mxu0 %v2633
    %3809 = vmatprep.subr.bf16.mxu0 %v2638
    %3810 = vmatpush1.bf16.msra.mxu0 %v2637
    %3811 = vmatprep.subr.bf16.mxu0 %v2642
    %3812 = vmatpush1.bf16.msra.mxu0 %v2641
    %3813 = vmatprep.subr.bf16.mxu0 %v2646
    %3814 = vmatpush1.bf16.msra.mxu0 %v2645
    %3815 = vmatprep.subr.bf16.mxu0 %v2650
    %3816 = vmatpush1.bf16.msra.mxu0 %v2649
    %3817 = vmatprep.subr.bf16.mxu0 %v2654
    %3818 = vmatpush1.bf16.msra.mxu0 %v2653
    %3819 = vmatprep.subr.bf16.mxu0 %v2658
    %3820 = vmatpush1.bf16.msra.mxu0 %v2657
    %3821 = vmatprep.subr.bf16.mxu0 %v2662
    %3822 = vmatpush1.bf16.msra.mxu0 %v2661
    %3823 = vmatprep.subr.bf16.mxu0 %v2666
    %3824 = vmatpush1.bf16.msra.mxu0 %v2665
    %3825 = vmatprep.subr.bf16.mxu0 %v2670
    %3826 = vmatpush1.bf16.msra.mxu0 %v2669
    %3827 = vmatprep.subr.bf16.mxu0 %v2674
    %3828 = vmatpush1.bf16.msra.mxu0 %v2673
    %3829 = vmatprep.subr.bf16.mxu0 %v2678
    %3830 = vmatpush1.bf16.msra.mxu0 %v2677
    %3831 = vmatprep.subr.bf16.mxu0 %v2682
    %3832 = vmatpush1.bf16.msra.mxu0 %v2681
    %3833 = vmatprep.mubr.bf16.mxu0 %v229
    %3834 = vmatmul.mubr.bf16.gmra.mrb[0].mxu0 %v228
    %v3835 = vpop.f32.mrb[0].mxu0
    %v3836 = vadd.f32 %v840, %v3835
    %v3837 = vpop.f32.mrb[0].mxu0
    %v3838 = vadd.f32 %v844, %v3837
    %v3839 = vpop.f32.mrb[0].mxu0
    %v3840 = vpop.f32.mrb[0].mxu0
    %3841 = vdwg.mxu0
    %3842 = vmatprep.subr.bf16.mxu0 %v2686
    %3843 = vmatpush1.bf16.msra.mxu0 %v2685
    %3844 = vmatprep.subr.bf16.mxu0 %v2690
    %3845 = vmatpush1.bf16.msra.mxu0 %v2689
    %3846 = vmatprep.subr.bf16.mxu0 %v2694
    %3847 = vmatpush1.bf16.msra.mxu0 %v2693
    %3848 = vmatprep.subr.bf16.mxu0 %v2698
    %3849 = vmatpush1.bf16.msra.mxu0 %v2697
    %3850 = vmatprep.subr.bf16.mxu0 %v2702
    %3851 = vmatpush1.bf16.msra.mxu0 %v2701
    %3852 = vmatprep.subr.bf16.mxu0 %v2706
    %3853 = vmatpush1.bf16.msra.mxu0 %v2705
    %3854 = vmatprep.subr.bf16.mxu0 %v2710
    %3855 = vmatpush1.bf16.msra.mxu0 %v2709
    %3856 = vmatprep.subr.bf16.mxu0 %v2714
    %3857 = vmatpush1.bf16.msra.mxu0 %v2713
    %3858 = vmatprep.subr.bf16.mxu0 %v2718
    %3859 = vmatpush1.bf16.msra.mxu0 %v2717
    %3860 = vmatprep.subr.bf16.mxu0 %v2722
    %3861 = vmatpush1.bf16.msra.mxu0 %v2721
    %3862 = vmatprep.subr.bf16.mxu0 %v2726
    %3863 = vmatpush1.bf16.msra.mxu0 %v2725
    %3864 = vmatprep.subr.bf16.mxu0 %v2730
    %3865 = vmatpush1.bf16.msra.mxu0 %v2729
    %3866 = vmatprep.subr.bf16.mxu0 %v2734
    %3867 = vmatpush1.bf16.msra.mxu0 %v2733
    %3868 = vmatprep.subr.bf16.mxu0 %v2738
    %3869 = vmatpush1.bf16.msra.mxu0 %v2737
    %3870 = vmatprep.subr.bf16.mxu0 %v2742
    %3871 = vmatpush1.bf16.msra.mxu0 %v2741
    %3872 = vmatprep.subr.bf16.mxu0 %v2746
    %3873 = vmatpush1.bf16.msra.mxu0 %v2745
    %3874 = vmatprep.mubr.bf16.mxu0 %v231
    %3875 = vmatmul.mubr.bf16.gmra.mrb[0].mxu0 %v230
    %v3876 = vpop.f32.mrb[0].mxu0
    %v3877 = vadd.f32 %v3836, %v3876
    %v3878 = vpop.f32.mrb[0].mxu0
    %v3879 = vadd.f32 %v3838, %v3878
    %v3880 = vpop.f32.mrb[0].mxu0
    %v3881 = vpop.f32.mrb[0].mxu0
    %3882 = vdwg.mxu0
    %3883 = vmatprep.subr.bf16.mxu0 %v2750
    %3884 = vmatpush1.bf16.msra.mxu0 %v2749
    %3885 = vmatprep.subr.bf16.mxu0 %v2754
    %3886 = vmatpush1.bf16.msra.mxu0 %v2753
    %3887 = vmatprep.subr.bf16.mxu0 %v2758
    %3888 = vmatpush1.bf16.msra.mxu0 %v2757
    %3889 = vmatprep.subr.bf16.mxu0 %v2762
    %3890 = vmatpush1.bf16.msra.mxu0 %v2761
    %3891 = vmatprep.subr.bf16.mxu0 %v2766
    %3892 = vmatpush1.bf16.msra.mxu0 %v2765
    %3893 = vmatprep.subr.bf16.mxu0 %v2770
    %3894 = vmatpush1.bf16.msra.mxu0 %v2769
    %3895 = vmatprep.subr.bf16.mxu0 %v2774
    %3896 = vmatpush1.bf16.msra.mxu0 %v2773
    %3897 = vmatprep.subr.bf16.mxu0 %v2778
    %3898 = vmatpush1.bf16.msra.mxu0 %v2777
    %3899 = vmatprep.subr.bf16.mxu0 %v2782
    %3900 = vmatpush1.bf16.msra.mxu0 %v2781
    %3901 = vmatprep.subr.bf16.mxu0 %v2786
    %3902 = vmatpush1.bf16.msra.mxu0 %v2785
    %3903 = vmatprep.subr.bf16.mxu0 %v2790
    %3904 = vmatpush1.bf16.msra.mxu0 %v2789
    %3905 = vmatprep.subr.bf16.mxu0 %v2794
    %3906 = vmatpush1.bf16.msra.mxu0 %v2793
    %3907 = vmatprep.subr.bf16.mxu0 %v2798
    %3908 = vmatpush1.bf16.msra.mxu0 %v2797
    %3909 = vmatprep.subr.bf16.mxu0 %v2802
    %3910 = vmatpush1.bf16.msra.mxu0 %v2801
    %3911 = vmatprep.subr.bf16.mxu0 %v2806
    %3912 = vmatpush1.bf16.msra.mxu0 %v2805
    %3913 = vmatprep.subr.bf16.mxu0 %v2810
    %3914 = vmatpush1.bf16.msra.mxu0 %v2809
    %3915 = vmatprep.mubr.bf16.mxu0 %v233
    %3916 = vmatmul.mubr.bf16.gmra.mrb[0].mxu0 %v232
    %v3917 = vpop.f32.mrb[0].mxu0
    %v3918 = vadd.f32 %v3877, %v3917
    %v3919 = vpop.f32.mrb[0].mxu0
    %v3920 = vadd.f32 %v3879, %v3919
    %v3921 = vpop.f32.mrb[0].mxu0
    %v3922 = vpop.f32.mrb[0].mxu0
    %3923 = vdwg.mxu0
    %3924 = vmatprep.subr.bf16.mxu0 %v2814
    %3925 = vmatpush1.bf16.msra.mxu0 %v2813
    %3926 = vmatprep.subr.bf16.mxu0 %v2818
    %3927 = vmatpush1.bf16.msra.mxu0 %v2817
    %3928 = vmatprep.subr.bf16.mxu0 %v2822
    %3929 = vmatpush1.bf16.msra.mxu0 %v2821
    %3930 = vmatprep.subr.bf16.mxu0 %v2826
    %3931 = vmatpush1.bf16.msra.mxu0 %v2825
    %3932 = vmatprep.subr.bf16.mxu0 %v2830
    %3933 = vmatpush1.bf16.msra.mxu0 %v2829
    %3934 = vmatprep.subr.bf16.mxu0 %v2834
    %3935 = vmatpush1.bf16.msra.mxu0 %v2833
    %3936 = vmatprep.subr.bf16.mxu0 %v2838
    %3937 = vmatpush1.bf16.msra.mxu0 %v2837
    %3938 = vmatprep.subr.bf16.mxu0 %v2842
    %3939 = vmatpush1.bf16.msra.mxu0 %v2841
    %3940 = vmatprep.subr.bf16.mxu0 %v2846
    %3941 = vmatpush1.bf16.msra.mxu0 %v2845
    %3942 = vmatprep.subr.bf16.mxu0 %v2850
    %3943 = vmatpush1.bf16.msra.mxu0 %v2849
    %3944 = vmatprep.subr.bf16.mxu0 %v2854
    %3945 = vmatpush1.bf16.msra.mxu0 %v2853
    %3946 = vmatprep.subr.bf16.mxu0 %v2858
    %3947 = vmatpush1.bf16.msra.mxu0 %v2857
    %3948 = vmatprep.subr.bf16.mxu0 %v2862
    %3949 = vmatpush1.bf16.msra.mxu0 %v2861
    %3950 = vmatprep.subr.bf16.mxu0 %v2866
    %3951 = vmatpush1.bf16.msra.mxu0 %v2865
    %3952 = vmatprep.subr.bf16.mxu0 %v2870
    %3953 = vmatpush1.bf16.msra.mxu0 %v2869
    %3954 = vmatprep.subr.bf16.mxu0 %v2874
    %3955 = vmatpush1.bf16.msra.mxu0 %v2873
    %3956 = vmatprep.mubr.bf16.mxu0 %v235
    %3957 = vmatmul.mubr.bf16.gmra.mrb[0].mxu0 %v234
    %v3958 = vpop.f32.mrb[0].mxu0
    %v3959 = vadd.f32 %v3918, %v3958
    %v3960 = vpop.f32.mrb[0].mxu0
    %v3961 = vadd.f32 %v3920, %v3960
    %v3962 = vpop.f32.mrb[0].mxu0
    %v3963 = vpop.f32.mrb[0].mxu0
    %3964 = vdwg.mxu0
    %3965 = vmatprep.subr.bf16.mxu0 %v2878
    %3966 = vmatpush1.bf16.msra.mxu0 %v2877
    %3967 = vmatprep.subr.bf16.mxu0 %v2882
    %3968 = vmatpush1.bf16.msra.mxu0 %v2881
    %3969 = vmatprep.subr.bf16.mxu0 %v2886
    %3970 = vmatpush1.bf16.msra.mxu0 %v2885
    %3971 = vmatprep.subr.bf16.mxu0 %v2890
    %3972 = vmatpush1.bf16.msra.mxu0 %v2889
    %3973 = vmatprep.subr.bf16.mxu0 %v2894
    %3974 = vmatpush1.bf16.msra.mxu0 %v2893
    %3975 = vmatprep.subr.bf16.mxu0 %v2898
    %3976 = vmatpush1.bf16.msra.mxu0 %v2897
    %3977 = vmatprep.subr.bf16.mxu0 %v2902
    %3978 = vmatpush1.bf16.msra.mxu0 %v2901
    %3979 = vmatprep.subr.bf16.mxu0 %v2906
    %3980 = vmatpush1.bf16.msra.mxu0 %v2905
    %3981 = vmatprep.subr.bf16.mxu0 %v2910
    %3982 = vmatpush1.bf16.msra.mxu0 %v2909
    %3983 = vmatprep.subr.bf16.mxu0 %v2914
    %3984 = vmatpush1.bf16.msra.mxu0 %v2913
    %3985 = vmatprep.subr.bf16.mxu0 %v2918
    %3986 = vmatpush1.bf16.msra.mxu0 %v2917
    %3987 = vmatprep.subr.bf16.mxu0 %v2922
    %3988 = vmatpush1.bf16.msra.mxu0 %v2921
    %3989 = vmatprep.subr.bf16.mxu0 %v2926
    %3990 = vmatpush1.bf16.msra.mxu0 %v2925
    %3991 = vmatprep.subr.bf16.mxu0 %v2930
    %3992 = vmatpush1.bf16.msra.mxu0 %v2929
    %3993 = vmatprep.subr.bf16.mxu0 %v2934
    %3994 = vmatpush1.bf16.msra.mxu0 %v2933
    %3995 = vmatprep.subr.bf16.mxu0 %v2938
    %3996 = vmatpush1.bf16.msra.mxu0 %v2937
    %3997 = vmatprep.mubr.bf16.mxu0 %v237
    %3998 = vmatmul.mubr.bf16.gmra.mrb[0].mxu0 %v236
    %v3999 = vpop.f32.mrb[0].mxu0
    %v4000 = vadd.f32 %v3959, %v3999
    %v4001 = vpop.f32.mrb[0].mxu0
    %v4002 = vadd.f32 %v3961, %v4001
    %v4003 = vpop.f32.mrb[0].mxu0
    %v4004 = vpop.f32.mrb[0].mxu0
    %4005 = vdwg.mxu0
    %4006 = vmatprep.subr.bf16.mxu0 %v2942
    %4007 = vmatpush1.bf16.msra.mxu0 %v2941
    %4008 = vmatprep.subr.bf16.mxu0 %v2946
    %4009 = vmatpush1.bf16.msra.mxu0 %v2945
    %4010 = vmatprep.subr.bf16.mxu0 %v2950
    %4011 = vmatpush1.bf16.msra.mxu0 %v2949
    %4012 = vmatprep.subr.bf16.mxu0 %v2954
    %4013 = vmatpush1.bf16.msra.mxu0 %v2953
    %4014 = vmatprep.subr.bf16.mxu0 %v2958
    %4015 = vmatpush1.bf16.msra.mxu0 %v2957
    %4016 = vmatprep.subr.bf16.mxu0 %v2962
    %4017 = vmatpush1.bf16.msra.mxu0 %v2961
    %4018 = vmatprep.subr.bf16.mxu0 %v2966
    %4019 = vmatpush1.bf16.msra.mxu0 %v2965
    %4020 = vmatprep.subr.bf16.mxu0 %v2970
    %4021 = vmatpush1.bf16.msra.mxu0 %v2969
    %4022 = vmatprep.subr.bf16.mxu0 %v2974
    %4023 = vmatpush1.bf16.msra.mxu0 %v2973
    %4024 = vmatprep.subr.bf16.mxu0 %v2978
    %4025 = vmatpush1.bf16.msra.mxu0 %v2977
    %4026 = vmatprep.subr.bf16.mxu0 %v2982
    %4027 = vmatpush1.bf16.msra.mxu0 %v2981
    %4028 = vmatprep.subr.bf16.mxu0 %v2986
    %4029 = vmatpush1.bf16.msra.mxu0 %v2985
    %4030 = vmatprep.subr.bf16.mxu0 %v2990
    %4031 = vmatpush1.bf16.msra.mxu0 %v2989
    %4032 = vmatprep.subr.bf16.mxu0 %v2994
    %4033 = vmatpush1.bf16.msra.mxu0 %v2993
    %4034 = vmatprep.subr.bf16.mxu0 %v2998
    %4035 = vmatpush1.bf16.msra.mxu0 %v2997
    %4036 = vmatprep.subr.bf16.mxu0 %v3002
    %4037 = vmatpush1.bf16.msra.mxu0 %v3001
    %4038 = vmatprep.mubr.bf16.mxu0 %v239
    %4039 = vmatmul.mubr.bf16.gmra.mrb[0].mxu0 %v238
    %v4040 = vpop.f32.mrb[0].mxu0
    %v4041 = vadd.f32 %v4000, %v4040
    %v4042 = vpop.f32.mrb[0].mxu0
    %v4043 = vadd.f32 %v4002, %v4042
    %v4044 = vpop.f32.mrb[0].mxu0
    %v4045 = vpop.f32.mrb[0].mxu0
    %4046 = vdwg.mxu0
    %4047 = vmatprep.subr.bf16.mxu0 %v3006
    %4048 = vmatpush1.bf16.msra.mxu0 %v3005
    %4049 = vmatprep.subr.bf16.mxu0 %v3010
    %4050 = vmatpush1.bf16.msra.mxu0 %v3009
    %4051 = vmatprep.subr.bf16.mxu0 %v3014
    %4052 = vmatpush1.bf16.msra.mxu0 %v3013
    %4053 = vmatprep.subr.bf16.mxu0 %v3018
    %4054 = vmatpush1.bf16.msra.mxu0 %v3017
    %4055 = vmatprep.subr.bf16.mxu0 %v3022
    %4056 = vmatpush1.bf16.msra.mxu0 %v3021
    %4057 = vmatprep.subr.bf16.mxu0 %v3026
    %4058 = vmatpush1.bf16.msra.mxu0 %v3025
    %4059 = vmatprep.subr.bf16.mxu0 %v3030
    %4060 = vmatpush1.bf16.msra.mxu0 %v3029
    %4061 = vmatprep.subr.bf16.mxu0 %v3034
    %4062 = vmatpush1.bf16.msra.mxu0 %v3033
    %4063 = vmatprep.subr.bf16.mxu0 %v3038
    %4064 = vmatpush1.bf16.msra.mxu0 %v3037
    %4065 = vmatprep.subr.bf16.mxu0 %v3042
    %4066 = vmatpush1.bf16.msra.mxu0 %v3041
    %4067 = vmatprep.subr.bf16.mxu0 %v3046
    %4068 = vmatpush1.bf16.msra.mxu0 %v3045
    %4069 = vmatprep.subr.bf16.mxu0 %v3050
    %4070 = vmatpush1.bf16.msra.mxu0 %v3049
    %4071 = vmatprep.subr.bf16.mxu0 %v3054
    %4072 = vmatpush1.bf16.msra.mxu0 %v3053
    %4073 = vmatprep.subr.bf16.mxu0 %v3058
    %4074 = vmatpush1.bf16.msra.mxu0 %v3057
    %4075 = vmatprep.subr.bf16.mxu0 %v3062
    %4076 = vmatpush1.bf16.msra.mxu0 %v3061
    %4077 = vmatprep.subr.bf16.mxu0 %v3066
    %4078 = vmatpush1.bf16.msra.mxu0 %v3065
    %4079 = vmatprep.mubr.bf16.mxu0 %v241
    %4080 = vmatmul.mubr.bf16.gmra.mrb[0].mxu0 %v240
    %v4081 = vpop.f32.mrb[0].mxu0
    %v4082 = vadd.f32 %v4041, %v4081
    %v4083 = vpop.f32.mrb[0].mxu0
    %v4084 = vadd.f32 %v4043, %v4083
    %v4085 = vpop.f32.mrb[0].mxu0
    %v4086 = vpop.f32.mrb[0].mxu0
    %4087 = vdwg.mxu0
    %4088 = vmatprep.subr.bf16.mxu0 %v3070
    %4089 = vmatpush1.bf16.msra.mxu0 %v3069
    %4090 = vmatprep.subr.bf16.mxu0 %v3074
    %4091 = vmatpush1.bf16.msra.mxu0 %v3073
    %4092 = vmatprep.subr.bf16.mxu0 %v3078
    %4093 = vmatpush1.bf16.msra.mxu0 %v3077
    %4094 = vmatprep.subr.bf16.mxu0 %v3082
    %4095 = vmatpush1.bf16.msra.mxu0 %v3081
    %4096 = vmatprep.subr.bf16.mxu0 %v3086
    %4097 = vmatpush1.bf16.msra.mxu0 %v3085
    %4098 = vmatprep.subr.bf16.mxu0 %v3090
    %4099 = vmatpush1.bf16.msra.mxu0 %v3089
    %4100 = vmatprep.subr.bf16.mxu0 %v3094
    %4101 = vmatpush1.bf16.msra.mxu0 %v3093
    %4102 = vmatprep.subr.bf16.mxu0 %v3098
    %4103 = vmatpush1.bf16.msra.mxu0 %v3097
    %4104 = vmatprep.subr.bf16.mxu0 %v3102
    %4105 = vmatpush1.bf16.msra.mxu0 %v3101
    %4106 = vmatprep.subr.bf16.mxu0 %v3106
    %4107 = vmatpush1.bf16.msra.mxu0 %v3105
    %4108 = vmatprep.subr.bf16.mxu0 %v3110
    %4109 = vmatpush1.bf16.msra.mxu0 %v3109
    %4110 = vmatprep.subr.bf16.mxu0 %v3114
    %4111 = vmatpush1.bf16.msra.mxu0 %v3113
    %4112 = vmatprep.subr.bf16.mxu0 %v3118
    %4113 = vmatpush1.bf16.msra.mxu0 %v3117
    %4114 = vmatprep.subr.bf16.mxu0 %v3122
    %4115 = vmatpush1.bf16.msra.mxu0 %v3121
    %4116 = vmatprep.subr.bf16.mxu0 %v3126
    %4117 = vmatpush1.bf16.msra.mxu0 %v3125
    %4118 = vmatprep.subr.bf16.mxu0 %v3130
    %4119 = vmatpush1.bf16.msra.mxu0 %v3129
    %4120 = vmatprep.mubr.bf16.mxu0 %v243
    %4121 = vmatmul.mubr.bf16.gmra.mrb[0].mxu0 %v242
    %v4122 = vpop.f32.mrb[0].mxu0
    %v4123 = vadd.f32 %v4082, %v4122
    %v4124 = vpop.f32.mrb[0].mxu0
    %v4125 = vadd.f32 %v4084, %v4124
    %v4126 = vpop.f32.mrb[0].mxu0
    %v4127 = vpop.f32.mrb[0].mxu0
    %4128 = vdwg.mxu0
    %4129 = vmatprep.subr.bf16.mxu0 %v3134
    %4130 = vmatpush1.bf16.msra.mxu0 %v3133
    %4131 = vmatprep.subr.bf16.mxu0 %v3138
    %4132 = vmatpush1.bf16.msra.mxu0 %v3137
    %4133 = vmatprep.subr.bf16.mxu0 %v3142
    %4134 = vmatpush1.bf16.msra.mxu0 %v3141
    %4135 = vmatprep.subr.bf16.mxu0 %v3146
    %4136 = vmatpush1.bf16.msra.mxu0 %v3145
    %4137 = vmatprep.subr.bf16.mxu0 %v3150
    %4138 = vmatpush1.bf16.msra.mxu0 %v3149
    %4139 = vmatprep.subr.bf16.mxu0 %v3154
    %4140 = vmatpush1.bf16.msra.mxu0 %v3153
    %4141 = vmatprep.subr.bf16.mxu0 %v3158
    %4142 = vmatpush1.bf16.msra.mxu0 %v3157
    %4143 = vmatprep.subr.bf16.mxu0 %v3162
    %4144 = vmatpush1.bf16.msra.mxu0 %v3161
    %4145 = vmatprep.subr.bf16.mxu0 %v3166
    %4146 = vmatpush1.bf16.msra.mxu0 %v3165
    %4147 = vmatprep.subr.bf16.mxu0 %v3170
    %4148 = vmatpush1.bf16.msra.mxu0 %v3169
    %4149 = vmatprep.subr.bf16.mxu0 %v3174
    %4150 = vmatpush1.bf16.msra.mxu0 %v3173
    %4151 = vmatprep.subr.bf16.mxu0 %v3178
    %4152 = vmatpush1.bf16.msra.mxu0 %v3177
    %4153 = vmatprep.subr.bf16.mxu0 %v3182
    %4154 = vmatpush1.bf16.msra.mxu0 %v3181
    %4155 = vmatprep.subr.bf16.mxu0 %v3186
    %4156 = vmatpush1.bf16.msra.mxu0 %v3185
    %4157 = vmatprep.subr.bf16.mxu0 %v3190
    %4158 = vmatpush1.bf16.msra.mxu0 %v3189
    %4159 = vmatprep.subr.bf16.mxu0 %v3194
    %4160 = vmatpush1.bf16.msra.mxu0 %v3193
    %4161 = vmatprep.mubr.bf16.mxu0 %v245
    %4162 = vmatmul.mubr.bf16.gmra.mrb[0].mxu0 %v244
    %v4163 = vpop.f32.mrb[0].mxu0
    %v4164 = vadd.f32 %v4123, %v4163
    %v4165 = vpop.f32.mrb[0].mxu0
    %v4166 = vadd.f32 %v4125, %v4165
    %v4167 = vpop.f32.mrb[0].mxu0
    %v4168 = vpop.f32.mrb[0].mxu0
    %4169 = vdwg.mxu0
    %4170 = vmatprep.subr.bf16.mxu0 %v3198
    %4171 = vmatpush1.bf16.msra.mxu0 %v3197
    %4172 = vmatprep.subr.bf16.mxu0 %v3202
    %4173 = vmatpush1.bf16.msra.mxu0 %v3201
    %4174 = vmatprep.subr.bf16.mxu0 %v3206
    %4175 = vmatpush1.bf16.msra.mxu0 %v3205
    %4176 = vmatprep.subr.bf16.mxu0 0
    %4177 = vmatpush1.bf16.msra.mxu0 0
    %4178 = vmatprep.subr.bf16.mxu0 0
    %4179 = vmatpush1.bf16.msra.mxu0 0
    %4180 = vmatprep.subr.bf16.mxu0 0
    %4181 = vmatpush1.bf16.msra.mxu0 0
    %4182 = vmatprep.subr.bf16.mxu0 0
    %4183 = vmatpush1.bf16.msra.mxu0 0
    %4184 = vmatprep.subr.bf16.mxu0 0
    %4185 = vmatpush1.bf16.msra.mxu0 0
    %4186 = vmatprep.subr.bf16.mxu0 0
    %4187 = vmatpush1.bf16.msra.mxu0 0
    %4188 = vmatprep.subr.bf16.mxu0 0
    %4189 = vmatpush1.bf16.msra.mxu0 0
    %4190 = vmatprep.subr.bf16.mxu0 0
    %4191 = vmatpush1.bf16.msra.mxu0 0
    %4192 = vmatprep.subr.bf16.mxu0 0
    %4193 = vmatpush1.bf16.msra.mxu0 0
    %4194 = vmatprep.subr.bf16.mxu0 0
    %4195 = vmatpush1.bf16.msra.mxu0 0
    %4196 = vmatprep.subr.bf16.mxu0 0
    %4197 = vmatpush1.bf16.msra.mxu0 0
    %4198 = vmatprep.subr.bf16.mxu0 0
    %4199 = vmatpush1.bf16.msra.mxu0 0
    %4200 = vmatprep.subr.bf16.mxu0 0
    %4201 = vmatpush1.bf16.msra.mxu0 0
    %4202 = vmatprep.mubr.bf16.mxu0 0
    %4203 = vmatmul.mubr.bf16.gmra.mrb[0].mxu0 %v3799
    %v4204 = vpop.f32.mrb[0].mxu0
    %v4205 = vadd.f32 %v4164, %v4204
    %v4206 = vpop.f32.mrb[0].mxu0
    %v4207 = vadd.f32 %v4166, %v4206
    %v4208 = vpop.f32.mrb[0].mxu0
    %v4209 = vpop.f32.mrb[0].mxu0
    %4210 = vdwg.mxu0
    %4211 = vmatprep.subr.bf16.mxu0 %v2624
    %4212 = vmatpush1.bf16.msra.mxu0 %v2623
    %4213 = vmatprep.subr.bf16.mxu0 %v2628
    %4214 = vmatpush1.bf16.msra.mxu0 %v2627
    %4215 = vmatprep.subr.bf16.mxu0 %v2632
    %4216 = vmatpush1.bf16.msra.mxu0 %v2631
    %4217 = vmatprep.subr.bf16.mxu0 %v2636
    %4218 = vmatpush1.bf16.msra.mxu0 %v2635
    %4219 = vmatprep.subr.bf16.mxu0 %v2640
    %4220 = vmatpush1.bf16.msra.mxu0 %v2639
    %4221 = vmatprep.subr.bf16.mxu0 %v2644
    %4222 = vmatpush1.bf16.msra.mxu0 %v2643
    %4223 = vmatprep.subr.bf16.mxu0 %v2648
    %4224 = vmatpush1.bf16.msra.mxu0 %v2647
    %4225 = vmatprep.subr.bf16.mxu0 %v2652
    %4226 = vmatpush1.bf16.msra.mxu0 %v2651
    %4227 = vmatprep.subr.bf16.mxu0 %v2656
    %4228 = vmatpush1.bf16.msra.mxu0 %v2655
    %4229 = vmatprep.subr.bf16.mxu0 %v2660
    %4230 = vmatpush1.bf16.msra.mxu0 %v2659
    %4231 = vmatprep.subr.bf16.mxu0 %v2664
    %4232 = vmatpush1.bf16.msra.mxu0 %v2663
    %4233 = vmatprep.subr.bf16.mxu0 %v2668
    %4234 = vmatpush1.bf16.msra.mxu0 %v2667
    %4235 = vmatprep.subr.bf16.mxu0 %v2672
    %4236 = vmatpush1.bf16.msra.mxu0 %v2671
    %4237 = vmatprep.subr.bf16.mxu0 %v2676
    %4238 = vmatpush1.bf16.msra.mxu0 %v2675
    %4239 = vmatprep.subr.bf16.mxu0 %v2680
    %4240 = vmatpush1.bf16.msra.mxu0 %v2679
    %4241 = vmatprep.subr.bf16.mxu0 %v2684
    %4242 = vmatpush1.bf16.msra.mxu0 %v2683
    %4243 = vmatprep.mubr.bf16.mxu0 %v229
    %4244 = vmatmul.mubr.bf16.gmra.mrb[0].mxu0 %v228
    %v4245 = vpop.f32.mrb[0].mxu0
    %v4246 = vadd.f32 %v848, %v4245
    %v4247 = vpop.f32.mrb[0].mxu0
    %v4248 = vadd.f32 %v852, %v4247
    %v4249 = vpop.f32.mrb[0].mxu0
    %v4250 = vpop.f32.mrb[0].mxu0
    %4251 = vdwg.mxu0
    %4252 = vmatprep.subr.bf16.mxu0 %v2688
    %4253 = vmatpush1.bf16.msra.mxu0 %v2687
    %4254 = vmatprep.subr.bf16.mxu0 %v2692
    %4255 = vmatpush1.bf16.msra.mxu0 %v2691
    %4256 = vmatprep.subr.bf16.mxu0 %v2696
    %4257 = vmatpush1.bf16.msra.mxu0 %v2695
    %4258 = vmatprep.subr.bf16.mxu0 %v2700
    %4259 = vmatpush1.bf16.msra.mxu0 %v2699
    %4260 = vmatprep.subr.bf16.mxu0 %v2704
    %4261 = vmatpush1.bf16.msra.mxu0 %v2703
    %4262 = vmatprep.subr.bf16.mxu0 %v2708
    %4263 = vmatpush1.bf16.msra.mxu0 %v2707
    %4264 = vmatprep.subr.bf16.mxu0 %v2712
    %4265 = vmatpush1.bf16.msra.mxu0 %v2711
    %4266 = vmatprep.subr.bf16.mxu0 %v2716
    %4267 = vmatpush1.bf16.msra.mxu0 %v2715
    %4268 = vmatprep.subr.bf16.mxu0 %v2720
    %4269 = vmatpush1.bf16.msra.mxu0 %v2719
    %4270 = vmatprep.subr.bf16.mxu0 %v2724
    %4271 = vmatpush1.bf16.msra.mxu0 %v2723
    %4272 = vmatprep.subr.bf16.mxu0 %v2728
    %4273 = vmatpush1.bf16.msra.mxu0 %v2727
    %4274 = vmatprep.subr.bf16.mxu0 %v2732
    %4275 = vmatpush1.bf16.msra.mxu0 %v2731
    %4276 = vmatprep.subr.bf16.mxu0 %v2736
    %4277 = vmatpush1.bf16.msra.mxu0 %v2735
    %4278 = vmatprep.subr.bf16.mxu0 %v2740
    %4279 = vmatpush1.bf16.msra.mxu0 %v2739
    %4280 = vmatprep.subr.bf16.mxu0 %v2744
    %4281 = vmatpush1.bf16.msra.mxu0 %v2743
    %4282 = vmatprep.subr.bf16.mxu0 %v2748
    %4283 = vmatpush1.bf16.msra.mxu0 %v2747
    %4284 = vmatprep.mubr.bf16.mxu0 %v231
    %4285 = vmatmul.mubr.bf16.gmra.mrb[0].mxu0 %v230
    %v4286 = vpop.f32.mrb[0].mxu0
    %v4287 = vadd.f32 %v4246, %v4286
    %v4288 = vpop.f32.mrb[0].mxu0
    %v4289 = vadd.f32 %v4248, %v4288
    %v4290 = vpop.f32.mrb[0].mxu0
    %v4291 = vpop.f32.mrb[0].mxu0
    %4292 = vdwg.mxu0
    %4293 = vmatprep.subr.bf16.mxu0 %v2752
    %4294 = vmatpush1.bf16.msra.mxu0 %v2751
    %4295 = vmatprep.subr.bf16.mxu0 %v2756
    %4296 = vmatpush1.bf16.msra.mxu0 %v2755
    %4297 = vmatprep.subr.bf16.mxu0 %v2760
    %4298 = vmatpush1.bf16.msra.mxu0 %v2759
    %4299 = vmatprep.subr.bf16.mxu0 %v2764
    %4300 = vmatpush1.bf16.msra.mxu0 %v2763
    %4301 = vmatprep.subr.bf16.mxu0 %v2768
    %4302 = vmatpush1.bf16.msra.mxu0 %v2767
    %4303 = vmatprep.subr.bf16.mxu0 %v2772
    %4304 = vmatpush1.bf16.msra.mxu0 %v2771
    %4305 = vmatprep.subr.bf16.mxu0 %v2776
    %4306 = vmatpush1.bf16.msra.mxu0 %v2775
    %4307 = vmatprep.subr.bf16.mxu0 %v2780
    %4308 = vmatpush1.bf16.msra.mxu0 %v2779
    %4309 = vmatprep.subr.bf16.mxu0 %v2784
    %4310 = vmatpush1.bf16.msra.mxu0 %v2783
    %4311 = vmatprep.subr.bf16.mxu0 %v2788
    %4312 = vmatpush1.bf16.msra.mxu0 %v2787
    %4313 = vmatprep.subr.bf16.mxu0 %v2792
    %4314 = vmatpush1.bf16.msra.mxu0 %v2791
    %4315 = vmatprep.subr.bf16.mxu0 %v2796
    %4316 = vmatpush1.bf16.msra.mxu0 %v2795
    %4317 = vmatprep.subr.bf16.mxu0 %v2800
    %4318 = vmatpush1.bf16.msra.mxu0 %v2799
    %4319 = vmatprep.subr.bf16.mxu0 %v2804
    %4320 = vmatpush1.bf16.msra.mxu0 %v2803
    %4321 = vmatprep.subr.bf16.mxu0 %v2808
    %4322 = vmatpush1.bf16.msra.mxu0 %v2807
    %4323 = vmatprep.subr.bf16.mxu0 %v2812
    %4324 = vmatpush1.bf16.msra.mxu0 %v2811
    %4325 = vmatprep.mubr.bf16.mxu0 %v233
    %4326 = vmatmul.mubr.bf16.gmra.mrb[0].mxu0 %v232
    %v4327 = vpop.f32.mrb[0].mxu0
    %v4328 = vadd.f32 %v4287, %v4327
    %v4329 = vpop.f32.mrb[0].mxu0
    %v4330 = vadd.f32 %v4289, %v4329
    %v4331 = vpop.f32.mrb[0].mxu0
    %v4332 = vpop.f32.mrb[0].mxu0
    %4333 = vdwg.mxu0
    %4334 = vmatprep.subr.bf16.mxu0 %v2816
    %4335 = vmatpush1.bf16.msra.mxu0 %v2815
    %4336 = vmatprep.subr.bf16.mxu0 %v2820
    %4337 = vmatpush1.bf16.msra.mxu0 %v2819
    %4338 = vmatprep.subr.bf16.mxu0 %v2824
    %4339 = vmatpush1.bf16.msra.mxu0 %v2823
    %4340 = vmatprep.subr.bf16.mxu0 %v2828
    %4341 = vmatpush1.bf16.msra.mxu0 %v2827
    %4342 = vmatprep.subr.bf16.mxu0 %v2832
    %4343 = vmatpush1.bf16.msra.mxu0 %v2831
    %4344 = vmatprep.subr.bf16.mxu0 %v2836
    %4345 = vmatpush1.bf16.msra.mxu0 %v2835
    %4346 = vmatprep.subr.bf16.mxu0 %v2840
    %4347 = vmatpush1.bf16.msra.mxu0 %v2839
    %4348 = vmatprep.subr.bf16.mxu0 %v2844
    %4349 = vmatpush1.bf16.msra.mxu0 %v2843
    %4350 = vmatprep.subr.bf16.mxu0 %v2848
    %4351 = vmatpush1.bf16.msra.mxu0 %v2847
    %4352 = vmatprep.subr.bf16.mxu0 %v2852
    %4353 = vmatpush1.bf16.msra.mxu0 %v2851
    %4354 = vmatprep.subr.bf16.mxu0 %v2856
    %4355 = vmatpush1.bf16.msra.mxu0 %v2855
    %4356 = vmatprep.subr.bf16.mxu0 %v2860
    %4357 = vmatpush1.bf16.msra.mxu0 %v2859
    %4358 = vmatprep.subr.bf16.mxu0 %v2864
    %4359 = vmatpush1.bf16.msra.mxu0 %v2863
    %4360 = vmatprep.subr.bf16.mxu0 %v2868
    %4361 = vmatpush1.bf16.msra.mxu0 %v2867
    %4362 = vmatprep.subr.bf16.mxu0 %v2872
    %4363 = vmatpush1.bf16.msra.mxu0 %v2871
    %4364 = vmatprep.subr.bf16.mxu0 %v2876
    %4365 = vmatpush1.bf16.msra.mxu0 %v2875
    %4366 = vmatprep.mubr.bf16.mxu0 %v235
    %4367 = vmatmul.mubr.bf16.gmra.mrb[0].mxu0 %v234
    %v4368 = vpop.f32.mrb[0].mxu0
    %v4369 = vadd.f32 %v4328, %v4368
    %v4370 = vpop.f32.mrb[0].mxu0
    %v4371 = vadd.f32 %v4330, %v4370
    %v4372 = vpop.f32.mrb[0].mxu0
    %v4373 = vpop.f32.mrb[0].mxu0
    %4374 = vdwg.mxu0
    %4375 = vmatprep.subr.bf16.mxu0 %v2880
    %4376 = vmatpush1.bf16.msra.mxu0 %v2879
    %4377 = vmatprep.subr.bf16.mxu0 %v2884
    %4378 = vmatpush1.bf16.msra.mxu0 %v2883
    %4379 = vmatprep.subr.bf16.mxu0 %v2888
    %4380 = vmatpush1.bf16.msra.mxu0 %v2887
    %4381 = vmatprep.subr.bf16.mxu0 %v2892
    %4382 = vmatpush1.bf16.msra.mxu0 %v2891
    %4383 = vmatprep.subr.bf16.mxu0 %v2896
    %4384 = vmatpush1.bf16.msra.mxu0 %v2895
    %4385 = vmatprep.subr.bf16.mxu0 %v2900
    %4386 = vmatpush1.bf16.msra.mxu0 %v2899
    %4387 = vmatprep.subr.bf16.mxu0 %v2904
    %4388 = vmatpush1.bf16.msra.mxu0 %v2903
    %4389 = vmatprep.subr.bf16.mxu0 %v2908
    %4390 = vmatpush1.bf16.msra.mxu0 %v2907
    %4391 = vmatprep.subr.bf16.mxu0 %v2912
    %4392 = vmatpush1.bf16.msra.mxu0 %v2911
    %4393 = vmatprep.subr.bf16.mxu0 %v2916
    %4394 = vmatpush1.bf16.msra.mxu0 %v2915
    %4395 = vmatprep.subr.bf16.mxu0 %v2920
    %4396 = vmatpush1.bf16.msra.mxu0 %v2919
    %4397 = vmatprep.subr.bf16.mxu0 %v2924
    %4398 = vmatpush1.bf16.msra.mxu0 %v2923
    %4399 = vmatprep.subr.bf16.mxu0 %v2928
    %4400 = vmatpush1.bf16.msra.mxu0 %v2927
    %4401 = vmatprep.subr.bf16.mxu0 %v2932
    %4402 = vmatpush1.bf16.msra.mxu0 %v2931
    %4403 = vmatprep.subr.bf16.mxu0 %v2936
    %4404 = vmatpush1.bf16.msra.mxu0 %v2935
    %4405 = vmatprep.subr.bf16.mxu0 %v2940
    %4406 = vmatpush1.bf16.msra.mxu0 %v2939
    %4407 = vmatprep.mubr.bf16.mxu0 %v237
    %4408 = vmatmul.mubr.bf16.gmra.mrb[0].mxu0 %v236
    %v4409 = vpop.f32.mrb[0].mxu0
    %v4410 = vadd.f32 %v4369, %v4409
    %v4411 = vpop.f32.mrb[0].mxu0
    %v4412 = vadd.f32 %v4371, %v4411
    %v4413 = vpop.f32.mrb[0].mxu0
    %v4414 = vpop.f32.mrb[0].mxu0
    %4415 = vdwg.mxu0
    %4416 = vmatprep.subr.bf16.mxu0 %v2944
    %4417 = vmatpush1.bf16.msra.mxu0 %v2943
    %4418 = vmatprep.subr.bf16.mxu0 %v2948
    %4419 = vmatpush1.bf16.msra.mxu0 %v2947
    %4420 = vmatprep.subr.bf16.mxu0 %v2952
    %4421 = vmatpush1.bf16.msra.mxu0 %v2951
    %4422 = vmatprep.subr.bf16.mxu0 %v2956
    %4423 = vmatpush1.bf16.msra.mxu0 %v2955
    %4424 = vmatprep.subr.bf16.mxu0 %v2960
    %4425 = vmatpush1.bf16.msra.mxu0 %v2959
    %4426 = vmatprep.subr.bf16.mxu0 %v2964
    %4427 = vmatpush1.bf16.msra.mxu0 %v2963
    %4428 = vmatprep.subr.bf16.mxu0 %v2968
    %4429 = vmatpush1.bf16.msra.mxu0 %v2967
    %4430 = vmatprep.subr.bf16.mxu0 %v2972
    %4431 = vmatpush1.bf16.msra.mxu0 %v2971
    %4432 = vmatprep.subr.bf16.mxu0 %v2976
    %4433 = vmatpush1.bf16.msra.mxu0 %v2975
    %4434 = vmatprep.subr.bf16.mxu0 %v2980
    %4435 = vmatpush1.bf16.msra.mxu0 %v2979
    %4436 = vmatprep.subr.bf16.mxu0 %v2984
    %4437 = vmatpush1.bf16.msra.mxu0 %v2983
    %4438 = vmatprep.subr.bf16.mxu0 %v2988
    %4439 = vmatpush1.bf16.msra.mxu0 %v2987
    %4440 = vmatprep.subr.bf16.mxu0 %v2992
    %4441 = vmatpush1.bf16.msra.mxu0 %v2991
    %4442 = vmatprep.subr.bf16.mxu0 %v2996
    %4443 = vmatpush1.bf16.msra.mxu0 %v2995
    %4444 = vmatprep.subr.bf16.mxu0 %v3000
    %4445 = vmatpush1.bf16.msra.mxu0 %v2999
    %4446 = vmatprep.subr.bf16.mxu0 %v3004
    %4447 = vmatpush1.bf16.msra.mxu0 %v3003
    %4448 = vmatprep.mubr.bf16.mxu0 %v239
    %4449 = vmatmul.mubr.bf16.gmra.mrb[0].mxu0 %v238
    %v4450 = vpop.f32.mrb[0].mxu0
    %v4451 = vadd.f32 %v4410, %v4450
    %v4452 = vpop.f32.mrb[0].mxu0
    %v4453 = vadd.f32 %v4412, %v4452
    %v4454 = vpop.f32.mrb[0].mxu0
    %v4455 = vpop.f32.mrb[0].mxu0
    %4456 = vdwg.mxu0
    %4457 = vmatprep.subr.bf16.mxu0 %v3008
    %4458 = vmatpush1.bf16.msra.mxu0 %v3007
    %4459 = vmatprep.subr.bf16.mxu0 %v3012
    %4460 = vmatpush1.bf16.msra.mxu0 %v3011
    %4461 = vmatprep.subr.bf16.mxu0 %v3016
    %4462 = vmatpush1.bf16.msra.mxu0 %v3015
    %4463 = vmatprep.subr.bf16.mxu0 %v3020
    %4464 = vmatpush1.bf16.msra.mxu0 %v3019
    %4465 = vmatprep.subr.bf16.mxu0 %v3024
    %4466 = vmatpush1.bf16.msra.mxu0 %v3023
    %4467 = vmatprep.subr.bf16.mxu0 %v3028
    %4468 = vmatpush1.bf16.msra.mxu0 %v3027
    %4469 = vmatprep.subr.bf16.mxu0 %v3032
    %4470 = vmatpush1.bf16.msra.mxu0 %v3031
    %4471 = vmatprep.subr.bf16.mxu0 %v3036
    %4472 = vmatpush1.bf16.msra.mxu0 %v3035
    %4473 = vmatprep.subr.bf16.mxu0 %v3040
    %4474 = vmatpush1.bf16.msra.mxu0 %v3039
    %4475 = vmatprep.subr.bf16.mxu0 %v3044
    %4476 = vmatpush1.bf16.msra.mxu0 %v3043
    %4477 = vmatprep.subr.bf16.mxu0 %v3048
    %4478 = vmatpush1.bf16.msra.mxu0 %v3047
    %4479 = vmatprep.subr.bf16.mxu0 %v3052
    %4480 = vmatpush1.bf16.msra.mxu0 %v3051
    %4481 = vmatprep.subr.bf16.mxu0 %v3056
    %4482 = vmatpush1.bf16.msra.mxu0 %v3055
    %4483 = vmatprep.subr.bf16.mxu0 %v3060
    %4484 = vmatpush1.bf16.msra.mxu0 %v3059
    %4485 = vmatprep.subr.bf16.mxu0 %v3064
    %4486 = vmatpush1.bf16.msra.mxu0 %v3063
    %4487 = vmatprep.subr.bf16.mxu0 %v3068
    %4488 = vmatpush1.bf16.msra.mxu0 %v3067
    %4489 = vmatprep.mubr.bf16.mxu0 %v241
    %4490 = vmatmul.mubr.bf16.gmra.mrb[0].mxu0 %v240
    %v4491 = vpop.f32.mrb[0].mxu0
    %v4492 = vadd.f32 %v4451, %v4491
    %v4493 = vpop.f32.mrb[0].mxu0
    %v4494 = vadd.f32 %v4453, %v4493
    %v4495 = vpop.f32.mrb[0].mxu0
    %v4496 = vpop.f32.mrb[0].mxu0
    %4497 = vdwg.mxu0
    %4498 = vmatprep.subr.bf16.mxu0 %v3072
    %4499 = vmatpush1.bf16.msra.mxu0 %v3071
    %4500 = vmatprep.subr.bf16.mxu0 %v3076
    %4501 = vmatpush1.bf16.msra.mxu0 %v3075
    %4502 = vmatprep.subr.bf16.mxu0 %v3080
    %4503 = vmatpush1.bf16.msra.mxu0 %v3079
    %4504 = vmatprep.subr.bf16.mxu0 %v3084
    %4505 = vmatpush1.bf16.msra.mxu0 %v3083
    %4506 = vmatprep.subr.bf16.mxu0 %v3088
    %4507 = vmatpush1.bf16.msra.mxu0 %v3087
    %4508 = vmatprep.subr.bf16.mxu0 %v3092
    %4509 = vmatpush1.bf16.msra.mxu0 %v3091
    %4510 = vmatprep.subr.bf16.mxu0 %v3096
    %4511 = vmatpush1.bf16.msra.mxu0 %v3095
    %4512 = vmatprep.subr.bf16.mxu0 %v3100
    %4513 = vmatpush1.bf16.msra.mxu0 %v3099
    %4514 = vmatprep.subr.bf16.mxu0 %v3104
    %4515 = vmatpush1.bf16.msra.mxu0 %v3103
    %4516 = vmatprep.subr.bf16.mxu0 %v3108
    %4517 = vmatpush1.bf16.msra.mxu0 %v3107
    %4518 = vmatprep.subr.bf16.mxu0 %v3112
    %4519 = vmatpush1.bf16.msra.mxu0 %v3111
    %4520 = vmatprep.subr.bf16.mxu0 %v3116
    %4521 = vmatpush1.bf16.msra.mxu0 %v3115
    %4522 = vmatprep.subr.bf16.mxu0 %v3120
    %4523 = vmatpush1.bf16.msra.mxu0 %v3119
    %4524 = vmatprep.subr.bf16.mxu0 %v3124
    %4525 = vmatpush1.bf16.msra.mxu0 %v3123
    %4526 = vmatprep.subr.bf16.mxu0 %v3128
    %4527 = vmatpush1.bf16.msra.mxu0 %v3127
    %4528 = vmatprep.subr.bf16.mxu0 %v3132
    %4529 = vmatpush1.bf16.msra.mxu0 %v3131
    %4530 = vmatprep.mubr.bf16.mxu0 %v243
    %4531 = vmatmul.mubr.bf16.gmra.mrb[0].mxu0 %v242
    %v4532 = vpop.f32.mrb[0].mxu0
    %v4533 = vadd.f32 %v4492, %v4532
    %v4534 = vpop.f32.mrb[0].mxu0
    %v4535 = vadd.f32 %v4494, %v4534
    %v4536 = vpop.f32.mrb[0].mxu0
    %v4537 = vpop.f32.mrb[0].mxu0
    %4538 = vdwg.mxu0
    %4539 = vmatprep.subr.bf16.mxu0 %v3136
    %4540 = vmatpush1.bf16.msra.mxu0 %v3135
    %4541 = vmatprep.subr.bf16.mxu0 %v3140
    %4542 = vmatpush1.bf16.msra.mxu0 %v3139
    %4543 = vmatprep.subr.bf16.mxu0 %v3144
    %4544 = vmatpush1.bf16.msra.mxu0 %v3143
    %4545 = vmatprep.subr.bf16.mxu0 %v3148
    %4546 = vmatpush1.bf16.msra.mxu0 %v3147
    %4547 = vmatprep.subr.bf16.mxu0 %v3152
    %4548 = vmatpush1.bf16.msra.mxu0 %v3151
    %4549 = vmatprep.subr.bf16.mxu0 %v3156
    %4550 = vmatpush1.bf16.msra.mxu0 %v3155
    %4551 = vmatprep.subr.bf16.mxu0 %v3160
    %4552 = vmatpush1.bf16.msra.mxu0 %v3159
    %4553 = vmatprep.subr.bf16.mxu0 %v3164
    %4554 = vmatpush1.bf16.msra.mxu0 %v3163
    %4555 = vmatprep.subr.bf16.mxu0 %v3168
    %4556 = vmatpush1.bf16.msra.mxu0 %v3167
    %4557 = vmatprep.subr.bf16.mxu0 %v3172
    %4558 = vmatpush1.bf16.msra.mxu0 %v3171
    %4559 = vmatprep.subr.bf16.mxu0 %v3176
    %4560 = vmatpush1.bf16.msra.mxu0 %v3175
    %4561 = vmatprep.subr.bf16.mxu0 %v3180
    %4562 = vmatpush1.bf16.msra.mxu0 %v3179
    %4563 = vmatprep.subr.bf16.mxu0 %v3184
    %4564 = vmatpush1.bf16.msra.mxu0 %v3183
    %4565 = vmatprep.subr.bf16.mxu0 %v3188
    %4566 = vmatpush1.bf16.msra.mxu0 %v3187
    %4567 = vmatprep.subr.bf16.mxu0 %v3192
    %4568 = vmatpush1.bf16.msra.mxu0 %v3191
    %4569 = vmatprep.subr.bf16.mxu0 %v3196
    %4570 = vmatpush1.bf16.msra.mxu0 %v3195
    %4571 = vmatprep.mubr.bf16.mxu0 %v245
    %4572 = vmatmul.mubr.bf16.gmra.mrb[0].mxu0 %v244
    %v4573 = vpop.f32.mrb[0].mxu0
    %v4574 = vadd.f32 %v4533, %v4573
    %v4575 = vpop.f32.mrb[0].mxu0
    %v4576 = vadd.f32 %v4535, %v4575
    %v4577 = vpop.f32.mrb[0].mxu0
    %v4578 = vpop.f32.mrb[0].mxu0
    %4579 = vdwg.mxu0
    %4580 = vmatprep.subr.bf16.mxu0 %v3200
    %4581 = vmatpush1.bf16.msra.mxu0 %v3199
    %4582 = vmatprep.subr.bf16.mxu0 %v3204
    %4583 = vmatpush1.bf16.msra.mxu0 %v3203
    %4584 = vmatprep.subr.bf16.mxu0 %v3208
    %4585 = vmatpush1.bf16.msra.mxu0 %v3207
    %4586 = vmatprep.subr.bf16.mxu0 0
    %4587 = vmatpush1.bf16.msra.mxu0 0
    %4588 = vmatprep.subr.bf16.mxu0 0
    %4589 = vmatpush1.bf16.msra.mxu0 0
    %4590 = vmatprep.subr.bf16.mxu0 0
    %4591 = vmatpush1.bf16.msra.mxu0 0
    %4592 = vmatprep.subr.bf16.mxu0 0
    %4593 = vmatpush1.bf16.msra.mxu0 0
    %4594 = vmatprep.subr.bf16.mxu0 0
    %4595 = vmatpush1.bf16.msra.mxu0 0
    %4596 = vmatprep.subr.bf16.mxu0 0
    %4597 = vmatpush1.bf16.msra.mxu0 0
    %4598 = vmatprep.subr.bf16.mxu0 0
    %4599 = vmatpush1.bf16.msra.mxu0 0
    %4600 = vmatprep.subr.bf16.mxu0 0
    %4601 = vmatpush1.bf16.msra.mxu0 0
    %4602 = vmatprep.subr.bf16.mxu0 0
    %4603 = vmatpush1.bf16.msra.mxu0 0
    %4604 = vmatprep.subr.bf16.mxu0 0
    %4605 = vmatpush1.bf16.msra.mxu0 0
    %4606 = vmatprep.subr.bf16.mxu0 0
    %4607 = vmatpush1.bf16.msra.mxu0 0
    %4608 = vmatprep.subr.bf16.mxu0 0
    %4609 = vmatpush1.bf16.msra.mxu0 0
    %4610 = vmatprep.subr.bf16.mxu0 0
    %4611 = vmatpush1.bf16.msra.mxu0 0
    %4612 = vmatprep.mubr.bf16.mxu0 0
    %4613 = vmatmul.mubr.bf16.gmra.mrb[0].mxu0 %v3799
    %v4614 = vpop.f32.mrb[0].mxu0
    %v4615 = vadd.f32 %v4574, %v4614
    %v4616 = vpop.f32.mrb[0].mxu0
    %v4617 = vadd.f32 %v4576, %v4616
    %v4618 = vpop.f32.mrb[0].mxu0
    %v4619 = vpop.f32.mrb[0].mxu0
    %4620 = vdwg.mxu0
    %v4621 = vmul.f32 %v4205, 0.01
    %v4622 = vmul.f32 %v4207, 0.01
    %v4623 = vmul.f32 %v4615, 0.01
    %v4624 = vmul.f32 %v4617, 0.01
    %v4625 = vmax.f32 %v4205, %v4621
    %v4626 = vmax.f32 %v4207, %v4622
    %v4627 = vmax.f32 %v4615, %v4623
    %v4628 = vmax.f32 %v4617, %v4624
    %v4629 = vpack.c.bf16 %v4625, %v4625
    %v4630 = vpack.c.bf16 %v4626, %v4626
    %v4631 = vpack.c.bf16 %v4627, %v4627
    %v4632 = vpack.c.bf16 %v4628, %v4628
    %v4633 = vld [vmem:[#allocation8] sm:$0xff]
    %v4634 = vld [vmem:[#allocation8 + $0x8] sm:$0xff]
    %v4635 = vld [vmem:[#allocation8 + $0x10] sm:$0xff]
    %v4636 = vld [vmem:[#allocation8 + $0x18] sm:$0xff]
    %v4637 = vld [vmem:[#allocation8 + $0x20] sm:$0xff]
    %v4638 = vld [vmem:[#allocation8 + $0x28] sm:$0xff]
    %v4639 = vld [vmem:[#allocation8 + $0x30] sm:$0xff]
    %v4640 = vld [vmem:[#allocation8 + $0x38] sm:$0xff]
    %v4641 = vld [vmem:[#allocation8 + $0x40] sm:$0xff]
    %v4642 = vld [vmem:[#allocation8 + $0x48] sm:$0xff]
    %v4643 = vld [vmem:[#allocation8 + $0x50] sm:$0xff]
    %v4644 = vld [vmem:[#allocation8 + $0x58] sm:$0xff]
    %v4645 = vld [vmem:[#allocation8 + $0x60] sm:$0xff]
    %v4646 = vld [vmem:[#allocation8 + $0x68] sm:$0xff]
    %v4647 = vld [vmem:[#allocation8 + $0x70] sm:$0xff]
    %v4648 = vld [vmem:[#allocation8 + $0x78] sm:$0xff]
    %v4649 = vld [vmem:[#allocation8 + $0x80] sm:$0xff]
    %v4650 = vld [vmem:[#allocation8 + $0x88] sm:$0xff]
    %v4651 = vld [vmem:[#allocation8 + $0x90] sm:$0xff]
    %v4652 = vld [vmem:[#allocation8 + $0x98] sm:$0xff]
    %v4653 = vld [vmem:[#allocation8 + $0xa0] sm:$0xff]
    %v4654 = vld [vmem:[#allocation8 + $0xa8] sm:$0xff]
    %v4655 = vld [vmem:[#allocation8 + $0xb0] sm:$0xff]
    %v4656 = vld [vmem:[#allocation8 + $0xb8] sm:$0xff]
    %v4657 = vld [vmem:[#allocation8 + $0xc0] sm:$0xff]
    %v4658 = vld [vmem:[#allocation8 + $0xc8] sm:$0xff]
    %v4659 = vld [vmem:[#allocation8 + $0xd0] sm:$0xff]
    %v4660 = vld [vmem:[#allocation8 + $0xd8] sm:$0xff]
    %v4661 = vld [vmem:[#allocation8 + $0xe0] sm:$0xff]
    %v4662 = vld [vmem:[#allocation8 + $0xe8] sm:$0xff]
    %v4663 = vld [vmem:[#allocation8 + $0xf0] sm:$0xff]
    %v4664 = vld [vmem:[#allocation8 + $0xf8] sm:$0xff]
    %v4665 = vld [vmem:[#allocation8 + $0x100] sm:$0xff]
    %v4666 = vld [vmem:[#allocation8 + $0x108] sm:$0xff]
    %v4667 = vld [vmem:[#allocation8 + $0x110] sm:$0xff]
    %v4668 = vld [vmem:[#allocation8 + $0x118] sm:$0xff]
    %v4669 = vld [vmem:[#allocation8 + $0x120] sm:$0xff]
    %v4670 = vld [vmem:[#allocation8 + $0x128] sm:$0xff]
    %v4671 = vld [vmem:[#allocation8 + $0x130] sm:$0xff]
    %v4672 = vld [vmem:[#allocation8 + $0x138] sm:$0xff]
    %v4673 = vld [vmem:[#allocation8 + $0x140] sm:$0xff]
    %v4674 = vld [vmem:[#allocation8 + $0x148] sm:$0xff]
    %v4675 = vld [vmem:[#allocation8 + $0x150] sm:$0xff]
    %v4676 = vld [vmem:[#allocation8 + $0x158] sm:$0xff]
    %v4677 = vld [vmem:[#allocation8 + $0x160] sm:$0xff]
    %v4678 = vld [vmem:[#allocation8 + $0x168] sm:$0xff]
    %v4679 = vld [vmem:[#allocation8 + $0x170] sm:$0xff]
    %v4680 = vld [vmem:[#allocation8 + $0x178] sm:$0xff]
    %v4681 = vld [vmem:[#allocation8 + $0x180] sm:$0xff]
    %v4682 = vld [vmem:[#allocation8 + $0x188] sm:$0xff]
    %v4683 = vld [vmem:[#allocation8 + $0x190] sm:$0xff]
    %v4684 = vld [vmem:[#allocation8 + $0x198] sm:$0xff]
    %v4685 = vld [vmem:[#allocation8 + $0x1a0] sm:$0xff]
    %v4686 = vld [vmem:[#allocation8 + $0x1a8] sm:$0xff]
    %v4687 = vld [vmem:[#allocation8 + $0x1b0] sm:$0xff]
    %v4688 = vld [vmem:[#allocation8 + $0x1b8] sm:$0xff]
    %v4689 = vld [vmem:[#allocation8 + $0x1c0] sm:$0xff]
    %v4690 = vld [vmem:[#allocation8 + $0x1c8] sm:$0xff]
    %v4691 = vld [vmem:[#allocation8 + $0x1d0] sm:$0xff]
    %v4692 = vld [vmem:[#allocation8 + $0x1d8] sm:$0xff]
    %v4693 = vld [vmem:[#allocation8 + $0x1e0] sm:$0xff]
    %v4694 = vld [vmem:[#allocation8 + $0x1e8] sm:$0xff]
    %v4695 = vld [vmem:[#allocation8 + $0x1f0] sm:$0xff]
    %v4696 = vld [vmem:[#allocation8 + $0x1f8] sm:$0xff]
    %v4697 = vld [vmem:[#allocation8 + $0x200] sm:$0xff]
    %v4698 = vld [vmem:[#allocation8 + $0x208] sm:$0xff]
    %v4699 = vld [vmem:[#allocation8 + $0x210] sm:$0xff]
    %v4700 = vld [vmem:[#allocation8 + $0x218] sm:$0xff]
    %v4701 = vld [vmem:[#allocation8 + $0x220] sm:$0xff]
    %v4702 = vld [vmem:[#allocation8 + $0x228] sm:$0xff]
    %v4703 = vld [vmem:[#allocation8 + $0x230] sm:$0xff]
    %v4704 = vld [vmem:[#allocation8 + $0x238] sm:$0xff]
    %v4705 = vld [vmem:[#allocation8 + $0x240] sm:$0xff]
    %v4706 = vld [vmem:[#allocation8 + $0x248] sm:$0xff]
    %v4707 = vld [vmem:[#allocation8 + $0x250] sm:$0xff]
    %v4708 = vld [vmem:[#allocation8 + $0x258] sm:$0xff]
    %v4709 = vld [vmem:[#allocation8 + $0x260] sm:$0xff]
    %v4710 = vld [vmem:[#allocation8 + $0x268] sm:$0xff]
    %v4711 = vld [vmem:[#allocation8 + $0x270] sm:$0xff]
    %v4712 = vld [vmem:[#allocation8 + $0x278] sm:$0xff]
    %v4713 = vld [vmem:[#allocation8 + $0x280] sm:$0xff]
    %v4714 = vld [vmem:[#allocation8 + $0x288] sm:$0xff]
    %v4715 = vld [vmem:[#allocation8 + $0x290] sm:$0xff]
    %v4716 = vld [vmem:[#allocation8 + $0x298] sm:$0xff]
    %v4717 = vld [vmem:[#allocation8 + $0x2a0] sm:$0xff]
    %v4718 = vld [vmem:[#allocation8 + $0x2a8] sm:$0xff]
    %v4719 = vld [vmem:[#allocation8 + $0x2b0] sm:$0xff]
    %v4720 = vld [vmem:[#allocation8 + $0x2b8] sm:$0xff]
    %v4721 = vld [vmem:[#allocation8 + $0x2c0] sm:$0xff]
    %v4722 = vld [vmem:[#allocation8 + $0x2c8] sm:$0xff]
    %v4723 = vld [vmem:[#allocation8 + $0x2d0] sm:$0xff]
    %v4724 = vld [vmem:[#allocation8 + $0x2d8] sm:$0xff]
    %v4725 = vld [vmem:[#allocation8 + $0x2e0] sm:$0xff]
    %v4726 = vld [vmem:[#allocation8 + $0x2e8] sm:$0xff]
    %v4727 = vld [vmem:[#allocation8 + $0x2f0] sm:$0xff]
    %v4728 = vld [vmem:[#allocation8 + $0x2f8] sm:$0xff]
    %v4729 = vld [vmem:[#allocation8 + $0x300] sm:$0xff]
    %v4730 = vld [vmem:[#allocation8 + $0x308] sm:$0xff]
    %v4731 = vld [vmem:[#allocation8 + $0x310] sm:$0xff]
    %v4732 = vld [vmem:[#allocation8 + $0x318] sm:$0xff]
    %v4733 = vld [vmem:[#allocation8 + $0x320] sm:$0xff]
    %v4734 = vld [vmem:[#allocation8 + $0x328] sm:$0xff]
    %v4735 = vld [vmem:[#allocation8 + $0x330] sm:$0xff]
    %v4736 = vld [vmem:[#allocation8 + $0x338] sm:$0xff]
    %v4737 = vld [vmem:[#allocation8 + $0x340] sm:$0xff]
    %v4738 = vld [vmem:[#allocation8 + $0x348] sm:$0xff]
    %v4739 = vld [vmem:[#allocation8 + $0x350] sm:$0xff]
    %v4740 = vld [vmem:[#allocation8 + $0x358] sm:$0xff]
    %v4741 = vld [vmem:[#allocation8 + $0x360] sm:$0xff]
    %v4742 = vld [vmem:[#allocation8 + $0x368] sm:$0xff]
    %v4743 = vld [vmem:[#allocation8 + $0x370] sm:$0xff]
    %v4744 = vld [vmem:[#allocation8 + $0x378] sm:$0xff]
    %v4745 = vld [vmem:[#allocation8 + $0x380] sm:$0xff]
    %v4746 = vld [vmem:[#allocation8 + $0x388] sm:$0xff]
    %v4747 = vld [vmem:[#allocation8 + $0x390] sm:$0xff]
    %v4748 = vld [vmem:[#allocation8 + $0x398] sm:$0xff]
    %v4749 = vld [vmem:[#allocation8 + $0x3a0] sm:$0xff]
    %v4750 = vld [vmem:[#allocation8 + $0x3a8] sm:$0xff]
    %v4751 = vld [vmem:[#allocation8 + $0x3b0] sm:$0xff]
    %v4752 = vld [vmem:[#allocation8 + $0x3b8] sm:$0xff]
    %v4753 = vld [vmem:[#allocation8 + $0x3c0] sm:$0xff]
    %v4754 = vld [vmem:[#allocation8 + $0x3c8] sm:$0xff]
    %v4755 = vld [vmem:[#allocation8 + $0x3d0] sm:$0xff]
    %v4756 = vld [vmem:[#allocation8 + $0x3d8] sm:$0xff]
    %v4757 = vld [vmem:[#allocation8 + $0x3e0] sm:$0xff]
    %v4758 = vld [vmem:[#allocation8 + $0x3e8] sm:$0xff]
    %v4759 = vld [vmem:[#allocation8 + $0x3f0] sm:$0xff]
    %v4760 = vld [vmem:[#allocation8 + $0x3f8] sm:$0xff]
    %v4761 = vld [vmem:[#allocation10] sm:$0xf]
    %v4763 = vlaneseq
    %v4764 = vshrl.u32 %v4763, 7
    %v4765 = vsub.s32 0, %v4764
    %v4766 = vrot.slane %v4761, %v4765
    %v4767 = vlaneseq
    %v4768 = vshrl.u32 %v4767, 7
    %v4769 = vsub.s32 1, %v4768
    %v4770 = vrot.slane %v4761, %v4769
    %v4771 = vlaneseq
    %v4772 = vshrl.u32 %v4771, 7
    %v4773 = vsub.s32 2, %v4772
    %v4774 = vrot.slane %v4761, %v4773
    %v4775 = vlaneseq
    %v4776 = vshrl.u32 %v4775, 7
    %v4777 = vsub.s32 3, %v4776
    %v4778 = vrot.slane %v4761, %v4777
    %v4911 = vunpack.c.l.b16 %v4633
    %v4912 = vunpack.c.h.b16 %v4633
    %v4913 = vunpack.c.l.b16 %v4634
    %v4914 = vunpack.c.h.b16 %v4634
    %v4915 = vunpack.c.l.b16 %v4635
    %v4916 = vunpack.c.h.b16 %v4635
    %v4917 = vunpack.c.l.b16 %v4636
    %v4918 = vunpack.c.h.b16 %v4636
    %v4919 = vunpack.c.l.b16 %v4637
    %v4920 = vunpack.c.h.b16 %v4637
    %v4921 = vunpack.c.l.b16 %v4638
    %v4922 = vunpack.c.h.b16 %v4638
    %v4923 = vunpack.c.l.b16 %v4639
    %v4924 = vunpack.c.h.b16 %v4639
    %v4925 = vunpack.c.l.b16 %v4640
    %v4926 = vunpack.c.h.b16 %v4640
    %v4927 = vunpack.c.l.b16 %v4641
    %v4928 = vunpack.c.h.b16 %v4641
    %v4929 = vunpack.c.l.b16 %v4642
    %v4930 = vunpack.c.h.b16 %v4642
    %v4931 = vunpack.c.l.b16 %v4643
    %v4932 = vunpack.c.h.b16 %v4643
    %v4933 = vunpack.c.l.b16 %v4644
    %v4934 = vunpack.c.h.b16 %v4644
    %v4935 = vunpack.c.l.b16 %v4645
    %v4936 = vunpack.c.h.b16 %v4645
    %v4937 = vunpack.c.l.b16 %v4646
    %v4938 = vunpack.c.h.b16 %v4646
    %v4939 = vunpack.c.l.b16 %v4647
    %v4940 = vunpack.c.h.b16 %v4647
    %v4941 = vunpack.c.l.b16 %v4648
    %v4942 = vunpack.c.h.b16 %v4648
    %v4943 = vunpack.c.l.b16 %v4649
    %v4944 = vunpack.c.h.b16 %v4649
    %v4945 = vunpack.c.l.b16 %v4650
    %v4946 = vunpack.c.h.b16 %v4650
    %v4947 = vunpack.c.l.b16 %v4651
    %v4948 = vunpack.c.h.b16 %v4651
    %v4949 = vunpack.c.l.b16 %v4652
    %v4950 = vunpack.c.h.b16 %v4652
    %v4951 = vunpack.c.l.b16 %v4653
    %v4952 = vunpack.c.h.b16 %v4653
    %v4953 = vunpack.c.l.b16 %v4654
    %v4954 = vunpack.c.h.b16 %v4654
    %v4955 = vunpack.c.l.b16 %v4655
    %v4956 = vunpack.c.h.b16 %v4655
    %v4957 = vunpack.c.l.b16 %v4656
    %v4958 = vunpack.c.h.b16 %v4656
    %v4959 = vunpack.c.l.b16 %v4657
    %v4960 = vunpack.c.h.b16 %v4657
    %v4961 = vunpack.c.l.b16 %v4658
    %v4962 = vunpack.c.h.b16 %v4658
    %v4963 = vunpack.c.l.b16 %v4659
    %v4964 = vunpack.c.h.b16 %v4659
    %v4965 = vunpack.c.l.b16 %v4660
    %v4966 = vunpack.c.h.b16 %v4660
    %v4967 = vunpack.c.l.b16 %v4661
    %v4968 = vunpack.c.h.b16 %v4661
    %v4969 = vunpack.c.l.b16 %v4662
    %v4970 = vunpack.c.h.b16 %v4662
    %v4971 = vunpack.c.l.b16 %v4663
    %v4972 = vunpack.c.h.b16 %v4663
    %v4973 = vunpack.c.l.b16 %v4664
    %v4974 = vunpack.c.h.b16 %v4664
    %v4975 = vunpack.c.l.b16 %v4665
    %v4976 = vunpack.c.h.b16 %v4665
    %v4977 = vunpack.c.l.b16 %v4666
    %v4978 = vunpack.c.h.b16 %v4666
    %v4979 = vunpack.c.l.b16 %v4667
    %v4980 = vunpack.c.h.b16 %v4667
    %v4981 = vunpack.c.l.b16 %v4668
    %v4982 = vunpack.c.h.b16 %v4668
    %v4983 = vunpack.c.l.b16 %v4669
    %v4984 = vunpack.c.h.b16 %v4669
    %v4985 = vunpack.c.l.b16 %v4670
    %v4986 = vunpack.c.h.b16 %v4670
    %v4987 = vunpack.c.l.b16 %v4671
    %v4988 = vunpack.c.h.b16 %v4671
    %v4989 = vunpack.c.l.b16 %v4672
    %v4990 = vunpack.c.h.b16 %v4672
    %v4991 = vunpack.c.l.b16 %v4673
    %v4992 = vunpack.c.h.b16 %v4673
    %v4993 = vunpack.c.l.b16 %v4674
    %v4994 = vunpack.c.h.b16 %v4674
    %v4995 = vunpack.c.l.b16 %v4675
    %v4996 = vunpack.c.h.b16 %v4675
    %v4997 = vunpack.c.l.b16 %v4676
    %v4998 = vunpack.c.h.b16 %v4676
    %v4999 = vunpack.c.l.b16 %v4677
    %v5000 = vunpack.c.h.b16 %v4677
    %v5001 = vunpack.c.l.b16 %v4678
    %v5002 = vunpack.c.h.b16 %v4678
    %v5003 = vunpack.c.l.b16 %v4679
    %v5004 = vunpack.c.h.b16 %v4679
    %v5005 = vunpack.c.l.b16 %v4680
    %v5006 = vunpack.c.h.b16 %v4680
    %v5007 = vunpack.c.l.b16 %v4681
    %v5008 = vunpack.c.h.b16 %v4681
    %v5009 = vunpack.c.l.b16 %v4682
    %v5010 = vunpack.c.h.b16 %v4682
    %v5011 = vunpack.c.l.b16 %v4683
    %v5012 = vunpack.c.h.b16 %v4683
    %v5013 = vunpack.c.l.b16 %v4684
    %v5014 = vunpack.c.h.b16 %v4684
    %v5015 = vunpack.c.l.b16 %v4685
    %v5016 = vunpack.c.h.b16 %v4685
    %v5017 = vunpack.c.l.b16 %v4686
    %v5018 = vunpack.c.h.b16 %v4686
    %v5019 = vunpack.c.l.b16 %v4687
    %v5020 = vunpack.c.h.b16 %v4687
    %v5021 = vunpack.c.l.b16 %v4688
    %v5022 = vunpack.c.h.b16 %v4688
    %v5023 = vunpack.c.l.b16 %v4689
    %v5024 = vunpack.c.h.b16 %v4689
    %v5025 = vunpack.c.l.b16 %v4690
    %v5026 = vunpack.c.h.b16 %v4690
    %v5027 = vunpack.c.l.b16 %v4691
    %v5028 = vunpack.c.h.b16 %v4691
    %v5029 = vunpack.c.l.b16 %v4692
    %v5030 = vunpack.c.h.b16 %v4692
    %v5031 = vunpack.c.l.b16 %v4693
    %v5032 = vunpack.c.h.b16 %v4693
    %v5033 = vunpack.c.l.b16 %v4694
    %v5034 = vunpack.c.h.b16 %v4694
    %v5035 = vunpack.c.l.b16 %v4695
    %v5036 = vunpack.c.h.b16 %v4695
    %v5037 = vunpack.c.l.b16 %v4696
    %v5038 = vunpack.c.h.b16 %v4696
    %v5039 = vunpack.c.l.b16 %v4697
    %v5040 = vunpack.c.h.b16 %v4697
    %v5041 = vunpack.c.l.b16 %v4698
    %v5042 = vunpack.c.h.b16 %v4698
    %v5043 = vunpack.c.l.b16 %v4699
    %v5044 = vunpack.c.h.b16 %v4699
    %v5045 = vunpack.c.l.b16 %v4700
    %v5046 = vunpack.c.h.b16 %v4700
    %v5047 = vunpack.c.l.b16 %v4701
    %v5048 = vunpack.c.h.b16 %v4701
    %v5049 = vunpack.c.l.b16 %v4702
    %v5050 = vunpack.c.h.b16 %v4702
    %v5051 = vunpack.c.l.b16 %v4703
    %v5052 = vunpack.c.h.b16 %v4703
    %v5053 = vunpack.c.l.b16 %v4704
    %v5054 = vunpack.c.h.b16 %v4704
    %v5055 = vunpack.c.l.b16 %v4705
    %v5056 = vunpack.c.h.b16 %v4705
    %v5057 = vunpack.c.l.b16 %v4706
    %v5058 = vunpack.c.h.b16 %v4706
    %v5059 = vunpack.c.l.b16 %v4707
    %v5060 = vunpack.c.h.b16 %v4707
    %v5061 = vunpack.c.l.b16 %v4708
    %v5062 = vunpack.c.h.b16 %v4708
    %v5063 = vunpack.c.l.b16 %v4709
    %v5064 = vunpack.c.h.b16 %v4709
    %v5065 = vunpack.c.l.b16 %v4710
    %v5066 = vunpack.c.h.b16 %v4710
    %v5067 = vunpack.c.l.b16 %v4711
    %v5068 = vunpack.c.h.b16 %v4711
    %v5069 = vunpack.c.l.b16 %v4712
    %v5070 = vunpack.c.h.b16 %v4712
    %v5071 = vunpack.c.l.b16 %v4713
    %v5072 = vunpack.c.h.b16 %v4713
    %v5073 = vunpack.c.l.b16 %v4714
    %v5074 = vunpack.c.h.b16 %v4714
    %v5075 = vunpack.c.l.b16 %v4715
    %v5076 = vunpack.c.h.b16 %v4715
    %v5077 = vunpack.c.l.b16 %v4716
    %v5078 = vunpack.c.h.b16 %v4716
    %v5079 = vunpack.c.l.b16 %v4717
    %v5080 = vunpack.c.h.b16 %v4717
    %v5081 = vunpack.c.l.b16 %v4718
    %v5082 = vunpack.c.h.b16 %v4718
    %v5083 = vunpack.c.l.b16 %v4719
    %v5084 = vunpack.c.h.b16 %v4719
    %v5085 = vunpack.c.l.b16 %v4720
    %v5086 = vunpack.c.h.b16 %v4720
    %v5087 = vunpack.c.l.b16 %v4721
    %v5088 = vunpack.c.h.b16 %v4721
    %v5089 = vunpack.c.l.b16 %v4722
    %v5090 = vunpack.c.h.b16 %v4722
    %v5091 = vunpack.c.l.b16 %v4723
    %v5092 = vunpack.c.h.b16 %v4723
    %v5093 = vunpack.c.l.b16 %v4724
    %v5094 = vunpack.c.h.b16 %v4724
    %v5095 = vunpack.c.l.b16 %v4725
    %v5096 = vunpack.c.h.b16 %v4725
    %v5097 = vunpack.c.l.b16 %v4726
    %v5098 = vunpack.c.h.b16 %v4726
    %v5099 = vunpack.c.l.b16 %v4727
    %v5100 = vunpack.c.h.b16 %v4727
    %v5101 = vunpack.c.l.b16 %v4728
    %v5102 = vunpack.c.h.b16 %v4728
    %v5103 = vunpack.c.l.b16 %v4729
    %v5104 = vunpack.c.h.b16 %v4729
    %v5105 = vunpack.c.l.b16 %v4730
    %v5106 = vunpack.c.h.b16 %v4730
    %v5107 = vunpack.c.l.b16 %v4731
    %v5108 = vunpack.c.h.b16 %v4731
    %v5109 = vunpack.c.l.b16 %v4732
    %v5110 = vunpack.c.h.b16 %v4732
    %v5111 = vunpack.c.l.b16 %v4733
    %v5112 = vunpack.c.h.b16 %v4733
    %v5113 = vunpack.c.l.b16 %v4734
    %v5114 = vunpack.c.h.b16 %v4734
    %v5115 = vunpack.c.l.b16 %v4735
    %v5116 = vunpack.c.h.b16 %v4735
    %v5117 = vunpack.c.l.b16 %v4736
    %v5118 = vunpack.c.h.b16 %v4736
    %v5119 = vunpack.c.l.b16 %v4737
    %v5120 = vunpack.c.h.b16 %v4737
    %v5121 = vunpack.c.l.b16 %v4738
    %v5122 = vunpack.c.h.b16 %v4738
    %v5123 = vunpack.c.l.b16 %v4739
    %v5124 = vunpack.c.h.b16 %v4739
    %v5125 = vunpack.c.l.b16 %v4740
    %v5126 = vunpack.c.h.b16 %v4740
    %v5127 = vunpack.c.l.b16 %v4741
    %v5128 = vunpack.c.h.b16 %v4741
    %v5129 = vunpack.c.l.b16 %v4742
    %v5130 = vunpack.c.h.b16 %v4742
    %v5131 = vunpack.c.l.b16 %v4743
    %v5132 = vunpack.c.h.b16 %v4743
    %v5133 = vunpack.c.l.b16 %v4744
    %v5134 = vunpack.c.h.b16 %v4744
    %v5135 = vunpack.c.l.b16 %v4745
    %v5136 = vunpack.c.h.b16 %v4745
    %v5137 = vunpack.c.l.b16 %v4746
    %v5138 = vunpack.c.h.b16 %v4746
    %v5139 = vunpack.c.l.b16 %v4747
    %v5140 = vunpack.c.h.b16 %v4747
    %v5141 = vunpack.c.l.b16 %v4748
    %v5142 = vunpack.c.h.b16 %v4748
    %v5143 = vunpack.c.l.b16 %v4749
    %v5144 = vunpack.c.h.b16 %v4749
    %v5145 = vunpack.c.l.b16 %v4750
    %v5146 = vunpack.c.h.b16 %v4750
    %v5147 = vunpack.c.l.b16 %v4751
    %v5148 = vunpack.c.h.b16 %v4751
    %v5149 = vunpack.c.l.b16 %v4752
    %v5150 = vunpack.c.h.b16 %v4752
    %v5151 = vunpack.c.l.b16 %v4753
    %v5152 = vunpack.c.h.b16 %v4753
    %v5153 = vunpack.c.l.b16 %v4754
    %v5154 = vunpack.c.h.b16 %v4754
    %v5155 = vunpack.c.l.b16 %v4755
    %v5156 = vunpack.c.h.b16 %v4755
    %v5157 = vunpack.c.l.b16 %v4756
    %v5158 = vunpack.c.h.b16 %v4756
    %v5159 = vunpack.c.l.b16 %v4757
    %v5160 = vunpack.c.h.b16 %v4757
    %v5161 = vunpack.c.l.b16 %v4758
    %v5162 = vunpack.c.h.b16 %v4758
    %v5163 = vunpack.c.l.b16 %v4759
    %v5164 = vunpack.c.h.b16 %v4759
    %v5165 = vunpack.c.l.b16 %v4760
    %v5166 = vunpack.c.h.b16 %v4760
    %v5167 = vpack.c.b16 %v4915, %v4911
    %v5168 = vpack.c.b16 %v4916, %v4912
    %v5169 = vpack.c.b16 %v4917, %v4913
    %v5170 = vpack.c.b16 %v4918, %v4914
    %v5171 = vpack.c.b16 %v4923, %v4919
    %v5172 = vpack.c.b16 %v4924, %v4920
    %v5173 = vpack.c.b16 %v4925, %v4921
    %v5174 = vpack.c.b16 %v4926, %v4922
    %v5175 = vpack.c.b16 %v4931, %v4927
    %v5176 = vpack.c.b16 %v4932, %v4928
    %v5177 = vpack.c.b16 %v4933, %v4929
    %v5178 = vpack.c.b16 %v4934, %v4930
    %v5179 = vpack.c.b16 %v4939, %v4935
    %v5180 = vpack.c.b16 %v4940, %v4936
    %v5181 = vpack.c.b16 %v4941, %v4937
    %v5182 = vpack.c.b16 %v4942, %v4938
    %v5183 = vpack.c.b16 %v4947, %v4943
    %v5184 = vpack.c.b16 %v4948, %v4944
    %v5185 = vpack.c.b16 %v4949, %v4945
    %v5186 = vpack.c.b16 %v4950, %v4946
    %v5187 = vpack.c.b16 %v4955, %v4951
    %v5188 = vpack.c.b16 %v4956, %v4952
    %v5189 = vpack.c.b16 %v4957, %v4953
    %v5190 = vpack.c.b16 %v4958, %v4954
    %v5191 = vpack.c.b16 %v4963, %v4959
    %v5192 = vpack.c.b16 %v4964, %v4960
    %v5193 = vpack.c.b16 %v4965, %v4961
    %v5194 = vpack.c.b16 %v4966, %v4962
    %v5195 = vpack.c.b16 %v4971, %v4967
    %v5196 = vpack.c.b16 %v4972, %v4968
    %v5197 = vpack.c.b16 %v4973, %v4969
    %v5198 = vpack.c.b16 %v4974, %v4970
    %v5199 = vpack.c.b16 %v4979, %v4975
    %v5200 = vpack.c.b16 %v4980, %v4976
    %v5201 = vpack.c.b16 %v4981, %v4977
    %v5202 = vpack.c.b16 %v4982, %v4978
    %v5203 = vpack.c.b16 %v4987, %v4983
    %v5204 = vpack.c.b16 %v4988, %v4984
    %v5205 = vpack.c.b16 %v4989, %v4985
    %v5206 = vpack.c.b16 %v4990, %v4986
    %v5207 = vpack.c.b16 %v4995, %v4991
    %v5208 = vpack.c.b16 %v4996, %v4992
    %v5209 = vpack.c.b16 %v4997, %v4993
    %v5210 = vpack.c.b16 %v4998, %v4994
    %v5211 = vpack.c.b16 %v5003, %v4999
    %v5212 = vpack.c.b16 %v5004, %v5000
    %v5213 = vpack.c.b16 %v5005, %v5001
    %v5214 = vpack.c.b16 %v5006, %v5002
    %v5215 = vpack.c.b16 %v5011, %v5007
    %v5216 = vpack.c.b16 %v5012, %v5008
    %v5217 = vpack.c.b16 %v5013, %v5009
    %v5218 = vpack.c.b16 %v5014, %v5010
    %v5219 = vpack.c.b16 %v5019, %v5015
    %v5220 = vpack.c.b16 %v5020, %v5016
    %v5221 = vpack.c.b16 %v5021, %v5017
    %v5222 = vpack.c.b16 %v5022, %v5018
    %v5223 = vpack.c.b16 %v5027, %v5023
    %v5224 = vpack.c.b16 %v5028, %v5024
    %v5225 = vpack.c.b16 %v5029, %v5025
    %v5226 = vpack.c.b16 %v5030, %v5026
    %v5227 = vpack.c.b16 %v5035, %v5031
    %v5228 = vpack.c.b16 %v5036, %v5032
    %v5229 = vpack.c.b16 %v5037, %v5033
    %v5230 = vpack.c.b16 %v5038, %v5034
    %v5231 = vpack.c.b16 %v5043, %v5039
    %v5232 = vpack.c.b16 %v5044, %v5040
    %v5233 = vpack.c.b16 %v5045, %v5041
    %v5234 = vpack.c.b16 %v5046, %v5042
    %v5235 = vpack.c.b16 %v5051, %v5047
    %v5236 = vpack.c.b16 %v5052, %v5048
    %v5237 = vpack.c.b16 %v5053, %v5049
    %v5238 = vpack.c.b16 %v5054, %v5050
    %v5239 = vpack.c.b16 %v5059, %v5055
    %v5240 = vpack.c.b16 %v5060, %v5056
    %v5241 = vpack.c.b16 %v5061, %v5057
    %v5242 = vpack.c.b16 %v5062, %v5058
    %v5243 = vpack.c.b16 %v5067, %v5063
    %v5244 = vpack.c.b16 %v5068, %v5064
    %v5245 = vpack.c.b16 %v5069, %v5065
    %v5246 = vpack.c.b16 %v5070, %v5066
    %v5247 = vpack.c.b16 %v5075, %v5071
    %v5248 = vpack.c.b16 %v5076, %v5072
    %v5249 = vpack.c.b16 %v5077, %v5073
    %v5250 = vpack.c.b16 %v5078, %v5074
    %v5251 = vpack.c.b16 %v5083, %v5079
    %v5252 = vpack.c.b16 %v5084, %v5080
    %v5253 = vpack.c.b16 %v5085, %v5081
    %v5254 = vpack.c.b16 %v5086, %v5082
    %v5255 = vpack.c.b16 %v5091, %v5087
    %v5256 = vpack.c.b16 %v5092, %v5088
    %v5257 = vpack.c.b16 %v5093, %v5089
    %v5258 = vpack.c.b16 %v5094, %v5090
    %v5259 = vpack.c.b16 %v5099, %v5095
    %v5260 = vpack.c.b16 %v5100, %v5096
    %v5261 = vpack.c.b16 %v5101, %v5097
    %v5262 = vpack.c.b16 %v5102, %v5098
    %v5263 = vpack.c.b16 %v5107, %v5103
    %v5264 = vpack.c.b16 %v5108, %v5104
    %v5265 = vpack.c.b16 %v5109, %v5105
    %v5266 = vpack.c.b16 %v5110, %v5106
    %v5267 = vpack.c.b16 %v5115, %v5111
    %v5268 = vpack.c.b16 %v5116, %v5112
    %v5269 = vpack.c.b16 %v5117, %v5113
    %v5270 = vpack.c.b16 %v5118, %v5114
    %v5271 = vpack.c.b16 %v5123, %v5119
    %v5272 = vpack.c.b16 %v5124, %v5120
    %v5273 = vpack.c.b16 %v5125, %v5121
    %v5274 = vpack.c.b16 %v5126, %v5122
    %v5275 = vpack.c.b16 %v5131, %v5127
    %v5276 = vpack.c.b16 %v5132, %v5128
    %v5277 = vpack.c.b16 %v5133, %v5129
    %v5278 = vpack.c.b16 %v5134, %v5130
    %v5279 = vpack.c.b16 %v5139, %v5135
    %v5280 = vpack.c.b16 %v5140, %v5136
    %v5281 = vpack.c.b16 %v5141, %v5137
    %v5282 = vpack.c.b16 %v5142, %v5138
    %v5283 = vpack.c.b16 %v5147, %v5143
    %v5284 = vpack.c.b16 %v5148, %v5144
    %v5285 = vpack.c.b16 %v5149, %v5145
    %v5286 = vpack.c.b16 %v5150, %v5146
    %v5287 = vpack.c.b16 %v5155, %v5151
    %v5288 = vpack.c.b16 %v5156, %v5152
    %v5289 = vpack.c.b16 %v5157, %v5153
    %v5290 = vpack.c.b16 %v5158, %v5154
    %v5291 = vpack.c.b16 %v5163, %v5159
    %v5292 = vpack.c.b16 %v5164, %v5160
    %v5293 = vpack.c.b16 %v5165, %v5161
    %v5294 = vpack.c.b16 %v5166, %v5162
    %5423 = vmatprep.subr.bf16.mxu0 %v5168
    %5424 = vmatpush1.bf16.msra.mxu0 %v5167
    %5425 = vmatprep.subr.bf16.mxu0 %v5172
    %5426 = vmatpush1.bf16.msra.mxu0 %v5171
    %5427 = vmatprep.subr.bf16.mxu0 %v5176
    %5428 = vmatpush1.bf16.msra.mxu0 %v5175
    %5429 = vmatprep.subr.bf16.mxu0 %v5180
    %5430 = vmatpush1.bf16.msra.mxu0 %v5179
    %5431 = vmatprep.subr.bf16.mxu0 %v5184
    %5432 = vmatpush1.bf16.msra.mxu0 %v5183
    %5433 = vmatprep.subr.bf16.mxu0 %v5188
    %5434 = vmatpush1.bf16.msra.mxu0 %v5187
    %5435 = vmatprep.subr.bf16.mxu0 %v5192
    %5436 = vmatpush1.bf16.msra.mxu0 %v5191
    %5437 = vmatprep.subr.bf16.mxu0 %v5196
    %5438 = vmatpush1.bf16.msra.mxu0 %v5195
    %5439 = vmatprep.subr.bf16.mxu0 %v5200
    %5440 = vmatpush1.bf16.msra.mxu0 %v5199
    %5441 = vmatprep.subr.bf16.mxu0 %v5204
    %5442 = vmatpush1.bf16.msra.mxu0 %v5203
    %5443 = vmatprep.subr.bf16.mxu0 %v5208
    %5444 = vmatpush1.bf16.msra.mxu0 %v5207
    %5445 = vmatprep.subr.bf16.mxu0 %v5212
    %5446 = vmatpush1.bf16.msra.mxu0 %v5211
    %5447 = vmatprep.subr.bf16.mxu0 %v5216
    %5448 = vmatpush1.bf16.msra.mxu0 %v5215
    %5449 = vmatprep.subr.bf16.mxu0 %v5220
    %5450 = vmatpush1.bf16.msra.mxu0 %v5219
    %5451 = vmatprep.subr.bf16.mxu0 %v5224
    %5452 = vmatpush1.bf16.msra.mxu0 %v5223
    %5453 = vmatprep.subr.bf16.mxu0 %v5228
    %5454 = vmatpush1.bf16.msra.mxu0 %v5227
    %5455 = vmatprep.mubr.bf16.mxu0 %v4630
    %5456 = vmatmul.mubr.bf16.gmra.mrb[0].mxu0 %v4629
    %v5457 = vpop.f32.mrb[0].mxu0
    %v5458 = vadd.f32 %v4766, %v5457
    %v5459 = vpop.f32.mrb[0].mxu0
    %v5460 = vadd.f32 %v4770, %v5459
    %v5461 = vpop.f32.mrb[0].mxu0
    %v5462 = vpop.f32.mrb[0].mxu0
    %5463 = vdwg.mxu0
    %5464 = vmatprep.subr.bf16.mxu0 %v5232
    %5465 = vmatpush1.bf16.msra.mxu0 %v5231
    %5466 = vmatprep.subr.bf16.mxu0 %v5236
    %5467 = vmatpush1.bf16.msra.mxu0 %v5235
    %5468 = vmatprep.subr.bf16.mxu0 %v5240
    %5469 = vmatpush1.bf16.msra.mxu0 %v5239
    %5470 = vmatprep.subr.bf16.mxu0 %v5244
    %5471 = vmatpush1.bf16.msra.mxu0 %v5243
    %5472 = vmatprep.subr.bf16.mxu0 %v5248
    %5473 = vmatpush1.bf16.msra.mxu0 %v5247
    %5474 = vmatprep.subr.bf16.mxu0 %v5252
    %5475 = vmatpush1.bf16.msra.mxu0 %v5251
    %5476 = vmatprep.subr.bf16.mxu0 %v5256
    %5477 = vmatpush1.bf16.msra.mxu0 %v5255
    %5478 = vmatprep.subr.bf16.mxu0 %v5260
    %5479 = vmatpush1.bf16.msra.mxu0 %v5259
    %5480 = vmatprep.subr.bf16.mxu0 %v5264
    %5481 = vmatpush1.bf16.msra.mxu0 %v5263
    %5482 = vmatprep.subr.bf16.mxu0 %v5268
    %5483 = vmatpush1.bf16.msra.mxu0 %v5267
    %5484 = vmatprep.subr.bf16.mxu0 %v5272
    %5485 = vmatpush1.bf16.msra.mxu0 %v5271
    %5486 = vmatprep.subr.bf16.mxu0 %v5276
    %5487 = vmatpush1.bf16.msra.mxu0 %v5275
    %5488 = vmatprep.subr.bf16.mxu0 %v5280
    %5489 = vmatpush1.bf16.msra.mxu0 %v5279
    %5490 = vmatprep.subr.bf16.mxu0 %v5284
    %5491 = vmatpush1.bf16.msra.mxu0 %v5283
    %5492 = vmatprep.subr.bf16.mxu0 %v5288
    %5493 = vmatpush1.bf16.msra.mxu0 %v5287
    %5494 = vmatprep.subr.bf16.mxu0 %v5292
    %5495 = vmatpush1.bf16.msra.mxu0 %v5291
    %5496 = vmatprep.mubr.bf16.mxu0 %v4632
    %5497 = vmatmul.mubr.bf16.gmra.mrb[0].mxu0 %v4631
    %v5498 = vpop.f32.mrb[0].mxu0
    %v5499 = vadd.f32 %v5458, %v5498
    %v5500 = vpop.f32.mrb[0].mxu0
    %v5501 = vadd.f32 %v5460, %v5500
    %v5502 = vpop.f32.mrb[0].mxu0
    %v5503 = vpop.f32.mrb[0].mxu0
    %5504 = vdwg.mxu0
    %5505 = vmatprep.subr.bf16.mxu0 %v5170
    %5506 = vmatpush1.bf16.msra.mxu0 %v5169
    %5507 = vmatprep.subr.bf16.mxu0 %v5174
    %5508 = vmatpush1.bf16.msra.mxu0 %v5173
    %5509 = vmatprep.subr.bf16.mxu0 %v5178
    %5510 = vmatpush1.bf16.msra.mxu0 %v5177
    %5511 = vmatprep.subr.bf16.mxu0 %v5182
    %5512 = vmatpush1.bf16.msra.mxu0 %v5181
    %5513 = vmatprep.subr.bf16.mxu0 %v5186
    %5514 = vmatpush1.bf16.msra.mxu0 %v5185
    %5515 = vmatprep.subr.bf16.mxu0 %v5190
    %5516 = vmatpush1.bf16.msra.mxu0 %v5189
    %5517 = vmatprep.subr.bf16.mxu0 %v5194
    %5518 = vmatpush1.bf16.msra.mxu0 %v5193
    %5519 = vmatprep.subr.bf16.mxu0 %v5198
    %5520 = vmatpush1.bf16.msra.mxu0 %v5197
    %5521 = vmatprep.subr.bf16.mxu0 %v5202
    %5522 = vmatpush1.bf16.msra.mxu0 %v5201
    %5523 = vmatprep.subr.bf16.mxu0 %v5206
    %5524 = vmatpush1.bf16.msra.mxu0 %v5205
    %5525 = vmatprep.subr.bf16.mxu0 %v5210
    %5526 = vmatpush1.bf16.msra.mxu0 %v5209
    %5527 = vmatprep.subr.bf16.mxu0 %v5214
    %5528 = vmatpush1.bf16.msra.mxu0 %v5213
    %5529 = vmatprep.subr.bf16.mxu0 %v5218
    %5530 = vmatpush1.bf16.msra.mxu0 %v5217
    %5531 = vmatprep.subr.bf16.mxu0 %v5222
    %5532 = vmatpush1.bf16.msra.mxu0 %v5221
    %5533 = vmatprep.subr.bf16.mxu0 %v5226
    %5534 = vmatpush1.bf16.msra.mxu0 %v5225
    %5535 = vmatprep.subr.bf16.mxu0 %v5230
    %5536 = vmatpush1.bf16.msra.mxu0 %v5229
    %5537 = vmatprep.mubr.bf16.mxu0 %v4630
    %5538 = vmatmul.mubr.bf16.gmra.mrb[0].mxu0 %v4629
    %v5539 = vpop.f32.mrb[0].mxu0
    %v5540 = vadd.f32 %v4774, %v5539
    %v5541 = vpop.f32.mrb[0].mxu0
    %v5542 = vadd.f32 %v4778, %v5541
    %v5543 = vpop.f32.mrb[0].mxu0
    %v5544 = vpop.f32.mrb[0].mxu0
    %5545 = vdwg.mxu0
    %5546 = vmatprep.subr.bf16.mxu0 %v5234
    %5547 = vmatpush1.bf16.msra.mxu0 %v5233
    %5548 = vmatprep.subr.bf16.mxu0 %v5238
    %5549 = vmatpush1.bf16.msra.mxu0 %v5237
    %5550 = vmatprep.subr.bf16.mxu0 %v5242
    %5551 = vmatpush1.bf16.msra.mxu0 %v5241
    %5552 = vmatprep.subr.bf16.mxu0 %v5246
    %5553 = vmatpush1.bf16.msra.mxu0 %v5245
    %5554 = vmatprep.subr.bf16.mxu0 %v5250
    %5555 = vmatpush1.bf16.msra.mxu0 %v5249
    %5556 = vmatprep.subr.bf16.mxu0 %v5254
    %5557 = vmatpush1.bf16.msra.mxu0 %v5253
    %5558 = vmatprep.subr.bf16.mxu0 %v5258
    %5559 = vmatpush1.bf16.msra.mxu0 %v5257
    %5560 = vmatprep.subr.bf16.mxu0 %v5262
    %5561 = vmatpush1.bf16.msra.mxu0 %v5261
    %5562 = vmatprep.subr.bf16.mxu0 %v5266
    %5563 = vmatpush1.bf16.msra.mxu0 %v5265
    %5564 = vmatprep.subr.bf16.mxu0 %v5270
    %5565 = vmatpush1.bf16.msra.mxu0 %v5269
    %5566 = vmatprep.subr.bf16.mxu0 %v5274
    %5567 = vmatpush1.bf16.msra.mxu0 %v5273
    %5568 = vmatprep.subr.bf16.mxu0 %v5278
    %5569 = vmatpush1.bf16.msra.mxu0 %v5277
    %5570 = vmatprep.subr.bf16.mxu0 %v5282
    %5571 = vmatpush1.bf16.msra.mxu0 %v5281
    %5572 = vmatprep.subr.bf16.mxu0 %v5286
    %5573 = vmatpush1.bf16.msra.mxu0 %v5285
    %5574 = vmatprep.subr.bf16.mxu0 %v5290
    %5575 = vmatpush1.bf16.msra.mxu0 %v5289
    %5576 = vmatprep.subr.bf16.mxu0 %v5294
    %5577 = vmatpush1.bf16.msra.mxu0 %v5293
    %5578 = vmatprep.mubr.bf16.mxu0 %v4632
    %5579 = vmatmul.mubr.bf16.gmra.mrb[0].mxu0 %v4631
    %v5580 = vpop.f32.mrb[0].mxu0
    %v5581 = vadd.f32 %v5540, %v5580
    %v5582 = vpop.f32.mrb[0].mxu0
    %v5583 = vadd.f32 %v5542, %v5582
    %v5584 = vpop.f32.mrb[0].mxu0
    %v5585 = vpop.f32.mrb[0].mxu0
    %5586 = vdwg.mxu0
    %v5587 = vmul.f32 %v5499, 0.01
    %v5588 = vmul.f32 %v5501, 0.01
    %v5589 = vmul.f32 %v5581, 0.01
    %v5590 = vmul.f32 %v5583, 0.01
    %v5591 = vmax.f32 %v5499, %v5587
    %v5592 = vmax.f32 %v5501, %v5588
    %v5593 = vmax.f32 %v5581, %v5589
    %v5594 = vmax.f32 %v5583, %v5590
    %v5595 = vpack.c.bf16 %v5591, %v5591
    %v5596 = vpack.c.bf16 %v5592, %v5592
    %v5597 = vpack.c.bf16 %v5593, %v5593
    %v5598 = vpack.c.bf16 %v5594, %v5594
    %v5599 = vld [vmem:[#allocation11] sm:$0xf]
    %v5600 = vld [vmem:[#allocation11 + $0x4] sm:$0xf]
    %v5601 = vld [vmem:[#allocation11 + $0x8] sm:$0xf]
    %v5602 = vld [vmem:[#allocation11 + $0xc] sm:$0xf]
    %v5603 = vld [vmem:[#allocation11 + $0x10] sm:$0xf]
    %v5604 = vld [vmem:[#allocation11 + $0x14] sm:$0xf]
    %v5605 = vld [vmem:[#allocation11 + $0x18] sm:$0xf]
    %v5606 = vld [vmem:[#allocation11 + $0x1c] sm:$0xf]
    %v5607 = vld [vmem:[#allocation11 + $0x20] sm:$0xf]
    %v5608 = vld [vmem:[#allocation11 + $0x24] sm:$0xf]
    %v5609 = vld [vmem:[#allocation11 + $0x28] sm:$0xf]
    %v5610 = vld [vmem:[#allocation11 + $0x2c] sm:$0xf]
    %v5611 = vld [vmem:[#allocation11 + $0x30] sm:$0xf]
    %v5612 = vld [vmem:[#allocation11 + $0x34] sm:$0xf]
    %v5613 = vld [vmem:[#allocation11 + $0x38] sm:$0xf]
    %v5614 = vld [vmem:[#allocation11 + $0x3c] sm:$0xf]
    %v5615 = vld [vmem:[#allocation11 + $0x40] sm:$0xf]
    %v5616 = vld [vmem:[#allocation11 + $0x44] sm:$0xf]
    %v5617 = vld [vmem:[#allocation11 + $0x48] sm:$0xf]
    %v5618 = vld [vmem:[#allocation11 + $0x4c] sm:$0xf]
    %v5619 = vld [vmem:[#allocation11 + $0x50] sm:$0xf]
    %v5620 = vld [vmem:[#allocation11 + $0x54] sm:$0xf]
    %v5621 = vld [vmem:[#allocation11 + $0x58] sm:$0xf]
    %v5622 = vld [vmem:[#allocation11 + $0x5c] sm:$0xf]
    %v5623 = vld [vmem:[#allocation11 + $0x60] sm:$0xf]
    %v5624 = vld [vmem:[#allocation11 + $0x64] sm:$0xf]
    %v5625 = vld [vmem:[#allocation11 + $0x68] sm:$0xf]
    %v5626 = vld [vmem:[#allocation11 + $0x6c] sm:$0xf]
    %v5627 = vld [vmem:[#allocation11 + $0x70] sm:$0xf]
    %v5628 = vld [vmem:[#allocation11 + $0x74] sm:$0xf]
    %v5629 = vld [vmem:[#allocation11 + $0x78] sm:$0xf]
    %v5630 = vld [vmem:[#allocation11 + $0x7c] sm:$0xf]
    %v5631 = vld [vmem:[#allocation11 + $0x80] sm:$0xf]
    %v5632 = vld [vmem:[#allocation11 + $0x84] sm:$0xf]
    %v5633 = vld [vmem:[#allocation11 + $0x88] sm:$0xf]
    %v5634 = vld [vmem:[#allocation11 + $0x8c] sm:$0xf]
    %v5635 = vld [vmem:[#allocation11 + $0x90] sm:$0xf]
    %v5636 = vld [vmem:[#allocation11 + $0x94] sm:$0xf]
    %v5637 = vld [vmem:[#allocation11 + $0x98] sm:$0xf]
    %v5638 = vld [vmem:[#allocation11 + $0x9c] sm:$0xf]
    %v5639 = vld [vmem:[#allocation11 + $0xa0] sm:$0xf]
    %v5640 = vld [vmem:[#allocation11 + $0xa4] sm:$0xf]
    %v5641 = vld [vmem:[#allocation11 + $0xa8] sm:$0xf]
    %v5642 = vld [vmem:[#allocation11 + $0xac] sm:$0xf]
    %v5643 = vld [vmem:[#allocation11 + $0xb0] sm:$0xf]
    %v5644 = vld [vmem:[#allocation11 + $0xb4] sm:$0xf]
    %v5645 = vld [vmem:[#allocation11 + $0xb8] sm:$0xf]
    %v5646 = vld [vmem:[#allocation11 + $0xbc] sm:$0xf]
    %v5647 = vld [vmem:[#allocation11 + $0xc0] sm:$0xf]
    %v5648 = vld [vmem:[#allocation11 + $0xc4] sm:$0xf]
    %v5649 = vld [vmem:[#allocation11 + $0xc8] sm:$0xf]
    %v5650 = vld [vmem:[#allocation11 + $0xcc] sm:$0xf]
    %v5651 = vld [vmem:[#allocation11 + $0xd0] sm:$0xf]
    %v5652 = vld [vmem:[#allocation11 + $0xd4] sm:$0xf]
    %v5653 = vld [vmem:[#allocation11 + $0xd8] sm:$0xf]
    %v5654 = vld [vmem:[#allocation11 + $0xdc] sm:$0xf]
    %v5655 = vld [vmem:[#allocation11 + $0xe0] sm:$0xf]
    %v5656 = vld [vmem:[#allocation11 + $0xe4] sm:$0xf]
    %v5657 = vld [vmem:[#allocation11 + $0xe8] sm:$0xf]
    %v5658 = vld [vmem:[#allocation11 + $0xec] sm:$0xf]
    %v5659 = vld [vmem:[#allocation11 + $0xf0] sm:$0xf]
    %v5660 = vld [vmem:[#allocation11 + $0xf4] sm:$0xf]
    %v5661 = vld [vmem:[#allocation11 + $0xf8] sm:$0xf]
    %v5662 = vld [vmem:[#allocation11 + $0xfc] sm:$0xf]
    %v5663 = vld [vmem:[#allocation13] sm:$0x1]
    %v5665 = vlaneseq
    %v5666 = vshrl.u32 %v5665, 7
    %v5667 = vsub.s32 0, %v5666
    %v5668 = vrot.slane %v5663, %v5667
    %v5734 = vunpack.c.l.b16 %v5599
    %v5735 = vunpack.c.l.b16 %v5600
    %v5736 = vunpack.c.l.b16 %v5601
    %v5737 = vunpack.c.l.b16 %v5602
    %v5738 = vunpack.c.l.b16 %v5603
    %v5739 = vunpack.c.l.b16 %v5604
    %v5740 = vunpack.c.l.b16 %v5605
    %v5741 = vunpack.c.l.b16 %v5606
    %v5742 = vunpack.c.l.b16 %v5607
    %v5743 = vunpack.c.l.b16 %v5608
    %v5744 = vunpack.c.l.b16 %v5609
    %v5745 = vunpack.c.l.b16 %v5610
    %v5746 = vunpack.c.l.b16 %v5611
    %v5747 = vunpack.c.l.b16 %v5612
    %v5748 = vunpack.c.l.b16 %v5613
    %v5749 = vunpack.c.l.b16 %v5614
    %v5750 = vunpack.c.l.b16 %v5615
    %v5751 = vunpack.c.l.b16 %v5616
    %v5752 = vunpack.c.l.b16 %v5617
    %v5753 = vunpack.c.l.b16 %v5618
    %v5754 = vunpack.c.l.b16 %v5619
    %v5755 = vunpack.c.l.b16 %v5620
    %v5756 = vunpack.c.l.b16 %v5621
    %v5757 = vunpack.c.l.b16 %v5622
    %v5758 = vunpack.c.l.b16 %v5623
    %v5759 = vunpack.c.l.b16 %v5624
    %v5760 = vunpack.c.l.b16 %v5625
    %v5761 = vunpack.c.l.b16 %v5626
    %v5762 = vunpack.c.l.b16 %v5627
    %v5763 = vunpack.c.l.b16 %v5628
    %v5764 = vunpack.c.l.b16 %v5629
    %v5765 = vunpack.c.l.b16 %v5630
    %v5766 = vunpack.c.l.b16 %v5631
    %v5767 = vunpack.c.l.b16 %v5632
    %v5768 = vunpack.c.l.b16 %v5633
    %v5769 = vunpack.c.l.b16 %v5634
    %v5770 = vunpack.c.l.b16 %v5635
    %v5771 = vunpack.c.l.b16 %v5636
    %v5772 = vunpack.c.l.b16 %v5637
    %v5773 = vunpack.c.l.b16 %v5638
    %v5774 = vunpack.c.l.b16 %v5639
    %v5775 = vunpack.c.l.b16 %v5640
    %v5776 = vunpack.c.l.b16 %v5641
    %v5777 = vunpack.c.l.b16 %v5642
    %v5778 = vunpack.c.l.b16 %v5643
    %v5779 = vunpack.c.l.b16 %v5644
    %v5780 = vunpack.c.l.b16 %v5645
    %v5781 = vunpack.c.l.b16 %v5646
    %v5782 = vunpack.c.l.b16 %v5647
    %v5783 = vunpack.c.l.b16 %v5648
    %v5784 = vunpack.c.l.b16 %v5649
    %v5785 = vunpack.c.l.b16 %v5650
    %v5786 = vunpack.c.l.b16 %v5651
    %v5787 = vunpack.c.l.b16 %v5652
    %v5788 = vunpack.c.l.b16 %v5653
    %v5789 = vunpack.c.l.b16 %v5654
    %v5790 = vunpack.c.l.b16 %v5655
    %v5791 = vunpack.c.l.b16 %v5656
    %v5792 = vunpack.c.l.b16 %v5657
    %v5793 = vunpack.c.l.b16 %v5658
    %v5794 = vunpack.c.l.b16 %v5659
    %v5795 = vunpack.c.l.b16 %v5660
    %v5796 = vunpack.c.l.b16 %v5661
    %v5797 = vunpack.c.l.b16 %v5662
    %v5798 = vpack.c.b16 %v5735, %v5734
    %v5799 = vpack.c.b16 %v5737, %v5736
    %v5800 = vpack.c.b16 %v5739, %v5738
    %v5801 = vpack.c.b16 %v5741, %v5740
    %v5802 = vpack.c.b16 %v5743, %v5742
    %v5803 = vpack.c.b16 %v5745, %v5744
    %v5804 = vpack.c.b16 %v5747, %v5746
    %v5805 = vpack.c.b16 %v5749, %v5748
    %v5806 = vpack.c.b16 %v5751, %v5750
    %v5807 = vpack.c.b16 %v5753, %v5752
    %v5808 = vpack.c.b16 %v5755, %v5754
    %v5809 = vpack.c.b16 %v5757, %v5756
    %v5810 = vpack.c.b16 %v5759, %v5758
    %v5811 = vpack.c.b16 %v5761, %v5760
    %v5812 = vpack.c.b16 %v5763, %v5762
    %v5813 = vpack.c.b16 %v5765, %v5764
    %v5814 = vpack.c.b16 %v5767, %v5766
    %v5815 = vpack.c.b16 %v5769, %v5768
    %v5816 = vpack.c.b16 %v5771, %v5770
    %v5817 = vpack.c.b16 %v5773, %v5772
    %v5818 = vpack.c.b16 %v5775, %v5774
    %v5819 = vpack.c.b16 %v5777, %v5776
    %v5820 = vpack.c.b16 %v5779, %v5778
    %v5821 = vpack.c.b16 %v5781, %v5780
    %v5822 = vpack.c.b16 %v5783, %v5782
    %v5823 = vpack.c.b16 %v5785, %v5784
    %v5824 = vpack.c.b16 %v5787, %v5786
    %v5825 = vpack.c.b16 %v5789, %v5788
    %v5826 = vpack.c.b16 %v5791, %v5790
    %v5827 = vpack.c.b16 %v5793, %v5792
    %v5828 = vpack.c.b16 %v5795, %v5794
    %v5829 = vpack.c.b16 %v5797, %v5796
    %5862 = vmatprep.subr.bf16.mxu0 0
    %5863 = vmatpush1.bf16.msra.mxu0 %v5798
    %5864 = vmatprep.subr.bf16.mxu0 0
    %5865 = vmatpush1.bf16.msra.mxu0 %v5799
    %5866 = vmatprep.subr.bf16.mxu0 0
    %5867 = vmatpush1.bf16.msra.mxu0 %v5800
    %5868 = vmatprep.subr.bf16.mxu0 0
    %5869 = vmatpush1.bf16.msra.mxu0 %v5801
    %5870 = vmatprep.subr.bf16.mxu0 0
    %5871 = vmatpush1.bf16.msra.mxu0 %v5802
    %5872 = vmatprep.subr.bf16.mxu0 0
    %5873 = vmatpush1.bf16.msra.mxu0 %v5803
    %5874 = vmatprep.subr.bf16.mxu0 0
    %5875 = vmatpush1.bf16.msra.mxu0 %v5804
    %5876 = vmatprep.subr.bf16.mxu0 0
    %5877 = vmatpush1.bf16.msra.mxu0 %v5805
    %5878 = vmatprep.subr.bf16.mxu0 0
    %5879 = vmatpush1.bf16.msra.mxu0 %v5806
    %5880 = vmatprep.subr.bf16.mxu0 0
    %5881 = vmatpush1.bf16.msra.mxu0 %v5807
    %5882 = vmatprep.subr.bf16.mxu0 0
    %5883 = vmatpush1.bf16.msra.mxu0 %v5808
    %5884 = vmatprep.subr.bf16.mxu0 0
    %5885 = vmatpush1.bf16.msra.mxu0 %v5809
    %5886 = vmatprep.subr.bf16.mxu0 0
    %5887 = vmatpush1.bf16.msra.mxu0 %v5810
    %5888 = vmatprep.subr.bf16.mxu0 0
    %5889 = vmatpush1.bf16.msra.mxu0 %v5811
    %5890 = vmatprep.subr.bf16.mxu0 0
    %5891 = vmatpush1.bf16.msra.mxu0 %v5812
    %5892 = vmatprep.subr.bf16.mxu0 0
    %5893 = vmatpush1.bf16.msra.mxu0 %v5813
    %5894 = vmatprep.mubr.bf16.mxu0 %v5596
    %5895 = vmatmul.mubr.bf16.gmra.mrb[0].mxu0 %v5595
    %v5896 = vpop.f32.mrb[0].mxu0
    %v5897 = vadd.f32 %v5668, %v5896
    %v5898 = vpop.f32.mrb[0].mxu0
    %v5899 = vpop.f32.mrb[0].mxu0
    %v5900 = vpop.f32.mrb[0].mxu0
    %5901 = vdwg.mxu0
    %5902 = vmatprep.subr.bf16.mxu0 0
    %5903 = vmatpush1.bf16.msra.mxu0 %v5814
    %5904 = vmatprep.subr.bf16.mxu0 0
    %5905 = vmatpush1.bf16.msra.mxu0 %v5815
    %5906 = vmatprep.subr.bf16.mxu0 0
    %5907 = vmatpush1.bf16.msra.mxu0 %v5816
    %5908 = vmatprep.subr.bf16.mxu0 0
    %5909 = vmatpush1.bf16.msra.mxu0 %v5817
    %5910 = vmatprep.subr.bf16.mxu0 0
    %5911 = vmatpush1.bf16.msra.mxu0 %v5818
    %5912 = vmatprep.subr.bf16.mxu0 0
    %5913 = vmatpush1.bf16.msra.mxu0 %v5819
    %5914 = vmatprep.subr.bf16.mxu0 0
    %5915 = vmatpush1.bf16.msra.mxu0 %v5820
    %5916 = vmatprep.subr.bf16.mxu0 0
    %5917 = vmatpush1.bf16.msra.mxu0 %v5821
    %5918 = vmatprep.subr.bf16.mxu0 0
    %5919 = vmatpush1.bf16.msra.mxu0 %v5822
    %5920 = vmatprep.subr.bf16.mxu0 0
    %5921 = vmatpush1.bf16.msra.mxu0 %v5823
    %5922 = vmatprep.subr.bf16.mxu0 0
    %5923 = vmatpush1.bf16.msra.mxu0 %v5824
    %5924 = vmatprep.subr.bf16.mxu0 0
    %5925 = vmatpush1.bf16.msra.mxu0 %v5825
    %5926 = vmatprep.subr.bf16.mxu0 0
    %5927 = vmatpush1.bf16.msra.mxu0 %v5826
    %5928 = vmatprep.subr.bf16.mxu0 0
    %5929 = vmatpush1.bf16.msra.mxu0 %v5827
    %5930 = vmatprep.subr.bf16.mxu0 0
    %5931 = vmatpush1.bf16.msra.mxu0 %v5828
    %5932 = vmatprep.subr.bf16.mxu0 0
    %5933 = vmatpush1.bf16.msra.mxu0 %v5829
    %5934 = vmatprep.mubr.bf16.mxu0 %v5598
    %5935 = vmatmul.mubr.bf16.gmra.mrb[0].mxu0 %v5597
    %v5936 = vpop.f32.mrb[0].mxu0
    %v5937 = vadd.f32 %v5897, %v5936
    %v5938 = vpop.f32.mrb[0].mxu0
    %v5939 = vpop.f32.mrb[0].mxu0
    %v5940 = vpop.f32.mrb[0].mxu0
    %5941 = vdwg.mxu0
    %5942 = vst [vmem:[#allocation14] sm:$0x3] %v5937
    // Predicated region
    $region58: #{tpu_custom_call.1} parent=1 // pred_check
      _
    $region59: #{tpu_custom_call.1} parent=1 // pred_check_branch
      %5944 = sbr.rel (0) target = $region61
    $region60: #{tpu_custom_call.1} parent=1 // pred_region
      %s5946 = ssub.s32 32, 32
      %5947 = vsyncadd [#allocation4], %s5946
      %s5949 = sshll.u32 [#allocation14], 4
      %s5950 = int_to_ptr.vmem [resolvable:$true] %s5949
      %5952 = dma.vmem_to_hbm [thread:$0]  %s5950, 32, %s7, [#allocation4]
    $region61: #{tpu_custom_call.1} parent=1 // pred_fallthru
      _
    // Predicated region
    $region62: #{tpu_custom_call.1} parent=1 // pred_check
      _
    $region63: #{tpu_custom_call.1} parent=1 // pred_check_branch
      %5954 = sbr.rel (0) target = $region65
    $region64: #{tpu_custom_call.1} parent=1 // pred_region
      %5955 = dma.done [#allocation4], 32
    $region65: #{tpu_custom_call.1} parent=1 // pred_fallthru
      _
    %5956 = vsyncpa [#allocation3], 1
    %5957 = vsyncpa [#allocation6], 1
    %5958 = vsyncpa [#allocation9], 1
    %5959 = vsyncpa [#allocation12], 1
    %5960 = vsyncpa [#allocation4], 1

</llo_original>
